<compile_context>
chip_gen: v6e
topology: v6e:2x2x1
jax: 0.10.0
libtpu: 0.0.40
codegen_flags: <defaults>
</compile_context>

<pallas_src>
import functools

import numpy as np
import jax
import jax.numpy as jnp
from jax.experimental import pallas as pl
from jax.experimental.pallas import tpu as pltpu  # noqa: F401  (TPU backend)

LEAK = 0.01      # nn.LeakyReLU default negative_slope
BN_EPS = 1e-5    # nn.BatchNorm2d default eps
S2D = 4          # space-to-depth factor == conv1 stride

# (kernel, stride, out_channels) for the three conv layers
CONV_CFG = [(8, 4, 32), (4, 2, 64), (3, 1, 64)]


def _leaky(x):
    return jnp.where(x >= 0, x, LEAK * x)


# ---------------- the single fused Pallas kernel ----------------

def actor_critic_kernel(x0_ref, sel1_ref, w1_ref, sel2_ref, w2_ref,
                        sel3_ref, w3_ref, wh1_ref, bh1_ref, wh2_ref, bh2_ref,
                        out_ref, *, n_actions):
    f32 = jnp.float32

    def conv_bn_lrelu(x, sel_ref, w_ref):
        # conv as a sum over kernel taps: (row-select) @ (per-tap weight); rows of the
        # result are (n, oh, ow), columns are output channels.
        n_taps = sel_ref.shape[0]
        acc = None
        for t in range(n_taps):                       # static unroll
            rows = jnp.dot(sel_ref[t], x, preferred_element_type=f32)
            contrib = jnp.dot(rows, w_ref[t], preferred_element_type=f32)
            acc = contrib if acc is None else acc + contrib
        # Conv2d bias is 0 at init and is cancelled exactly by the batch-mean
        # subtraction of the following BatchNorm2d, so it is omitted.
        mean = jnp.mean(acc, axis=0, keepdims=True)        # per channel over (N, H, W)
        cen = acc - mean
        var = jnp.mean(cen * cen, axis=0, keepdims=True)   # biased var (training mode)
        return _leaky(cen * jax.lax.rsqrt(var + BN_EPS))   # gamma=1, beta=0 at init

    a1 = conv_bn_lrelu(x0_ref[...], sel1_ref, w1_ref)      # (N*8*8, 32)
    a2 = conv_bn_lrelu(a1, sel2_ref, w2_ref)               # (N*3*3, 64)
    a3 = conv_bn_lrelu(a2, sel3_ref, w3_ref)               # (N, 64)  == conv_out

    # Fused heads: [policy_fc1 | value_fc1] as one 1024-lane matmul, then a
    # block-diagonal second stage -> cols [0:A) = policy logits, col A = value, rest 0.
    h = _leaky(jnp.dot(a3, wh1_ref[...], preferred_element_type=f32) + bh1_ref[...])
    full = jnp.dot(h, wh2_ref[...], preferred_element_type=f32) + bh2_ref[...]  # (N,128)

    col = jax.lax.broadcasted_iota(jnp.int32, full.shape, 1)
    is_logit = col < n_actions
    m = jnp.max(jnp.where(is_logit, full, -1e30), axis=1, keepdims=True)
    e = jnp.where(is_logit, jnp.exp(full - m), 0.0)
    probs = e / jnp.sum(e, axis=1, keepdims=True)           # F.softmax(dim=1)
    out_ref[...] = jnp.where(col == n_actions, full, probs)  # probs | value | zero pad


# ---------------- host-side constants, init, forward ----------------

def _spatial_chain(h):
    sizes = []
    for k, s, _ in CONV_CFG:
        h = (h - k) // s + 1
        sizes.append(h)
    return sizes


@functools.lru_cache(maxsize=None)
def _selection_mats(batch, height, width):
    """0/1 row-selection matrices implementing patch gathering for each conv layer."""
    h1, h2, h3 = _spatial_chain(height)
    w1, w2, w3 = _spatial_chain(width)

    def sel(ih, iw, oh, ow, k, s):
        mats = np.zeros((k * k, batch * oh * ow, batch * ih * iw), np.float32)
        for i in range(k):
            for j in range(k):
                t = i * k + j
                for n in range(batch):
                    for p in range(oh):
                        for q in range(ow):
                            mats[t, (n * oh + p) * ow + q,
                                 (n * ih + (p * s + i)) * iw + (q * s + j)] = 1.0
        return jnp.asarray(mats)

    # conv1 acts on the space-to-depth'ed input: kernel 8 / stride 4 -> kernel 2 / stride 1
    return (sel(h1 + 1, w1 + 1, h1, w1, 2, 1),
            sel(h1, w1, h2, w2, CONV_CFG[1][0], CONV_CFG[1][1]),
            sel(h2, w2, h3, w3, CONV_CFG[2][0], CONV_CFG[2][1]))


def kaiming_uniform(key, shape, fan_in):
    # nn.init.kaiming_uniform_ default: a=0, fan_in, leaky_relu -> bound = sqrt(6/fan_in)
    bound = (6.0 / fan_in) ** 0.5
    return jax.random.uniform(key, shape, jnp.float32, -bound, bound)


def init_params(key, input_dim, n_actions):
    in_ch, H, W = input_dim
    h1, h2, h3 = _spatial_chain(H)
    w1_, w2_, w3_ = _spatial_chain(W)
    assert h3 == 1 and w3_ == 1, "fused head path assumes a 1x1 conv output feature map"
    assert n_actions <= 127
    conv_out = CONV_CFG[-1][2] * h3 * w3_

    keys = jax.random.split(key, 7)
    # torch-layout conv weights (OC, C, KH, KW)
    c1 = kaiming_uniform(keys[0], (32, in_ch, 8, 8), in_ch * 64)
    c2 = kaiming_uniform(keys[1], (64, 32, 4, 4), 32 * 16)
    c3 = kaiming_uniform(keys[2], (64, 64, 3, 3), 64 * 9)

    # conv1: fold the space-to-depth(4) layout into 2x2 = 4 tap matrices
    # of shape (S2D*S2D*C, 32) with rows ordered (ry, rx, c).
    w1 = c1.reshape(32, in_ch, 2, S2D, 2, S2D)           # (oc, c, ti, ry, tj, rx)
    w1 = jnp.transpose(w1, (2, 4, 3, 5, 1, 0))           # (ti, tj, ry, rx, c, oc)
    w1 = w1.reshape(4, S2D * S2D * in_ch, 32)

    def taps(w):                                         # (OC, C, KH, KW) -> (KH*KW, C, OC)
        oc, c, kh, kw = w.shape
        return jnp.transpose(w, (2, 3, 1, 0)).reshape(kh * kw, c, oc)

    # heads: torch Linear weights are (out, in); fold into x @ W form and fuse heads.
    pw1 = kaiming_uniform(keys[3], (512, conv_out), conv_out)
    pw2 = kaiming_uniform(keys[4], (n_actions, 512), 512)
    vw1 = kaiming_uniform(keys[5], (512, conv_out), conv_out)
    vw2 = kaiming_uniform(keys[6], (1, 512), 512)

    wh1 = jnp.concatenate([pw1.T, vw1.T], axis=1)        # (conv_out, 1024)
    bh1 = jnp.zeros((1, 1024), jnp.float32)              # Linear biases are 0 at init
    wh2 = jnp.zeros((1024, 128), jnp.float32)            # block-diag: logits | value | 0
    wh2 = wh2.at[:512, :n_actions].set(pw2.T)
    wh2 = wh2.at[512:, n_actions].set(vw2[0])
    bh2 = jnp.zeros((1, 128), jnp.float32)

    return {"w1": w1, "w2": taps(c2), "w3": taps(c3),
            "wh1": wh1, "bh1": bh1, "wh2": wh2, "bh2": bh2}


def actor_critic_forward(params, observation, n_actions):
    x = observation.astype(jnp.float32)                  # observation.float()
    N, C, H, W = x.shape
    h1, _, _ = _spatial_chain(H)
    w1_, _, _ = _spatial_chain(W)
    Hc, Wc = (h1 + 1) * S2D, (w1_ + 1) * S2D             # valid extent (multiple of 4)

    # Single host-side layout transform: NCHW -> space-to-depth(4), flattened to a
    # 2-D matrix with rows (n, h, w) and cols (ry, rx, c).
    x = jnp.transpose(x[:, :, :Hc, :Wc], (0, 2, 3, 1))                # (N, Hc, Wc, C)
    x = x.reshape(N, h1 + 1, S2D, w1_ + 1, S2D, C)
    x = jnp.transpose(x, (0, 1, 3, 2, 4, 5)).reshape(
        N * (h1 + 1) * (w1_ + 1), S2D * S2D * C)

    sel1, sel2, sel3 = _selection_mats(N, H, W)

    # One fused pallas_call: no grid, every operand is a whole-array VMEM block.
    out = pl.pallas_call(
        functools.partial(actor_critic_kernel, n_actions=n_actions),
        out_shape=jax.ShapeDtypeStruct((N, 128), jnp.float32),
    )(x, sel1, params["w1"], sel2, params["w2"], sel3, params["w3"],
      params["wh1"], params["bh1"], params["wh2"], params["bh2"])

    action_dist = out[:, :n_actions]
    value = out[:, n_actions:n_actions + 1]
    return value, action_dist


if __name__ == "__main__":
    key = jax.random.PRNGKey(0)
    input_dim = (4, 36, 36)   # smallest spatial size giving a 1x1x64 feature map
    n_actions = 6
    batch = 2

    kp, kx = jax.random.split(key)
    params = init_params(kp, input_dim, n_actions)
    obs = jax.random.normal(kx, (batch,) + input_dim, jnp.float32)

    fwd = jax.jit(actor_critic_forward, static_argnums=2)
    value, action_dist = fwd(params, obs, n_actions)
    jax.block_until_ready((value, action_dist))

    assert value.shape == (batch, 1)
    assert action_dist.shape == (batch, n_actions)
    assert bool(jnp.all(jnp.isfinite(value))) and bool(jnp.all(jnp.isfinite(action_dist)))
    assert bool(jnp.allclose(jnp.sum(action_dist, axis=1), 1.0, atol=1e-5))
    print("KERNEL_OK")
</pallas_src>

<mosaic_0001>
module attributes {stable_mosaic.version = 11 : i64} {
  func.func @actor_critic_kernel(%arg0: memref<162x64xf32, #tpu.memory_space<vmem>>, %arg1: memref<4x128x162xf32, #tpu.memory_space<vmem>>, %arg2: memref<4x64x32xf32, #tpu.memory_space<vmem>>, %arg3: memref<16x18x128xf32, #tpu.memory_space<vmem>>, %arg4: memref<16x32x64xf32, #tpu.memory_space<vmem>>, %arg5: memref<9x2x18xf32, #tpu.memory_space<vmem>>, %arg6: memref<9x64x64xf32, #tpu.memory_space<vmem>>, %arg7: memref<64x1024xf32, #tpu.memory_space<vmem>>, %arg8: memref<1x1024xf32, #tpu.memory_space<vmem>>, %arg9: memref<1024x128xf32, #tpu.memory_space<vmem>>, %arg10: memref<1x128xf32, #tpu.memory_space<vmem>>, %arg11: memref<2x128xf32, #tpu.memory_space<vmem>>) attributes {dimension_semantics = [], scalar_prefetch = 0 : i64, scratch_operands = 0 : i64, tpu.core_type = #tpu.core_type<tc>} {
    %c0 = arith.constant 0 : index
    %c0_0 = arith.constant 0 : index
    %0 = vector.load %arg0[%c0, %c0_0] : memref<162x64xf32, #tpu.memory_space<vmem>>, vector<162x64xf32>
    %c0_1 = arith.constant 0 : index
    %c0_2 = arith.constant 0 : index
    %c0_3 = arith.constant 0 : index
    %1 = vector.load %arg1[%c0_1, %c0_2, %c0_3] : memref<4x128x162xf32, #tpu.memory_space<vmem>>, vector<1x128x162xf32>
    %2 = vector.shape_cast %1 : vector<1x128x162xf32> to vector<128x162xf32>
    %cst = arith.constant dense<0.000000e+00> : vector<128x64xf32>
    %3 = tpu.matmul %2, %0, %cst {dimension_numbers = #tpu.dot_dimension_numbers<[1], [0], [0], [1], [0, 0, 1, 1], [], []>} : vector<128x162xf32>, vector<162x64xf32>, vector<128x64xf32> -> vector<128x64xf32>
    %c0_4 = arith.constant 0 : index
    %c0_5 = arith.constant 0 : index
    %c0_6 = arith.constant 0 : index
    %4 = vector.load %arg2[%c0_4, %c0_5, %c0_6] : memref<4x64x32xf32, #tpu.memory_space<vmem>>, vector<1x64x32xf32>
    %5 = vector.shape_cast %4 : vector<1x64x32xf32> to vector<64x32xf32>
    %cst_7 = arith.constant dense<0.000000e+00> : vector<128x32xf32>
    %6 = tpu.matmul %3, %5, %cst_7 {dimension_numbers = #tpu.dot_dimension_numbers<[1], [0], [0], [1], [0, 0, 1, 1], [], []>} : vector<128x64xf32>, vector<64x32xf32>, vector<128x32xf32> -> vector<128x32xf32>
    %c1 = arith.constant 1 : index
    %c0_8 = arith.constant 0 : index
    %c0_9 = arith.constant 0 : index
    %7 = vector.load %arg1[%c1, %c0_8, %c0_9] : memref<4x128x162xf32, #tpu.memory_space<vmem>>, vector<1x128x162xf32>
    %8 = vector.shape_cast %7 : vector<1x128x162xf32> to vector<128x162xf32>
    %cst_10 = arith.constant dense<0.000000e+00> : vector<128x64xf32>
    %9 = tpu.matmul %8, %0, %cst_10 {dimension_numbers = #tpu.dot_dimension_numbers<[1], [0], [0], [1], [0, 0, 1, 1], [], []>} : vector<128x162xf32>, vector<162x64xf32>, vector<128x64xf32> -> vector<128x64xf32>
    %c1_11 = arith.constant 1 : index
    %c0_12 = arith.constant 0 : index
    %c0_13 = arith.constant 0 : index
    %10 = vector.load %arg2[%c1_11, %c0_12, %c0_13] : memref<4x64x32xf32, #tpu.memory_space<vmem>>, vector<1x64x32xf32>
    %11 = vector.shape_cast %10 : vector<1x64x32xf32> to vector<64x32xf32>
    %cst_14 = arith.constant dense<0.000000e+00> : vector<128x32xf32>
    %12 = tpu.matmul %9, %11, %cst_14 {dimension_numbers = #tpu.dot_dimension_numbers<[1], [0], [0], [1], [0, 0, 1, 1], [], []>} : vector<128x64xf32>, vector<64x32xf32>, vector<128x32xf32> -> vector<128x32xf32>
    %13 = arith.addf %6, %12 : vector<128x32xf32>
    %c2 = arith.constant 2 : index
    %c0_15 = arith.constant 0 : index
    %c0_16 = arith.constant 0 : index
    %14 = vector.load %arg1[%c2, %c0_15, %c0_16] : memref<4x128x162xf32, #tpu.memory_space<vmem>>, vector<1x128x162xf32>
    %15 = vector.shape_cast %14 : vector<1x128x162xf32> to vector<128x162xf32>
    %cst_17 = arith.constant dense<0.000000e+00> : vector<128x64xf32>
    %16 = tpu.matmul %15, %0, %cst_17 {dimension_numbers = #tpu.dot_dimension_numbers<[1], [0], [0], [1], [0, 0, 1, 1], [], []>} : vector<128x162xf32>, vector<162x64xf32>, vector<128x64xf32> -> vector<128x64xf32>
    %c2_18 = arith.constant 2 : index
    %c0_19 = arith.constant 0 : index
    %c0_20 = arith.constant 0 : index
    %17 = vector.load %arg2[%c2_18, %c0_19, %c0_20] : memref<4x64x32xf32, #tpu.memory_space<vmem>>, vector<1x64x32xf32>
    %18 = vector.shape_cast %17 : vector<1x64x32xf32> to vector<64x32xf32>
    %cst_21 = arith.constant dense<0.000000e+00> : vector<128x32xf32>
    %19 = tpu.matmul %16, %18, %cst_21 {dimension_numbers = #tpu.dot_dimension_numbers<[1], [0], [0], [1], [0, 0, 1, 1], [], []>} : vector<128x64xf32>, vector<64x32xf32>, vector<128x32xf32> -> vector<128x32xf32>
    %20 = arith.addf %13, %19 : vector<128x32xf32>
    %c3 = arith.constant 3 : index
    %c0_22 = arith.constant 0 : index
    %c0_23 = arith.constant 0 : index
    %21 = vector.load %arg1[%c3, %c0_22, %c0_23] : memref<4x128x162xf32, #tpu.memory_space<vmem>>, vector<1x128x162xf32>
    %22 = vector.shape_cast %21 : vector<1x128x162xf32> to vector<128x162xf32>
    %cst_24 = arith.constant dense<0.000000e+00> : vector<128x64xf32>
    %23 = tpu.matmul %22, %0, %cst_24 {dimension_numbers = #tpu.dot_dimension_numbers<[1], [0], [0], [1], [0, 0, 1, 1], [], []>} : vector<128x162xf32>, vector<162x64xf32>, vector<128x64xf32> -> vector<128x64xf32>
    %c3_25 = arith.constant 3 : index
    %c0_26 = arith.constant 0 : index
    %c0_27 = arith.constant 0 : index
    %24 = vector.load %arg2[%c3_25, %c0_26, %c0_27] : memref<4x64x32xf32, #tpu.memory_space<vmem>>, vector<1x64x32xf32>
    %25 = vector.shape_cast %24 : vector<1x64x32xf32> to vector<64x32xf32>
    %cst_28 = arith.constant dense<0.000000e+00> : vector<128x32xf32>
    %26 = tpu.matmul %23, %25, %cst_28 {dimension_numbers = #tpu.dot_dimension_numbers<[1], [0], [0], [1], [0, 0, 1, 1], [], []>} : vector<128x64xf32>, vector<64x32xf32>, vector<128x32xf32> -> vector<128x32xf32>
    %27 = arith.addf %20, %26 : vector<128x32xf32>
    %cst_29 = arith.constant dense<0.000000e+00> : vector<32xf32>
    %28 = vector.multi_reduction <add>, %27, %cst_29 [0] : vector<128x32xf32> to vector<32xf32>
    %29 = vector.shape_cast %28 : vector<32xf32> to vector<1x32xf32>
    %cst_30 = arith.constant 1.280000e+02 : f32
    %30 = vector.broadcast %cst_30 : f32 to vector<1x32xf32>
    %31 = arith.divf %29, %30 : vector<1x32xf32>
    %32 = vector.broadcast %31 : vector<1x32xf32> to vector<128x32xf32>
    %33 = arith.subf %27, %32 : vector<128x32xf32>
    %34 = arith.mulf %33, %33 : vector<128x32xf32>
    %cst_31 = arith.constant dense<0.000000e+00> : vector<32xf32>
    %35 = vector.multi_reduction <add>, %34, %cst_31 [0] : vector<128x32xf32> to vector<32xf32>
    %36 = vector.shape_cast %35 : vector<32xf32> to vector<1x32xf32>
    %cst_32 = arith.constant 1.280000e+02 : f32
    %37 = vector.broadcast %cst_32 : f32 to vector<1x32xf32>
    %38 = arith.divf %36, %37 : vector<1x32xf32>
    %cst_33 = arith.constant 9.99999974E-6 : f32
    %39 = vector.broadcast %cst_33 : f32 to vector<1x32xf32>
    %40 = arith.addf %38, %39 : vector<1x32xf32>
    %41 = math.rsqrt %40 : vector<1x32xf32>
    %42 = vector.broadcast %41 : vector<1x32xf32> to vector<128x32xf32>
    %43 = arith.mulf %33, %42 : vector<128x32xf32>
    %cst_34 = arith.constant 0.000000e+00 : f32
    %44 = vector.broadcast %cst_34 : f32 to vector<128x32xf32>
    %45 = arith.cmpf oge, %43, %44 : vector<128x32xf32>
    %cst_35 = arith.constant 0.00999999977 : f32
    %46 = vector.broadcast %cst_35 : f32 to vector<128x32xf32>
    %47 = arith.mulf %46, %43 : vector<128x32xf32>
    %48 = arith.select %45, %43, %47 : vector<128x32xi1>, vector<128x32xf32>
    %c0_36 = arith.constant 0 : index
    %c0_37 = arith.constant 0 : index
    %c0_38 = arith.constant 0 : index
    %49 = vector.load %arg3[%c0_36, %c0_37, %c0_38] : memref<16x18x128xf32, #tpu.memory_space<vmem>>, vector<1x18x128xf32>
    %50 = vector.shape_cast %49 : vector<1x18x128xf32> to vector<18x128xf32>
    %cst_39 = arith.constant dense<0.000000e+00> : vector<18x32xf32>
    %51 = tpu.matmul %50, %48, %cst_39 {dimension_numbers = #tpu.dot_dimension_numbers<[1], [0], [0], [1], [0, 0, 1, 1], [], []>} : vector<18x128xf32>, vector<128x32xf32>, vector<18x32xf32> -> vector<18x32xf32>
    %c0_40 = arith.constant 0 : index
    %c0_41 = arith.constant 0 : index
    %c0_42 = arith.constant 0 : index
    %52 = vector.load %arg4[%c0_40, %c0_41, %c0_42] : memref<16x32x64xf32, #tpu.memory_space<vmem>>, vector<1x32x64xf32>
    %53 = vector.shape_cast %52 : vector<1x32x64xf32> to vector<32x64xf32>
    %cst_43 = arith.constant dense<0.000000e+00> : vector<18x64xf32>
    %54 = tpu.matmul %51, %53, %cst_43 {dimension_numbers = #tpu.dot_dimension_numbers<[1], [0], [0], [1], [0, 0, 1, 1], [], []>} : vector<18x32xf32>, vector<32x64xf32>, vector<18x64xf32> -> vector<18x64xf32>
    %c1_44 = arith.constant 1 : index
    %c0_45 = arith.constant 0 : index
    %c0_46 = arith.constant 0 : index
    %55 = vector.load %arg3[%c1_44, %c0_45, %c0_46] : memref<16x18x128xf32, #tpu.memory_space<vmem>>, vector<1x18x128xf32>
    %56 = vector.shape_cast %55 : vector<1x18x128xf32> to vector<18x128xf32>
    %cst_47 = arith.constant dense<0.000000e+00> : vector<18x32xf32>
    %57 = tpu.matmul %56, %48, %cst_47 {dimension_numbers = #tpu.dot_dimension_numbers<[1], [0], [0], [1], [0, 0, 1, 1], [], []>} : vector<18x128xf32>, vector<128x32xf32>, vector<18x32xf32> -> vector<18x32xf32>
    %c1_48 = arith.constant 1 : index
    %c0_49 = arith.constant 0 : index
    %c0_50 = arith.constant 0 : index
    %58 = vector.load %arg4[%c1_48, %c0_49, %c0_50] : memref<16x32x64xf32, #tpu.memory_space<vmem>>, vector<1x32x64xf32>
    %59 = vector.shape_cast %58 : vector<1x32x64xf32> to vector<32x64xf32>
    %cst_51 = arith.constant dense<0.000000e+00> : vector<18x64xf32>
    %60 = tpu.matmul %57, %59, %cst_51 {dimension_numbers = #tpu.dot_dimension_numbers<[1], [0], [0], [1], [0, 0, 1, 1], [], []>} : vector<18x32xf32>, vector<32x64xf32>, vector<18x64xf32> -> vector<18x64xf32>
    %61 = arith.addf %54, %60 : vector<18x64xf32>
    %c2_52 = arith.constant 2 : index
    %c0_53 = arith.constant 0 : index
    %c0_54 = arith.constant 0 : index
    %62 = vector.load %arg3[%c2_52, %c0_53, %c0_54] : memref<16x18x128xf32, #tpu.memory_space<vmem>>, vector<1x18x128xf32>
    %63 = vector.shape_cast %62 : vector<1x18x128xf32> to vector<18x128xf32>
    %cst_55 = arith.constant dense<0.000000e+00> : vector<18x32xf32>
    %64 = tpu.matmul %63, %48, %cst_55 {dimension_numbers = #tpu.dot_dimension_numbers<[1], [0], [0], [1], [0, 0, 1, 1], [], []>} : vector<18x128xf32>, vector<128x32xf32>, vector<18x32xf32> -> vector<18x32xf32>
    %c2_56 = arith.constant 2 : index
    %c0_57 = arith.constant 0 : index
    %c0_58 = arith.constant 0 : index
    %65 = vector.load %arg4[%c2_56, %c0_57, %c0_58] : memref<16x32x64xf32, #tpu.memory_space<vmem>>, vector<1x32x64xf32>
    %66 = vector.shape_cast %65 : vector<1x32x64xf32> to vector<32x64xf32>
    %cst_59 = arith.constant dense<0.000000e+00> : vector<18x64xf32>
    %67 = tpu.matmul %64, %66, %cst_59 {dimension_numbers = #tpu.dot_dimension_numbers<[1], [0], [0], [1], [0, 0, 1, 1], [], []>} : vector<18x32xf32>, vector<32x64xf32>, vector<18x64xf32> -> vector<18x64xf32>
    %68 = arith.addf %61, %67 : vector<18x64xf32>
    %c3_60 = arith.constant 3 : index
    %c0_61 = arith.constant 0 : index
    %c0_62 = arith.constant 0 : index
    %69 = vector.load %arg3[%c3_60, %c0_61, %c0_62] : memref<16x18x128xf32, #tpu.memory_space<vmem>>, vector<1x18x128xf32>
    %70 = vector.shape_cast %69 : vector<1x18x128xf32> to vector<18x128xf32>
    %cst_63 = arith.constant dense<0.000000e+00> : vector<18x32xf32>
    %71 = tpu.matmul %70, %48, %cst_63 {dimension_numbers = #tpu.dot_dimension_numbers<[1], [0], [0], [1], [0, 0, 1, 1], [], []>} : vector<18x128xf32>, vector<128x32xf32>, vector<18x32xf32> -> vector<18x32xf32>
    %c3_64 = arith.constant 3 : index
    %c0_65 = arith.constant 0 : index
    %c0_66 = arith.constant 0 : index
    %72 = vector.load %arg4[%c3_64, %c0_65, %c0_66] : memref<16x32x64xf32, #tpu.memory_space<vmem>>, vector<1x32x64xf32>
    %73 = vector.shape_cast %72 : vector<1x32x64xf32> to vector<32x64xf32>
    %cst_67 = arith.constant dense<0.000000e+00> : vector<18x64xf32>
    %74 = tpu.matmul %71, %73, %cst_67 {dimension_numbers = #tpu.dot_dimension_numbers<[1], [0], [0], [1], [0, 0, 1, 1], [], []>} : vector<18x32xf32>, vector<32x64xf32>, vector<18x64xf32> -> vector<18x64xf32>
    %75 = arith.addf %68, %74 : vector<18x64xf32>
    %c4 = arith.constant 4 : index
    %c0_68 = arith.constant 0 : index
    %c0_69 = arith.constant 0 : index
    %76 = vector.load %arg3[%c4, %c0_68, %c0_69] : memref<16x18x128xf32, #tpu.memory_space<vmem>>, vector<1x18x128xf32>
    %77 = vector.shape_cast %76 : vector<1x18x128xf32> to vector<18x128xf32>
    %cst_70 = arith.constant dense<0.000000e+00> : vector<18x32xf32>
    %78 = tpu.matmul %77, %48, %cst_70 {dimension_numbers = #tpu.dot_dimension_numbers<[1], [0], [0], [1], [0, 0, 1, 1], [], []>} : vector<18x128xf32>, vector<128x32xf32>, vector<18x32xf32> -> vector<18x32xf32>
    %c4_71 = arith.constant 4 : index
    %c0_72 = arith.constant 0 : index
    %c0_73 = arith.constant 0 : index
    %79 = vector.load %arg4[%c4_71, %c0_72, %c0_73] : memref<16x32x64xf32, #tpu.memory_space<vmem>>, vector<1x32x64xf32>
    %80 = vector.shape_cast %79 : vector<1x32x64xf32> to vector<32x64xf32>
    %cst_74 = arith.constant dense<0.000000e+00> : vector<18x64xf32>
    %81 = tpu.matmul %78, %80, %cst_74 {dimension_numbers = #tpu.dot_dimension_numbers<[1], [0], [0], [1], [0, 0, 1, 1], [], []>} : vector<18x32xf32>, vector<32x64xf32>, vector<18x64xf32> -> vector<18x64xf32>
    %82 = arith.addf %75, %81 : vector<18x64xf32>
    %c5 = arith.constant 5 : index
    %c0_75 = arith.constant 0 : index
    %c0_76 = arith.constant 0 : index
    %83 = vector.load %arg3[%c5, %c0_75, %c0_76] : memref<16x18x128xf32, #tpu.memory_space<vmem>>, vector<1x18x128xf32>
    %84 = vector.shape_cast %83 : vector<1x18x128xf32> to vector<18x128xf32>
    %cst_77 = arith.constant dense<0.000000e+00> : vector<18x32xf32>
    %85 = tpu.matmul %84, %48, %cst_77 {dimension_numbers = #tpu.dot_dimension_numbers<[1], [0], [0], [1], [0, 0, 1, 1], [], []>} : vector<18x128xf32>, vector<128x32xf32>, vector<18x32xf32> -> vector<18x32xf32>
    %c5_78 = arith.constant 5 : index
    %c0_79 = arith.constant 0 : index
    %c0_80 = arith.constant 0 : index
    %86 = vector.load %arg4[%c5_78, %c0_79, %c0_80] : memref<16x32x64xf32, #tpu.memory_space<vmem>>, vector<1x32x64xf32>
    %87 = vector.shape_cast %86 : vector<1x32x64xf32> to vector<32x64xf32>
    %cst_81 = arith.constant dense<0.000000e+00> : vector<18x64xf32>
    %88 = tpu.matmul %85, %87, %cst_81 {dimension_numbers = #tpu.dot_dimension_numbers<[1], [0], [0], [1], [0, 0, 1, 1], [], []>} : vector<18x32xf32>, vector<32x64xf32>, vector<18x64xf32> -> vector<18x64xf32>
    %89 = arith.addf %82, %88 : vector<18x64xf32>
    %c6 = arith.constant 6 : index
    %c0_82 = arith.constant 0 : index
    %c0_83 = arith.constant 0 : index
    %90 = vector.load %arg3[%c6, %c0_82, %c0_83] : memref<16x18x128xf32, #tpu.memory_space<vmem>>, vector<1x18x128xf32>
    %91 = vector.shape_cast %90 : vector<1x18x128xf32> to vector<18x128xf32>
    %cst_84 = arith.constant dense<0.000000e+00> : vector<18x32xf32>
    %92 = tpu.matmul %91, %48, %cst_84 {dimension_numbers = #tpu.dot_dimension_numbers<[1], [0], [0], [1], [0, 0, 1, 1], [], []>} : vector<18x128xf32>, vector<128x32xf32>, vector<18x32xf32> -> vector<18x32xf32>
    %c6_85 = arith.constant 6 : index
    %c0_86 = arith.constant 0 : index
    %c0_87 = arith.constant 0 : index
    %93 = vector.load %arg4[%c6_85, %c0_86, %c0_87] : memref<16x32x64xf32, #tpu.memory_space<vmem>>, vector<1x32x64xf32>
    %94 = vector.shape_cast %93 : vector<1x32x64xf32> to vector<32x64xf32>
    %cst_88 = arith.constant dense<0.000000e+00> : vector<18x64xf32>
    %95 = tpu.matmul %92, %94, %cst_88 {dimension_numbers = #tpu.dot_dimension_numbers<[1], [0], [0], [1], [0, 0, 1, 1], [], []>} : vector<18x32xf32>, vector<32x64xf32>, vector<18x64xf32> -> vector<18x64xf32>
    %96 = arith.addf %89, %95 : vector<18x64xf32>
    %c7 = arith.constant 7 : index
    %c0_89 = arith.constant 0 : index
    %c0_90 = arith.constant 0 : index
    %97 = vector.load %arg3[%c7, %c0_89, %c0_90] : memref<16x18x128xf32, #tpu.memory_space<vmem>>, vector<1x18x128xf32>
    %98 = vector.shape_cast %97 : vector<1x18x128xf32> to vector<18x128xf32>
    %cst_91 = arith.constant dense<0.000000e+00> : vector<18x32xf32>
    %99 = tpu.matmul %98, %48, %cst_91 {dimension_numbers = #tpu.dot_dimension_numbers<[1], [0], [0], [1], [0, 0, 1, 1], [], []>} : vector<18x128xf32>, vector<128x32xf32>, vector<18x32xf32> -> vector<18x32xf32>
    %c7_92 = arith.constant 7 : index
    %c0_93 = arith.constant 0 : index
    %c0_94 = arith.constant 0 : index
    %100 = vector.load %arg4[%c7_92, %c0_93, %c0_94] : memref<16x32x64xf32, #tpu.memory_space<vmem>>, vector<1x32x64xf32>
    %101 = vector.shape_cast %100 : vector<1x32x64xf32> to vector<32x64xf32>
    %cst_95 = arith.constant dense<0.000000e+00> : vector<18x64xf32>
    %102 = tpu.matmul %99, %101, %cst_95 {dimension_numbers = #tpu.dot_dimension_numbers<[1], [0], [0], [1], [0, 0, 1, 1], [], []>} : vector<18x32xf32>, vector<32x64xf32>, vector<18x64xf32> -> vector<18x64xf32>
    %103 = arith.addf %96, %102 : vector<18x64xf32>
    %c8 = arith.constant 8 : index
    %c0_96 = arith.constant 0 : index
    %c0_97 = arith.constant 0 : index
    %104 = vector.load %arg3[%c8, %c0_96, %c0_97] : memref<16x18x128xf32, #tpu.memory_space<vmem>>, vector<1x18x128xf32>
    %105 = vector.shape_cast %104 : vector<1x18x128xf32> to vector<18x128xf32>
    %cst_98 = arith.constant dense<0.000000e+00> : vector<18x32xf32>
    %106 = tpu.matmul %105, %48, %cst_98 {dimension_numbers = #tpu.dot_dimension_numbers<[1], [0], [0], [1], [0, 0, 1, 1], [], []>} : vector<18x128xf32>, vector<128x32xf32>, vector<18x32xf32> -> vector<18x32xf32>
    %c8_99 = arith.constant 8 : index
    %c0_100 = arith.constant 0 : index
    %c0_101 = arith.constant 0 : index
    %107 = vector.load %arg4[%c8_99, %c0_100, %c0_101] : memref<16x32x64xf32, #tpu.memory_space<vmem>>, vector<1x32x64xf32>
    %108 = vector.shape_cast %107 : vector<1x32x64xf32> to vector<32x64xf32>
    %cst_102 = arith.constant dense<0.000000e+00> : vector<18x64xf32>
    %109 = tpu.matmul %106, %108, %cst_102 {dimension_numbers = #tpu.dot_dimension_numbers<[1], [0], [0], [1], [0, 0, 1, 1], [], []>} : vector<18x32xf32>, vector<32x64xf32>, vector<18x64xf32> -> vector<18x64xf32>
    %110 = arith.addf %103, %109 : vector<18x64xf32>
    %c9 = arith.constant 9 : index
    %c0_103 = arith.constant 0 : index
    %c0_104 = arith.constant 0 : index
    %111 = vector.load %arg3[%c9, %c0_103, %c0_104] : memref<16x18x128xf32, #tpu.memory_space<vmem>>, vector<1x18x128xf32>
    %112 = vector.shape_cast %111 : vector<1x18x128xf32> to vector<18x128xf32>
    %cst_105 = arith.constant dense<0.000000e+00> : vector<18x32xf32>
    %113 = tpu.matmul %112, %48, %cst_105 {dimension_numbers = #tpu.dot_dimension_numbers<[1], [0], [0], [1], [0, 0, 1, 1], [], []>} : vector<18x128xf32>, vector<128x32xf32>, vector<18x32xf32> -> vector<18x32xf32>
    %c9_106 = arith.constant 9 : index
    %c0_107 = arith.constant 0 : index
    %c0_108 = arith.constant 0 : index
    %114 = vector.load %arg4[%c9_106, %c0_107, %c0_108] : memref<16x32x64xf32, #tpu.memory_space<vmem>>, vector<1x32x64xf32>
    %115 = vector.shape_cast %114 : vector<1x32x64xf32> to vector<32x64xf32>
    %cst_109 = arith.constant dense<0.000000e+00> : vector<18x64xf32>
    %116 = tpu.matmul %113, %115, %cst_109 {dimension_numbers = #tpu.dot_dimension_numbers<[1], [0], [0], [1], [0, 0, 1, 1], [], []>} : vector<18x32xf32>, vector<32x64xf32>, vector<18x64xf32> -> vector<18x64xf32>
    %117 = arith.addf %110, %116 : vector<18x64xf32>
    %c10 = arith.constant 10 : index
    %c0_110 = arith.constant 0 : index
    %c0_111 = arith.constant 0 : index
    %118 = vector.load %arg3[%c10, %c0_110, %c0_111] : memref<16x18x128xf32, #tpu.memory_space<vmem>>, vector<1x18x128xf32>
    %119 = vector.shape_cast %118 : vector<1x18x128xf32> to vector<18x128xf32>
    %cst_112 = arith.constant dense<0.000000e+00> : vector<18x32xf32>
    %120 = tpu.matmul %119, %48, %cst_112 {dimension_numbers = #tpu.dot_dimension_numbers<[1], [0], [0], [1], [0, 0, 1, 1], [], []>} : vector<18x128xf32>, vector<128x32xf32>, vector<18x32xf32> -> vector<18x32xf32>
    %c10_113 = arith.constant 10 : index
    %c0_114 = arith.constant 0 : index
    %c0_115 = arith.constant 0 : index
    %121 = vector.load %arg4[%c10_113, %c0_114, %c0_115] : memref<16x32x64xf32, #tpu.memory_space<vmem>>, vector<1x32x64xf32>
    %122 = vector.shape_cast %121 : vector<1x32x64xf32> to vector<32x64xf32>
    %cst_116 = arith.constant dense<0.000000e+00> : vector<18x64xf32>
    %123 = tpu.matmul %120, %122, %cst_116 {dimension_numbers = #tpu.dot_dimension_numbers<[1], [0], [0], [1], [0, 0, 1, 1], [], []>} : vector<18x32xf32>, vector<32x64xf32>, vector<18x64xf32> -> vector<18x64xf32>
    %124 = arith.addf %117, %123 : vector<18x64xf32>
    %c11 = arith.constant 11 : index
    %c0_117 = arith.constant 0 : index
    %c0_118 = arith.constant 0 : index
    %125 = vector.load %arg3[%c11, %c0_117, %c0_118] : memref<16x18x128xf32, #tpu.memory_space<vmem>>, vector<1x18x128xf32>
    %126 = vector.shape_cast %125 : vector<1x18x128xf32> to vector<18x128xf32>
    %cst_119 = arith.constant dense<0.000000e+00> : vector<18x32xf32>
    %127 = tpu.matmul %126, %48, %cst_119 {dimension_numbers = #tpu.dot_dimension_numbers<[1], [0], [0], [1], [0, 0, 1, 1], [], []>} : vector<18x128xf32>, vector<128x32xf32>, vector<18x32xf32> -> vector<18x32xf32>
    %c11_120 = arith.constant 11 : index
    %c0_121 = arith.constant 0 : index
    %c0_122 = arith.constant 0 : index
    %128 = vector.load %arg4[%c11_120, %c0_121, %c0_122] : memref<16x32x64xf32, #tpu.memory_space<vmem>>, vector<1x32x64xf32>
    %129 = vector.shape_cast %128 : vector<1x32x64xf32> to vector<32x64xf32>
    %cst_123 = arith.constant dense<0.000000e+00> : vector<18x64xf32>
    %130 = tpu.matmul %127, %129, %cst_123 {dimension_numbers = #tpu.dot_dimension_numbers<[1], [0], [0], [1], [0, 0, 1, 1], [], []>} : vector<18x32xf32>, vector<32x64xf32>, vector<18x64xf32> -> vector<18x64xf32>
    %131 = arith.addf %124, %130 : vector<18x64xf32>
    %c12 = arith.constant 12 : index
    %c0_124 = arith.constant 0 : index
    %c0_125 = arith.constant 0 : index
    %132 = vector.load %arg3[%c12, %c0_124, %c0_125] : memref<16x18x128xf32, #tpu.memory_space<vmem>>, vector<1x18x128xf32>
    %133 = vector.shape_cast %132 : vector<1x18x128xf32> to vector<18x128xf32>
    %cst_126 = arith.constant dense<0.000000e+00> : vector<18x32xf32>
    %134 = tpu.matmul %133, %48, %cst_126 {dimension_numbers = #tpu.dot_dimension_numbers<[1], [0], [0], [1], [0, 0, 1, 1], [], []>} : vector<18x128xf32>, vector<128x32xf32>, vector<18x32xf32> -> vector<18x32xf32>
    %c12_127 = arith.constant 12 : index
    %c0_128 = arith.constant 0 : index
    %c0_129 = arith.constant 0 : index
    %135 = vector.load %arg4[%c12_127, %c0_128, %c0_129] : memref<16x32x64xf32, #tpu.memory_space<vmem>>, vector<1x32x64xf32>
    %136 = vector.shape_cast %135 : vector<1x32x64xf32> to vector<32x64xf32>
    %cst_130 = arith.constant dense<0.000000e+00> : vector<18x64xf32>
    %137 = tpu.matmul %134, %136, %cst_130 {dimension_numbers = #tpu.dot_dimension_numbers<[1], [0], [0], [1], [0, 0, 1, 1], [], []>} : vector<18x32xf32>, vector<32x64xf32>, vector<18x64xf32> -> vector<18x64xf32>
    %138 = arith.addf %131, %137 : vector<18x64xf32>
    %c13 = arith.constant 13 : index
    %c0_131 = arith.constant 0 : index
    %c0_132 = arith.constant 0 : index
    %139 = vector.load %arg3[%c13, %c0_131, %c0_132] : memref<16x18x128xf32, #tpu.memory_space<vmem>>, vector<1x18x128xf32>
    %140 = vector.shape_cast %139 : vector<1x18x128xf32> to vector<18x128xf32>
    %cst_133 = arith.constant dense<0.000000e+00> : vector<18x32xf32>
    %141 = tpu.matmul %140, %48, %cst_133 {dimension_numbers = #tpu.dot_dimension_numbers<[1], [0], [0], [1], [0, 0, 1, 1], [], []>} : vector<18x128xf32>, vector<128x32xf32>, vector<18x32xf32> -> vector<18x32xf32>
    %c13_134 = arith.constant 13 : index
    %c0_135 = arith.constant 0 : index
    %c0_136 = arith.constant 0 : index
    %142 = vector.load %arg4[%c13_134, %c0_135, %c0_136] : memref<16x32x64xf32, #tpu.memory_space<vmem>>, vector<1x32x64xf32>
    %143 = vector.shape_cast %142 : vector<1x32x64xf32> to vector<32x64xf32>
    %cst_137 = arith.constant dense<0.000000e+00> : vector<18x64xf32>
    %144 = tpu.matmul %141, %143, %cst_137 {dimension_numbers = #tpu.dot_dimension_numbers<[1], [0], [0], [1], [0, 0, 1, 1], [], []>} : vector<18x32xf32>, vector<32x64xf32>, vector<18x64xf32> -> vector<18x64xf32>
    %145 = arith.addf %138, %144 : vector<18x64xf32>
    %c14 = arith.constant 14 : index
    %c0_138 = arith.constant 0 : index
    %c0_139 = arith.constant 0 : index
    %146 = vector.load %arg3[%c14, %c0_138, %c0_139] : memref<16x18x128xf32, #tpu.memory_space<vmem>>, vector<1x18x128xf32>
    %147 = vector.shape_cast %146 : vector<1x18x128xf32> to vector<18x128xf32>
    %cst_140 = arith.constant dense<0.000000e+00> : vector<18x32xf32>
    %148 = tpu.matmul %147, %48, %cst_140 {dimension_numbers = #tpu.dot_dimension_numbers<[1], [0], [0], [1], [0, 0, 1, 1], [], []>} : vector<18x128xf32>, vector<128x32xf32>, vector<18x32xf32> -> vector<18x32xf32>
    %c14_141 = arith.constant 14 : index
    %c0_142 = arith.constant 0 : index
    %c0_143 = arith.constant 0 : index
    %149 = vector.load %arg4[%c14_141, %c0_142, %c0_143] : memref<16x32x64xf32, #tpu.memory_space<vmem>>, vector<1x32x64xf32>
    %150 = vector.shape_cast %149 : vector<1x32x64xf32> to vector<32x64xf32>
    %cst_144 = arith.constant dense<0.000000e+00> : vector<18x64xf32>
    %151 = tpu.matmul %148, %150, %cst_144 {dimension_numbers = #tpu.dot_dimension_numbers<[1], [0], [0], [1], [0, 0, 1, 1], [], []>} : vector<18x32xf32>, vector<32x64xf32>, vector<18x64xf32> -> vector<18x64xf32>
    %152 = arith.addf %145, %151 : vector<18x64xf32>
    %c15 = arith.constant 15 : index
    %c0_145 = arith.constant 0 : index
    %c0_146 = arith.constant 0 : index
    %153 = vector.load %arg3[%c15, %c0_145, %c0_146] : memref<16x18x128xf32, #tpu.memory_space<vmem>>, vector<1x18x128xf32>
    %154 = vector.shape_cast %153 : vector<1x18x128xf32> to vector<18x128xf32>
    %cst_147 = arith.constant dense<0.000000e+00> : vector<18x32xf32>
    %155 = tpu.matmul %154, %48, %cst_147 {dimension_numbers = #tpu.dot_dimension_numbers<[1], [0], [0], [1], [0, 0, 1, 1], [], []>} : vector<18x128xf32>, vector<128x32xf32>, vector<18x32xf32> -> vector<18x32xf32>
    %c15_148 = arith.constant 15 : index
    %c0_149 = arith.constant 0 : index
    %c0_150 = arith.constant 0 : index
    %156 = vector.load %arg4[%c15_148, %c0_149, %c0_150] : memref<16x32x64xf32, #tpu.memory_space<vmem>>, vector<1x32x64xf32>
    %157 = vector.shape_cast %156 : vector<1x32x64xf32> to vector<32x64xf32>
    %cst_151 = arith.constant dense<0.000000e+00> : vector<18x64xf32>
    %158 = tpu.matmul %155, %157, %cst_151 {dimension_numbers = #tpu.dot_dimension_numbers<[1], [0], [0], [1], [0, 0, 1, 1], [], []>} : vector<18x32xf32>, vector<32x64xf32>, vector<18x64xf32> -> vector<18x64xf32>
    %159 = arith.addf %152, %158 : vector<18x64xf32>
    %cst_152 = arith.constant dense<0.000000e+00> : vector<64xf32>
    %160 = vector.multi_reduction <add>, %159, %cst_152 [0] : vector<18x64xf32> to vector<64xf32>
    %161 = vector.shape_cast %160 : vector<64xf32> to vector<1x64xf32>
    %cst_153 = arith.constant 1.800000e+01 : f32
    %162 = vector.broadcast %cst_153 : f32 to vector<1x64xf32>
    %163 = arith.divf %161, %162 : vector<1x64xf32>
    %164 = vector.broadcast %163 : vector<1x64xf32> to vector<18x64xf32>
    %165 = arith.subf %159, %164 : vector<18x64xf32>
    %166 = arith.mulf %165, %165 : vector<18x64xf32>
    %cst_154 = arith.constant dense<0.000000e+00> : vector<64xf32>
    %167 = vector.multi_reduction <add>, %166, %cst_154 [0] : vector<18x64xf32> to vector<64xf32>
    %168 = vector.shape_cast %167 : vector<64xf32> to vector<1x64xf32>
    %cst_155 = arith.constant 1.800000e+01 : f32
    %169 = vector.broadcast %cst_155 : f32 to vector<1x64xf32>
    %170 = arith.divf %168, %169 : vector<1x64xf32>
    %cst_156 = arith.constant 9.99999974E-6 : f32
    %171 = vector.broadcast %cst_156 : f32 to vector<1x64xf32>
    %172 = arith.addf %170, %171 : vector<1x64xf32>
    %173 = math.rsqrt %172 : vector<1x64xf32>
    %174 = vector.broadcast %173 : vector<1x64xf32> to vector<18x64xf32>
    %175 = arith.mulf %165, %174 : vector<18x64xf32>
    %cst_157 = arith.constant 0.000000e+00 : f32
    %176 = vector.broadcast %cst_157 : f32 to vector<18x64xf32>
    %177 = arith.cmpf oge, %175, %176 : vector<18x64xf32>
    %cst_158 = arith.constant 0.00999999977 : f32
    %178 = vector.broadcast %cst_158 : f32 to vector<18x64xf32>
    %179 = arith.mulf %178, %175 : vector<18x64xf32>
    %180 = arith.select %177, %175, %179 : vector<18x64xi1>, vector<18x64xf32>
    %c0_159 = arith.constant 0 : index
    %c0_160 = arith.constant 0 : index
    %c0_161 = arith.constant 0 : index
    %181 = vector.load %arg5[%c0_159, %c0_160, %c0_161] : memref<9x2x18xf32, #tpu.memory_space<vmem>>, vector<1x2x18xf32>
    %182 = vector.shape_cast %181 : vector<1x2x18xf32> to vector<2x18xf32>
    %cst_162 = arith.constant dense<0.000000e+00> : vector<2x64xf32>
    %183 = tpu.matmul %182, %180, %cst_162 {dimension_numbers = #tpu.dot_dimension_numbers<[1], [0], [0], [1], [0, 0, 1, 1], [], []>} : vector<2x18xf32>, vector<18x64xf32>, vector<2x64xf32> -> vector<2x64xf32>
    %c0_163 = arith.constant 0 : index
    %c0_164 = arith.constant 0 : index
    %c0_165 = arith.constant 0 : index
    %184 = vector.load %arg6[%c0_163, %c0_164, %c0_165] : memref<9x64x64xf32, #tpu.memory_space<vmem>>, vector<1x64x64xf32>
    %185 = vector.shape_cast %184 : vector<1x64x64xf32> to vector<64x64xf32>
    %cst_166 = arith.constant dense<0.000000e+00> : vector<2x64xf32>
    %186 = tpu.matmul %183, %185, %cst_166 {dimension_numbers = #tpu.dot_dimension_numbers<[1], [0], [0], [1], [0, 0, 1, 1], [], []>} : vector<2x64xf32>, vector<64x64xf32>, vector<2x64xf32> -> vector<2x64xf32>
    %c1_167 = arith.constant 1 : index
    %c0_168 = arith.constant 0 : index
    %c0_169 = arith.constant 0 : index
    %187 = vector.load %arg5[%c1_167, %c0_168, %c0_169] : memref<9x2x18xf32, #tpu.memory_space<vmem>>, vector<1x2x18xf32>
    %188 = vector.shape_cast %187 : vector<1x2x18xf32> to vector<2x18xf32>
    %cst_170 = arith.constant dense<0.000000e+00> : vector<2x64xf32>
    %189 = tpu.matmul %188, %180, %cst_170 {dimension_numbers = #tpu.dot_dimension_numbers<[1], [0], [0], [1], [0, 0, 1, 1], [], []>} : vector<2x18xf32>, vector<18x64xf32>, vector<2x64xf32> -> vector<2x64xf32>
    %c1_171 = arith.constant 1 : index
    %c0_172 = arith.constant 0 : index
    %c0_173 = arith.constant 0 : index
    %190 = vector.load %arg6[%c1_171, %c0_172, %c0_173] : memref<9x64x64xf32, #tpu.memory_space<vmem>>, vector<1x64x64xf32>
    %191 = vector.shape_cast %190 : vector<1x64x64xf32> to vector<64x64xf32>
    %cst_174 = arith.constant dense<0.000000e+00> : vector<2x64xf32>
    %192 = tpu.matmul %189, %191, %cst_174 {dimension_numbers = #tpu.dot_dimension_numbers<[1], [0], [0], [1], [0, 0, 1, 1], [], []>} : vector<2x64xf32>, vector<64x64xf32>, vector<2x64xf32> -> vector<2x64xf32>
    %193 = arith.addf %186, %192 : vector<2x64xf32>
    %c2_175 = arith.constant 2 : index
    %c0_176 = arith.constant 0 : index
    %c0_177 = arith.constant 0 : index
    %194 = vector.load %arg5[%c2_175, %c0_176, %c0_177] : memref<9x2x18xf32, #tpu.memory_space<vmem>>, vector<1x2x18xf32>
    %195 = vector.shape_cast %194 : vector<1x2x18xf32> to vector<2x18xf32>
    %cst_178 = arith.constant dense<0.000000e+00> : vector<2x64xf32>
    %196 = tpu.matmul %195, %180, %cst_178 {dimension_numbers = #tpu.dot_dimension_numbers<[1], [0], [0], [1], [0, 0, 1, 1], [], []>} : vector<2x18xf32>, vector<18x64xf32>, vector<2x64xf32> -> vector<2x64xf32>
    %c2_179 = arith.constant 2 : index
    %c0_180 = arith.constant 0 : index
    %c0_181 = arith.constant 0 : index
    %197 = vector.load %arg6[%c2_179, %c0_180, %c0_181] : memref<9x64x64xf32, #tpu.memory_space<vmem>>, vector<1x64x64xf32>
    %198 = vector.shape_cast %197 : vector<1x64x64xf32> to vector<64x64xf32>
    %cst_182 = arith.constant dense<0.000000e+00> : vector<2x64xf32>
    %199 = tpu.matmul %196, %198, %cst_182 {dimension_numbers = #tpu.dot_dimension_numbers<[1], [0], [0], [1], [0, 0, 1, 1], [], []>} : vector<2x64xf32>, vector<64x64xf32>, vector<2x64xf32> -> vector<2x64xf32>
    %200 = arith.addf %193, %199 : vector<2x64xf32>
    %c3_183 = arith.constant 3 : index
    %c0_184 = arith.constant 0 : index
    %c0_185 = arith.constant 0 : index
    %201 = vector.load %arg5[%c3_183, %c0_184, %c0_185] : memref<9x2x18xf32, #tpu.memory_space<vmem>>, vector<1x2x18xf32>
    %202 = vector.shape_cast %201 : vector<1x2x18xf32> to vector<2x18xf32>
    %cst_186 = arith.constant dense<0.000000e+00> : vector<2x64xf32>
    %203 = tpu.matmul %202, %180, %cst_186 {dimension_numbers = #tpu.dot_dimension_numbers<[1], [0], [0], [1], [0, 0, 1, 1], [], []>} : vector<2x18xf32>, vector<18x64xf32>, vector<2x64xf32> -> vector<2x64xf32>
    %c3_187 = arith.constant 3 : index
    %c0_188 = arith.constant 0 : index
    %c0_189 = arith.constant 0 : index
    %204 = vector.load %arg6[%c3_187, %c0_188, %c0_189] : memref<9x64x64xf32, #tpu.memory_space<vmem>>, vector<1x64x64xf32>
    %205 = vector.shape_cast %204 : vector<1x64x64xf32> to vector<64x64xf32>
    %cst_190 = arith.constant dense<0.000000e+00> : vector<2x64xf32>
    %206 = tpu.matmul %203, %205, %cst_190 {dimension_numbers = #tpu.dot_dimension_numbers<[1], [0], [0], [1], [0, 0, 1, 1], [], []>} : vector<2x64xf32>, vector<64x64xf32>, vector<2x64xf32> -> vector<2x64xf32>
    %207 = arith.addf %200, %206 : vector<2x64xf32>
    %c4_191 = arith.constant 4 : index
    %c0_192 = arith.constant 0 : index
    %c0_193 = arith.constant 0 : index
    %208 = vector.load %arg5[%c4_191, %c0_192, %c0_193] : memref<9x2x18xf32, #tpu.memory_space<vmem>>, vector<1x2x18xf32>
    %209 = vector.shape_cast %208 : vector<1x2x18xf32> to vector<2x18xf32>
    %cst_194 = arith.constant dense<0.000000e+00> : vector<2x64xf32>
    %210 = tpu.matmul %209, %180, %cst_194 {dimension_numbers = #tpu.dot_dimension_numbers<[1], [0], [0], [1], [0, 0, 1, 1], [], []>} : vector<2x18xf32>, vector<18x64xf32>, vector<2x64xf32> -> vector<2x64xf32>
    %c4_195 = arith.constant 4 : index
    %c0_196 = arith.constant 0 : index
    %c0_197 = arith.constant 0 : index
    %211 = vector.load %arg6[%c4_195, %c0_196, %c0_197] : memref<9x64x64xf32, #tpu.memory_space<vmem>>, vector<1x64x64xf32>
    %212 = vector.shape_cast %211 : vector<1x64x64xf32> to vector<64x64xf32>
    %cst_198 = arith.constant dense<0.000000e+00> : vector<2x64xf32>
    %213 = tpu.matmul %210, %212, %cst_198 {dimension_numbers = #tpu.dot_dimension_numbers<[1], [0], [0], [1], [0, 0, 1, 1], [], []>} : vector<2x64xf32>, vector<64x64xf32>, vector<2x64xf32> -> vector<2x64xf32>
    %214 = arith.addf %207, %213 : vector<2x64xf32>
    %c5_199 = arith.constant 5 : index
    %c0_200 = arith.constant 0 : index
    %c0_201 = arith.constant 0 : index
    %215 = vector.load %arg5[%c5_199, %c0_200, %c0_201] : memref<9x2x18xf32, #tpu.memory_space<vmem>>, vector<1x2x18xf32>
    %216 = vector.shape_cast %215 : vector<1x2x18xf32> to vector<2x18xf32>
    %cst_202 = arith.constant dense<0.000000e+00> : vector<2x64xf32>
    %217 = tpu.matmul %216, %180, %cst_202 {dimension_numbers = #tpu.dot_dimension_numbers<[1], [0], [0], [1], [0, 0, 1, 1], [], []>} : vector<2x18xf32>, vector<18x64xf32>, vector<2x64xf32> -> vector<2x64xf32>
    %c5_203 = arith.constant 5 : index
    %c0_204 = arith.constant 0 : index
    %c0_205 = arith.constant 0 : index
    %218 = vector.load %arg6[%c5_203, %c0_204, %c0_205] : memref<9x64x64xf32, #tpu.memory_space<vmem>>, vector<1x64x64xf32>
    %219 = vector.shape_cast %218 : vector<1x64x64xf32> to vector<64x64xf32>
    %cst_206 = arith.constant dense<0.000000e+00> : vector<2x64xf32>
    %220 = tpu.matmul %217, %219, %cst_206 {dimension_numbers = #tpu.dot_dimension_numbers<[1], [0], [0], [1], [0, 0, 1, 1], [], []>} : vector<2x64xf32>, vector<64x64xf32>, vector<2x64xf32> -> vector<2x64xf32>
    %221 = arith.addf %214, %220 : vector<2x64xf32>
    %c6_207 = arith.constant 6 : index
    %c0_208 = arith.constant 0 : index
    %c0_209 = arith.constant 0 : index
    %222 = vector.load %arg5[%c6_207, %c0_208, %c0_209] : memref<9x2x18xf32, #tpu.memory_space<vmem>>, vector<1x2x18xf32>
    %223 = vector.shape_cast %222 : vector<1x2x18xf32> to vector<2x18xf32>
    %cst_210 = arith.constant dense<0.000000e+00> : vector<2x64xf32>
    %224 = tpu.matmul %223, %180, %cst_210 {dimension_numbers = #tpu.dot_dimension_numbers<[1], [0], [0], [1], [0, 0, 1, 1], [], []>} : vector<2x18xf32>, vector<18x64xf32>, vector<2x64xf32> -> vector<2x64xf32>
    %c6_211 = arith.constant 6 : index
    %c0_212 = arith.constant 0 : index
    %c0_213 = arith.constant 0 : index
    %225 = vector.load %arg6[%c6_211, %c0_212, %c0_213] : memref<9x64x64xf32, #tpu.memory_space<vmem>>, vector<1x64x64xf32>
    %226 = vector.shape_cast %225 : vector<1x64x64xf32> to vector<64x64xf32>
    %cst_214 = arith.constant dense<0.000000e+00> : vector<2x64xf32>
    %227 = tpu.matmul %224, %226, %cst_214 {dimension_numbers = #tpu.dot_dimension_numbers<[1], [0], [0], [1], [0, 0, 1, 1], [], []>} : vector<2x64xf32>, vector<64x64xf32>, vector<2x64xf32> -> vector<2x64xf32>
    %228 = arith.addf %221, %227 : vector<2x64xf32>
    %c7_215 = arith.constant 7 : index
    %c0_216 = arith.constant 0 : index
    %c0_217 = arith.constant 0 : index
    %229 = vector.load %arg5[%c7_215, %c0_216, %c0_217] : memref<9x2x18xf32, #tpu.memory_space<vmem>>, vector<1x2x18xf32>
    %230 = vector.shape_cast %229 : vector<1x2x18xf32> to vector<2x18xf32>
    %cst_218 = arith.constant dense<0.000000e+00> : vector<2x64xf32>
    %231 = tpu.matmul %230, %180, %cst_218 {dimension_numbers = #tpu.dot_dimension_numbers<[1], [0], [0], [1], [0, 0, 1, 1], [], []>} : vector<2x18xf32>, vector<18x64xf32>, vector<2x64xf32> -> vector<2x64xf32>
    %c7_219 = arith.constant 7 : index
    %c0_220 = arith.constant 0 : index
    %c0_221 = arith.constant 0 : index
    %232 = vector.load %arg6[%c7_219, %c0_220, %c0_221] : memref<9x64x64xf32, #tpu.memory_space<vmem>>, vector<1x64x64xf32>
    %233 = vector.shape_cast %232 : vector<1x64x64xf32> to vector<64x64xf32>
    %cst_222 = arith.constant dense<0.000000e+00> : vector<2x64xf32>
    %234 = tpu.matmul %231, %233, %cst_222 {dimension_numbers = #tpu.dot_dimension_numbers<[1], [0], [0], [1], [0, 0, 1, 1], [], []>} : vector<2x64xf32>, vector<64x64xf32>, vector<2x64xf32> -> vector<2x64xf32>
    %235 = arith.addf %228, %234 : vector<2x64xf32>
    %c8_223 = arith.constant 8 : index
    %c0_224 = arith.constant 0 : index
    %c0_225 = arith.constant 0 : index
    %236 = vector.load %arg5[%c8_223, %c0_224, %c0_225] : memref<9x2x18xf32, #tpu.memory_space<vmem>>, vector<1x2x18xf32>
    %237 = vector.shape_cast %236 : vector<1x2x18xf32> to vector<2x18xf32>
    %cst_226 = arith.constant dense<0.000000e+00> : vector<2x64xf32>
    %238 = tpu.matmul %237, %180, %cst_226 {dimension_numbers = #tpu.dot_dimension_numbers<[1], [0], [0], [1], [0, 0, 1, 1], [], []>} : vector<2x18xf32>, vector<18x64xf32>, vector<2x64xf32> -> vector<2x64xf32>
    %c8_227 = arith.constant 8 : index
    %c0_228 = arith.constant 0 : index
    %c0_229 = arith.constant 0 : index
    %239 = vector.load %arg6[%c8_227, %c0_228, %c0_229] : memref<9x64x64xf32, #tpu.memory_space<vmem>>, vector<1x64x64xf32>
    %240 = vector.shape_cast %239 : vector<1x64x64xf32> to vector<64x64xf32>
    %cst_230 = arith.constant dense<0.000000e+00> : vector<2x64xf32>
    %241 = tpu.matmul %238, %240, %cst_230 {dimension_numbers = #tpu.dot_dimension_numbers<[1], [0], [0], [1], [0, 0, 1, 1], [], []>} : vector<2x64xf32>, vector<64x64xf32>, vector<2x64xf32> -> vector<2x64xf32>
    %242 = arith.addf %235, %241 : vector<2x64xf32>
    %cst_231 = arith.constant dense<0.000000e+00> : vector<64xf32>
    %243 = vector.multi_reduction <add>, %242, %cst_231 [0] : vector<2x64xf32> to vector<64xf32>
    %244 = vector.shape_cast %243 : vector<64xf32> to vector<1x64xf32>
    %cst_232 = arith.constant 2.000000e+00 : f32
    %245 = vector.broadcast %cst_232 : f32 to vector<1x64xf32>
    %246 = arith.divf %244, %245 : vector<1x64xf32>
    %247 = vector.broadcast %246 : vector<1x64xf32> to vector<2x64xf32>
    %248 = arith.subf %242, %247 : vector<2x64xf32>
    %249 = arith.mulf %248, %248 : vector<2x64xf32>
    %cst_233 = arith.constant dense<0.000000e+00> : vector<64xf32>
    %250 = vector.multi_reduction <add>, %249, %cst_233 [0] : vector<2x64xf32> to vector<64xf32>
    %251 = vector.shape_cast %250 : vector<64xf32> to vector<1x64xf32>
    %cst_234 = arith.constant 2.000000e+00 : f32
    %252 = vector.broadcast %cst_234 : f32 to vector<1x64xf32>
    %253 = arith.divf %251, %252 : vector<1x64xf32>
    %cst_235 = arith.constant 9.99999974E-6 : f32
    %254 = vector.broadcast %cst_235 : f32 to vector<1x64xf32>
    %255 = arith.addf %253, %254 : vector<1x64xf32>
    %256 = math.rsqrt %255 : vector<1x64xf32>
    %257 = vector.broadcast %256 : vector<1x64xf32> to vector<2x64xf32>
    %258 = arith.mulf %248, %257 : vector<2x64xf32>
    %cst_236 = arith.constant 0.000000e+00 : f32
    %259 = vector.broadcast %cst_236 : f32 to vector<2x64xf32>
    %260 = arith.cmpf oge, %258, %259 : vector<2x64xf32>
    %cst_237 = arith.constant 0.00999999977 : f32
    %261 = vector.broadcast %cst_237 : f32 to vector<2x64xf32>
    %262 = arith.mulf %261, %258 : vector<2x64xf32>
    %263 = arith.select %260, %258, %262 : vector<2x64xi1>, vector<2x64xf32>
    %c0_238 = arith.constant 0 : index
    %c0_239 = arith.constant 0 : index
    %264 = vector.load %arg7[%c0_238, %c0_239] : memref<64x1024xf32, #tpu.memory_space<vmem>>, vector<64x1024xf32>
    %cst_240 = arith.constant dense<0.000000e+00> : vector<2x1024xf32>
    %265 = tpu.matmul %263, %264, %cst_240 {dimension_numbers = #tpu.dot_dimension_numbers<[1], [0], [0], [1], [0, 0, 1, 1], [], []>} : vector<2x64xf32>, vector<64x1024xf32>, vector<2x1024xf32> -> vector<2x1024xf32>
    %c0_241 = arith.constant 0 : index
    %c0_242 = arith.constant 0 : index
    %266 = vector.load %arg8[%c0_241, %c0_242] : memref<1x1024xf32, #tpu.memory_space<vmem>>, vector<1x1024xf32>
    %267 = vector.broadcast %266 : vector<1x1024xf32> to vector<2x1024xf32>
    %268 = arith.addf %265, %267 : vector<2x1024xf32>
    %cst_243 = arith.constant 0.000000e+00 : f32
    %269 = vector.broadcast %cst_243 : f32 to vector<2x1024xf32>
    %270 = arith.cmpf oge, %268, %269 : vector<2x1024xf32>
    %cst_244 = arith.constant 0.00999999977 : f32
    %271 = vector.broadcast %cst_244 : f32 to vector<2x1024xf32>
    %272 = arith.mulf %271, %268 : vector<2x1024xf32>
    %273 = arith.select %270, %268, %272 : vector<2x1024xi1>, vector<2x1024xf32>
    %c0_245 = arith.constant 0 : index
    %c0_246 = arith.constant 0 : index
    %274 = vector.load %arg9[%c0_245, %c0_246] : memref<1024x128xf32, #tpu.memory_space<vmem>>, vector<1024x128xf32>
    %cst_247 = arith.constant dense<0.000000e+00> : vector<2x128xf32>
    %275 = tpu.matmul %273, %274, %cst_247 {dimension_numbers = #tpu.dot_dimension_numbers<[1], [0], [0], [1], [0, 0, 1, 1], [], []>} : vector<2x1024xf32>, vector<1024x128xf32>, vector<2x128xf32> -> vector<2x128xf32>
    %c0_248 = arith.constant 0 : index
    %c0_249 = arith.constant 0 : index
    %276 = vector.load %arg10[%c0_248, %c0_249] : memref<1x128xf32, #tpu.memory_space<vmem>>, vector<1x128xf32>
    %277 = vector.broadcast %276 : vector<1x128xf32> to vector<2x128xf32>
    %278 = arith.addf %275, %277 : vector<2x128xf32>
    %279 = tpu.iota {dimensions = array<i32: 1>} : vector<2x128xi32>
    %c6_i32 = arith.constant 6 : i32
    %280 = vector.broadcast %c6_i32 : i32 to vector<2x128xi32>
    %281 = arith.cmpi slt, %279, %280 : vector<2x128xi32>
    %cst_250 = arith.constant -1.000000e+30 : f32
    %282 = vector.broadcast %cst_250 : f32 to vector<2x128xf32>
    %283 = arith.select %281, %278, %282 : vector<2x128xi1>, vector<2x128xf32>
    %cst_251 = arith.constant dense<0xFF800000> : vector<2xf32>
    %284 = vector.multi_reduction <maximumf>, %283, %cst_251 [1] : vector<2x128xf32> to vector<2xf32>
    %285 = vector.shape_cast %284 : vector<2xf32> to vector<2x1xf32>
    %286 = vector.broadcast %285 : vector<2x1xf32> to vector<2x128xf32>
    %287 = arith.subf %278, %286 : vector<2x128xf32>
    %288 = math.exp %287 : vector<2x128xf32>
    %cst_252 = arith.constant 0.000000e+00 : f32
    %289 = vector.broadcast %cst_252 : f32 to vector<2x128xf32>
    %290 = arith.select %281, %288, %289 : vector<2x128xi1>, vector<2x128xf32>
    %cst_253 = arith.constant dense<0.000000e+00> : vector<2xf32>
    %291 = vector.multi_reduction <add>, %290, %cst_253 [1] : vector<2x128xf32> to vector<2xf32>
    %292 = vector.shape_cast %291 : vector<2xf32> to vector<2x1xf32>
    %293 = vector.broadcast %292 : vector<2x1xf32> to vector<2x128xf32>
    %294 = arith.divf %290, %293 : vector<2x128xf32>
    %c6_i32_254 = arith.constant 6 : i32
    %295 = vector.broadcast %c6_i32_254 : i32 to vector<2x128xi32>
    %296 = arith.cmpi eq, %279, %295 : vector<2x128xi32>
    %297 = arith.select %296, %278, %294 : vector<2x128xi1>, vector<2x128xf32>
    %c0_255 = arith.constant 0 : index
    %c0_256 = arith.constant 0 : index
    %298 = vector.load %arg11[%c0_255, %c0_256] : memref<2x128xf32, #tpu.memory_space<vmem>>, vector<2x128xf32>
    tpu.vector_store %arg11[%c0_255, %c0_256], %297 {strides = array<i32>} : memref<2x128xf32, #tpu.memory_space<vmem>>, vector<2x128xf32>,
    return
  }
}

</mosaic_0001>

<llo_original>
// kernel: actor_critic_forward.1
$region0: #{actor_critic_forward.1}
  #allocation0 [shape = 'u32[]', space=smem, size = 0x4, offset = 0x4, fixed_abs, tag = 'smem constant byte address 0x4 - core index']
  #allocation1 [shape = 'u32[144,128]{1,0:T(1,128)}', space=vmem, size = 0x12000, scoped, tag = 'internal scratch']
  %s0 = inlined_call_operand.vmem [shape: f32[162,64], index: 0, kind: input, shape index: {}]
  %s1 = inlined_call_operand.vmem [shape: f32[4,128,162], index: 1, kind: input, shape index: {}]
  %s2 = inlined_call_operand.vmem [shape: f32[4,64,32], index: 2, kind: input, shape index: {}]
  %s3 = inlined_call_operand.vmem [shape: f32[16,18,128], index: 3, kind: input, shape index: {}]
  %s4 = inlined_call_operand.vmem [shape: f32[16,32,64], index: 4, kind: input, shape index: {}]
  %s5 = inlined_call_operand.vmem [shape: f32[9,2,18], index: 5, kind: input, shape index: {}]
  %s6 = inlined_call_operand.vmem [shape: f32[9,64,64], index: 6, kind: input, shape index: {}]
  %s7 = inlined_call_operand.vmem [shape: f32[64,1024], index: 7, kind: input, shape index: {}]
  %s8 = inlined_call_operand.vmem [shape: f32[1,1024], index: 8, kind: input, shape index: {}]
  %s9 = inlined_call_operand.vmem [shape: f32[1024,128], index: 9, kind: input, shape index: {}]
  %s10 = inlined_call_operand.vmem [shape: f32[1,128], index: 10, kind: input, shape index: {}]
  %s11 = inlined_call_operand.vmem [shape: f32[2,128], index: 11, kind: output, shape index: {}]
  %s12 = sld [smem:[#allocation0]]
  $region54: #{actor_critic_forward.1} parent=0
    _
  %s14 = ssub.s32 1, %s12
  %s15 = scalar_select 0, %s14, %s12
  // Predicated region
  $region2: #{actor_critic_forward.1} parent=0 // pred_check
    _
  $region3: #{actor_critic_forward.1} parent=0 // pred_check_branch
    %17 = sbr.rel (0) target = $region5
  $region4: #{actor_critic_forward.1} parent=0 // pred_region
    _
  $region5: #{actor_critic_forward.1} parent=0 // pred_fallthru
    _
  // Predicated region
  $region6: #{actor_critic_forward.1} parent=0 // pred_check
    _
  $region7: #{actor_critic_forward.1} parent=0 // pred_check_branch
    %19 = sbr.rel (0) target = $region9
  $region8: #{actor_critic_forward.1} parent=0 // pred_region
    _
  $region9: #{actor_critic_forward.1} parent=0 // pred_fallthru
    _
  // Predicated region
  $region10: #{actor_critic_forward.1} parent=0 // pred_check
    _
  $region11: #{actor_critic_forward.1} parent=0 // pred_check_branch
    %21 = sbr.rel (0) target = $region13
  $region12: #{actor_critic_forward.1} parent=0 // pred_region
    _
  $region13: #{actor_critic_forward.1} parent=0 // pred_fallthru
    _
  // Predicated region
  $region14: #{actor_critic_forward.1} parent=0 // pred_check
    _
  $region15: #{actor_critic_forward.1} parent=0 // pred_check_branch
    %23 = sbr.rel (0) target = $region17
  $region16: #{actor_critic_forward.1} parent=0 // pred_region
    _
  $region17: #{actor_critic_forward.1} parent=0 // pred_fallthru
    _
  // Predicated region
  $region18: #{actor_critic_forward.1} parent=0 // pred_check
    _
  $region19: #{actor_critic_forward.1} parent=0 // pred_check_branch
    %25 = sbr.rel (0) target = $region21
  $region20: #{actor_critic_forward.1} parent=0 // pred_region
    _
  $region21: #{actor_critic_forward.1} parent=0 // pred_fallthru
    _
  // Predicated region
  $region22: #{actor_critic_forward.1} parent=0 // pred_check
    _
  $region23: #{actor_critic_forward.1} parent=0 // pred_check_branch
    %27 = sbr.rel (0) target = $region25
  $region24: #{actor_critic_forward.1} parent=0 // pred_region
    _
  $region25: #{actor_critic_forward.1} parent=0 // pred_fallthru
    _
  // Predicated region
  $region26: #{actor_critic_forward.1} parent=0 // pred_check
    _
  $region27: #{actor_critic_forward.1} parent=0 // pred_check_branch
    %29 = sbr.rel (0) target = $region29
  $region28: #{actor_critic_forward.1} parent=0 // pred_region
    _
  $region29: #{actor_critic_forward.1} parent=0 // pred_fallthru
    _
  // Predicated region
  $region30: #{actor_critic_forward.1} parent=0 // pred_check
    _
  $region31: #{actor_critic_forward.1} parent=0 // pred_check_branch
    %31 = sbr.rel (0) target = $region33
  $region32: #{actor_critic_forward.1} parent=0 // pred_region
    _
  $region33: #{actor_critic_forward.1} parent=0 // pred_fallthru
    _
  // Predicated region
  $region34: #{actor_critic_forward.1} parent=0 // pred_check
    _
  $region35: #{actor_critic_forward.1} parent=0 // pred_check_branch
    %33 = sbr.rel (0) target = $region37
  $region36: #{actor_critic_forward.1} parent=0 // pred_region
    _
  $region37: #{actor_critic_forward.1} parent=0 // pred_fallthru
    _
  // Predicated region
  $region38: #{actor_critic_forward.1} parent=0 // pred_check
    _
  $region39: #{actor_critic_forward.1} parent=0 // pred_check_branch
    %35 = sbr.rel (0) target = $region41
  $region40: #{actor_critic_forward.1} parent=0 // pred_region
    _
  $region41: #{actor_critic_forward.1} parent=0 // pred_fallthru
    _
  // Predicated region
  $region42: #{actor_critic_forward.1} parent=0 // pred_check
    _
  $region43: #{actor_critic_forward.1} parent=0 // pred_check_branch
    %37 = sbr.rel (0) target = $region45
  $region44: #{actor_critic_forward.1} parent=0 // pred_region
    _
  $region45: #{actor_critic_forward.1} parent=0 // pred_fallthru
    _
  %v38 = vld [vmem:[%s0] sm:$0xff]
  %v39 = vld [vmem:[%s0 + $0x8] sm:$0xff]
  %v40 = vld [vmem:[%s0 + $0x10] sm:$0xff]
  %v41 = vld [vmem:[%s0 + $0x18] sm:$0xff]
  %v42 = vld [vmem:[%s0 + $0x20] sm:$0xff]
  %v43 = vld [vmem:[%s0 + $0x28] sm:$0xff]
  %v44 = vld [vmem:[%s0 + $0x30] sm:$0xff]
  %v45 = vld [vmem:[%s0 + $0x38] sm:$0xff]
  %v46 = vld [vmem:[%s0 + $0x40] sm:$0xff]
  %v47 = vld [vmem:[%s0 + $0x48] sm:$0xff]
  %v48 = vld [vmem:[%s0 + $0x50] sm:$0xff]
  %v49 = vld [vmem:[%s0 + $0x58] sm:$0xff]
  %v50 = vld [vmem:[%s0 + $0x60] sm:$0xff]
  %v51 = vld [vmem:[%s0 + $0x68] sm:$0xff]
  %v52 = vld [vmem:[%s0 + $0x70] sm:$0xff]
  %v53 = vld [vmem:[%s0 + $0x78] sm:$0xff]
  %v54 = vld [vmem:[%s0 + $0x80] sm:$0xff]
  %v55 = vld [vmem:[%s0 + $0x88] sm:$0xff]
  %v56 = vld [vmem:[%s0 + $0x90] sm:$0xff]
  %v57 = vld [vmem:[%s0 + $0x98] sm:$0xff]
  %v58 = vld [vmem:[%s0 + $0xa0] sm:$0x3]
  %v59 = vld [vmem:[%s1] sm:$0xff]
  %v60 = vld [vmem:[%s1 + $0x8] sm:$0xff]
  %v61 = vld [vmem:[%s1 + $0x10] sm:$0xff]
  %v62 = vld [vmem:[%s1 + $0x18] sm:$0xff]
  %v63 = vld [vmem:[%s1 + $0x20] sm:$0xff]
  %v64 = vld [vmem:[%s1 + $0x28] sm:$0xff]
  %v65 = vld [vmem:[%s1 + $0x30] sm:$0xff]
  %v66 = vld [vmem:[%s1 + $0x38] sm:$0xff]
  %v67 = vld [vmem:[%s1 + $0x40] sm:$0xff]
  %v68 = vld [vmem:[%s1 + $0x48] sm:$0xff]
  %v69 = vld [vmem:[%s1 + $0x50] sm:$0xff]
  %v70 = vld [vmem:[%s1 + $0x58] sm:$0xff]
  %v71 = vld [vmem:[%s1 + $0x60] sm:$0xff]
  %v72 = vld [vmem:[%s1 + $0x68] sm:$0xff]
  %v73 = vld [vmem:[%s1 + $0x70] sm:$0xff]
  %v74 = vld [vmem:[%s1 + $0x78] sm:$0xff]
  %v75 = vld [vmem:[%s1 + $0x80] sm:$0xff]
  %v76 = vld [vmem:[%s1 + $0x88] sm:$0xff]
  %v77 = vld [vmem:[%s1 + $0x90] sm:$0xff]
  %v78 = vld [vmem:[%s1 + $0x98] sm:$0xff]
  %v79 = vld [vmem:[%s1 + $0xa0] sm:$0xff]
  %v80 = vld [vmem:[%s1 + $0xa8] sm:$0xff]
  %v81 = vld [vmem:[%s1 + $0xb0] sm:$0xff]
  %v82 = vld [vmem:[%s1 + $0xb8] sm:$0xff]
  %v83 = vld [vmem:[%s1 + $0xc0] sm:$0xff]
  %v84 = vld [vmem:[%s1 + $0xc8] sm:$0xff]
  %v85 = vld [vmem:[%s1 + $0xd0] sm:$0xff]
  %v86 = vld [vmem:[%s1 + $0xd8] sm:$0xff]
  %v87 = vld [vmem:[%s1 + $0xe0] sm:$0xff]
  %v88 = vld [vmem:[%s1 + $0xe8] sm:$0xff]
  %v89 = vld [vmem:[%s1 + $0xf0] sm:$0xff]
  %v90 = vld [vmem:[%s1 + $0xf8] sm:$0xff]
  %vm91 = vcmask 277504
  %v93 = vsel %vm91, %v60, 0
  %v96 = vsel %vm91, %v62, 0
  %v99 = vsel %vm91, %v64, 0
  %v102 = vsel %vm91, %v66, 0
  %v105 = vsel %vm91, %v68, 0
  %v108 = vsel %vm91, %v70, 0
  %v111 = vsel %vm91, %v72, 0
  %v114 = vsel %vm91, %v74, 0
  %v117 = vsel %vm91, %v76, 0
  %v120 = vsel %vm91, %v78, 0
  %v123 = vsel %vm91, %v80, 0
  %v126 = vsel %vm91, %v82, 0
  %v129 = vsel %vm91, %v84, 0
  %v132 = vsel %vm91, %v86, 0
  %v135 = vsel %vm91, %v88, 0
  %v138 = vsel %vm91, %v90, 0
  %vm140 = vcmask 1041408
  %v142 = vsel %vm140, %v58, 0
  %144 = vmatprep.subr.mxu0 0.0
  %145 = vmatpush1.msra.mxu0 %v53
  %146 = vmatprep.subr.mxu0 0.0
  %147 = vmatpush1.msra.mxu0 %v52
  %148 = vmatprep.subr.mxu0 0.0
  %149 = vmatpush1.msra.mxu0 %v51
  %150 = vmatprep.subr.mxu0 0.0
  %151 = vmatpush1.msra.mxu0 %v50
  %152 = vmatprep.subr.mxu0 0.0
  %153 = vmatpush1.msra.mxu0 %v49
  %154 = vmatprep.subr.mxu0 0.0
  %155 = vmatpush1.msra.mxu0 %v48
  %156 = vmatprep.subr.mxu0 0.0
  %157 = vmatpush1.msra.mxu0 %v47
  %158 = vmatprep.subr.mxu0 0.0
  %159 = vmatpush1.msra.mxu0 %v46
  %160 = vmatprep.subr.mxu0 0.0
  %161 = vmatpush1.msra.mxu0 %v45
  %162 = vmatprep.subr.mxu0 0.0
  %163 = vmatpush1.msra.mxu0 %v44
  %164 = vmatprep.subr.mxu0 0.0
  %165 = vmatpush1.msra.mxu0 %v43
  %166 = vmatprep.subr.mxu0 0.0
  %167 = vmatpush1.msra.mxu0 %v42
  %168 = vmatprep.subr.mxu0 0.0
  %169 = vmatpush1.msra.mxu0 %v41
  %170 = vmatprep.subr.mxu0 0.0
  %171 = vmatpush1.msra.mxu0 %v40
  %172 = vmatprep.subr.mxu0 0.0
  %173 = vmatpush1.msra.mxu0 %v39
  %174 = vmatprep.subr.mxu0 0.0
  %175 = vmatpush1.msra.mxu0 %v38
  %176 = vmatprep.subr.mxu0 0.0
  %177 = vmatpush2.msra.mxu0 0.0
  %178 = vmatprep.subr.mxu0 0.0
  %179 = vmatpush2.msra.mxu0 0.0
  %180 = vmatprep.subr.mxu0 0.0
  %181 = vmatpush2.msra.mxu0 0.0
  %182 = vmatprep.subr.mxu0 0.0
  %183 = vmatpush2.msra.mxu0 0.0
  %184 = vmatprep.subr.mxu0 0.0
  %185 = vmatpush2.msra.mxu0 0.0
  %186 = vmatprep.subr.mxu0 0.0
  %187 = vmatpush2.msra.mxu0 0.0
  %188 = vmatprep.subr.mxu0 0.0
  %189 = vmatpush2.msra.mxu0 0.0
  %190 = vmatprep.subr.mxu0 0.0
  %191 = vmatpush2.msra.mxu0 0.0
  %192 = vmatprep.subr.mxu0 0.0
  %193 = vmatpush2.msra.mxu0 0.0
  %194 = vmatprep.subr.mxu0 0.0
  %195 = vmatpush2.msra.mxu0 0.0
  %196 = vmatprep.subr.mxu0 0.0
  %197 = vmatpush2.msra.mxu0 0.0
  %198 = vmatprep.subr.mxu0 0.0
  %199 = vmatpush2.msra.mxu0 %v142
  %200 = vmatprep.subr.mxu0 0.0
  %201 = vmatpush2.msra.mxu0 %v57
  %202 = vmatprep.subr.mxu0 0.0
  %203 = vmatpush2.msra.mxu0 %v56
  %204 = vmatprep.subr.mxu0 0.0
  %205 = vmatpush2.msra.mxu0 %v55
  %206 = vmatprep.subr.mxu0 0.0
  %207 = vmatpush2.msra.mxu0 %v54
  %208 = vmatprep.mubr.f32.mxu0 %v93
  %209 = vmatmul.mubr.f32.gmra.mxu0 %v59
  %v210 = vpop.f32.mrf.mxu0
  %v211 = vadd.f32 0.0, %v210
  %v212 = vpop.f32.mrf.mxu0
  %213 = vmatprep.mubr.f32.mxu0 %v96
  %214 = vmatmul.mubr.f32.gmra.mxu0 %v61
  %v215 = vpop.f32.mrf.mxu0
  %v216 = vadd.f32 0.0, %v215
  %v217 = vpop.f32.mrf.mxu0
  %218 = vmatprep.mubr.f32.mxu0 %v99
  %219 = vmatmul.mubr.f32.gmra.mxu0 %v63
  %v220 = vpop.f32.mrf.mxu0
  %v221 = vadd.f32 0.0, %v220
  %v222 = vpop.f32.mrf.mxu0
  %223 = vmatprep.mubr.f32.mxu0 %v102
  %224 = vmatmul.mubr.f32.gmra.mxu0 %v65
  %v225 = vpop.f32.mrf.mxu0
  %v226 = vadd.f32 0.0, %v225
  %v227 = vpop.f32.mrf.mxu0
  %228 = vmatprep.mubr.f32.mxu0 %v105
  %229 = vmatmul.mubr.f32.gmra.mxu0 %v67
  %v230 = vpop.f32.mrf.mxu0
  %v231 = vadd.f32 0.0, %v230
  %v232 = vpop.f32.mrf.mxu0
  %233 = vmatprep.mubr.f32.mxu0 %v108
  %234 = vmatmul.mubr.f32.gmra.mxu0 %v69
  %v235 = vpop.f32.mrf.mxu0
  %v236 = vadd.f32 0.0, %v235
  %v237 = vpop.f32.mrf.mxu0
  %238 = vmatprep.mubr.f32.mxu0 %v111
  %239 = vmatmul.mubr.f32.gmra.mxu0 %v71
  %v240 = vpop.f32.mrf.mxu0
  %v241 = vadd.f32 0.0, %v240
  %v242 = vpop.f32.mrf.mxu0
  %243 = vmatprep.mubr.f32.mxu0 %v114
  %244 = vmatmul.mubr.f32.gmra.mxu0 %v73
  %v245 = vpop.f32.mrf.mxu0
  %v246 = vadd.f32 0.0, %v245
  %v247 = vpop.f32.mrf.mxu0
  %248 = vmatprep.mubr.f32.mxu0 %v117
  %249 = vmatmul.mubr.f32.gmra.mxu0 %v75
  %v250 = vpop.f32.mrf.mxu0
  %v251 = vadd.f32 0.0, %v250
  %v252 = vpop.f32.mrf.mxu0
  %253 = vmatprep.mubr.f32.mxu0 %v120
  %254 = vmatmul.mubr.f32.gmra.mxu0 %v77
  %v255 = vpop.f32.mrf.mxu0
  %v256 = vadd.f32 0.0, %v255
  %v257 = vpop.f32.mrf.mxu0
  %258 = vmatprep.mubr.f32.mxu0 %v123
  %259 = vmatmul.mubr.f32.gmra.mxu0 %v79
  %v260 = vpop.f32.mrf.mxu0
  %v261 = vadd.f32 0.0, %v260
  %v262 = vpop.f32.mrf.mxu0
  %263 = vmatprep.mubr.f32.mxu0 %v126
  %264 = vmatmul.mubr.f32.gmra.mxu0 %v81
  %v265 = vpop.f32.mrf.mxu0
  %v266 = vadd.f32 0.0, %v265
  %v267 = vpop.f32.mrf.mxu0
  %268 = vmatprep.mubr.f32.mxu0 %v129
  %269 = vmatmul.mubr.f32.gmra.mxu0 %v83
  %v270 = vpop.f32.mrf.mxu0
  %v271 = vadd.f32 0.0, %v270
  %v272 = vpop.f32.mrf.mxu0
  %273 = vmatprep.mubr.f32.mxu0 %v132
  %274 = vmatmul.mubr.f32.gmra.mxu0 %v85
  %v275 = vpop.f32.mrf.mxu0
  %v276 = vadd.f32 0.0, %v275
  %v277 = vpop.f32.mrf.mxu0
  %278 = vmatprep.mubr.f32.mxu0 %v135
  %279 = vmatmul.mubr.f32.gmra.mxu0 %v87
  %v280 = vpop.f32.mrf.mxu0
  %v281 = vadd.f32 0.0, %v280
  %v282 = vpop.f32.mrf.mxu0
  %283 = vmatprep.mubr.f32.mxu0 %v138
  %284 = vmatmul.mubr.f32.gmra.mxu0 %v89
  %v285 = vpop.f32.mrf.mxu0
  %v286 = vadd.f32 0.0, %v285
  %v287 = vpop.f32.mrf.mxu0
  %288 = vdwg.mxu0
  %v289 = vld [vmem:[%s2] sm:$0xff]
  %v290 = vld [vmem:[%s2 + $0x8] sm:$0xff]
  %v291 = vld [vmem:[%s2 + $0x10] sm:$0xff]
  %v292 = vld [vmem:[%s2 + $0x18] sm:$0xff]
  %v293 = vld [vmem:[%s2 + $0x20] sm:$0xff]
  %v294 = vld [vmem:[%s2 + $0x28] sm:$0xff]
  %v295 = vld [vmem:[%s2 + $0x30] sm:$0xff]
  %v296 = vld [vmem:[%s2 + $0x38] sm:$0xff]
  %s297 = scalar_lea.vmem %s1, 256
  %v298 = vld [vmem:[%s297] sm:$0xff]
  %v299 = vld [vmem:[%s297 + $0x8] sm:$0xff]
  %v300 = vld [vmem:[%s297 + $0x10] sm:$0xff]
  %v301 = vld [vmem:[%s297 + $0x18] sm:$0xff]
  %v302 = vld [vmem:[%s297 + $0x20] sm:$0xff]
  %v303 = vld [vmem:[%s297 + $0x28] sm:$0xff]
  %v304 = vld [vmem:[%s297 + $0x30] sm:$0xff]
  %v305 = vld [vmem:[%s297 + $0x38] sm:$0xff]
  %v306 = vld [vmem:[%s297 + $0x40] sm:$0xff]
  %v307 = vld [vmem:[%s297 + $0x48] sm:$0xff]
  %v308 = vld [vmem:[%s297 + $0x50] sm:$0xff]
  %v309 = vld [vmem:[%s297 + $0x58] sm:$0xff]
  %v310 = vld [vmem:[%s297 + $0x60] sm:$0xff]
  %v311 = vld [vmem:[%s297 + $0x68] sm:$0xff]
  %v312 = vld [vmem:[%s297 + $0x70] sm:$0xff]
  %v313 = vld [vmem:[%s297 + $0x78] sm:$0xff]
  %v314 = vld [vmem:[%s297 + $0x80] sm:$0xff]
  %v315 = vld [vmem:[%s297 + $0x88] sm:$0xff]
  %v316 = vld [vmem:[%s297 + $0x90] sm:$0xff]
  %v317 = vld [vmem:[%s297 + $0x98] sm:$0xff]
  %v318 = vld [vmem:[%s297 + $0xa0] sm:$0xff]
  %v319 = vld [vmem:[%s297 + $0xa8] sm:$0xff]
  %v320 = vld [vmem:[%s297 + $0xb0] sm:$0xff]
  %v321 = vld [vmem:[%s297 + $0xb8] sm:$0xff]
  %v322 = vld [vmem:[%s297 + $0xc0] sm:$0xff]
  %v323 = vld [vmem:[%s297 + $0xc8] sm:$0xff]
  %v324 = vld [vmem:[%s297 + $0xd0] sm:$0xff]
  %v325 = vld [vmem:[%s297 + $0xd8] sm:$0xff]
  %v326 = vld [vmem:[%s297 + $0xe0] sm:$0xff]
  %v327 = vld [vmem:[%s297 + $0xe8] sm:$0xff]
  %v328 = vld [vmem:[%s297 + $0xf0] sm:$0xff]
  %v329 = vld [vmem:[%s297 + $0xf8] sm:$0xff]
  %v331 = vsel %vm91, %v299, 0
  %v334 = vsel %vm91, %v301, 0
  %v337 = vsel %vm91, %v303, 0
  %v340 = vsel %vm91, %v305, 0
  %v343 = vsel %vm91, %v307, 0
  %v346 = vsel %vm91, %v309, 0
  %v349 = vsel %vm91, %v311, 0
  %v352 = vsel %vm91, %v313, 0
  %v355 = vsel %vm91, %v315, 0
  %v358 = vsel %vm91, %v317, 0
  %v361 = vsel %vm91, %v319, 0
  %v364 = vsel %vm91, %v321, 0
  %v367 = vsel %vm91, %v323, 0
  %v370 = vsel %vm91, %v325, 0
  %v373 = vsel %vm91, %v327, 0
  %v376 = vsel %vm91, %v329, 0
  %378 = vmatprep.subr.mxu0 0.0
  %379 = vmatpush1.msra.mxu0 %v53
  %380 = vmatprep.subr.mxu0 0.0
  %381 = vmatpush1.msra.mxu0 %v52
  %382 = vmatprep.subr.mxu0 0.0
  %383 = vmatpush1.msra.mxu0 %v51
  %384 = vmatprep.subr.mxu0 0.0
  %385 = vmatpush1.msra.mxu0 %v50
  %386 = vmatprep.subr.mxu0 0.0
  %387 = vmatpush1.msra.mxu0 %v49
  %388 = vmatprep.subr.mxu0 0.0
  %389 = vmatpush1.msra.mxu0 %v48
  %390 = vmatprep.subr.mxu0 0.0
  %391 = vmatpush1.msra.mxu0 %v47
  %392 = vmatprep.subr.mxu0 0.0
  %393 = vmatpush1.msra.mxu0 %v46
  %394 = vmatprep.subr.mxu0 0.0
  %395 = vmatpush1.msra.mxu0 %v45
  %396 = vmatprep.subr.mxu0 0.0
  %397 = vmatpush1.msra.mxu0 %v44
  %398 = vmatprep.subr.mxu0 0.0
  %399 = vmatpush1.msra.mxu0 %v43
  %400 = vmatprep.subr.mxu0 0.0
  %401 = vmatpush1.msra.mxu0 %v42
  %402 = vmatprep.subr.mxu0 0.0
  %403 = vmatpush1.msra.mxu0 %v41
  %404 = vmatprep.subr.mxu0 0.0
  %405 = vmatpush1.msra.mxu0 %v40
  %406 = vmatprep.subr.mxu0 0.0
  %407 = vmatpush1.msra.mxu0 %v39
  %408 = vmatprep.subr.mxu0 0.0
  %409 = vmatpush1.msra.mxu0 %v38
  %410 = vmatprep.subr.mxu0 0.0
  %411 = vmatpush2.msra.mxu0 0.0
  %412 = vmatprep.subr.mxu0 0.0
  %413 = vmatpush2.msra.mxu0 0.0
  %414 = vmatprep.subr.mxu0 0.0
  %415 = vmatpush2.msra.mxu0 0.0
  %416 = vmatprep.subr.mxu0 0.0
  %417 = vmatpush2.msra.mxu0 0.0
  %418 = vmatprep.subr.mxu0 0.0
  %419 = vmatpush2.msra.mxu0 0.0
  %420 = vmatprep.subr.mxu0 0.0
  %421 = vmatpush2.msra.mxu0 0.0
  %422 = vmatprep.subr.mxu0 0.0
  %423 = vmatpush2.msra.mxu0 0.0
  %424 = vmatprep.subr.mxu0 0.0
  %425 = vmatpush2.msra.mxu0 0.0
  %426 = vmatprep.subr.mxu0 0.0
  %427 = vmatpush2.msra.mxu0 0.0
  %428 = vmatprep.subr.mxu0 0.0
  %429 = vmatpush2.msra.mxu0 0.0
  %430 = vmatprep.subr.mxu0 0.0
  %431 = vmatpush2.msra.mxu0 0.0
  %432 = vmatprep.subr.mxu0 0.0
  %433 = vmatpush2.msra.mxu0 %v142
  %434 = vmatprep.subr.mxu0 0.0
  %435 = vmatpush2.msra.mxu0 %v57
  %436 = vmatprep.subr.mxu0 0.0
  %437 = vmatpush2.msra.mxu0 %v56
  %438 = vmatprep.subr.mxu0 0.0
  %439 = vmatpush2.msra.mxu0 %v55
  %440 = vmatprep.subr.mxu0 0.0
  %441 = vmatpush2.msra.mxu0 %v54
  %442 = vmatprep.mubr.f32.mxu0 %v331
  %443 = vmatmul.mubr.f32.gmra.mxu0 %v298
  %v444 = vpop.f32.mrf.mxu0
  %v445 = vadd.f32 0.0, %v444
  %v446 = vpop.f32.mrf.mxu0
  %447 = vmatprep.mubr.f32.mxu0 %v334
  %448 = vmatmul.mubr.f32.gmra.mxu0 %v300
  %v449 = vpop.f32.mrf.mxu0
  %v450 = vadd.f32 0.0, %v449
  %v451 = vpop.f32.mrf.mxu0
  %452 = vmatprep.mubr.f32.mxu0 %v337
  %453 = vmatmul.mubr.f32.gmra.mxu0 %v302
  %v454 = vpop.f32.mrf.mxu0
  %v455 = vadd.f32 0.0, %v454
  %v456 = vpop.f32.mrf.mxu0
  %457 = vmatprep.mubr.f32.mxu0 %v340
  %458 = vmatmul.mubr.f32.gmra.mxu0 %v304
  %v459 = vpop.f32.mrf.mxu0
  %v460 = vadd.f32 0.0, %v459
  %v461 = vpop.f32.mrf.mxu0
  %462 = vmatprep.mubr.f32.mxu0 %v343
  %463 = vmatmul.mubr.f32.gmra.mxu0 %v306
  %v464 = vpop.f32.mrf.mxu0
  %v465 = vadd.f32 0.0, %v464
  %v466 = vpop.f32.mrf.mxu0
  %467 = vmatprep.mubr.f32.mxu0 %v346
  %468 = vmatmul.mubr.f32.gmra.mxu0 %v308
  %v469 = vpop.f32.mrf.mxu0
  %v470 = vadd.f32 0.0, %v469
  %v471 = vpop.f32.mrf.mxu0
  %472 = vmatprep.mubr.f32.mxu0 %v349
  %473 = vmatmul.mubr.f32.gmra.mxu0 %v310
  %v474 = vpop.f32.mrf.mxu0
  %v475 = vadd.f32 0.0, %v474
  %v476 = vpop.f32.mrf.mxu0
  %477 = vmatprep.mubr.f32.mxu0 %v352
  %478 = vmatmul.mubr.f32.gmra.mxu0 %v312
  %v479 = vpop.f32.mrf.mxu0
  %v480 = vadd.f32 0.0, %v479
  %v481 = vpop.f32.mrf.mxu0
  %482 = vmatprep.mubr.f32.mxu0 %v355
  %483 = vmatmul.mubr.f32.gmra.mxu0 %v314
  %v484 = vpop.f32.mrf.mxu0
  %v485 = vadd.f32 0.0, %v484
  %v486 = vpop.f32.mrf.mxu0
  %487 = vmatprep.mubr.f32.mxu0 %v358
  %488 = vmatmul.mubr.f32.gmra.mxu0 %v316
  %v489 = vpop.f32.mrf.mxu0
  %v490 = vadd.f32 0.0, %v489
  %v491 = vpop.f32.mrf.mxu0
  %492 = vmatprep.mubr.f32.mxu0 %v361
  %493 = vmatmul.mubr.f32.gmra.mxu0 %v318
  %v494 = vpop.f32.mrf.mxu0
  %v495 = vadd.f32 0.0, %v494
  %v496 = vpop.f32.mrf.mxu0
  %497 = vmatprep.mubr.f32.mxu0 %v364
  %498 = vmatmul.mubr.f32.gmra.mxu0 %v320
  %v499 = vpop.f32.mrf.mxu0
  %v500 = vadd.f32 0.0, %v499
  %v501 = vpop.f32.mrf.mxu0
  %502 = vmatprep.mubr.f32.mxu0 %v367
  %503 = vmatmul.mubr.f32.gmra.mxu0 %v322
  %v504 = vpop.f32.mrf.mxu0
  %v505 = vadd.f32 0.0, %v504
  %v506 = vpop.f32.mrf.mxu0
  %507 = vmatprep.mubr.f32.mxu0 %v370
  %508 = vmatmul.mubr.f32.gmra.mxu0 %v324
  %v509 = vpop.f32.mrf.mxu0
  %v510 = vadd.f32 0.0, %v509
  %v511 = vpop.f32.mrf.mxu0
  %512 = vmatprep.mubr.f32.mxu0 %v373
  %513 = vmatmul.mubr.f32.gmra.mxu0 %v326
  %v514 = vpop.f32.mrf.mxu0
  %v515 = vadd.f32 0.0, %v514
  %v516 = vpop.f32.mrf.mxu0
  %517 = vmatprep.mubr.f32.mxu0 %v376
  %518 = vmatmul.mubr.f32.gmra.mxu0 %v328
  %v519 = vpop.f32.mrf.mxu0
  %v520 = vadd.f32 0.0, %v519
  %v521 = vpop.f32.mrf.mxu0
  %522 = vdwg.mxu0
  %s523 = scalar_lea.vmem %s2, 64
  %v524 = vld [vmem:[%s523] sm:$0xff]
  %v525 = vld [vmem:[%s523 + $0x8] sm:$0xff]
  %v526 = vld [vmem:[%s523 + $0x10] sm:$0xff]
  %v527 = vld [vmem:[%s523 + $0x18] sm:$0xff]
  %v528 = vld [vmem:[%s523 + $0x20] sm:$0xff]
  %v529 = vld [vmem:[%s523 + $0x28] sm:$0xff]
  %v530 = vld [vmem:[%s523 + $0x30] sm:$0xff]
  %v531 = vld [vmem:[%s523 + $0x38] sm:$0xff]
  %vm532 = vcmask 523264
  %v534 = vsel %vm532, %v445, 0
  %v537 = vsel %vm532, %v450, 0
  %v540 = vsel %vm532, %v455, 0
  %v543 = vsel %vm532, %v460, 0
  %v546 = vsel %vm532, %v465, 0
  %v549 = vsel %vm532, %v470, 0
  %v552 = vsel %vm532, %v475, 0
  %v555 = vsel %vm532, %v480, 0
  %v558 = vsel %vm532, %v485, 0
  %v561 = vsel %vm532, %v490, 0
  %v564 = vsel %vm532, %v495, 0
  %v567 = vsel %vm532, %v500, 0
  %v570 = vsel %vm532, %v505, 0
  %v573 = vsel %vm532, %v510, 0
  %v576 = vsel %vm532, %v515, 0
  %v579 = vsel %vm532, %v520, 0
  %581 = vmatprep.subr.mxu0 0.0
  %582 = vmatpush1.msra.mxu0 0.0
  %583 = vmatprep.subr.mxu0 0.0
  %584 = vmatpush1.msra.mxu0 0.0
  %585 = vmatprep.subr.mxu0 0.0
  %586 = vmatpush1.msra.mxu0 0.0
  %587 = vmatprep.subr.mxu0 0.0
  %588 = vmatpush1.msra.mxu0 0.0
  %589 = vmatprep.subr.mxu0 0.0
  %590 = vmatpush1.msra.mxu0 0.0
  %591 = vmatprep.subr.mxu0 0.0
  %592 = vmatpush1.msra.mxu0 0.0
  %593 = vmatprep.subr.mxu0 0.0
  %594 = vmatpush1.msra.mxu0 0.0
  %595 = vmatprep.subr.mxu0 0.0
  %596 = vmatpush1.msra.mxu0 0.0
  %597 = vmatprep.subr.mxu0 0.0
  %598 = vmatpush1.msra.mxu0 %v531
  %599 = vmatprep.subr.mxu0 0.0
  %600 = vmatpush1.msra.mxu0 %v530
  %601 = vmatprep.subr.mxu0 0.0
  %602 = vmatpush1.msra.mxu0 %v529
  %603 = vmatprep.subr.mxu0 0.0
  %604 = vmatpush1.msra.mxu0 %v528
  %605 = vmatprep.subr.mxu0 0.0
  %606 = vmatpush1.msra.mxu0 %v527
  %607 = vmatprep.subr.mxu0 0.0
  %608 = vmatpush1.msra.mxu0 %v526
  %609 = vmatprep.subr.mxu0 0.0
  %610 = vmatpush1.msra.mxu0 %v525
  %611 = vmatprep.subr.mxu0 0.0
  %612 = vmatpush1.msra.mxu0 %v524
  %613 = vmatprep.subr.mxu0 0.0
  %614 = vmatpush2.msra.mxu0 0.0
  %615 = vmatprep.subr.mxu0 0.0
  %616 = vmatpush2.msra.mxu0 0.0
  %617 = vmatprep.subr.mxu0 0.0
  %618 = vmatpush2.msra.mxu0 0.0
  %619 = vmatprep.subr.mxu0 0.0
  %620 = vmatpush2.msra.mxu0 0.0
  %621 = vmatprep.subr.mxu0 0.0
  %622 = vmatpush2.msra.mxu0 0.0
  %623 = vmatprep.subr.mxu0 0.0
  %624 = vmatpush2.msra.mxu0 0.0
  %625 = vmatprep.subr.mxu0 0.0
  %626 = vmatpush2.msra.mxu0 0.0
  %627 = vmatprep.subr.mxu0 0.0
  %628 = vmatpush2.msra.mxu0 0.0
  %629 = vmatprep.subr.mxu0 0.0
  %630 = vmatpush2.msra.mxu0 0.0
  %631 = vmatprep.subr.mxu0 0.0
  %632 = vmatpush2.msra.mxu0 0.0
  %633 = vmatprep.subr.mxu0 0.0
  %634 = vmatpush2.msra.mxu0 0.0
  %635 = vmatprep.subr.mxu0 0.0
  %636 = vmatpush2.msra.mxu0 0.0
  %637 = vmatprep.subr.mxu0 0.0
  %638 = vmatpush2.msra.mxu0 0.0
  %639 = vmatprep.subr.mxu0 0.0
  %640 = vmatpush2.msra.mxu0 0.0
  %641 = vmatprep.subr.mxu0 0.0
  %642 = vmatpush2.msra.mxu0 0.0
  %643 = vmatprep.subr.mxu0 0.0
  %644 = vmatpush2.msra.mxu0 0.0
  %645 = vmatprep.mubr.f32.mxu0 0.0
  %646 = vmatmul.mubr.f32.gmra.mxu0 %v534
  %v647 = vpop.f32.mrf.mxu0
  %v648 = vadd.f32 0.0, %v647
  %v649 = vpop.f32.mrf.mxu0
  %650 = vmatprep.mubr.f32.mxu0 0.0
  %651 = vmatmul.mubr.f32.gmra.mxu0 %v537
  %v652 = vpop.f32.mrf.mxu0
  %v653 = vadd.f32 0.0, %v652
  %v654 = vpop.f32.mrf.mxu0
  %655 = vmatprep.mubr.f32.mxu0 0.0
  %656 = vmatmul.mubr.f32.gmra.mxu0 %v540
  %v657 = vpop.f32.mrf.mxu0
  %v658 = vadd.f32 0.0, %v657
  %v659 = vpop.f32.mrf.mxu0
  %660 = vmatprep.mubr.f32.mxu0 0.0
  %661 = vmatmul.mubr.f32.gmra.mxu0 %v543
  %v662 = vpop.f32.mrf.mxu0
  %v663 = vadd.f32 0.0, %v662
  %v664 = vpop.f32.mrf.mxu0
  %665 = vmatprep.mubr.f32.mxu0 0.0
  %666 = vmatmul.mubr.f32.gmra.mxu0 %v546
  %v667 = vpop.f32.mrf.mxu0
  %v668 = vadd.f32 0.0, %v667
  %v669 = vpop.f32.mrf.mxu0
  %670 = vmatprep.mubr.f32.mxu0 0.0
  %671 = vmatmul.mubr.f32.gmra.mxu0 %v549
  %v672 = vpop.f32.mrf.mxu0
  %v673 = vadd.f32 0.0, %v672
  %v674 = vpop.f32.mrf.mxu0
  %675 = vmatprep.mubr.f32.mxu0 0.0
  %676 = vmatmul.mubr.f32.gmra.mxu0 %v552
  %v677 = vpop.f32.mrf.mxu0
  %v678 = vadd.f32 0.0, %v677
  %v679 = vpop.f32.mrf.mxu0
  %680 = vmatprep.mubr.f32.mxu0 0.0
  %681 = vmatmul.mubr.f32.gmra.mxu0 %v555
  %v682 = vpop.f32.mrf.mxu0
  %v683 = vadd.f32 0.0, %v682
  %v684 = vpop.f32.mrf.mxu0
  %685 = vmatprep.mubr.f32.mxu0 0.0
  %686 = vmatmul.mubr.f32.gmra.mxu0 %v558
  %v687 = vpop.f32.mrf.mxu0
  %v688 = vadd.f32 0.0, %v687
  %v689 = vpop.f32.mrf.mxu0
  %690 = vmatprep.mubr.f32.mxu0 0.0
  %691 = vmatmul.mubr.f32.gmra.mxu0 %v561
  %v692 = vpop.f32.mrf.mxu0
  %v693 = vadd.f32 0.0, %v692
  %v694 = vpop.f32.mrf.mxu0
  %695 = vmatprep.mubr.f32.mxu0 0.0
  %696 = vmatmul.mubr.f32.gmra.mxu0 %v564
  %v697 = vpop.f32.mrf.mxu0
  %v698 = vadd.f32 0.0, %v697
  %v699 = vpop.f32.mrf.mxu0
  %700 = vmatprep.mubr.f32.mxu0 0.0
  %701 = vmatmul.mubr.f32.gmra.mxu0 %v567
  %v702 = vpop.f32.mrf.mxu0
  %v703 = vadd.f32 0.0, %v702
  %v704 = vpop.f32.mrf.mxu0
  %705 = vmatprep.mubr.f32.mxu0 0.0
  %706 = vmatmul.mubr.f32.gmra.mxu0 %v570
  %v707 = vpop.f32.mrf.mxu0
  %v708 = vadd.f32 0.0, %v707
  %v709 = vpop.f32.mrf.mxu0
  %710 = vmatprep.mubr.f32.mxu0 0.0
  %711 = vmatmul.mubr.f32.gmra.mxu0 %v573
  %v712 = vpop.f32.mrf.mxu0
  %v713 = vadd.f32 0.0, %v712
  %v714 = vpop.f32.mrf.mxu0
  %715 = vmatprep.mubr.f32.mxu0 0.0
  %716 = vmatmul.mubr.f32.gmra.mxu0 %v576
  %v717 = vpop.f32.mrf.mxu0
  %v718 = vadd.f32 0.0, %v717
  %v719 = vpop.f32.mrf.mxu0
  %720 = vmatprep.mubr.f32.mxu0 0.0
  %721 = vmatmul.mubr.f32.gmra.mxu0 %v579
  %v722 = vpop.f32.mrf.mxu0
  %v723 = vadd.f32 0.0, %v722
  %v724 = vpop.f32.mrf.mxu0
  %725 = vdwg.mxu0
  %v727 = vsel %vm532, %v211, 0
  %v730 = vsel %vm532, %v216, 0
  %v733 = vsel %vm532, %v221, 0
  %v736 = vsel %vm532, %v226, 0
  %v739 = vsel %vm532, %v231, 0
  %v742 = vsel %vm532, %v236, 0
  %v745 = vsel %vm532, %v241, 0
  %v748 = vsel %vm532, %v246, 0
  %v751 = vsel %vm532, %v251, 0
  %v754 = vsel %vm532, %v256, 0
  %v757 = vsel %vm532, %v261, 0
  %v760 = vsel %vm532, %v266, 0
  %v763 = vsel %vm532, %v271, 0
  %v766 = vsel %vm532, %v276, 0
  %v769 = vsel %vm532, %v281, 0
  %v772 = vsel %vm532, %v286, 0
  %774 = vmatprep.subr.mxu0 0.0
  %775 = vmatpush1.msra.mxu0 0.0
  %776 = vmatprep.subr.mxu0 0.0
  %777 = vmatpush1.msra.mxu0 0.0
  %778 = vmatprep.subr.mxu0 0.0
  %779 = vmatpush1.msra.mxu0 0.0
  %780 = vmatprep.subr.mxu0 0.0
  %781 = vmatpush1.msra.mxu0 0.0
  %782 = vmatprep.subr.mxu0 0.0
  %783 = vmatpush1.msra.mxu0 0.0
  %784 = vmatprep.subr.mxu0 0.0
  %785 = vmatpush1.msra.mxu0 0.0
  %786 = vmatprep.subr.mxu0 0.0
  %787 = vmatpush1.msra.mxu0 0.0
  %788 = vmatprep.subr.mxu0 0.0
  %789 = vmatpush1.msra.mxu0 0.0
  %790 = vmatprep.subr.mxu0 0.0
  %791 = vmatpush1.msra.mxu0 %v296
  %792 = vmatprep.subr.mxu0 0.0
  %793 = vmatpush1.msra.mxu0 %v295
  %794 = vmatprep.subr.mxu0 0.0
  %795 = vmatpush1.msra.mxu0 %v294
  %796 = vmatprep.subr.mxu0 0.0
  %797 = vmatpush1.msra.mxu0 %v293
  %798 = vmatprep.subr.mxu0 0.0
  %799 = vmatpush1.msra.mxu0 %v292
  %800 = vmatprep.subr.mxu0 0.0
  %801 = vmatpush1.msra.mxu0 %v291
  %802 = vmatprep.subr.mxu0 0.0
  %803 = vmatpush1.msra.mxu0 %v290
  %804 = vmatprep.subr.mxu0 0.0
  %805 = vmatpush1.msra.mxu0 %v289
  %806 = vmatprep.subr.mxu0 0.0
  %807 = vmatpush2.msra.mxu0 0.0
  %808 = vmatprep.subr.mxu0 0.0
  %809 = vmatpush2.msra.mxu0 0.0
  %810 = vmatprep.subr.mxu0 0.0
  %811 = vmatpush2.msra.mxu0 0.0
  %812 = vmatprep.subr.mxu0 0.0
  %813 = vmatpush2.msra.mxu0 0.0
  %814 = vmatprep.subr.mxu0 0.0
  %815 = vmatpush2.msra.mxu0 0.0
  %816 = vmatprep.subr.mxu0 0.0
  %817 = vmatpush2.msra.mxu0 0.0
  %818 = vmatprep.subr.mxu0 0.0
  %819 = vmatpush2.msra.mxu0 0.0
  %820 = vmatprep.subr.mxu0 0.0
  %821 = vmatpush2.msra.mxu0 0.0
  %822 = vmatprep.subr.mxu0 0.0
  %823 = vmatpush2.msra.mxu0 0.0
  %824 = vmatprep.subr.mxu0 0.0
  %825 = vmatpush2.msra.mxu0 0.0
  %826 = vmatprep.subr.mxu0 0.0
  %827 = vmatpush2.msra.mxu0 0.0
  %828 = vmatprep.subr.mxu0 0.0
  %829 = vmatpush2.msra.mxu0 0.0
  %830 = vmatprep.subr.mxu0 0.0
  %831 = vmatpush2.msra.mxu0 0.0
  %832 = vmatprep.subr.mxu0 0.0
  %833 = vmatpush2.msra.mxu0 0.0
  %834 = vmatprep.subr.mxu0 0.0
  %835 = vmatpush2.msra.mxu0 0.0
  %836 = vmatprep.subr.mxu0 0.0
  %837 = vmatpush2.msra.mxu0 0.0
  %838 = vmatprep.mubr.f32.mxu0 0.0
  %839 = vmatmul.mubr.f32.gmra.mxu0 %v727
  %v840 = vpop.f32.mrf.mxu0
  %v841 = vadd.f32 %v648, %v840
  %v842 = vpop.f32.mrf.mxu0
  %843 = vmatprep.mubr.f32.mxu0 0.0
  %844 = vmatmul.mubr.f32.gmra.mxu0 %v730
  %v845 = vpop.f32.mrf.mxu0
  %v846 = vadd.f32 %v653, %v845
  %v847 = vpop.f32.mrf.mxu0
  %848 = vmatprep.mubr.f32.mxu0 0.0
  %849 = vmatmul.mubr.f32.gmra.mxu0 %v733
  %v850 = vpop.f32.mrf.mxu0
  %v851 = vadd.f32 %v658, %v850
  %v852 = vpop.f32.mrf.mxu0
  %853 = vmatprep.mubr.f32.mxu0 0.0
  %854 = vmatmul.mubr.f32.gmra.mxu0 %v736
  %v855 = vpop.f32.mrf.mxu0
  %v856 = vadd.f32 %v663, %v855
  %v857 = vpop.f32.mrf.mxu0
  %858 = vmatprep.mubr.f32.mxu0 0.0
  %859 = vmatmul.mubr.f32.gmra.mxu0 %v739
  %v860 = vpop.f32.mrf.mxu0
  %v861 = vadd.f32 %v668, %v860
  %v862 = vpop.f32.mrf.mxu0
  %863 = vmatprep.mubr.f32.mxu0 0.0
  %864 = vmatmul.mubr.f32.gmra.mxu0 %v742
  %v865 = vpop.f32.mrf.mxu0
  %v866 = vadd.f32 %v673, %v865
  %v867 = vpop.f32.mrf.mxu0
  %868 = vmatprep.mubr.f32.mxu0 0.0
  %869 = vmatmul.mubr.f32.gmra.mxu0 %v745
  %v870 = vpop.f32.mrf.mxu0
  %v871 = vadd.f32 %v678, %v870
  %v872 = vpop.f32.mrf.mxu0
  %873 = vmatprep.mubr.f32.mxu0 0.0
  %874 = vmatmul.mubr.f32.gmra.mxu0 %v748
  %v875 = vpop.f32.mrf.mxu0
  %v876 = vadd.f32 %v683, %v875
  %v877 = vpop.f32.mrf.mxu0
  %878 = vmatprep.mubr.f32.mxu0 0.0
  %879 = vmatmul.mubr.f32.gmra.mxu0 %v751
  %v880 = vpop.f32.mrf.mxu0
  %v881 = vadd.f32 %v688, %v880
  %v882 = vpop.f32.mrf.mxu0
  %883 = vmatprep.mubr.f32.mxu0 0.0
  %884 = vmatmul.mubr.f32.gmra.mxu0 %v754
  %v885 = vpop.f32.mrf.mxu0
  %v886 = vadd.f32 %v693, %v885
  %v887 = vpop.f32.mrf.mxu0
  %888 = vmatprep.mubr.f32.mxu0 0.0
  %889 = vmatmul.mubr.f32.gmra.mxu0 %v757
  %v890 = vpop.f32.mrf.mxu0
  %v891 = vadd.f32 %v698, %v890
  %v892 = vpop.f32.mrf.mxu0
  %893 = vmatprep.mubr.f32.mxu0 0.0
  %894 = vmatmul.mubr.f32.gmra.mxu0 %v760
  %v895 = vpop.f32.mrf.mxu0
  %v896 = vadd.f32 %v703, %v895
  %v897 = vpop.f32.mrf.mxu0
  %898 = vmatprep.mubr.f32.mxu0 0.0
  %899 = vmatmul.mubr.f32.gmra.mxu0 %v763
  %v900 = vpop.f32.mrf.mxu0
  %v901 = vadd.f32 %v708, %v900
  %v902 = vpop.f32.mrf.mxu0
  %903 = vmatprep.mubr.f32.mxu0 0.0
  %904 = vmatmul.mubr.f32.gmra.mxu0 %v766
  %v905 = vpop.f32.mrf.mxu0
  %v906 = vadd.f32 %v713, %v905
  %v907 = vpop.f32.mrf.mxu0
  %908 = vmatprep.mubr.f32.mxu0 0.0
  %909 = vmatmul.mubr.f32.gmra.mxu0 %v769
  %v910 = vpop.f32.mrf.mxu0
  %v911 = vadd.f32 %v718, %v910
  %v912 = vpop.f32.mrf.mxu0
  %913 = vmatprep.mubr.f32.mxu0 0.0
  %914 = vmatmul.mubr.f32.gmra.mxu0 %v772
  %v915 = vpop.f32.mrf.mxu0
  %v916 = vadd.f32 %v723, %v915
  %v917 = vpop.f32.mrf.mxu0
  %918 = vdwg.mxu0
  %s919 = scalar_lea.vmem %s1, 512
  %v920 = vld [vmem:[%s919] sm:$0xff]
  %v921 = vld [vmem:[%s919 + $0x8] sm:$0xff]
  %v922 = vld [vmem:[%s919 + $0x10] sm:$0xff]
  %v923 = vld [vmem:[%s919 + $0x18] sm:$0xff]
  %v924 = vld [vmem:[%s919 + $0x20] sm:$0xff]
  %v925 = vld [vmem:[%s919 + $0x28] sm:$0xff]
  %v926 = vld [vmem:[%s919 + $0x30] sm:$0xff]
  %v927 = vld [vmem:[%s919 + $0x38] sm:$0xff]
  %v928 = vld [vmem:[%s919 + $0x40] sm:$0xff]
  %v929 = vld [vmem:[%s919 + $0x48] sm:$0xff]
  %v930 = vld [vmem:[%s919 + $0x50] sm:$0xff]
  %v931 = vld [vmem:[%s919 + $0x58] sm:$0xff]
  %v932 = vld [vmem:[%s919 + $0x60] sm:$0xff]
  %v933 = vld [vmem:[%s919 + $0x68] sm:$0xff]
  %v934 = vld [vmem:[%s919 + $0x70] sm:$0xff]
  %v935 = vld [vmem:[%s919 + $0x78] sm:$0xff]
  %v936 = vld [vmem:[%s919 + $0x80] sm:$0xff]
  %v937 = vld [vmem:[%s919 + $0x88] sm:$0xff]
  %v938 = vld [vmem:[%s919 + $0x90] sm:$0xff]
  %v939 = vld [vmem:[%s919 + $0x98] sm:$0xff]
  %v940 = vld [vmem:[%s919 + $0xa0] sm:$0xff]
  %v941 = vld [vmem:[%s919 + $0xa8] sm:$0xff]
  %v942 = vld [vmem:[%s919 + $0xb0] sm:$0xff]
  %v943 = vld [vmem:[%s919 + $0xb8] sm:$0xff]
  %v944 = vld [vmem:[%s919 + $0xc0] sm:$0xff]
  %v945 = vld [vmem:[%s919 + $0xc8] sm:$0xff]
  %v946 = vld [vmem:[%s919 + $0xd0] sm:$0xff]
  %v947 = vld [vmem:[%s919 + $0xd8] sm:$0xff]
  %v948 = vld [vmem:[%s919 + $0xe0] sm:$0xff]
  %v949 = vld [vmem:[%s919 + $0xe8] sm:$0xff]
  %v950 = vld [vmem:[%s919 + $0xf0] sm:$0xff]
  %v951 = vld [vmem:[%s919 + $0xf8] sm:$0xff]
  %v953 = vsel %vm91, %v921, 0
  %v956 = vsel %vm91, %v923, 0
  %v959 = vsel %vm91, %v925, 0
  %v962 = vsel %vm91, %v927, 0
  %v965 = vsel %vm91, %v929, 0
  %v968 = vsel %vm91, %v931, 0
  %v971 = vsel %vm91, %v933, 0
  %v974 = vsel %vm91, %v935, 0
  %v977 = vsel %vm91, %v937, 0
  %v980 = vsel %vm91, %v939, 0
  %v983 = vsel %vm91, %v941, 0
  %v986 = vsel %vm91, %v943, 0
  %v989 = vsel %vm91, %v945, 0
  %v992 = vsel %vm91, %v947, 0
  %v995 = vsel %vm91, %v949, 0
  %v998 = vsel %vm91, %v951, 0
  %1000 = vmatprep.subr.mxu0 0.0
  %1001 = vmatpush1.msra.mxu0 %v53
  %1002 = vmatprep.subr.mxu0 0.0
  %1003 = vmatpush1.msra.mxu0 %v52
  %1004 = vmatprep.subr.mxu0 0.0
  %1005 = vmatpush1.msra.mxu0 %v51
  %1006 = vmatprep.subr.mxu0 0.0
  %1007 = vmatpush1.msra.mxu0 %v50
  %1008 = vmatprep.subr.mxu0 0.0
  %1009 = vmatpush1.msra.mxu0 %v49
  %1010 = vmatprep.subr.mxu0 0.0
  %1011 = vmatpush1.msra.mxu0 %v48
  %1012 = vmatprep.subr.mxu0 0.0
  %1013 = vmatpush1.msra.mxu0 %v47
  %1014 = vmatprep.subr.mxu0 0.0
  %1015 = vmatpush1.msra.mxu0 %v46
  %1016 = vmatprep.subr.mxu0 0.0
  %1017 = vmatpush1.msra.mxu0 %v45
  %1018 = vmatprep.subr.mxu0 0.0
  %1019 = vmatpush1.msra.mxu0 %v44
  %1020 = vmatprep.subr.mxu0 0.0
  %1021 = vmatpush1.msra.mxu0 %v43
  %1022 = vmatprep.subr.mxu0 0.0
  %1023 = vmatpush1.msra.mxu0 %v42
  %1024 = vmatprep.subr.mxu0 0.0
  %1025 = vmatpush1.msra.mxu0 %v41
  %1026 = vmatprep.subr.mxu0 0.0
  %1027 = vmatpush1.msra.mxu0 %v40
  %1028 = vmatprep.subr.mxu0 0.0
  %1029 = vmatpush1.msra.mxu0 %v39
  %1030 = vmatprep.subr.mxu0 0.0
  %1031 = vmatpush1.msra.mxu0 %v38
  %1032 = vmatprep.subr.mxu0 0.0
  %1033 = vmatpush2.msra.mxu0 0.0
  %1034 = vmatprep.subr.mxu0 0.0
  %1035 = vmatpush2.msra.mxu0 0.0
  %1036 = vmatprep.subr.mxu0 0.0
  %1037 = vmatpush2.msra.mxu0 0.0
  %1038 = vmatprep.subr.mxu0 0.0
  %1039 = vmatpush2.msra.mxu0 0.0
  %1040 = vmatprep.subr.mxu0 0.0
  %1041 = vmatpush2.msra.mxu0 0.0
  %1042 = vmatprep.subr.mxu0 0.0
  %1043 = vmatpush2.msra.mxu0 0.0
  %1044 = vmatprep.subr.mxu0 0.0
  %1045 = vmatpush2.msra.mxu0 0.0
  %1046 = vmatprep.subr.mxu0 0.0
  %1047 = vmatpush2.msra.mxu0 0.0
  %1048 = vmatprep.subr.mxu0 0.0
  %1049 = vmatpush2.msra.mxu0 0.0
  %1050 = vmatprep.subr.mxu0 0.0
  %1051 = vmatpush2.msra.mxu0 0.0
  %1052 = vmatprep.subr.mxu0 0.0
  %1053 = vmatpush2.msra.mxu0 0.0
  %1054 = vmatprep.subr.mxu0 0.0
  %1055 = vmatpush2.msra.mxu0 %v142
  %1056 = vmatprep.subr.mxu0 0.0
  %1057 = vmatpush2.msra.mxu0 %v57
  %1058 = vmatprep.subr.mxu0 0.0
  %1059 = vmatpush2.msra.mxu0 %v56
  %1060 = vmatprep.subr.mxu0 0.0
  %1061 = vmatpush2.msra.mxu0 %v55
  %1062 = vmatprep.subr.mxu0 0.0
  %1063 = vmatpush2.msra.mxu0 %v54
  %1064 = vmatprep.mubr.f32.mxu0 %v953
  %1065 = vmatmul.mubr.f32.gmra.mxu0 %v920
  %v1066 = vpop.f32.mrf.mxu0
  %v1067 = vadd.f32 0.0, %v1066
  %v1068 = vpop.f32.mrf.mxu0
  %1069 = vmatprep.mubr.f32.mxu0 %v956
  %1070 = vmatmul.mubr.f32.gmra.mxu0 %v922
  %v1071 = vpop.f32.mrf.mxu0
  %v1072 = vadd.f32 0.0, %v1071
  %v1073 = vpop.f32.mrf.mxu0
  %1074 = vmatprep.mubr.f32.mxu0 %v959
  %1075 = vmatmul.mubr.f32.gmra.mxu0 %v924
  %v1076 = vpop.f32.mrf.mxu0
  %v1077 = vadd.f32 0.0, %v1076
  %v1078 = vpop.f32.mrf.mxu0
  %1079 = vmatprep.mubr.f32.mxu0 %v962
  %1080 = vmatmul.mubr.f32.gmra.mxu0 %v926
  %v1081 = vpop.f32.mrf.mxu0
  %v1082 = vadd.f32 0.0, %v1081
  %v1083 = vpop.f32.mrf.mxu0
  %1084 = vmatprep.mubr.f32.mxu0 %v965
  %1085 = vmatmul.mubr.f32.gmra.mxu0 %v928
  %v1086 = vpop.f32.mrf.mxu0
  %v1087 = vadd.f32 0.0, %v1086
  %v1088 = vpop.f32.mrf.mxu0
  %1089 = vmatprep.mubr.f32.mxu0 %v968
  %1090 = vmatmul.mubr.f32.gmra.mxu0 %v930
  %v1091 = vpop.f32.mrf.mxu0
  %v1092 = vadd.f32 0.0, %v1091
  %v1093 = vpop.f32.mrf.mxu0
  %1094 = vmatprep.mubr.f32.mxu0 %v971
  %1095 = vmatmul.mubr.f32.gmra.mxu0 %v932
  %v1096 = vpop.f32.mrf.mxu0
  %v1097 = vadd.f32 0.0, %v1096
  %v1098 = vpop.f32.mrf.mxu0
  %1099 = vmatprep.mubr.f32.mxu0 %v974
  %1100 = vmatmul.mubr.f32.gmra.mxu0 %v934
  %v1101 = vpop.f32.mrf.mxu0
  %v1102 = vadd.f32 0.0, %v1101
  %v1103 = vpop.f32.mrf.mxu0
  %1104 = vmatprep.mubr.f32.mxu0 %v977
  %1105 = vmatmul.mubr.f32.gmra.mxu0 %v936
  %v1106 = vpop.f32.mrf.mxu0
  %v1107 = vadd.f32 0.0, %v1106
  %v1108 = vpop.f32.mrf.mxu0
  %1109 = vmatprep.mubr.f32.mxu0 %v980
  %1110 = vmatmul.mubr.f32.gmra.mxu0 %v938
  %v1111 = vpop.f32.mrf.mxu0
  %v1112 = vadd.f32 0.0, %v1111
  %v1113 = vpop.f32.mrf.mxu0
  %1114 = vmatprep.mubr.f32.mxu0 %v983
  %1115 = vmatmul.mubr.f32.gmra.mxu0 %v940
  %v1116 = vpop.f32.mrf.mxu0
  %v1117 = vadd.f32 0.0, %v1116
  %v1118 = vpop.f32.mrf.mxu0
  %1119 = vmatprep.mubr.f32.mxu0 %v986
  %1120 = vmatmul.mubr.f32.gmra.mxu0 %v942
  %v1121 = vpop.f32.mrf.mxu0
  %v1122 = vadd.f32 0.0, %v1121
  %v1123 = vpop.f32.mrf.mxu0
  %1124 = vmatprep.mubr.f32.mxu0 %v989
  %1125 = vmatmul.mubr.f32.gmra.mxu0 %v944
  %v1126 = vpop.f32.mrf.mxu0
  %v1127 = vadd.f32 0.0, %v1126
  %v1128 = vpop.f32.mrf.mxu0
  %1129 = vmatprep.mubr.f32.mxu0 %v992
  %1130 = vmatmul.mubr.f32.gmra.mxu0 %v946
  %v1131 = vpop.f32.mrf.mxu0
  %v1132 = vadd.f32 0.0, %v1131
  %v1133 = vpop.f32.mrf.mxu0
  %1134 = vmatprep.mubr.f32.mxu0 %v995
  %1135 = vmatmul.mubr.f32.gmra.mxu0 %v948
  %v1136 = vpop.f32.mrf.mxu0
  %v1137 = vadd.f32 0.0, %v1136
  %v1138 = vpop.f32.mrf.mxu0
  %1139 = vmatprep.mubr.f32.mxu0 %v998
  %1140 = vmatmul.mubr.f32.gmra.mxu0 %v950
  %v1141 = vpop.f32.mrf.mxu0
  %v1142 = vadd.f32 0.0, %v1141
  %v1143 = vpop.f32.mrf.mxu0
  %1144 = vdwg.mxu0
  %s1145 = scalar_lea.vmem %s2, 128
  %v1146 = vld [vmem:[%s1145] sm:$0xff]
  %v1147 = vld [vmem:[%s1145 + $0x8] sm:$0xff]
  %v1148 = vld [vmem:[%s1145 + $0x10] sm:$0xff]
  %v1149 = vld [vmem:[%s1145 + $0x18] sm:$0xff]
  %v1150 = vld [vmem:[%s1145 + $0x20] sm:$0xff]
  %v1151 = vld [vmem:[%s1145 + $0x28] sm:$0xff]
  %v1152 = vld [vmem:[%s1145 + $0x30] sm:$0xff]
  %v1153 = vld [vmem:[%s1145 + $0x38] sm:$0xff]
  %v1155 = vsel %vm532, %v1067, 0
  %v1158 = vsel %vm532, %v1072, 0
  %v1161 = vsel %vm532, %v1077, 0
  %v1164 = vsel %vm532, %v1082, 0
  %v1167 = vsel %vm532, %v1087, 0
  %v1170 = vsel %vm532, %v1092, 0
  %v1173 = vsel %vm532, %v1097, 0
  %v1176 = vsel %vm532, %v1102, 0
  %v1179 = vsel %vm532, %v1107, 0
  %v1182 = vsel %vm532, %v1112, 0
  %v1185 = vsel %vm532, %v1117, 0
  %v1188 = vsel %vm532, %v1122, 0
  %v1191 = vsel %vm532, %v1127, 0
  %v1194 = vsel %vm532, %v1132, 0
  %v1197 = vsel %vm532, %v1137, 0
  %v1200 = vsel %vm532, %v1142, 0
  %1202 = vmatprep.subr.mxu0 0.0
  %1203 = vmatpush1.msra.mxu0 0.0
  %1204 = vmatprep.subr.mxu0 0.0
  %1205 = vmatpush1.msra.mxu0 0.0
  %1206 = vmatprep.subr.mxu0 0.0
  %1207 = vmatpush1.msra.mxu0 0.0
  %1208 = vmatprep.subr.mxu0 0.0
  %1209 = vmatpush1.msra.mxu0 0.0
  %1210 = vmatprep.subr.mxu0 0.0
  %1211 = vmatpush1.msra.mxu0 0.0
  %1212 = vmatprep.subr.mxu0 0.0
  %1213 = vmatpush1.msra.mxu0 0.0
  %1214 = vmatprep.subr.mxu0 0.0
  %1215 = vmatpush1.msra.mxu0 0.0
  %1216 = vmatprep.subr.mxu0 0.0
  %1217 = vmatpush1.msra.mxu0 0.0
  %1218 = vmatprep.subr.mxu0 0.0
  %1219 = vmatpush1.msra.mxu0 %v1153
  %1220 = vmatprep.subr.mxu0 0.0
  %1221 = vmatpush1.msra.mxu0 %v1152
  %1222 = vmatprep.subr.mxu0 0.0
  %1223 = vmatpush1.msra.mxu0 %v1151
  %1224 = vmatprep.subr.mxu0 0.0
  %1225 = vmatpush1.msra.mxu0 %v1150
  %1226 = vmatprep.subr.mxu0 0.0
  %1227 = vmatpush1.msra.mxu0 %v1149
  %1228 = vmatprep.subr.mxu0 0.0
  %1229 = vmatpush1.msra.mxu0 %v1148
  %1230 = vmatprep.subr.mxu0 0.0
  %1231 = vmatpush1.msra.mxu0 %v1147
  %1232 = vmatprep.subr.mxu0 0.0
  %1233 = vmatpush1.msra.mxu0 %v1146
  %1234 = vmatprep.subr.mxu0 0.0
  %1235 = vmatpush2.msra.mxu0 0.0
  %1236 = vmatprep.subr.mxu0 0.0
  %1237 = vmatpush2.msra.mxu0 0.0
  %1238 = vmatprep.subr.mxu0 0.0
  %1239 = vmatpush2.msra.mxu0 0.0
  %1240 = vmatprep.subr.mxu0 0.0
  %1241 = vmatpush2.msra.mxu0 0.0
  %1242 = vmatprep.subr.mxu0 0.0
  %1243 = vmatpush2.msra.mxu0 0.0
  %1244 = vmatprep.subr.mxu0 0.0
  %1245 = vmatpush2.msra.mxu0 0.0
  %1246 = vmatprep.subr.mxu0 0.0
  %1247 = vmatpush2.msra.mxu0 0.0
  %1248 = vmatprep.subr.mxu0 0.0
  %1249 = vmatpush2.msra.mxu0 0.0
  %1250 = vmatprep.subr.mxu0 0.0
  %1251 = vmatpush2.msra.mxu0 0.0
  %1252 = vmatprep.subr.mxu0 0.0
  %1253 = vmatpush2.msra.mxu0 0.0
  %1254 = vmatprep.subr.mxu0 0.0
  %1255 = vmatpush2.msra.mxu0 0.0
  %1256 = vmatprep.subr.mxu0 0.0
  %1257 = vmatpush2.msra.mxu0 0.0
  %1258 = vmatprep.subr.mxu0 0.0
  %1259 = vmatpush2.msra.mxu0 0.0
  %1260 = vmatprep.subr.mxu0 0.0
  %1261 = vmatpush2.msra.mxu0 0.0
  %1262 = vmatprep.subr.mxu0 0.0
  %1263 = vmatpush2.msra.mxu0 0.0
  %1264 = vmatprep.subr.mxu0 0.0
  %1265 = vmatpush2.msra.mxu0 0.0
  %1266 = vmatprep.mubr.f32.mxu0 0.0
  %1267 = vmatmul.mubr.f32.gmra.mxu0 %v1155
  %v1268 = vpop.f32.mrf.mxu0
  %v1269 = vadd.f32 0.0, %v1268
  %v1270 = vpop.f32.mrf.mxu0
  %1271 = vmatprep.mubr.f32.mxu0 0.0
  %1272 = vmatmul.mubr.f32.gmra.mxu0 %v1158
  %v1273 = vpop.f32.mrf.mxu0
  %v1274 = vadd.f32 0.0, %v1273
  %v1275 = vpop.f32.mrf.mxu0
  %1276 = vmatprep.mubr.f32.mxu0 0.0
  %1277 = vmatmul.mubr.f32.gmra.mxu0 %v1161
  %v1278 = vpop.f32.mrf.mxu0
  %v1279 = vadd.f32 0.0, %v1278
  %v1280 = vpop.f32.mrf.mxu0
  %1281 = vmatprep.mubr.f32.mxu0 0.0
  %1282 = vmatmul.mubr.f32.gmra.mxu0 %v1164
  %v1283 = vpop.f32.mrf.mxu0
  %v1284 = vadd.f32 0.0, %v1283
  %v1285 = vpop.f32.mrf.mxu0
  %1286 = vmatprep.mubr.f32.mxu0 0.0
  %1287 = vmatmul.mubr.f32.gmra.mxu0 %v1167
  %v1288 = vpop.f32.mrf.mxu0
  %v1289 = vadd.f32 0.0, %v1288
  %v1290 = vpop.f32.mrf.mxu0
  %1291 = vmatprep.mubr.f32.mxu0 0.0
  %1292 = vmatmul.mubr.f32.gmra.mxu0 %v1170
  %v1293 = vpop.f32.mrf.mxu0
  %v1294 = vadd.f32 0.0, %v1293
  %v1295 = vpop.f32.mrf.mxu0
  %1296 = vmatprep.mubr.f32.mxu0 0.0
  %1297 = vmatmul.mubr.f32.gmra.mxu0 %v1173
  %v1298 = vpop.f32.mrf.mxu0
  %v1299 = vadd.f32 0.0, %v1298
  %v1300 = vpop.f32.mrf.mxu0
  %1301 = vmatprep.mubr.f32.mxu0 0.0
  %1302 = vmatmul.mubr.f32.gmra.mxu0 %v1176
  %v1303 = vpop.f32.mrf.mxu0
  %v1304 = vadd.f32 0.0, %v1303
  %v1305 = vpop.f32.mrf.mxu0
  %1306 = vmatprep.mubr.f32.mxu0 0.0
  %1307 = vmatmul.mubr.f32.gmra.mxu0 %v1179
  %v1308 = vpop.f32.mrf.mxu0
  %v1309 = vadd.f32 0.0, %v1308
  %v1310 = vpop.f32.mrf.mxu0
  %1311 = vmatprep.mubr.f32.mxu0 0.0
  %1312 = vmatmul.mubr.f32.gmra.mxu0 %v1182
  %v1313 = vpop.f32.mrf.mxu0
  %v1314 = vadd.f32 0.0, %v1313
  %v1315 = vpop.f32.mrf.mxu0
  %1316 = vmatprep.mubr.f32.mxu0 0.0
  %1317 = vmatmul.mubr.f32.gmra.mxu0 %v1185
  %v1318 = vpop.f32.mrf.mxu0
  %v1319 = vadd.f32 0.0, %v1318
  %v1320 = vpop.f32.mrf.mxu0
  %1321 = vmatprep.mubr.f32.mxu0 0.0
  %1322 = vmatmul.mubr.f32.gmra.mxu0 %v1188
  %v1323 = vpop.f32.mrf.mxu0
  %v1324 = vadd.f32 0.0, %v1323
  %v1325 = vpop.f32.mrf.mxu0
  %1326 = vmatprep.mubr.f32.mxu0 0.0
  %1327 = vmatmul.mubr.f32.gmra.mxu0 %v1191
  %v1328 = vpop.f32.mrf.mxu0
  %v1329 = vadd.f32 0.0, %v1328
  %v1330 = vpop.f32.mrf.mxu0
  %1331 = vmatprep.mubr.f32.mxu0 0.0
  %1332 = vmatmul.mubr.f32.gmra.mxu0 %v1194
  %v1333 = vpop.f32.mrf.mxu0
  %v1334 = vadd.f32 0.0, %v1333
  %v1335 = vpop.f32.mrf.mxu0
  %1336 = vmatprep.mubr.f32.mxu0 0.0
  %1337 = vmatmul.mubr.f32.gmra.mxu0 %v1197
  %v1338 = vpop.f32.mrf.mxu0
  %v1339 = vadd.f32 0.0, %v1338
  %v1340 = vpop.f32.mrf.mxu0
  %1341 = vmatprep.mubr.f32.mxu0 0.0
  %1342 = vmatmul.mubr.f32.gmra.mxu0 %v1200
  %v1343 = vpop.f32.mrf.mxu0
  %v1344 = vadd.f32 0.0, %v1343
  %v1345 = vpop.f32.mrf.mxu0
  %1346 = vdwg.mxu0
  %v1347 = vadd.f32 %v841, %v1269
  %v1348 = vadd.f32 %v846, %v1274
  %v1349 = vadd.f32 %v851, %v1279
  %v1350 = vadd.f32 %v856, %v1284
  %v1351 = vadd.f32 %v861, %v1289
  %v1352 = vadd.f32 %v866, %v1294
  %v1353 = vadd.f32 %v871, %v1299
  %v1354 = vadd.f32 %v876, %v1304
  %v1355 = vadd.f32 %v881, %v1309
  %v1356 = vadd.f32 %v886, %v1314
  %v1357 = vadd.f32 %v891, %v1319
  %v1358 = vadd.f32 %v896, %v1324
  %v1359 = vadd.f32 %v901, %v1329
  %v1360 = vadd.f32 %v906, %v1334
  %v1361 = vadd.f32 %v911, %v1339
  %v1362 = vadd.f32 %v916, %v1344
  %s1363 = scalar_lea.vmem %s1, 768
  %v1364 = vld [vmem:[%s1363] sm:$0xff]
  %v1365 = vld [vmem:[%s1363 + $0x8] sm:$0xff]
  %v1366 = vld [vmem:[%s1363 + $0x10] sm:$0xff]
  %v1367 = vld [vmem:[%s1363 + $0x18] sm:$0xff]
  %v1368 = vld [vmem:[%s1363 + $0x20] sm:$0xff]
  %v1369 = vld [vmem:[%s1363 + $0x28] sm:$0xff]
  %v1370 = vld [vmem:[%s1363 + $0x30] sm:$0xff]
  %v1371 = vld [vmem:[%s1363 + $0x38] sm:$0xff]
  %v1372 = vld [vmem:[%s1363 + $0x40] sm:$0xff]
  %v1373 = vld [vmem:[%s1363 + $0x48] sm:$0xff]
  %v1374 = vld [vmem:[%s1363 + $0x50] sm:$0xff]
  %v1375 = vld [vmem:[%s1363 + $0x58] sm:$0xff]
  %v1376 = vld [vmem:[%s1363 + $0x60] sm:$0xff]
  %v1377 = vld [vmem:[%s1363 + $0x68] sm:$0xff]
  %v1378 = vld [vmem:[%s1363 + $0x70] sm:$0xff]
  %v1379 = vld [vmem:[%s1363 + $0x78] sm:$0xff]
  %v1380 = vld [vmem:[%s1363 + $0x80] sm:$0xff]
  %v1381 = vld [vmem:[%s1363 + $0x88] sm:$0xff]
  %v1382 = vld [vmem:[%s1363 + $0x90] sm:$0xff]
  %v1383 = vld [vmem:[%s1363 + $0x98] sm:$0xff]
  %v1384 = vld [vmem:[%s1363 + $0xa0] sm:$0xff]
  %v1385 = vld [vmem:[%s1363 + $0xa8] sm:$0xff]
  %v1386 = vld [vmem:[%s1363 + $0xb0] sm:$0xff]
  %v1387 = vld [vmem:[%s1363 + $0xb8] sm:$0xff]
  %v1388 = vld [vmem:[%s1363 + $0xc0] sm:$0xff]
  %v1389 = vld [vmem:[%s1363 + $0xc8] sm:$0xff]
  %v1390 = vld [vmem:[%s1363 + $0xd0] sm:$0xff]
  %v1391 = vld [vmem:[%s1363 + $0xd8] sm:$0xff]
  %v1392 = vld [vmem:[%s1363 + $0xe0] sm:$0xff]
  %v1393 = vld [vmem:[%s1363 + $0xe8] sm:$0xff]
  %v1394 = vld [vmem:[%s1363 + $0xf0] sm:$0xff]
  %v1395 = vld [vmem:[%s1363 + $0xf8] sm:$0xff]
  %v1397 = vsel %vm91, %v1365, 0
  %v1400 = vsel %vm91, %v1367, 0
  %v1403 = vsel %vm91, %v1369, 0
  %v1406 = vsel %vm91, %v1371, 0
  %v1409 = vsel %vm91, %v1373, 0
  %v1412 = vsel %vm91, %v1375, 0
  %v1415 = vsel %vm91, %v1377, 0
  %v1418 = vsel %vm91, %v1379, 0
  %v1421 = vsel %vm91, %v1381, 0
  %v1424 = vsel %vm91, %v1383, 0
  %v1427 = vsel %vm91, %v1385, 0
  %v1430 = vsel %vm91, %v1387, 0
  %v1433 = vsel %vm91, %v1389, 0
  %v1436 = vsel %vm91, %v1391, 0
  %v1439 = vsel %vm91, %v1393, 0
  %v1442 = vsel %vm91, %v1395, 0
  %1444 = vmatprep.subr.mxu0 0.0
  %1445 = vmatpush1.msra.mxu0 %v53
  %1446 = vmatprep.subr.mxu0 0.0
  %1447 = vmatpush1.msra.mxu0 %v52
  %1448 = vmatprep.subr.mxu0 0.0
  %1449 = vmatpush1.msra.mxu0 %v51
  %1450 = vmatprep.subr.mxu0 0.0
  %1451 = vmatpush1.msra.mxu0 %v50
  %1452 = vmatprep.subr.mxu0 0.0
  %1453 = vmatpush1.msra.mxu0 %v49
  %1454 = vmatprep.subr.mxu0 0.0
  %1455 = vmatpush1.msra.mxu0 %v48
  %1456 = vmatprep.subr.mxu0 0.0
  %1457 = vmatpush1.msra.mxu0 %v47
  %1458 = vmatprep.subr.mxu0 0.0
  %1459 = vmatpush1.msra.mxu0 %v46
  %1460 = vmatprep.subr.mxu0 0.0
  %1461 = vmatpush1.msra.mxu0 %v45
  %1462 = vmatprep.subr.mxu0 0.0
  %1463 = vmatpush1.msra.mxu0 %v44
  %1464 = vmatprep.subr.mxu0 0.0
  %1465 = vmatpush1.msra.mxu0 %v43
  %1466 = vmatprep.subr.mxu0 0.0
  %1467 = vmatpush1.msra.mxu0 %v42
  %1468 = vmatprep.subr.mxu0 0.0
  %1469 = vmatpush1.msra.mxu0 %v41
  %1470 = vmatprep.subr.mxu0 0.0
  %1471 = vmatpush1.msra.mxu0 %v40
  %1472 = vmatprep.subr.mxu0 0.0
  %1473 = vmatpush1.msra.mxu0 %v39
  %1474 = vmatprep.subr.mxu0 0.0
  %1475 = vmatpush1.msra.mxu0 %v38
  %1476 = vmatprep.subr.mxu0 0.0
  %1477 = vmatpush2.msra.mxu0 0.0
  %1478 = vmatprep.subr.mxu0 0.0
  %1479 = vmatpush2.msra.mxu0 0.0
  %1480 = vmatprep.subr.mxu0 0.0
  %1481 = vmatpush2.msra.mxu0 0.0
  %1482 = vmatprep.subr.mxu0 0.0
  %1483 = vmatpush2.msra.mxu0 0.0
  %1484 = vmatprep.subr.mxu0 0.0
  %1485 = vmatpush2.msra.mxu0 0.0
  %1486 = vmatprep.subr.mxu0 0.0
  %1487 = vmatpush2.msra.mxu0 0.0
  %1488 = vmatprep.subr.mxu0 0.0
  %1489 = vmatpush2.msra.mxu0 0.0
  %1490 = vmatprep.subr.mxu0 0.0
  %1491 = vmatpush2.msra.mxu0 0.0
  %1492 = vmatprep.subr.mxu0 0.0
  %1493 = vmatpush2.msra.mxu0 0.0
  %1494 = vmatprep.subr.mxu0 0.0
  %1495 = vmatpush2.msra.mxu0 0.0
  %1496 = vmatprep.subr.mxu0 0.0
  %1497 = vmatpush2.msra.mxu0 0.0
  %1498 = vmatprep.subr.mxu0 0.0
  %1499 = vmatpush2.msra.mxu0 %v142
  %1500 = vmatprep.subr.mxu0 0.0
  %1501 = vmatpush2.msra.mxu0 %v57
  %1502 = vmatprep.subr.mxu0 0.0
  %1503 = vmatpush2.msra.mxu0 %v56
  %1504 = vmatprep.subr.mxu0 0.0
  %1505 = vmatpush2.msra.mxu0 %v55
  %1506 = vmatprep.subr.mxu0 0.0
  %1507 = vmatpush2.msra.mxu0 %v54
  %1508 = vmatprep.mubr.f32.mxu0 %v1397
  %1509 = vmatmul.mubr.f32.gmra.mxu0 %v1364
  %v1510 = vpop.f32.mrf.mxu0
  %v1511 = vadd.f32 0.0, %v1510
  %v1512 = vpop.f32.mrf.mxu0
  %1513 = vmatprep.mubr.f32.mxu0 %v1400
  %1514 = vmatmul.mubr.f32.gmra.mxu0 %v1366
  %v1515 = vpop.f32.mrf.mxu0
  %v1516 = vadd.f32 0.0, %v1515
  %v1517 = vpop.f32.mrf.mxu0
  %1518 = vmatprep.mubr.f32.mxu0 %v1403
  %1519 = vmatmul.mubr.f32.gmra.mxu0 %v1368
  %v1520 = vpop.f32.mrf.mxu0
  %v1521 = vadd.f32 0.0, %v1520
  %v1522 = vpop.f32.mrf.mxu0
  %1523 = vmatprep.mubr.f32.mxu0 %v1406
  %1524 = vmatmul.mubr.f32.gmra.mxu0 %v1370
  %v1525 = vpop.f32.mrf.mxu0
  %v1526 = vadd.f32 0.0, %v1525
  %v1527 = vpop.f32.mrf.mxu0
  %1528 = vmatprep.mubr.f32.mxu0 %v1409
  %1529 = vmatmul.mubr.f32.gmra.mxu0 %v1372
  %v1530 = vpop.f32.mrf.mxu0
  %v1531 = vadd.f32 0.0, %v1530
  %v1532 = vpop.f32.mrf.mxu0
  %1533 = vmatprep.mubr.f32.mxu0 %v1412
  %1534 = vmatmul.mubr.f32.gmra.mxu0 %v1374
  %v1535 = vpop.f32.mrf.mxu0
  %v1536 = vadd.f32 0.0, %v1535
  %v1537 = vpop.f32.mrf.mxu0
  %1538 = vmatprep.mubr.f32.mxu0 %v1415
  %1539 = vmatmul.mubr.f32.gmra.mxu0 %v1376
  %v1540 = vpop.f32.mrf.mxu0
  %v1541 = vadd.f32 0.0, %v1540
  %v1542 = vpop.f32.mrf.mxu0
  %1543 = vmatprep.mubr.f32.mxu0 %v1418
  %1544 = vmatmul.mubr.f32.gmra.mxu0 %v1378
  %v1545 = vpop.f32.mrf.mxu0
  %v1546 = vadd.f32 0.0, %v1545
  %v1547 = vpop.f32.mrf.mxu0
  %1548 = vmatprep.mubr.f32.mxu0 %v1421
  %1549 = vmatmul.mubr.f32.gmra.mxu0 %v1380
  %v1550 = vpop.f32.mrf.mxu0
  %v1551 = vadd.f32 0.0, %v1550
  %v1552 = vpop.f32.mrf.mxu0
  %1553 = vmatprep.mubr.f32.mxu0 %v1424
  %1554 = vmatmul.mubr.f32.gmra.mxu0 %v1382
  %v1555 = vpop.f32.mrf.mxu0
  %v1556 = vadd.f32 0.0, %v1555
  %v1557 = vpop.f32.mrf.mxu0
  %1558 = vmatprep.mubr.f32.mxu0 %v1427
  %1559 = vmatmul.mubr.f32.gmra.mxu0 %v1384
  %v1560 = vpop.f32.mrf.mxu0
  %v1561 = vadd.f32 0.0, %v1560
  %v1562 = vpop.f32.mrf.mxu0
  %1563 = vmatprep.mubr.f32.mxu0 %v1430
  %1564 = vmatmul.mubr.f32.gmra.mxu0 %v1386
  %v1565 = vpop.f32.mrf.mxu0
  %v1566 = vadd.f32 0.0, %v1565
  %v1567 = vpop.f32.mrf.mxu0
  %1568 = vmatprep.mubr.f32.mxu0 %v1433
  %1569 = vmatmul.mubr.f32.gmra.mxu0 %v1388
  %v1570 = vpop.f32.mrf.mxu0
  %v1571 = vadd.f32 0.0, %v1570
  %v1572 = vpop.f32.mrf.mxu0
  %1573 = vmatprep.mubr.f32.mxu0 %v1436
  %1574 = vmatmul.mubr.f32.gmra.mxu0 %v1390
  %v1575 = vpop.f32.mrf.mxu0
  %v1576 = vadd.f32 0.0, %v1575
  %v1577 = vpop.f32.mrf.mxu0
  %1578 = vmatprep.mubr.f32.mxu0 %v1439
  %1579 = vmatmul.mubr.f32.gmra.mxu0 %v1392
  %v1580 = vpop.f32.mrf.mxu0
  %v1581 = vadd.f32 0.0, %v1580
  %v1582 = vpop.f32.mrf.mxu0
  %1583 = vmatprep.mubr.f32.mxu0 %v1442
  %1584 = vmatmul.mubr.f32.gmra.mxu0 %v1394
  %v1585 = vpop.f32.mrf.mxu0
  %v1586 = vadd.f32 0.0, %v1585
  %v1587 = vpop.f32.mrf.mxu0
  %1588 = vdwg.mxu0
  %s1589 = scalar_lea.vmem %s2, 192
  %v1590 = vld [vmem:[%s1589] sm:$0xff]
  %v1591 = vld [vmem:[%s1589 + $0x8] sm:$0xff]
  %v1592 = vld [vmem:[%s1589 + $0x10] sm:$0xff]
  %v1593 = vld [vmem:[%s1589 + $0x18] sm:$0xff]
  %v1594 = vld [vmem:[%s1589 + $0x20] sm:$0xff]
  %v1595 = vld [vmem:[%s1589 + $0x28] sm:$0xff]
  %v1596 = vld [vmem:[%s1589 + $0x30] sm:$0xff]
  %v1597 = vld [vmem:[%s1589 + $0x38] sm:$0xff]
  %v1599 = vsel %vm532, %v1511, 0
  %v1602 = vsel %vm532, %v1516, 0
  %v1605 = vsel %vm532, %v1521, 0
  %v1608 = vsel %vm532, %v1526, 0
  %v1611 = vsel %vm532, %v1531, 0
  %v1614 = vsel %vm532, %v1536, 0
  %v1617 = vsel %vm532, %v1541, 0
  %v1620 = vsel %vm532, %v1546, 0
  %v1623 = vsel %vm532, %v1551, 0
  %v1626 = vsel %vm532, %v1556, 0
  %v1629 = vsel %vm532, %v1561, 0
  %v1632 = vsel %vm532, %v1566, 0
  %v1635 = vsel %vm532, %v1571, 0
  %v1638 = vsel %vm532, %v1576, 0
  %v1641 = vsel %vm532, %v1581, 0
  %v1644 = vsel %vm532, %v1586, 0
  %1646 = vmatprep.subr.mxu0 0.0
  %1647 = vmatpush1.msra.mxu0 0.0
  %1648 = vmatprep.subr.mxu0 0.0
  %1649 = vmatpush1.msra.mxu0 0.0
  %1650 = vmatprep.subr.mxu0 0.0
  %1651 = vmatpush1.msra.mxu0 0.0
  %1652 = vmatprep.subr.mxu0 0.0
  %1653 = vmatpush1.msra.mxu0 0.0
  %1654 = vmatprep.subr.mxu0 0.0
  %1655 = vmatpush1.msra.mxu0 0.0
  %1656 = vmatprep.subr.mxu0 0.0
  %1657 = vmatpush1.msra.mxu0 0.0
  %1658 = vmatprep.subr.mxu0 0.0
  %1659 = vmatpush1.msra.mxu0 0.0
  %1660 = vmatprep.subr.mxu0 0.0
  %1661 = vmatpush1.msra.mxu0 0.0
  %1662 = vmatprep.subr.mxu0 0.0
  %1663 = vmatpush1.msra.mxu0 %v1597
  %1664 = vmatprep.subr.mxu0 0.0
  %1665 = vmatpush1.msra.mxu0 %v1596
  %1666 = vmatprep.subr.mxu0 0.0
  %1667 = vmatpush1.msra.mxu0 %v1595
  %1668 = vmatprep.subr.mxu0 0.0
  %1669 = vmatpush1.msra.mxu0 %v1594
  %1670 = vmatprep.subr.mxu0 0.0
  %1671 = vmatpush1.msra.mxu0 %v1593
  %1672 = vmatprep.subr.mxu0 0.0
  %1673 = vmatpush1.msra.mxu0 %v1592
  %1674 = vmatprep.subr.mxu0 0.0
  %1675 = vmatpush1.msra.mxu0 %v1591
  %1676 = vmatprep.subr.mxu0 0.0
  %1677 = vmatpush1.msra.mxu0 %v1590
  %1678 = vmatprep.subr.mxu0 0.0
  %1679 = vmatpush2.msra.mxu0 0.0
  %1680 = vmatprep.subr.mxu0 0.0
  %1681 = vmatpush2.msra.mxu0 0.0
  %1682 = vmatprep.subr.mxu0 0.0
  %1683 = vmatpush2.msra.mxu0 0.0
  %1684 = vmatprep.subr.mxu0 0.0
  %1685 = vmatpush2.msra.mxu0 0.0
  %1686 = vmatprep.subr.mxu0 0.0
  %1687 = vmatpush2.msra.mxu0 0.0
  %1688 = vmatprep.subr.mxu0 0.0
  %1689 = vmatpush2.msra.mxu0 0.0
  %1690 = vmatprep.subr.mxu0 0.0
  %1691 = vmatpush2.msra.mxu0 0.0
  %1692 = vmatprep.subr.mxu0 0.0
  %1693 = vmatpush2.msra.mxu0 0.0
  %1694 = vmatprep.subr.mxu0 0.0
  %1695 = vmatpush2.msra.mxu0 0.0
  %1696 = vmatprep.subr.mxu0 0.0
  %1697 = vmatpush2.msra.mxu0 0.0
  %1698 = vmatprep.subr.mxu0 0.0
  %1699 = vmatpush2.msra.mxu0 0.0
  %1700 = vmatprep.subr.mxu0 0.0
  %1701 = vmatpush2.msra.mxu0 0.0
  %1702 = vmatprep.subr.mxu0 0.0
  %1703 = vmatpush2.msra.mxu0 0.0
  %1704 = vmatprep.subr.mxu0 0.0
  %1705 = vmatpush2.msra.mxu0 0.0
  %1706 = vmatprep.subr.mxu0 0.0
  %1707 = vmatpush2.msra.mxu0 0.0
  %1708 = vmatprep.subr.mxu0 0.0
  %1709 = vmatpush2.msra.mxu0 0.0
  %1710 = vmatprep.mubr.f32.mxu0 0.0
  %1711 = vmatmul.mubr.f32.gmra.mxu0 %v1599
  %v1712 = vpop.f32.mrf.mxu0
  %v1713 = vadd.f32 0.0, %v1712
  %v1714 = vpop.f32.mrf.mxu0
  %1715 = vmatprep.mubr.f32.mxu0 0.0
  %1716 = vmatmul.mubr.f32.gmra.mxu0 %v1602
  %v1717 = vpop.f32.mrf.mxu0
  %v1718 = vadd.f32 0.0, %v1717
  %v1719 = vpop.f32.mrf.mxu0
  %1720 = vmatprep.mubr.f32.mxu0 0.0
  %1721 = vmatmul.mubr.f32.gmra.mxu0 %v1605
  %v1722 = vpop.f32.mrf.mxu0
  %v1723 = vadd.f32 0.0, %v1722
  %v1724 = vpop.f32.mrf.mxu0
  %1725 = vmatprep.mubr.f32.mxu0 0.0
  %1726 = vmatmul.mubr.f32.gmra.mxu0 %v1608
  %v1727 = vpop.f32.mrf.mxu0
  %v1728 = vadd.f32 0.0, %v1727
  %v1729 = vpop.f32.mrf.mxu0
  %1730 = vmatprep.mubr.f32.mxu0 0.0
  %1731 = vmatmul.mubr.f32.gmra.mxu0 %v1611
  %v1732 = vpop.f32.mrf.mxu0
  %v1733 = vadd.f32 0.0, %v1732
  %v1734 = vpop.f32.mrf.mxu0
  %1735 = vmatprep.mubr.f32.mxu0 0.0
  %1736 = vmatmul.mubr.f32.gmra.mxu0 %v1614
  %v1737 = vpop.f32.mrf.mxu0
  %v1738 = vadd.f32 0.0, %v1737
  %v1739 = vpop.f32.mrf.mxu0
  %1740 = vmatprep.mubr.f32.mxu0 0.0
  %1741 = vmatmul.mubr.f32.gmra.mxu0 %v1617
  %v1742 = vpop.f32.mrf.mxu0
  %v1743 = vadd.f32 0.0, %v1742
  %v1744 = vpop.f32.mrf.mxu0
  %1745 = vmatprep.mubr.f32.mxu0 0.0
  %1746 = vmatmul.mubr.f32.gmra.mxu0 %v1620
  %v1747 = vpop.f32.mrf.mxu0
  %v1748 = vadd.f32 0.0, %v1747
  %v1749 = vpop.f32.mrf.mxu0
  %1750 = vmatprep.mubr.f32.mxu0 0.0
  %1751 = vmatmul.mubr.f32.gmra.mxu0 %v1623
  %v1752 = vpop.f32.mrf.mxu0
  %v1753 = vadd.f32 0.0, %v1752
  %v1754 = vpop.f32.mrf.mxu0
  %1755 = vmatprep.mubr.f32.mxu0 0.0
  %1756 = vmatmul.mubr.f32.gmra.mxu0 %v1626
  %v1757 = vpop.f32.mrf.mxu0
  %v1758 = vadd.f32 0.0, %v1757
  %v1759 = vpop.f32.mrf.mxu0
  %1760 = vmatprep.mubr.f32.mxu0 0.0
  %1761 = vmatmul.mubr.f32.gmra.mxu0 %v1629
  %v1762 = vpop.f32.mrf.mxu0
  %v1763 = vadd.f32 0.0, %v1762
  %v1764 = vpop.f32.mrf.mxu0
  %1765 = vmatprep.mubr.f32.mxu0 0.0
  %1766 = vmatmul.mubr.f32.gmra.mxu0 %v1632
  %v1767 = vpop.f32.mrf.mxu0
  %v1768 = vadd.f32 0.0, %v1767
  %v1769 = vpop.f32.mrf.mxu0
  %1770 = vmatprep.mubr.f32.mxu0 0.0
  %1771 = vmatmul.mubr.f32.gmra.mxu0 %v1635
  %v1772 = vpop.f32.mrf.mxu0
  %v1773 = vadd.f32 0.0, %v1772
  %v1774 = vpop.f32.mrf.mxu0
  %1775 = vmatprep.mubr.f32.mxu0 0.0
  %1776 = vmatmul.mubr.f32.gmra.mxu0 %v1638
  %v1777 = vpop.f32.mrf.mxu0
  %v1778 = vadd.f32 0.0, %v1777
  %v1779 = vpop.f32.mrf.mxu0
  %1780 = vmatprep.mubr.f32.mxu0 0.0
  %1781 = vmatmul.mubr.f32.gmra.mxu0 %v1641
  %v1782 = vpop.f32.mrf.mxu0
  %v1783 = vadd.f32 0.0, %v1782
  %v1784 = vpop.f32.mrf.mxu0
  %1785 = vmatprep.mubr.f32.mxu0 0.0
  %1786 = vmatmul.mubr.f32.gmra.mxu0 %v1644
  %v1787 = vpop.f32.mrf.mxu0
  %v1788 = vadd.f32 0.0, %v1787
  %v1789 = vpop.f32.mrf.mxu0
  %1790 = vdwg.mxu0
  %v1791 = vadd.f32 %v1347, %v1713
  %v1792 = vadd.f32 %v1348, %v1718
  %v1793 = vadd.f32 %v1349, %v1723
  %v1794 = vadd.f32 %v1350, %v1728
  %v1795 = vadd.f32 %v1351, %v1733
  %v1796 = vadd.f32 %v1352, %v1738
  %v1797 = vadd.f32 %v1353, %v1743
  %v1798 = vadd.f32 %v1354, %v1748
  %v1799 = vadd.f32 %v1355, %v1753
  %v1800 = vadd.f32 %v1356, %v1758
  %v1801 = vadd.f32 %v1357, %v1763
  %v1802 = vadd.f32 %v1358, %v1768
  %v1803 = vadd.f32 %v1359, %v1773
  %v1804 = vadd.f32 %v1360, %v1778
  %v1805 = vadd.f32 %v1361, %v1783
  %v1806 = vadd.f32 %v1362, %v1788
  %vm1807 = vcmask 261120
  %v1808 = vsel %vm1807, %v1791, 0.0
  %v1809 = vsel %vm1807, %v1792, 0.0
  %v1810 = vadd.f32 %v1808, %v1809
  %v1811 = vsel %vm1807, %v1793, 0.0
  %v1812 = vadd.f32 %v1810, %v1811
  %v1813 = vsel %vm1807, %v1794, 0.0
  %v1814 = vadd.f32 %v1812, %v1813
  %v1815 = vsel %vm1807, %v1795, 0.0
  %v1816 = vadd.f32 %v1814, %v1815
  %v1817 = vsel %vm1807, %v1796, 0.0
  %v1818 = vadd.f32 %v1816, %v1817
  %v1819 = vsel %vm1807, %v1797, 0.0
  %v1820 = vadd.f32 %v1818, %v1819
  %v1821 = vsel %vm1807, %v1798, 0.0
  %v1822 = vadd.f32 %v1820, %v1821
  %v1823 = vsel %vm1807, %v1799, 0.0
  %v1824 = vadd.f32 %v1822, %v1823
  %v1825 = vsel %vm1807, %v1800, 0.0
  %v1826 = vadd.f32 %v1824, %v1825
  %v1827 = vsel %vm1807, %v1801, 0.0
  %v1828 = vadd.f32 %v1826, %v1827
  %v1829 = vsel %vm1807, %v1802, 0.0
  %v1830 = vadd.f32 %v1828, %v1829
  %v1831 = vsel %vm1807, %v1803, 0.0
  %v1832 = vadd.f32 %v1830, %v1831
  %v1833 = vsel %vm1807, %v1804, 0.0
  %v1834 = vadd.f32 %v1832, %v1833
  %v1835 = vsel %vm1807, %v1805, 0.0
  %v1836 = vadd.f32 %v1834, %v1835
  %v1837 = vsel %vm1807, %v1806, 0.0
  %v1838 = vadd.f32 %v1836, %v1837
  %v1839 = vrot.slane %v1838, 4
  %v1840 = vadd.f32 %v1838, %v1839
  %v1841 = vrot.slane %v1840, 2
  %v1842 = vadd.f32 %v1840, %v1841
  %v1843 = vrot.slane %v1842, 1
  %v1844 = vadd.f32 %v1842, %v1843
  %v1845 = vrcp.pop 128.0
  %v1846 = vmul.f32 %v1844, %v1845
  %v1847 = vsub.f32 %v1791, %v1846
  %v1848 = vsub.f32 %v1792, %v1846
  %v1849 = vsub.f32 %v1793, %v1846
  %v1850 = vsub.f32 %v1794, %v1846
  %v1851 = vsub.f32 %v1795, %v1846
  %v1852 = vsub.f32 %v1796, %v1846
  %v1853 = vsub.f32 %v1797, %v1846
  %v1854 = vsub.f32 %v1798, %v1846
  %v1855 = vsub.f32 %v1799, %v1846
  %v1856 = vsub.f32 %v1800, %v1846
  %v1857 = vsub.f32 %v1801, %v1846
  %v1858 = vsub.f32 %v1802, %v1846
  %v1859 = vsub.f32 %v1803, %v1846
  %v1860 = vsub.f32 %v1804, %v1846
  %v1861 = vsub.f32 %v1805, %v1846
  %v1862 = vsub.f32 %v1806, %v1846
  %v1863 = vmul.f32 %v1847, %v1847
  %v1864 = vmul.f32 %v1848, %v1848
  %v1865 = vmul.f32 %v1849, %v1849
  %v1866 = vmul.f32 %v1850, %v1850
  %v1867 = vmul.f32 %v1851, %v1851
  %v1868 = vmul.f32 %v1852, %v1852
  %v1869 = vmul.f32 %v1853, %v1853
  %v1870 = vmul.f32 %v1854, %v1854
  %v1871 = vmul.f32 %v1855, %v1855
  %v1872 = vmul.f32 %v1856, %v1856
  %v1873 = vmul.f32 %v1857, %v1857
  %v1874 = vmul.f32 %v1858, %v1858
  %v1875 = vmul.f32 %v1859, %v1859
  %v1876 = vmul.f32 %v1860, %v1860
  %v1877 = vmul.f32 %v1861, %v1861
  %v1878 = vmul.f32 %v1862, %v1862
  %v1879 = vsel %vm1807, %v1863, 0.0
  %v1880 = vsel %vm1807, %v1864, 0.0
  %v1881 = vadd.f32 %v1879, %v1880
  %v1882 = vsel %vm1807, %v1865, 0.0
  %v1883 = vadd.f32 %v1881, %v1882
  %v1884 = vsel %vm1807, %v1866, 0.0
  %v1885 = vadd.f32 %v1883, %v1884
  %v1886 = vsel %vm1807, %v1867, 0.0
  %v1887 = vadd.f32 %v1885, %v1886
  %v1888 = vsel %vm1807, %v1868, 0.0
  %v1889 = vadd.f32 %v1887, %v1888
  %v1890 = vsel %vm1807, %v1869, 0.0
  %v1891 = vadd.f32 %v1889, %v1890
  %v1892 = vsel %vm1807, %v1870, 0.0
  %v1893 = vadd.f32 %v1891, %v1892
  %v1894 = vsel %vm1807, %v1871, 0.0
  %v1895 = vadd.f32 %v1893, %v1894
  %v1896 = vsel %vm1807, %v1872, 0.0
  %v1897 = vadd.f32 %v1895, %v1896
  %v1898 = vsel %vm1807, %v1873, 0.0
  %v1899 = vadd.f32 %v1897, %v1898
  %v1900 = vsel %vm1807, %v1874, 0.0
  %v1901 = vadd.f32 %v1899, %v1900
  %v1902 = vsel %vm1807, %v1875, 0.0
  %v1903 = vadd.f32 %v1901, %v1902
  %v1904 = vsel %vm1807, %v1876, 0.0
  %v1905 = vadd.f32 %v1903, %v1904
  %v1906 = vsel %vm1807, %v1877, 0.0
  %v1907 = vadd.f32 %v1905, %v1906
  %v1908 = vsel %vm1807, %v1878, 0.0
  %v1909 = vadd.f32 %v1907, %v1908
  %v1910 = vrot.slane %v1909, 4
  %v1911 = vadd.f32 %v1909, %v1910
  %v1912 = vrot.slane %v1911, 2
  %v1913 = vadd.f32 %v1911, %v1912
  %v1914 = vrot.slane %v1913, 1
  %v1915 = vadd.f32 %v1913, %v1914
  %v1916 = vmul.f32 %v1915, %v1845
  %v1917 = vadd.f32 %v1916, 1e-05
  %v1918 = vrsqrt.pop %v1917
  %v1919 = vmul.f32 %v1847, %v1918
  %v1920 = vmul.f32 %v1848, %v1918
  %v1921 = vmul.f32 %v1849, %v1918
  %v1922 = vmul.f32 %v1850, %v1918
  %v1923 = vmul.f32 %v1851, %v1918
  %v1924 = vmul.f32 %v1852, %v1918
  %v1925 = vmul.f32 %v1853, %v1918
  %v1926 = vmul.f32 %v1854, %v1918
  %v1927 = vmul.f32 %v1855, %v1918
  %v1928 = vmul.f32 %v1856, %v1918
  %v1929 = vmul.f32 %v1857, %v1918
  %v1930 = vmul.f32 %v1858, %v1918
  %v1931 = vmul.f32 %v1859, %v1918
  %v1932 = vmul.f32 %v1860, %v1918
  %v1933 = vmul.f32 %v1861, %v1918
  %v1934 = vmul.f32 %v1862, %v1918
  %vm1935 = vcmp.ge.f32.partialorder %v1919, 0.0
  %vm1936 = vcmp.ge.f32.partialorder %v1920, 0.0
  %vm1937 = vcmp.ge.f32.partialorder %v1921, 0.0
  %vm1938 = vcmp.ge.f32.partialorder %v1922, 0.0
  %vm1939 = vcmp.ge.f32.partialorder %v1923, 0.0
  %vm1940 = vcmp.ge.f32.partialorder %v1924, 0.0
  %vm1941 = vcmp.ge.f32.partialorder %v1925, 0.0
  %vm1942 = vcmp.ge.f32.partialorder %v1926, 0.0
  %vm1943 = vcmp.ge.f32.partialorder %v1927, 0.0
  %vm1944 = vcmp.ge.f32.partialorder %v1928, 0.0
  %vm1945 = vcmp.ge.f32.partialorder %v1929, 0.0
  %vm1946 = vcmp.ge.f32.partialorder %v1930, 0.0
  %vm1947 = vcmp.ge.f32.partialorder %v1931, 0.0
  %vm1948 = vcmp.ge.f32.partialorder %v1932, 0.0
  %vm1949 = vcmp.ge.f32.partialorder %v1933, 0.0
  %vm1950 = vcmp.ge.f32.partialorder %v1934, 0.0
  %v1951 = vmul.f32 %v1919, 0.01
  %v1952 = vmul.f32 %v1920, 0.01
  %v1953 = vmul.f32 %v1921, 0.01
  %v1954 = vmul.f32 %v1922, 0.01
  %v1955 = vmul.f32 %v1923, 0.01
  %v1956 = vmul.f32 %v1924, 0.01
  %v1957 = vmul.f32 %v1925, 0.01
  %v1958 = vmul.f32 %v1926, 0.01
  %v1959 = vmul.f32 %v1927, 0.01
  %v1960 = vmul.f32 %v1928, 0.01
  %v1961 = vmul.f32 %v1929, 0.01
  %v1962 = vmul.f32 %v1930, 0.01
  %v1963 = vmul.f32 %v1931, 0.01
  %v1964 = vmul.f32 %v1932, 0.01
  %v1965 = vmul.f32 %v1933, 0.01
  %v1966 = vmul.f32 %v1934, 0.01
  %v1967 = vsel %vm1935, %v1919, %v1951
  %v1968 = vsel %vm1936, %v1920, %v1952
  %v1969 = vsel %vm1937, %v1921, %v1953
  %v1970 = vsel %vm1938, %v1922, %v1954
  %v1971 = vsel %vm1939, %v1923, %v1955
  %v1972 = vsel %vm1940, %v1924, %v1956
  %v1973 = vsel %vm1941, %v1925, %v1957
  %v1974 = vsel %vm1942, %v1926, %v1958
  %v1975 = vsel %vm1943, %v1927, %v1959
  %v1976 = vsel %vm1944, %v1928, %v1960
  %v1977 = vsel %vm1945, %v1929, %v1961
  %v1978 = vsel %vm1946, %v1930, %v1962
  %v1979 = vsel %vm1947, %v1931, %v1963
  %v1980 = vsel %vm1948, %v1932, %v1964
  %v1981 = vsel %vm1949, %v1933, %v1965
  %v1982 = vsel %vm1950, %v1934, %v1966
  %v1983 = vld [vmem:[%s3] sm:$0xff]
  %v1984 = vld [vmem:[%s3 + $0x8] sm:$0xff]
  %v1985 = vld [vmem:[%s3 + $0x10] sm:$0x3]
  %1986 = vmatprep.subr.mxu0 0.0
  %1987 = vmatpush1.msra.mxu0 %v1982
  %1988 = vmatprep.subr.mxu0 0.0
  %1989 = vmatpush1.msra.mxu0 %v1981
  %1990 = vmatprep.subr.mxu0 0.0
  %1991 = vmatpush1.msra.mxu0 %v1980
  %1992 = vmatprep.subr.mxu0 0.0
  %1993 = vmatpush1.msra.mxu0 %v1979
  %1994 = vmatprep.subr.mxu0 0.0
  %1995 = vmatpush1.msra.mxu0 %v1978
  %1996 = vmatprep.subr.mxu0 0.0
  %1997 = vmatpush1.msra.mxu0 %v1977
  %1998 = vmatprep.subr.mxu0 0.0
  %1999 = vmatpush1.msra.mxu0 %v1976
  %2000 = vmatprep.subr.mxu0 0.0
  %2001 = vmatpush1.msra.mxu0 %v1975
  %2002 = vmatprep.subr.mxu0 0.0
  %2003 = vmatpush1.msra.mxu0 %v1974
  %2004 = vmatprep.subr.mxu0 0.0
  %2005 = vmatpush1.msra.mxu0 %v1973
  %2006 = vmatprep.subr.mxu0 0.0
  %2007 = vmatpush1.msra.mxu0 %v1972
  %2008 = vmatprep.subr.mxu0 0.0
  %2009 = vmatpush1.msra.mxu0 %v1971
  %2010 = vmatprep.subr.mxu0 0.0
  %2011 = vmatpush1.msra.mxu0 %v1970
  %2012 = vmatprep.subr.mxu0 0.0
  %2013 = vmatpush1.msra.mxu0 %v1969
  %2014 = vmatprep.subr.mxu0 0.0
  %2015 = vmatpush1.msra.mxu0 %v1968
  %2016 = vmatprep.subr.mxu0 0.0
  %2017 = vmatpush1.msra.mxu0 %v1967
  %2018 = vmatprep.subr.mxu0 0.0
  %2019 = vmatpush2.msra.mxu0 0.0
  %2020 = vmatprep.subr.mxu0 0.0
  %2021 = vmatpush2.msra.mxu0 0.0
  %2022 = vmatprep.subr.mxu0 0.0
  %2023 = vmatpush2.msra.mxu0 0.0
  %2024 = vmatprep.subr.mxu0 0.0
  %2025 = vmatpush2.msra.mxu0 0.0
  %2026 = vmatprep.subr.mxu0 0.0
  %2027 = vmatpush2.msra.mxu0 0.0
  %2028 = vmatprep.subr.mxu0 0.0
  %2029 = vmatpush2.msra.mxu0 0.0
  %2030 = vmatprep.subr.mxu0 0.0
  %2031 = vmatpush2.msra.mxu0 0.0
  %2032 = vmatprep.subr.mxu0 0.0
  %2033 = vmatpush2.msra.mxu0 0.0
  %2034 = vmatprep.subr.mxu0 0.0
  %2035 = vmatpush2.msra.mxu0 0.0
  %2036 = vmatprep.subr.mxu0 0.0
  %2037 = vmatpush2.msra.mxu0 0.0
  %2038 = vmatprep.subr.mxu0 0.0
  %2039 = vmatpush2.msra.mxu0 0.0
  %2040 = vmatprep.subr.mxu0 0.0
  %2041 = vmatpush2.msra.mxu0 0.0
  %2042 = vmatprep.subr.mxu0 0.0
  %2043 = vmatpush2.msra.mxu0 0.0
  %2044 = vmatprep.subr.mxu0 0.0
  %2045 = vmatpush2.msra.mxu0 0.0
  %2046 = vmatprep.subr.mxu0 0.0
  %2047 = vmatpush2.msra.mxu0 0.0
  %2048 = vmatprep.subr.mxu0 0.0
  %2049 = vmatpush2.msra.mxu0 0.0
  %2050 = vmatprep.mubr.f32.mxu0 0.0
  %2051 = vmatmul.mubr.f32.gmra.mxu0 %v1983
  %v2052 = vpop.f32.mrf.mxu0
  %v2053 = vadd.f32 0.0, %v2052
  %v2054 = vpop.f32.mrf.mxu0
  %2055 = vmatprep.mubr.f32.mxu0 0.0
  %2056 = vmatmul.mubr.f32.gmra.mxu0 %v1984
  %v2057 = vpop.f32.mrf.mxu0
  %v2058 = vadd.f32 0.0, %v2057
  %v2059 = vpop.f32.mrf.mxu0
  %2060 = vmatprep.mubr.f32.mxu0 0.0
  %2061 = vmatmul.mubr.f32.gmra.mxu0 %v1985
  %v2062 = vpop.f32.mrf.mxu0
  %v2063 = vadd.f32 0.0, %v2062
  %v2064 = vpop.f32.mrf.mxu0
  %2065 = vdwg.mxu0
  %v2066 = vld [vmem:[%s4] sm:$0xff]
  %v2067 = vld [vmem:[%s4 + $0x8] sm:$0xff]
  %v2068 = vld [vmem:[%s4 + $0x10] sm:$0xff]
  %v2069 = vld [vmem:[%s4 + $0x18] sm:$0xff]
  %s2070 = scalar_lea.vmem %s3, 24
  %v2071 = vld [vmem:[%s2070] sm:$0xff]
  %v2072 = vld [vmem:[%s2070 + $0x8] sm:$0xff]
  %v2073 = vld [vmem:[%s2070 + $0x10] sm:$0x3]
  %2074 = vmatprep.subr.mxu0 0.0
  %2075 = vmatpush1.msra.mxu0 %v1982
  %2076 = vmatprep.subr.mxu0 0.0
  %2077 = vmatpush1.msra.mxu0 %v1981
  %2078 = vmatprep.subr.mxu0 0.0
  %2079 = vmatpush1.msra.mxu0 %v1980
  %2080 = vmatprep.subr.mxu0 0.0
  %2081 = vmatpush1.msra.mxu0 %v1979
  %2082 = vmatprep.subr.mxu0 0.0
  %2083 = vmatpush1.msra.mxu0 %v1978
  %2084 = vmatprep.subr.mxu0 0.0
  %2085 = vmatpush1.msra.mxu0 %v1977
  %2086 = vmatprep.subr.mxu0 0.0
  %2087 = vmatpush1.msra.mxu0 %v1976
  %2088 = vmatprep.subr.mxu0 0.0
  %2089 = vmatpush1.msra.mxu0 %v1975
  %2090 = vmatprep.subr.mxu0 0.0
  %2091 = vmatpush1.msra.mxu0 %v1974
  %2092 = vmatprep.subr.mxu0 0.0
  %2093 = vmatpush1.msra.mxu0 %v1973
  %2094 = vmatprep.subr.mxu0 0.0
  %2095 = vmatpush1.msra.mxu0 %v1972
  %2096 = vmatprep.subr.mxu0 0.0
  %2097 = vmatpush1.msra.mxu0 %v1971
  %2098 = vmatprep.subr.mxu0 0.0
  %2099 = vmatpush1.msra.mxu0 %v1970
  %2100 = vmatprep.subr.mxu0 0.0
  %2101 = vmatpush1.msra.mxu0 %v1969
  %2102 = vmatprep.subr.mxu0 0.0
  %2103 = vmatpush1.msra.mxu0 %v1968
  %2104 = vmatprep.subr.mxu0 0.0
  %2105 = vmatpush1.msra.mxu0 %v1967
  %2106 = vmatprep.subr.mxu0 0.0
  %2107 = vmatpush2.msra.mxu0 0.0
  %2108 = vmatprep.subr.mxu0 0.0
  %2109 = vmatpush2.msra.mxu0 0.0
  %2110 = vmatprep.subr.mxu0 0.0
  %2111 = vmatpush2.msra.mxu0 0.0
  %2112 = vmatprep.subr.mxu0 0.0
  %2113 = vmatpush2.msra.mxu0 0.0
  %2114 = vmatprep.subr.mxu0 0.0
  %2115 = vmatpush2.msra.mxu0 0.0
  %2116 = vmatprep.subr.mxu0 0.0
  %2117 = vmatpush2.msra.mxu0 0.0
  %2118 = vmatprep.subr.mxu0 0.0
  %2119 = vmatpush2.msra.mxu0 0.0
  %2120 = vmatprep.subr.mxu0 0.0
  %2121 = vmatpush2.msra.mxu0 0.0
  %2122 = vmatprep.subr.mxu0 0.0
  %2123 = vmatpush2.msra.mxu0 0.0
  %2124 = vmatprep.subr.mxu0 0.0
  %2125 = vmatpush2.msra.mxu0 0.0
  %2126 = vmatprep.subr.mxu0 0.0
  %2127 = vmatpush2.msra.mxu0 0.0
  %2128 = vmatprep.subr.mxu0 0.0
  %2129 = vmatpush2.msra.mxu0 0.0
  %2130 = vmatprep.subr.mxu0 0.0
  %2131 = vmatpush2.msra.mxu0 0.0
  %2132 = vmatprep.subr.mxu0 0.0
  %2133 = vmatpush2.msra.mxu0 0.0
  %2134 = vmatprep.subr.mxu0 0.0
  %2135 = vmatpush2.msra.mxu0 0.0
  %2136 = vmatprep.subr.mxu0 0.0
  %2137 = vmatpush2.msra.mxu0 0.0
  %2138 = vmatprep.mubr.f32.mxu0 0.0
  %2139 = vmatmul.mubr.f32.gmra.mxu0 %v2071
  %v2140 = vpop.f32.mrf.mxu0
  %v2141 = vadd.f32 0.0, %v2140
  %v2142 = vpop.f32.mrf.mxu0
  %2143 = vmatprep.mubr.f32.mxu0 0.0
  %2144 = vmatmul.mubr.f32.gmra.mxu0 %v2072
  %v2145 = vpop.f32.mrf.mxu0
  %v2146 = vadd.f32 0.0, %v2145
  %v2147 = vpop.f32.mrf.mxu0
  %2148 = vmatprep.mubr.f32.mxu0 0.0
  %2149 = vmatmul.mubr.f32.gmra.mxu0 %v2073
  %v2150 = vpop.f32.mrf.mxu0
  %v2151 = vadd.f32 0.0, %v2150
  %v2152 = vpop.f32.mrf.mxu0
  %2153 = vdwg.mxu0
  %s2154 = scalar_lea.vmem %s4, 32
  %v2155 = vld [vmem:[%s2154] sm:$0xff]
  %v2156 = vld [vmem:[%s2154 + $0x8] sm:$0xff]
  %v2157 = vld [vmem:[%s2154 + $0x10] sm:$0xff]
  %v2158 = vld [vmem:[%s2154 + $0x18] sm:$0xff]
  %v2160 = vsel %vm1807, %v2141, 0
  %v2163 = vsel %vm1807, %v2146, 0
  %v2166 = vsel %vm1807, %v2151, 0
  %2168 = vmatprep.subr.mxu0 0.0
  %2169 = vmatpush1.msra.mxu0 0.0
  %2170 = vmatprep.subr.mxu0 0.0
  %2171 = vmatpush1.msra.mxu0 0.0
  %2172 = vmatprep.subr.mxu0 0.0
  %2173 = vmatpush1.msra.mxu0 0.0
  %2174 = vmatprep.subr.mxu0 0.0
  %2175 = vmatpush1.msra.mxu0 0.0
  %2176 = vmatprep.subr.mxu0 0.0
  %2177 = vmatpush1.msra.mxu0 0.0
  %2178 = vmatprep.subr.mxu0 0.0
  %2179 = vmatpush1.msra.mxu0 0.0
  %2180 = vmatprep.subr.mxu0 0.0
  %2181 = vmatpush1.msra.mxu0 0.0
  %2182 = vmatprep.subr.mxu0 0.0
  %2183 = vmatpush1.msra.mxu0 0.0
  %2184 = vmatprep.subr.mxu0 0.0
  %2185 = vmatpush1.msra.mxu0 0.0
  %2186 = vmatprep.subr.mxu0 0.0
  %2187 = vmatpush1.msra.mxu0 0.0
  %2188 = vmatprep.subr.mxu0 0.0
  %2189 = vmatpush1.msra.mxu0 0.0
  %2190 = vmatprep.subr.mxu0 0.0
  %2191 = vmatpush1.msra.mxu0 0.0
  %2192 = vmatprep.subr.mxu0 0.0
  %2193 = vmatpush1.msra.mxu0 %v2158
  %2194 = vmatprep.subr.mxu0 0.0
  %2195 = vmatpush1.msra.mxu0 %v2157
  %2196 = vmatprep.subr.mxu0 0.0
  %2197 = vmatpush1.msra.mxu0 %v2156
  %2198 = vmatprep.subr.mxu0 0.0
  %2199 = vmatpush1.msra.mxu0 %v2155
  %2200 = vmatprep.subr.mxu0 0.0
  %2201 = vmatpush2.msra.mxu0 0.0
  %2202 = vmatprep.subr.mxu0 0.0
  %2203 = vmatpush2.msra.mxu0 0.0
  %2204 = vmatprep.subr.mxu0 0.0
  %2205 = vmatpush2.msra.mxu0 0.0
  %2206 = vmatprep.subr.mxu0 0.0
  %2207 = vmatpush2.msra.mxu0 0.0
  %2208 = vmatprep.subr.mxu0 0.0
  %2209 = vmatpush2.msra.mxu0 0.0
  %2210 = vmatprep.subr.mxu0 0.0
  %2211 = vmatpush2.msra.mxu0 0.0
  %2212 = vmatprep.subr.mxu0 0.0
  %2213 = vmatpush2.msra.mxu0 0.0
  %2214 = vmatprep.subr.mxu0 0.0
  %2215 = vmatpush2.msra.mxu0 0.0
  %2216 = vmatprep.subr.mxu0 0.0
  %2217 = vmatpush2.msra.mxu0 0.0
  %2218 = vmatprep.subr.mxu0 0.0
  %2219 = vmatpush2.msra.mxu0 0.0
  %2220 = vmatprep.subr.mxu0 0.0
  %2221 = vmatpush2.msra.mxu0 0.0
  %2222 = vmatprep.subr.mxu0 0.0
  %2223 = vmatpush2.msra.mxu0 0.0
  %2224 = vmatprep.subr.mxu0 0.0
  %2225 = vmatpush2.msra.mxu0 0.0
  %2226 = vmatprep.subr.mxu0 0.0
  %2227 = vmatpush2.msra.mxu0 0.0
  %2228 = vmatprep.subr.mxu0 0.0
  %2229 = vmatpush2.msra.mxu0 0.0
  %2230 = vmatprep.subr.mxu0 0.0
  %2231 = vmatpush2.msra.mxu0 0.0
  %2232 = vmatprep.mubr.f32.mxu0 0.0
  %2233 = vmatmul.mubr.f32.gmra.mxu0 %v2160
  %v2234 = vpop.f32.mrf.mxu0
  %v2235 = vadd.f32 0.0, %v2234
  %v2236 = vpop.f32.mrf.mxu0
  %2237 = vmatprep.mubr.f32.mxu0 0.0
  %2238 = vmatmul.mubr.f32.gmra.mxu0 %v2163
  %v2239 = vpop.f32.mrf.mxu0
  %v2240 = vadd.f32 0.0, %v2239
  %v2241 = vpop.f32.mrf.mxu0
  %2242 = vmatprep.mubr.f32.mxu0 0.0
  %2243 = vmatmul.mubr.f32.gmra.mxu0 %v2166
  %v2244 = vpop.f32.mrf.mxu0
  %v2245 = vadd.f32 0.0, %v2244
  %v2246 = vpop.f32.mrf.mxu0
  %2247 = vdwg.mxu0
  %v2249 = vsel %vm1807, %v2053, 0
  %v2252 = vsel %vm1807, %v2058, 0
  %v2255 = vsel %vm1807, %v2063, 0
  %2257 = vmatprep.subr.mxu0 0.0
  %2258 = vmatpush1.msra.mxu0 0.0
  %2259 = vmatprep.subr.mxu0 0.0
  %2260 = vmatpush1.msra.mxu0 0.0
  %2261 = vmatprep.subr.mxu0 0.0
  %2262 = vmatpush1.msra.mxu0 0.0
  %2263 = vmatprep.subr.mxu0 0.0
  %2264 = vmatpush1.msra.mxu0 0.0
  %2265 = vmatprep.subr.mxu0 0.0
  %2266 = vmatpush1.msra.mxu0 0.0
  %2267 = vmatprep.subr.mxu0 0.0
  %2268 = vmatpush1.msra.mxu0 0.0
  %2269 = vmatprep.subr.mxu0 0.0
  %2270 = vmatpush1.msra.mxu0 0.0
  %2271 = vmatprep.subr.mxu0 0.0
  %2272 = vmatpush1.msra.mxu0 0.0
  %2273 = vmatprep.subr.mxu0 0.0
  %2274 = vmatpush1.msra.mxu0 0.0
  %2275 = vmatprep.subr.mxu0 0.0
  %2276 = vmatpush1.msra.mxu0 0.0
  %2277 = vmatprep.subr.mxu0 0.0
  %2278 = vmatpush1.msra.mxu0 0.0
  %2279 = vmatprep.subr.mxu0 0.0
  %2280 = vmatpush1.msra.mxu0 0.0
  %2281 = vmatprep.subr.mxu0 0.0
  %2282 = vmatpush1.msra.mxu0 %v2069
  %2283 = vmatprep.subr.mxu0 0.0
  %2284 = vmatpush1.msra.mxu0 %v2068
  %2285 = vmatprep.subr.mxu0 0.0
  %2286 = vmatpush1.msra.mxu0 %v2067
  %2287 = vmatprep.subr.mxu0 0.0
  %2288 = vmatpush1.msra.mxu0 %v2066
  %2289 = vmatprep.subr.mxu0 0.0
  %2290 = vmatpush2.msra.mxu0 0.0
  %2291 = vmatprep.subr.mxu0 0.0
  %2292 = vmatpush2.msra.mxu0 0.0
  %2293 = vmatprep.subr.mxu0 0.0
  %2294 = vmatpush2.msra.mxu0 0.0
  %2295 = vmatprep.subr.mxu0 0.0
  %2296 = vmatpush2.msra.mxu0 0.0
  %2297 = vmatprep.subr.mxu0 0.0
  %2298 = vmatpush2.msra.mxu0 0.0
  %2299 = vmatprep.subr.mxu0 0.0
  %2300 = vmatpush2.msra.mxu0 0.0
  %2301 = vmatprep.subr.mxu0 0.0
  %2302 = vmatpush2.msra.mxu0 0.0
  %2303 = vmatprep.subr.mxu0 0.0
  %2304 = vmatpush2.msra.mxu0 0.0
  %2305 = vmatprep.subr.mxu0 0.0
  %2306 = vmatpush2.msra.mxu0 0.0
  %2307 = vmatprep.subr.mxu0 0.0
  %2308 = vmatpush2.msra.mxu0 0.0
  %2309 = vmatprep.subr.mxu0 0.0
  %2310 = vmatpush2.msra.mxu0 0.0
  %2311 = vmatprep.subr.mxu0 0.0
  %2312 = vmatpush2.msra.mxu0 0.0
  %2313 = vmatprep.subr.mxu0 0.0
  %2314 = vmatpush2.msra.mxu0 0.0
  %2315 = vmatprep.subr.mxu0 0.0
  %2316 = vmatpush2.msra.mxu0 0.0
  %2317 = vmatprep.subr.mxu0 0.0
  %2318 = vmatpush2.msra.mxu0 0.0
  %2319 = vmatprep.subr.mxu0 0.0
  %2320 = vmatpush2.msra.mxu0 0.0
  %2321 = vmatprep.mubr.f32.mxu0 0.0
  %2322 = vmatmul.mubr.f32.gmra.mxu0 %v2249
  %v2323 = vpop.f32.mrf.mxu0
  %v2324 = vadd.f32 %v2235, %v2323
  %v2325 = vpop.f32.mrf.mxu0
  %2326 = vmatprep.mubr.f32.mxu0 0.0
  %2327 = vmatmul.mubr.f32.gmra.mxu0 %v2252
  %v2328 = vpop.f32.mrf.mxu0
  %v2329 = vadd.f32 %v2240, %v2328
  %v2330 = vpop.f32.mrf.mxu0
  %2331 = vmatprep.mubr.f32.mxu0 0.0
  %2332 = vmatmul.mubr.f32.gmra.mxu0 %v2255
  %v2333 = vpop.f32.mrf.mxu0
  %v2334 = vadd.f32 %v2245, %v2333
  %v2335 = vpop.f32.mrf.mxu0
  %2336 = vdwg.mxu0
  %s2337 = scalar_lea.vmem %s3, 48
  %v2338 = vld [vmem:[%s2337] sm:$0xff]
  %v2339 = vld [vmem:[%s2337 + $0x8] sm:$0xff]
  %v2340 = vld [vmem:[%s2337 + $0x10] sm:$0x3]
  %2341 = vmatprep.subr.mxu0 0.0
  %2342 = vmatpush1.msra.mxu0 %v1982
  %2343 = vmatprep.subr.mxu0 0.0
  %2344 = vmatpush1.msra.mxu0 %v1981
  %2345 = vmatprep.subr.mxu0 0.0
  %2346 = vmatpush1.msra.mxu0 %v1980
  %2347 = vmatprep.subr.mxu0 0.0
  %2348 = vmatpush1.msra.mxu0 %v1979
  %2349 = vmatprep.subr.mxu0 0.0
  %2350 = vmatpush1.msra.mxu0 %v1978
  %2351 = vmatprep.subr.mxu0 0.0
  %2352 = vmatpush1.msra.mxu0 %v1977
  %2353 = vmatprep.subr.mxu0 0.0
  %2354 = vmatpush1.msra.mxu0 %v1976
  %2355 = vmatprep.subr.mxu0 0.0
  %2356 = vmatpush1.msra.mxu0 %v1975
  %2357 = vmatprep.subr.mxu0 0.0
  %2358 = vmatpush1.msra.mxu0 %v1974
  %2359 = vmatprep.subr.mxu0 0.0
  %2360 = vmatpush1.msra.mxu0 %v1973
  %2361 = vmatprep.subr.mxu0 0.0
  %2362 = vmatpush1.msra.mxu0 %v1972
  %2363 = vmatprep.subr.mxu0 0.0
  %2364 = vmatpush1.msra.mxu0 %v1971
  %2365 = vmatprep.subr.mxu0 0.0
  %2366 = vmatpush1.msra.mxu0 %v1970
  %2367 = vmatprep.subr.mxu0 0.0
  %2368 = vmatpush1.msra.mxu0 %v1969
  %2369 = vmatprep.subr.mxu0 0.0
  %2370 = vmatpush1.msra.mxu0 %v1968
  %2371 = vmatprep.subr.mxu0 0.0
  %2372 = vmatpush1.msra.mxu0 %v1967
  %2373 = vmatprep.subr.mxu0 0.0
  %2374 = vmatpush2.msra.mxu0 0.0
  %2375 = vmatprep.subr.mxu0 0.0
  %2376 = vmatpush2.msra.mxu0 0.0
  %2377 = vmatprep.subr.mxu0 0.0
  %2378 = vmatpush2.msra.mxu0 0.0
  %2379 = vmatprep.subr.mxu0 0.0
  %2380 = vmatpush2.msra.mxu0 0.0
  %2381 = vmatprep.subr.mxu0 0.0
  %2382 = vmatpush2.msra.mxu0 0.0
  %2383 = vmatprep.subr.mxu0 0.0
  %2384 = vmatpush2.msra.mxu0 0.0
  %2385 = vmatprep.subr.mxu0 0.0
  %2386 = vmatpush2.msra.mxu0 0.0
  %2387 = vmatprep.subr.mxu0 0.0
  %2388 = vmatpush2.msra.mxu0 0.0
  %2389 = vmatprep.subr.mxu0 0.0
  %2390 = vmatpush2.msra.mxu0 0.0
  %2391 = vmatprep.subr.mxu0 0.0
  %2392 = vmatpush2.msra.mxu0 0.0
  %2393 = vmatprep.subr.mxu0 0.0
  %2394 = vmatpush2.msra.mxu0 0.0
  %2395 = vmatprep.subr.mxu0 0.0
  %2396 = vmatpush2.msra.mxu0 0.0
  %2397 = vmatprep.subr.mxu0 0.0
  %2398 = vmatpush2.msra.mxu0 0.0
  %2399 = vmatprep.subr.mxu0 0.0
  %2400 = vmatpush2.msra.mxu0 0.0
  %2401 = vmatprep.subr.mxu0 0.0
  %2402 = vmatpush2.msra.mxu0 0.0
  %2403 = vmatprep.subr.mxu0 0.0
  %2404 = vmatpush2.msra.mxu0 0.0
  %2405 = vmatprep.mubr.f32.mxu0 0.0
  %2406 = vmatmul.mubr.f32.gmra.mxu0 %v2338
  %v2407 = vpop.f32.mrf.mxu0
  %v2408 = vadd.f32 0.0, %v2407
  %v2409 = vpop.f32.mrf.mxu0
  %2410 = vmatprep.mubr.f32.mxu0 0.0
  %2411 = vmatmul.mubr.f32.gmra.mxu0 %v2339
  %v2412 = vpop.f32.mrf.mxu0
  %v2413 = vadd.f32 0.0, %v2412
  %v2414 = vpop.f32.mrf.mxu0
  %2415 = vmatprep.mubr.f32.mxu0 0.0
  %2416 = vmatmul.mubr.f32.gmra.mxu0 %v2340
  %v2417 = vpop.f32.mrf.mxu0
  %v2418 = vadd.f32 0.0, %v2417
  %v2419 = vpop.f32.mrf.mxu0
  %2420 = vdwg.mxu0
  %s2421 = scalar_lea.vmem %s4, 64
  %v2422 = vld [vmem:[%s2421] sm:$0xff]
  %v2423 = vld [vmem:[%s2421 + $0x8] sm:$0xff]
  %v2424 = vld [vmem:[%s2421 + $0x10] sm:$0xff]
  %v2425 = vld [vmem:[%s2421 + $0x18] sm:$0xff]
  %v2427 = vsel %vm1807, %v2408, 0
  %v2430 = vsel %vm1807, %v2413, 0
  %v2433 = vsel %vm1807, %v2418, 0
  %2435 = vmatprep.subr.mxu0 0.0
  %2436 = vmatpush1.msra.mxu0 0.0
  %2437 = vmatprep.subr.mxu0 0.0
  %2438 = vmatpush1.msra.mxu0 0.0
  %2439 = vmatprep.subr.mxu0 0.0
  %2440 = vmatpush1.msra.mxu0 0.0
  %2441 = vmatprep.subr.mxu0 0.0
  %2442 = vmatpush1.msra.mxu0 0.0
  %2443 = vmatprep.subr.mxu0 0.0
  %2444 = vmatpush1.msra.mxu0 0.0
  %2445 = vmatprep.subr.mxu0 0.0
  %2446 = vmatpush1.msra.mxu0 0.0
  %2447 = vmatprep.subr.mxu0 0.0
  %2448 = vmatpush1.msra.mxu0 0.0
  %2449 = vmatprep.subr.mxu0 0.0
  %2450 = vmatpush1.msra.mxu0 0.0
  %2451 = vmatprep.subr.mxu0 0.0
  %2452 = vmatpush1.msra.mxu0 0.0
  %2453 = vmatprep.subr.mxu0 0.0
  %2454 = vmatpush1.msra.mxu0 0.0
  %2455 = vmatprep.subr.mxu0 0.0
  %2456 = vmatpush1.msra.mxu0 0.0
  %2457 = vmatprep.subr.mxu0 0.0
  %2458 = vmatpush1.msra.mxu0 0.0
  %2459 = vmatprep.subr.mxu0 0.0
  %2460 = vmatpush1.msra.mxu0 %v2425
  %2461 = vmatprep.subr.mxu0 0.0
  %2462 = vmatpush1.msra.mxu0 %v2424
  %2463 = vmatprep.subr.mxu0 0.0
  %2464 = vmatpush1.msra.mxu0 %v2423
  %2465 = vmatprep.subr.mxu0 0.0
  %2466 = vmatpush1.msra.mxu0 %v2422
  %2467 = vmatprep.subr.mxu0 0.0
  %2468 = vmatpush2.msra.mxu0 0.0
  %2469 = vmatprep.subr.mxu0 0.0
  %2470 = vmatpush2.msra.mxu0 0.0
  %2471 = vmatprep.subr.mxu0 0.0
  %2472 = vmatpush2.msra.mxu0 0.0
  %2473 = vmatprep.subr.mxu0 0.0
  %2474 = vmatpush2.msra.mxu0 0.0
  %2475 = vmatprep.subr.mxu0 0.0
  %2476 = vmatpush2.msra.mxu0 0.0
  %2477 = vmatprep.subr.mxu0 0.0
  %2478 = vmatpush2.msra.mxu0 0.0
  %2479 = vmatprep.subr.mxu0 0.0
  %2480 = vmatpush2.msra.mxu0 0.0
  %2481 = vmatprep.subr.mxu0 0.0
  %2482 = vmatpush2.msra.mxu0 0.0
  %2483 = vmatprep.subr.mxu0 0.0
  %2484 = vmatpush2.msra.mxu0 0.0
  %2485 = vmatprep.subr.mxu0 0.0
  %2486 = vmatpush2.msra.mxu0 0.0
  %2487 = vmatprep.subr.mxu0 0.0
  %2488 = vmatpush2.msra.mxu0 0.0
  %2489 = vmatprep.subr.mxu0 0.0
  %2490 = vmatpush2.msra.mxu0 0.0
  %2491 = vmatprep.subr.mxu0 0.0
  %2492 = vmatpush2.msra.mxu0 0.0
  %2493 = vmatprep.subr.mxu0 0.0
  %2494 = vmatpush2.msra.mxu0 0.0
  %2495 = vmatprep.subr.mxu0 0.0
  %2496 = vmatpush2.msra.mxu0 0.0
  %2497 = vmatprep.subr.mxu0 0.0
  %2498 = vmatpush2.msra.mxu0 0.0
  %2499 = vmatprep.mubr.f32.mxu0 0.0
  %2500 = vmatmul.mubr.f32.gmra.mxu0 %v2427
  %v2501 = vpop.f32.mrf.mxu0
  %v2502 = vadd.f32 0.0, %v2501
  %v2503 = vpop.f32.mrf.mxu0
  %2504 = vmatprep.mubr.f32.mxu0 0.0
  %2505 = vmatmul.mubr.f32.gmra.mxu0 %v2430
  %v2506 = vpop.f32.mrf.mxu0
  %v2507 = vadd.f32 0.0, %v2506
  %v2508 = vpop.f32.mrf.mxu0
  %2509 = vmatprep.mubr.f32.mxu0 0.0
  %2510 = vmatmul.mubr.f32.gmra.mxu0 %v2433
  %v2511 = vpop.f32.mrf.mxu0
  %v2512 = vadd.f32 0.0, %v2511
  %v2513 = vpop.f32.mrf.mxu0
  %2514 = vdwg.mxu0
  %v2515 = vadd.f32 %v2324, %v2502
  %v2516 = vadd.f32 %v2329, %v2507
  %v2517 = vadd.f32 %v2334, %v2512
  %s2518 = scalar_lea.vmem %s3, 72
  %v2519 = vld [vmem:[%s2518] sm:$0xff]
  %v2520 = vld [vmem:[%s2518 + $0x8] sm:$0xff]
  %v2521 = vld [vmem:[%s2518 + $0x10] sm:$0x3]
  %2522 = vmatprep.subr.mxu0 0.0
  %2523 = vmatpush1.msra.mxu0 %v1982
  %2524 = vmatprep.subr.mxu0 0.0
  %2525 = vmatpush1.msra.mxu0 %v1981
  %2526 = vmatprep.subr.mxu0 0.0
  %2527 = vmatpush1.msra.mxu0 %v1980
  %2528 = vmatprep.subr.mxu0 0.0
  %2529 = vmatpush1.msra.mxu0 %v1979
  %2530 = vmatprep.subr.mxu0 0.0
  %2531 = vmatpush1.msra.mxu0 %v1978
  %2532 = vmatprep.subr.mxu0 0.0
  %2533 = vmatpush1.msra.mxu0 %v1977
  %2534 = vmatprep.subr.mxu0 0.0
  %2535 = vmatpush1.msra.mxu0 %v1976
  %2536 = vmatprep.subr.mxu0 0.0
  %2537 = vmatpush1.msra.mxu0 %v1975
  %2538 = vmatprep.subr.mxu0 0.0
  %2539 = vmatpush1.msra.mxu0 %v1974
  %2540 = vmatprep.subr.mxu0 0.0
  %2541 = vmatpush1.msra.mxu0 %v1973
  %2542 = vmatprep.subr.mxu0 0.0
  %2543 = vmatpush1.msra.mxu0 %v1972
  %2544 = vmatprep.subr.mxu0 0.0
  %2545 = vmatpush1.msra.mxu0 %v1971
  %2546 = vmatprep.subr.mxu0 0.0
  %2547 = vmatpush1.msra.mxu0 %v1970
  %2548 = vmatprep.subr.mxu0 0.0
  %2549 = vmatpush1.msra.mxu0 %v1969
  %2550 = vmatprep.subr.mxu0 0.0
  %2551 = vmatpush1.msra.mxu0 %v1968
  %2552 = vmatprep.subr.mxu0 0.0
  %2553 = vmatpush1.msra.mxu0 %v1967
  %2554 = vmatprep.subr.mxu0 0.0
  %2555 = vmatpush2.msra.mxu0 0.0
  %2556 = vmatprep.subr.mxu0 0.0
  %2557 = vmatpush2.msra.mxu0 0.0
  %2558 = vmatprep.subr.mxu0 0.0
  %2559 = vmatpush2.msra.mxu0 0.0
  %2560 = vmatprep.subr.mxu0 0.0
  %2561 = vmatpush2.msra.mxu0 0.0
  %2562 = vmatprep.subr.mxu0 0.0
  %2563 = vmatpush2.msra.mxu0 0.0
  %2564 = vmatprep.subr.mxu0 0.0
  %2565 = vmatpush2.msra.mxu0 0.0
  %2566 = vmatprep.subr.mxu0 0.0
  %2567 = vmatpush2.msra.mxu0 0.0
  %2568 = vmatprep.subr.mxu0 0.0
  %2569 = vmatpush2.msra.mxu0 0.0
  %2570 = vmatprep.subr.mxu0 0.0
  %2571 = vmatpush2.msra.mxu0 0.0
  %2572 = vmatprep.subr.mxu0 0.0
  %2573 = vmatpush2.msra.mxu0 0.0
  %2574 = vmatprep.subr.mxu0 0.0
  %2575 = vmatpush2.msra.mxu0 0.0
  %2576 = vmatprep.subr.mxu0 0.0
  %2577 = vmatpush2.msra.mxu0 0.0
  %2578 = vmatprep.subr.mxu0 0.0
  %2579 = vmatpush2.msra.mxu0 0.0
  %2580 = vmatprep.subr.mxu0 0.0
  %2581 = vmatpush2.msra.mxu0 0.0
  %2582 = vmatprep.subr.mxu0 0.0
  %2583 = vmatpush2.msra.mxu0 0.0
  %2584 = vmatprep.subr.mxu0 0.0
  %2585 = vmatpush2.msra.mxu0 0.0
  %2586 = vmatprep.mubr.f32.mxu0 0.0
  %2587 = vmatmul.mubr.f32.gmra.mxu0 %v2519
  %v2588 = vpop.f32.mrf.mxu0
  %v2589 = vadd.f32 0.0, %v2588
  %v2590 = vpop.f32.mrf.mxu0
  %2591 = vmatprep.mubr.f32.mxu0 0.0
  %2592 = vmatmul.mubr.f32.gmra.mxu0 %v2520
  %v2593 = vpop.f32.mrf.mxu0
  %v2594 = vadd.f32 0.0, %v2593
  %v2595 = vpop.f32.mrf.mxu0
  %2596 = vmatprep.mubr.f32.mxu0 0.0
  %2597 = vmatmul.mubr.f32.gmra.mxu0 %v2521
  %v2598 = vpop.f32.mrf.mxu0
  %v2599 = vadd.f32 0.0, %v2598
  %v2600 = vpop.f32.mrf.mxu0
  %2601 = vdwg.mxu0
  %s2602 = scalar_lea.vmem %s4, 96
  %v2603 = vld [vmem:[%s2602] sm:$0xff]
  %v2604 = vld [vmem:[%s2602 + $0x8] sm:$0xff]
  %v2605 = vld [vmem:[%s2602 + $0x10] sm:$0xff]
  %v2606 = vld [vmem:[%s2602 + $0x18] sm:$0xff]
  %v2608 = vsel %vm1807, %v2589, 0
  %v2611 = vsel %vm1807, %v2594, 0
  %v2614 = vsel %vm1807, %v2599, 0
  %2616 = vmatprep.subr.mxu0 0.0
  %2617 = vmatpush1.msra.mxu0 0.0
  %2618 = vmatprep.subr.mxu0 0.0
  %2619 = vmatpush1.msra.mxu0 0.0
  %2620 = vmatprep.subr.mxu0 0.0
  %2621 = vmatpush1.msra.mxu0 0.0
  %2622 = vmatprep.subr.mxu0 0.0
  %2623 = vmatpush1.msra.mxu0 0.0
  %2624 = vmatprep.subr.mxu0 0.0
  %2625 = vmatpush1.msra.mxu0 0.0
  %2626 = vmatprep.subr.mxu0 0.0
  %2627 = vmatpush1.msra.mxu0 0.0
  %2628 = vmatprep.subr.mxu0 0.0
  %2629 = vmatpush1.msra.mxu0 0.0
  %2630 = vmatprep.subr.mxu0 0.0
  %2631 = vmatpush1.msra.mxu0 0.0
  %2632 = vmatprep.subr.mxu0 0.0
  %2633 = vmatpush1.msra.mxu0 0.0
  %2634 = vmatprep.subr.mxu0 0.0
  %2635 = vmatpush1.msra.mxu0 0.0
  %2636 = vmatprep.subr.mxu0 0.0
  %2637 = vmatpush1.msra.mxu0 0.0
  %2638 = vmatprep.subr.mxu0 0.0
  %2639 = vmatpush1.msra.mxu0 0.0
  %2640 = vmatprep.subr.mxu0 0.0
  %2641 = vmatpush1.msra.mxu0 %v2606
  %2642 = vmatprep.subr.mxu0 0.0
  %2643 = vmatpush1.msra.mxu0 %v2605
  %2644 = vmatprep.subr.mxu0 0.0
  %2645 = vmatpush1.msra.mxu0 %v2604
  %2646 = vmatprep.subr.mxu0 0.0
  %2647 = vmatpush1.msra.mxu0 %v2603
  %2648 = vmatprep.subr.mxu0 0.0
  %2649 = vmatpush2.msra.mxu0 0.0
  %2650 = vmatprep.subr.mxu0 0.0
  %2651 = vmatpush2.msra.mxu0 0.0
  %2652 = vmatprep.subr.mxu0 0.0
  %2653 = vmatpush2.msra.mxu0 0.0
  %2654 = vmatprep.subr.mxu0 0.0
  %2655 = vmatpush2.msra.mxu0 0.0
  %2656 = vmatprep.subr.mxu0 0.0
  %2657 = vmatpush2.msra.mxu0 0.0
  %2658 = vmatprep.subr.mxu0 0.0
  %2659 = vmatpush2.msra.mxu0 0.0
  %2660 = vmatprep.subr.mxu0 0.0
  %2661 = vmatpush2.msra.mxu0 0.0
  %2662 = vmatprep.subr.mxu0 0.0
  %2663 = vmatpush2.msra.mxu0 0.0
  %2664 = vmatprep.subr.mxu0 0.0
  %2665 = vmatpush2.msra.mxu0 0.0
  %2666 = vmatprep.subr.mxu0 0.0
  %2667 = vmatpush2.msra.mxu0 0.0
  %2668 = vmatprep.subr.mxu0 0.0
  %2669 = vmatpush2.msra.mxu0 0.0
  %2670 = vmatprep.subr.mxu0 0.0
  %2671 = vmatpush2.msra.mxu0 0.0
  %2672 = vmatprep.subr.mxu0 0.0
  %2673 = vmatpush2.msra.mxu0 0.0
  %2674 = vmatprep.subr.mxu0 0.0
  %2675 = vmatpush2.msra.mxu0 0.0
  %2676 = vmatprep.subr.mxu0 0.0
  %2677 = vmatpush2.msra.mxu0 0.0
  %2678 = vmatprep.subr.mxu0 0.0
  %2679 = vmatpush2.msra.mxu0 0.0
  %2680 = vmatprep.mubr.f32.mxu0 0.0
  %2681 = vmatmul.mubr.f32.gmra.mxu0 %v2608
  %v2682 = vpop.f32.mrf.mxu0
  %v2683 = vadd.f32 0.0, %v2682
  %v2684 = vpop.f32.mrf.mxu0
  %2685 = vmatprep.mubr.f32.mxu0 0.0
  %2686 = vmatmul.mubr.f32.gmra.mxu0 %v2611
  %v2687 = vpop.f32.mrf.mxu0
  %v2688 = vadd.f32 0.0, %v2687
  %v2689 = vpop.f32.mrf.mxu0
  %2690 = vmatprep.mubr.f32.mxu0 0.0
  %2691 = vmatmul.mubr.f32.gmra.mxu0 %v2614
  %v2692 = vpop.f32.mrf.mxu0
  %v2693 = vadd.f32 0.0, %v2692
  %v2694 = vpop.f32.mrf.mxu0
  %2695 = vdwg.mxu0
  %v2696 = vadd.f32 %v2515, %v2683
  %v2697 = vadd.f32 %v2516, %v2688
  %v2698 = vadd.f32 %v2517, %v2693
  %s2699 = scalar_lea.vmem %s3, 96
  %v2700 = vld [vmem:[%s2699] sm:$0xff]
  %v2701 = vld [vmem:[%s2699 + $0x8] sm:$0xff]
  %v2702 = vld [vmem:[%s2699 + $0x10] sm:$0x3]
  %2703 = vmatprep.subr.mxu0 0.0
  %2704 = vmatpush1.msra.mxu0 %v1982
  %2705 = vmatprep.subr.mxu0 0.0
  %2706 = vmatpush1.msra.mxu0 %v1981
  %2707 = vmatprep.subr.mxu0 0.0
  %2708 = vmatpush1.msra.mxu0 %v1980
  %2709 = vmatprep.subr.mxu0 0.0
  %2710 = vmatpush1.msra.mxu0 %v1979
  %2711 = vmatprep.subr.mxu0 0.0
  %2712 = vmatpush1.msra.mxu0 %v1978
  %2713 = vmatprep.subr.mxu0 0.0
  %2714 = vmatpush1.msra.mxu0 %v1977
  %2715 = vmatprep.subr.mxu0 0.0
  %2716 = vmatpush1.msra.mxu0 %v1976
  %2717 = vmatprep.subr.mxu0 0.0
  %2718 = vmatpush1.msra.mxu0 %v1975
  %2719 = vmatprep.subr.mxu0 0.0
  %2720 = vmatpush1.msra.mxu0 %v1974
  %2721 = vmatprep.subr.mxu0 0.0
  %2722 = vmatpush1.msra.mxu0 %v1973
  %2723 = vmatprep.subr.mxu0 0.0
  %2724 = vmatpush1.msra.mxu0 %v1972
  %2725 = vmatprep.subr.mxu0 0.0
  %2726 = vmatpush1.msra.mxu0 %v1971
  %2727 = vmatprep.subr.mxu0 0.0
  %2728 = vmatpush1.msra.mxu0 %v1970
  %2729 = vmatprep.subr.mxu0 0.0
  %2730 = vmatpush1.msra.mxu0 %v1969
  %2731 = vmatprep.subr.mxu0 0.0
  %2732 = vmatpush1.msra.mxu0 %v1968
  %2733 = vmatprep.subr.mxu0 0.0
  %2734 = vmatpush1.msra.mxu0 %v1967
  %2735 = vmatprep.subr.mxu0 0.0
  %2736 = vmatpush2.msra.mxu0 0.0
  %2737 = vmatprep.subr.mxu0 0.0
  %2738 = vmatpush2.msra.mxu0 0.0
  %2739 = vmatprep.subr.mxu0 0.0
  %2740 = vmatpush2.msra.mxu0 0.0
  %2741 = vmatprep.subr.mxu0 0.0
  %2742 = vmatpush2.msra.mxu0 0.0
  %2743 = vmatprep.subr.mxu0 0.0
  %2744 = vmatpush2.msra.mxu0 0.0
  %2745 = vmatprep.subr.mxu0 0.0
  %2746 = vmatpush2.msra.mxu0 0.0
  %2747 = vmatprep.subr.mxu0 0.0
  %2748 = vmatpush2.msra.mxu0 0.0
  %2749 = vmatprep.subr.mxu0 0.0
  %2750 = vmatpush2.msra.mxu0 0.0
  %2751 = vmatprep.subr.mxu0 0.0
  %2752 = vmatpush2.msra.mxu0 0.0
  %2753 = vmatprep.subr.mxu0 0.0
  %2754 = vmatpush2.msra.mxu0 0.0
  %2755 = vmatprep.subr.mxu0 0.0
  %2756 = vmatpush2.msra.mxu0 0.0
  %2757 = vmatprep.subr.mxu0 0.0
  %2758 = vmatpush2.msra.mxu0 0.0
  %2759 = vmatprep.subr.mxu0 0.0
  %2760 = vmatpush2.msra.mxu0 0.0
  %2761 = vmatprep.subr.mxu0 0.0
  %2762 = vmatpush2.msra.mxu0 0.0
  %2763 = vmatprep.subr.mxu0 0.0
  %2764 = vmatpush2.msra.mxu0 0.0
  %2765 = vmatprep.subr.mxu0 0.0
  %2766 = vmatpush2.msra.mxu0 0.0
  %2767 = vmatprep.mubr.f32.mxu0 0.0
  %2768 = vmatmul.mubr.f32.gmra.mxu0 %v2700
  %v2769 = vpop.f32.mrf.mxu0
  %v2770 = vadd.f32 0.0, %v2769
  %v2771 = vpop.f32.mrf.mxu0
  %2772 = vmatprep.mubr.f32.mxu0 0.0
  %2773 = vmatmul.mubr.f32.gmra.mxu0 %v2701
  %v2774 = vpop.f32.mrf.mxu0
  %v2775 = vadd.f32 0.0, %v2774
  %v2776 = vpop.f32.mrf.mxu0
  %2777 = vmatprep.mubr.f32.mxu0 0.0
  %2778 = vmatmul.mubr.f32.gmra.mxu0 %v2702
  %v2779 = vpop.f32.mrf.mxu0
  %v2780 = vadd.f32 0.0, %v2779
  %v2781 = vpop.f32.mrf.mxu0
  %2782 = vdwg.mxu0
  %s2783 = scalar_lea.vmem %s4, 128
  %v2784 = vld [vmem:[%s2783] sm:$0xff]
  %v2785 = vld [vmem:[%s2783 + $0x8] sm:$0xff]
  %v2786 = vld [vmem:[%s2783 + $0x10] sm:$0xff]
  %v2787 = vld [vmem:[%s2783 + $0x18] sm:$0xff]
  %v2789 = vsel %vm1807, %v2770, 0
  %v2792 = vsel %vm1807, %v2775, 0
  %v2795 = vsel %vm1807, %v2780, 0
  %2797 = vmatprep.subr.mxu0 0.0
  %2798 = vmatpush1.msra.mxu0 0.0
  %2799 = vmatprep.subr.mxu0 0.0
  %2800 = vmatpush1.msra.mxu0 0.0
  %2801 = vmatprep.subr.mxu0 0.0
  %2802 = vmatpush1.msra.mxu0 0.0
  %2803 = vmatprep.subr.mxu0 0.0
  %2804 = vmatpush1.msra.mxu0 0.0
  %2805 = vmatprep.subr.mxu0 0.0
  %2806 = vmatpush1.msra.mxu0 0.0
  %2807 = vmatprep.subr.mxu0 0.0
  %2808 = vmatpush1.msra.mxu0 0.0
  %2809 = vmatprep.subr.mxu0 0.0
  %2810 = vmatpush1.msra.mxu0 0.0
  %2811 = vmatprep.subr.mxu0 0.0
  %2812 = vmatpush1.msra.mxu0 0.0
  %2813 = vmatprep.subr.mxu0 0.0
  %2814 = vmatpush1.msra.mxu0 0.0
  %2815 = vmatprep.subr.mxu0 0.0
  %2816 = vmatpush1.msra.mxu0 0.0
  %2817 = vmatprep.subr.mxu0 0.0
  %2818 = vmatpush1.msra.mxu0 0.0
  %2819 = vmatprep.subr.mxu0 0.0
  %2820 = vmatpush1.msra.mxu0 0.0
  %2821 = vmatprep.subr.mxu0 0.0
  %2822 = vmatpush1.msra.mxu0 %v2787
  %2823 = vmatprep.subr.mxu0 0.0
  %2824 = vmatpush1.msra.mxu0 %v2786
  %2825 = vmatprep.subr.mxu0 0.0
  %2826 = vmatpush1.msra.mxu0 %v2785
  %2827 = vmatprep.subr.mxu0 0.0
  %2828 = vmatpush1.msra.mxu0 %v2784
  %2829 = vmatprep.subr.mxu0 0.0
  %2830 = vmatpush2.msra.mxu0 0.0
  %2831 = vmatprep.subr.mxu0 0.0
  %2832 = vmatpush2.msra.mxu0 0.0
  %2833 = vmatprep.subr.mxu0 0.0
  %2834 = vmatpush2.msra.mxu0 0.0
  %2835 = vmatprep.subr.mxu0 0.0
  %2836 = vmatpush2.msra.mxu0 0.0
  %2837 = vmatprep.subr.mxu0 0.0
  %2838 = vmatpush2.msra.mxu0 0.0
  %2839 = vmatprep.subr.mxu0 0.0
  %2840 = vmatpush2.msra.mxu0 0.0
  %2841 = vmatprep.subr.mxu0 0.0
  %2842 = vmatpush2.msra.mxu0 0.0
  %2843 = vmatprep.subr.mxu0 0.0
  %2844 = vmatpush2.msra.mxu0 0.0
  %2845 = vmatprep.subr.mxu0 0.0
  %2846 = vmatpush2.msra.mxu0 0.0
  %2847 = vmatprep.subr.mxu0 0.0
  %2848 = vmatpush2.msra.mxu0 0.0
  %2849 = vmatprep.subr.mxu0 0.0
  %2850 = vmatpush2.msra.mxu0 0.0
  %2851 = vmatprep.subr.mxu0 0.0
  %2852 = vmatpush2.msra.mxu0 0.0
  %2853 = vmatprep.subr.mxu0 0.0
  %2854 = vmatpush2.msra.mxu0 0.0
  %2855 = vmatprep.subr.mxu0 0.0
  %2856 = vmatpush2.msra.mxu0 0.0
  %2857 = vmatprep.subr.mxu0 0.0
  %2858 = vmatpush2.msra.mxu0 0.0
  %2859 = vmatprep.subr.mxu0 0.0
  %2860 = vmatpush2.msra.mxu0 0.0
  %2861 = vmatprep.mubr.f32.mxu0 0.0
  %2862 = vmatmul.mubr.f32.gmra.mxu0 %v2789
  %v2863 = vpop.f32.mrf.mxu0
  %v2864 = vadd.f32 0.0, %v2863
  %v2865 = vpop.f32.mrf.mxu0
  %2866 = vmatprep.mubr.f32.mxu0 0.0
  %2867 = vmatmul.mubr.f32.gmra.mxu0 %v2792
  %v2868 = vpop.f32.mrf.mxu0
  %v2869 = vadd.f32 0.0, %v2868
  %v2870 = vpop.f32.mrf.mxu0
  %2871 = vmatprep.mubr.f32.mxu0 0.0
  %2872 = vmatmul.mubr.f32.gmra.mxu0 %v2795
  %v2873 = vpop.f32.mrf.mxu0
  %v2874 = vadd.f32 0.0, %v2873
  %v2875 = vpop.f32.mrf.mxu0
  %2876 = vdwg.mxu0
  %v2877 = vadd.f32 %v2696, %v2864
  %v2878 = vadd.f32 %v2697, %v2869
  %v2879 = vadd.f32 %v2698, %v2874
  %s2880 = scalar_lea.vmem %s3, 120
  %v2881 = vld [vmem:[%s2880] sm:$0xff]
  %v2882 = vld [vmem:[%s2880 + $0x8] sm:$0xff]
  %v2883 = vld [vmem:[%s2880 + $0x10] sm:$0x3]
  %2884 = vmatprep.subr.mxu0 0.0
  %2885 = vmatpush1.msra.mxu0 %v1982
  %2886 = vmatprep.subr.mxu0 0.0
  %2887 = vmatpush1.msra.mxu0 %v1981
  %2888 = vmatprep.subr.mxu0 0.0
  %2889 = vmatpush1.msra.mxu0 %v1980
  %2890 = vmatprep.subr.mxu0 0.0
  %2891 = vmatpush1.msra.mxu0 %v1979
  %2892 = vmatprep.subr.mxu0 0.0
  %2893 = vmatpush1.msra.mxu0 %v1978
  %2894 = vmatprep.subr.mxu0 0.0
  %2895 = vmatpush1.msra.mxu0 %v1977
  %2896 = vmatprep.subr.mxu0 0.0
  %2897 = vmatpush1.msra.mxu0 %v1976
  %2898 = vmatprep.subr.mxu0 0.0
  %2899 = vmatpush1.msra.mxu0 %v1975
  %2900 = vmatprep.subr.mxu0 0.0
  %2901 = vmatpush1.msra.mxu0 %v1974
  %2902 = vmatprep.subr.mxu0 0.0
  %2903 = vmatpush1.msra.mxu0 %v1973
  %2904 = vmatprep.subr.mxu0 0.0
  %2905 = vmatpush1.msra.mxu0 %v1972
  %2906 = vmatprep.subr.mxu0 0.0
  %2907 = vmatpush1.msra.mxu0 %v1971
  %2908 = vmatprep.subr.mxu0 0.0
  %2909 = vmatpush1.msra.mxu0 %v1970
  %2910 = vmatprep.subr.mxu0 0.0
  %2911 = vmatpush1.msra.mxu0 %v1969
  %2912 = vmatprep.subr.mxu0 0.0
  %2913 = vmatpush1.msra.mxu0 %v1968
  %2914 = vmatprep.subr.mxu0 0.0
  %2915 = vmatpush1.msra.mxu0 %v1967
  %2916 = vmatprep.subr.mxu0 0.0
  %2917 = vmatpush2.msra.mxu0 0.0
  %2918 = vmatprep.subr.mxu0 0.0
  %2919 = vmatpush2.msra.mxu0 0.0
  %2920 = vmatprep.subr.mxu0 0.0
  %2921 = vmatpush2.msra.mxu0 0.0
  %2922 = vmatprep.subr.mxu0 0.0
  %2923 = vmatpush2.msra.mxu0 0.0
  %2924 = vmatprep.subr.mxu0 0.0
  %2925 = vmatpush2.msra.mxu0 0.0
  %2926 = vmatprep.subr.mxu0 0.0
  %2927 = vmatpush2.msra.mxu0 0.0
  %2928 = vmatprep.subr.mxu0 0.0
  %2929 = vmatpush2.msra.mxu0 0.0
  %2930 = vmatprep.subr.mxu0 0.0
  %2931 = vmatpush2.msra.mxu0 0.0
  %2932 = vmatprep.subr.mxu0 0.0
  %2933 = vmatpush2.msra.mxu0 0.0
  %2934 = vmatprep.subr.mxu0 0.0
  %2935 = vmatpush2.msra.mxu0 0.0
  %2936 = vmatprep.subr.mxu0 0.0
  %2937 = vmatpush2.msra.mxu0 0.0
  %2938 = vmatprep.subr.mxu0 0.0
  %2939 = vmatpush2.msra.mxu0 0.0
  %2940 = vmatprep.subr.mxu0 0.0
  %2941 = vmatpush2.msra.mxu0 0.0
  %2942 = vmatprep.subr.mxu0 0.0
  %2943 = vmatpush2.msra.mxu0 0.0
  %2944 = vmatprep.subr.mxu0 0.0
  %2945 = vmatpush2.msra.mxu0 0.0
  %2946 = vmatprep.subr.mxu0 0.0
  %2947 = vmatpush2.msra.mxu0 0.0
  %2948 = vmatprep.mubr.f32.mxu0 0.0
  %2949 = vmatmul.mubr.f32.gmra.mxu0 %v2881
  %v2950 = vpop.f32.mrf.mxu0
  %v2951 = vadd.f32 0.0, %v2950
  %v2952 = vpop.f32.mrf.mxu0
  %2953 = vmatprep.mubr.f32.mxu0 0.0
  %2954 = vmatmul.mubr.f32.gmra.mxu0 %v2882
  %v2955 = vpop.f32.mrf.mxu0
  %v2956 = vadd.f32 0.0, %v2955
  %v2957 = vpop.f32.mrf.mxu0
  %2958 = vmatprep.mubr.f32.mxu0 0.0
  %2959 = vmatmul.mubr.f32.gmra.mxu0 %v2883
  %v2960 = vpop.f32.mrf.mxu0
  %v2961 = vadd.f32 0.0, %v2960
  %v2962 = vpop.f32.mrf.mxu0
  %2963 = vdwg.mxu0
  %s2964 = scalar_lea.vmem %s4, 160
  %v2965 = vld [vmem:[%s2964] sm:$0xff]
  %v2966 = vld [vmem:[%s2964 + $0x8] sm:$0xff]
  %v2967 = vld [vmem:[%s2964 + $0x10] sm:$0xff]
  %v2968 = vld [vmem:[%s2964 + $0x18] sm:$0xff]
  %v2970 = vsel %vm1807, %v2951, 0
  %v2973 = vsel %vm1807, %v2956, 0
  %v2976 = vsel %vm1807, %v2961, 0
  %2978 = vmatprep.subr.mxu0 0.0
  %2979 = vmatpush1.msra.mxu0 0.0
  %2980 = vmatprep.subr.mxu0 0.0
  %2981 = vmatpush1.msra.mxu0 0.0
  %2982 = vmatprep.subr.mxu0 0.0
  %2983 = vmatpush1.msra.mxu0 0.0
  %2984 = vmatprep.subr.mxu0 0.0
  %2985 = vmatpush1.msra.mxu0 0.0
  %2986 = vmatprep.subr.mxu0 0.0
  %2987 = vmatpush1.msra.mxu0 0.0
  %2988 = vmatprep.subr.mxu0 0.0
  %2989 = vmatpush1.msra.mxu0 0.0
  %2990 = vmatprep.subr.mxu0 0.0
  %2991 = vmatpush1.msra.mxu0 0.0
  %2992 = vmatprep.subr.mxu0 0.0
  %2993 = vmatpush1.msra.mxu0 0.0
  %2994 = vmatprep.subr.mxu0 0.0
  %2995 = vmatpush1.msra.mxu0 0.0
  %2996 = vmatprep.subr.mxu0 0.0
  %2997 = vmatpush1.msra.mxu0 0.0
  %2998 = vmatprep.subr.mxu0 0.0
  %2999 = vmatpush1.msra.mxu0 0.0
  %3000 = vmatprep.subr.mxu0 0.0
  %3001 = vmatpush1.msra.mxu0 0.0
  %3002 = vmatprep.subr.mxu0 0.0
  %3003 = vmatpush1.msra.mxu0 %v2968
  %3004 = vmatprep.subr.mxu0 0.0
  %3005 = vmatpush1.msra.mxu0 %v2967
  %3006 = vmatprep.subr.mxu0 0.0
  %3007 = vmatpush1.msra.mxu0 %v2966
  %3008 = vmatprep.subr.mxu0 0.0
  %3009 = vmatpush1.msra.mxu0 %v2965
  %3010 = vmatprep.subr.mxu0 0.0
  %3011 = vmatpush2.msra.mxu0 0.0
  %3012 = vmatprep.subr.mxu0 0.0
  %3013 = vmatpush2.msra.mxu0 0.0
  %3014 = vmatprep.subr.mxu0 0.0
  %3015 = vmatpush2.msra.mxu0 0.0
  %3016 = vmatprep.subr.mxu0 0.0
  %3017 = vmatpush2.msra.mxu0 0.0
  %3018 = vmatprep.subr.mxu0 0.0
  %3019 = vmatpush2.msra.mxu0 0.0
  %3020 = vmatprep.subr.mxu0 0.0
  %3021 = vmatpush2.msra.mxu0 0.0
  %3022 = vmatprep.subr.mxu0 0.0
  %3023 = vmatpush2.msra.mxu0 0.0
  %3024 = vmatprep.subr.mxu0 0.0
  %3025 = vmatpush2.msra.mxu0 0.0
  %3026 = vmatprep.subr.mxu0 0.0
  %3027 = vmatpush2.msra.mxu0 0.0
  %3028 = vmatprep.subr.mxu0 0.0
  %3029 = vmatpush2.msra.mxu0 0.0
  %3030 = vmatprep.subr.mxu0 0.0
  %3031 = vmatpush2.msra.mxu0 0.0
  %3032 = vmatprep.subr.mxu0 0.0
  %3033 = vmatpush2.msra.mxu0 0.0
  %3034 = vmatprep.subr.mxu0 0.0
  %3035 = vmatpush2.msra.mxu0 0.0
  %3036 = vmatprep.subr.mxu0 0.0
  %3037 = vmatpush2.msra.mxu0 0.0
  %3038 = vmatprep.subr.mxu0 0.0
  %3039 = vmatpush2.msra.mxu0 0.0
  %3040 = vmatprep.subr.mxu0 0.0
  %3041 = vmatpush2.msra.mxu0 0.0
  %3042 = vmatprep.mubr.f32.mxu0 0.0
  %3043 = vmatmul.mubr.f32.gmra.mxu0 %v2970
  %v3044 = vpop.f32.mrf.mxu0
  %v3045 = vadd.f32 0.0, %v3044
  %v3046 = vpop.f32.mrf.mxu0
  %3047 = vmatprep.mubr.f32.mxu0 0.0
  %3048 = vmatmul.mubr.f32.gmra.mxu0 %v2973
  %v3049 = vpop.f32.mrf.mxu0
  %v3050 = vadd.f32 0.0, %v3049
  %v3051 = vpop.f32.mrf.mxu0
  %3052 = vmatprep.mubr.f32.mxu0 0.0
  %3053 = vmatmul.mubr.f32.gmra.mxu0 %v2976
  %v3054 = vpop.f32.mrf.mxu0
  %v3055 = vadd.f32 0.0, %v3054
  %v3056 = vpop.f32.mrf.mxu0
  %3057 = vdwg.mxu0
  %v3058 = vadd.f32 %v2877, %v3045
  %v3059 = vadd.f32 %v2878, %v3050
  %v3060 = vadd.f32 %v2879, %v3055
  %s3061 = scalar_lea.vmem %s3, 144
  %v3062 = vld [vmem:[%s3061] sm:$0xff]
  %v3063 = vld [vmem:[%s3061 + $0x8] sm:$0xff]
  %v3064 = vld [vmem:[%s3061 + $0x10] sm:$0x3]
  %3065 = vmatprep.subr.mxu0 0.0
  %3066 = vmatpush1.msra.mxu0 %v1982
  %3067 = vmatprep.subr.mxu0 0.0
  %3068 = vmatpush1.msra.mxu0 %v1981
  %3069 = vmatprep.subr.mxu0 0.0
  %3070 = vmatpush1.msra.mxu0 %v1980
  %3071 = vmatprep.subr.mxu0 0.0
  %3072 = vmatpush1.msra.mxu0 %v1979
  %3073 = vmatprep.subr.mxu0 0.0
  %3074 = vmatpush1.msra.mxu0 %v1978
  %3075 = vmatprep.subr.mxu0 0.0
  %3076 = vmatpush1.msra.mxu0 %v1977
  %3077 = vmatprep.subr.mxu0 0.0
  %3078 = vmatpush1.msra.mxu0 %v1976
  %3079 = vmatprep.subr.mxu0 0.0
  %3080 = vmatpush1.msra.mxu0 %v1975
  %3081 = vmatprep.subr.mxu0 0.0
  %3082 = vmatpush1.msra.mxu0 %v1974
  %3083 = vmatprep.subr.mxu0 0.0
  %3084 = vmatpush1.msra.mxu0 %v1973
  %3085 = vmatprep.subr.mxu0 0.0
  %3086 = vmatpush1.msra.mxu0 %v1972
  %3087 = vmatprep.subr.mxu0 0.0
  %3088 = vmatpush1.msra.mxu0 %v1971
  %3089 = vmatprep.subr.mxu0 0.0
  %3090 = vmatpush1.msra.mxu0 %v1970
  %3091 = vmatprep.subr.mxu0 0.0
  %3092 = vmatpush1.msra.mxu0 %v1969
  %3093 = vmatprep.subr.mxu0 0.0
  %3094 = vmatpush1.msra.mxu0 %v1968
  %3095 = vmatprep.subr.mxu0 0.0
  %3096 = vmatpush1.msra.mxu0 %v1967
  %3097 = vmatprep.subr.mxu0 0.0
  %3098 = vmatpush2.msra.mxu0 0.0
  %3099 = vmatprep.subr.mxu0 0.0
  %3100 = vmatpush2.msra.mxu0 0.0
  %3101 = vmatprep.subr.mxu0 0.0
  %3102 = vmatpush2.msra.mxu0 0.0
  %3103 = vmatprep.subr.mxu0 0.0
  %3104 = vmatpush2.msra.mxu0 0.0
  %3105 = vmatprep.subr.mxu0 0.0
  %3106 = vmatpush2.msra.mxu0 0.0
  %3107 = vmatprep.subr.mxu0 0.0
  %3108 = vmatpush2.msra.mxu0 0.0
  %3109 = vmatprep.subr.mxu0 0.0
  %3110 = vmatpush2.msra.mxu0 0.0
  %3111 = vmatprep.subr.mxu0 0.0
  %3112 = vmatpush2.msra.mxu0 0.0
  %3113 = vmatprep.subr.mxu0 0.0
  %3114 = vmatpush2.msra.mxu0 0.0
  %3115 = vmatprep.subr.mxu0 0.0
  %3116 = vmatpush2.msra.mxu0 0.0
  %3117 = vmatprep.subr.mxu0 0.0
  %3118 = vmatpush2.msra.mxu0 0.0
  %3119 = vmatprep.subr.mxu0 0.0
  %3120 = vmatpush2.msra.mxu0 0.0
  %3121 = vmatprep.subr.mxu0 0.0
  %3122 = vmatpush2.msra.mxu0 0.0
  %3123 = vmatprep.subr.mxu0 0.0
  %3124 = vmatpush2.msra.mxu0 0.0
  %3125 = vmatprep.subr.mxu0 0.0
  %3126 = vmatpush2.msra.mxu0 0.0
  %3127 = vmatprep.subr.mxu0 0.0
  %3128 = vmatpush2.msra.mxu0 0.0
  %3129 = vmatprep.mubr.f32.mxu0 0.0
  %3130 = vmatmul.mubr.f32.gmra.mxu0 %v3062
  %v3131 = vpop.f32.mrf.mxu0
  %v3132 = vadd.f32 0.0, %v3131
  %v3133 = vpop.f32.mrf.mxu0
  %3134 = vmatprep.mubr.f32.mxu0 0.0
  %3135 = vmatmul.mubr.f32.gmra.mxu0 %v3063
  %v3136 = vpop.f32.mrf.mxu0
  %v3137 = vadd.f32 0.0, %v3136
  %v3138 = vpop.f32.mrf.mxu0
  %3139 = vmatprep.mubr.f32.mxu0 0.0
  %3140 = vmatmul.mubr.f32.gmra.mxu0 %v3064
  %v3141 = vpop.f32.mrf.mxu0
  %v3142 = vadd.f32 0.0, %v3141
  %v3143 = vpop.f32.mrf.mxu0
  %3144 = vdwg.mxu0
  %s3145 = scalar_lea.vmem %s4, 192
  %v3146 = vld [vmem:[%s3145] sm:$0xff]
  %v3147 = vld [vmem:[%s3145 + $0x8] sm:$0xff]
  %v3148 = vld [vmem:[%s3145 + $0x10] sm:$0xff]
  %v3149 = vld [vmem:[%s3145 + $0x18] sm:$0xff]
  %v3151 = vsel %vm1807, %v3132, 0
  %v3154 = vsel %vm1807, %v3137, 0
  %v3157 = vsel %vm1807, %v3142, 0
  %3159 = vmatprep.subr.mxu0 0.0
  %3160 = vmatpush1.msra.mxu0 0.0
  %3161 = vmatprep.subr.mxu0 0.0
  %3162 = vmatpush1.msra.mxu0 0.0
  %3163 = vmatprep.subr.mxu0 0.0
  %3164 = vmatpush1.msra.mxu0 0.0
  %3165 = vmatprep.subr.mxu0 0.0
  %3166 = vmatpush1.msra.mxu0 0.0
  %3167 = vmatprep.subr.mxu0 0.0
  %3168 = vmatpush1.msra.mxu0 0.0
  %3169 = vmatprep.subr.mxu0 0.0
  %3170 = vmatpush1.msra.mxu0 0.0
  %3171 = vmatprep.subr.mxu0 0.0
  %3172 = vmatpush1.msra.mxu0 0.0
  %3173 = vmatprep.subr.mxu0 0.0
  %3174 = vmatpush1.msra.mxu0 0.0
  %3175 = vmatprep.subr.mxu0 0.0
  %3176 = vmatpush1.msra.mxu0 0.0
  %3177 = vmatprep.subr.mxu0 0.0
  %3178 = vmatpush1.msra.mxu0 0.0
  %3179 = vmatprep.subr.mxu0 0.0
  %3180 = vmatpush1.msra.mxu0 0.0
  %3181 = vmatprep.subr.mxu0 0.0
  %3182 = vmatpush1.msra.mxu0 0.0
  %3183 = vmatprep.subr.mxu0 0.0
  %3184 = vmatpush1.msra.mxu0 %v3149
  %3185 = vmatprep.subr.mxu0 0.0
  %3186 = vmatpush1.msra.mxu0 %v3148
  %3187 = vmatprep.subr.mxu0 0.0
  %3188 = vmatpush1.msra.mxu0 %v3147
  %3189 = vmatprep.subr.mxu0 0.0
  %3190 = vmatpush1.msra.mxu0 %v3146
  %3191 = vmatprep.subr.mxu0 0.0
  %3192 = vmatpush2.msra.mxu0 0.0
  %3193 = vmatprep.subr.mxu0 0.0
  %3194 = vmatpush2.msra.mxu0 0.0
  %3195 = vmatprep.subr.mxu0 0.0
  %3196 = vmatpush2.msra.mxu0 0.0
  %3197 = vmatprep.subr.mxu0 0.0
  %3198 = vmatpush2.msra.mxu0 0.0
  %3199 = vmatprep.subr.mxu0 0.0
  %3200 = vmatpush2.msra.mxu0 0.0
  %3201 = vmatprep.subr.mxu0 0.0
  %3202 = vmatpush2.msra.mxu0 0.0
  %3203 = vmatprep.subr.mxu0 0.0
  %3204 = vmatpush2.msra.mxu0 0.0
  %3205 = vmatprep.subr.mxu0 0.0
  %3206 = vmatpush2.msra.mxu0 0.0
  %3207 = vmatprep.subr.mxu0 0.0
  %3208 = vmatpush2.msra.mxu0 0.0
  %3209 = vmatprep.subr.mxu0 0.0
  %3210 = vmatpush2.msra.mxu0 0.0
  %3211 = vmatprep.subr.mxu0 0.0
  %3212 = vmatpush2.msra.mxu0 0.0
  %3213 = vmatprep.subr.mxu0 0.0
  %3214 = vmatpush2.msra.mxu0 0.0
  %3215 = vmatprep.subr.mxu0 0.0
  %3216 = vmatpush2.msra.mxu0 0.0
  %3217 = vmatprep.subr.mxu0 0.0
  %3218 = vmatpush2.msra.mxu0 0.0
  %3219 = vmatprep.subr.mxu0 0.0
  %3220 = vmatpush2.msra.mxu0 0.0
  %3221 = vmatprep.subr.mxu0 0.0
  %3222 = vmatpush2.msra.mxu0 0.0
  %3223 = vmatprep.mubr.f32.mxu0 0.0
  %3224 = vmatmul.mubr.f32.gmra.mxu0 %v3151
  %v3225 = vpop.f32.mrf.mxu0
  %v3226 = vadd.f32 0.0, %v3225
  %v3227 = vpop.f32.mrf.mxu0
  %3228 = vmatprep.mubr.f32.mxu0 0.0
  %3229 = vmatmul.mubr.f32.gmra.mxu0 %v3154
  %v3230 = vpop.f32.mrf.mxu0
  %v3231 = vadd.f32 0.0, %v3230
  %v3232 = vpop.f32.mrf.mxu0
  %3233 = vmatprep.mubr.f32.mxu0 0.0
  %3234 = vmatmul.mubr.f32.gmra.mxu0 %v3157
  %v3235 = vpop.f32.mrf.mxu0
  %v3236 = vadd.f32 0.0, %v3235
  %v3237 = vpop.f32.mrf.mxu0
  %3238 = vdwg.mxu0
  %v3239 = vadd.f32 %v3058, %v3226
  %v3240 = vadd.f32 %v3059, %v3231
  %v3241 = vadd.f32 %v3060, %v3236
  %s3242 = scalar_lea.vmem %s3, 168
  %v3243 = vld [vmem:[%s3242] sm:$0xff]
  %v3244 = vld [vmem:[%s3242 + $0x8] sm:$0xff]
  %v3245 = vld [vmem:[%s3242 + $0x10] sm:$0x3]
  %3246 = vmatprep.subr.mxu0 0.0
  %3247 = vmatpush1.msra.mxu0 %v1982
  %3248 = vmatprep.subr.mxu0 0.0
  %3249 = vmatpush1.msra.mxu0 %v1981
  %3250 = vmatprep.subr.mxu0 0.0
  %3251 = vmatpush1.msra.mxu0 %v1980
  %3252 = vmatprep.subr.mxu0 0.0
  %3253 = vmatpush1.msra.mxu0 %v1979
  %3254 = vmatprep.subr.mxu0 0.0
  %3255 = vmatpush1.msra.mxu0 %v1978
  %3256 = vmatprep.subr.mxu0 0.0
  %3257 = vmatpush1.msra.mxu0 %v1977
  %3258 = vmatprep.subr.mxu0 0.0
  %3259 = vmatpush1.msra.mxu0 %v1976
  %3260 = vmatprep.subr.mxu0 0.0
  %3261 = vmatpush1.msra.mxu0 %v1975
  %3262 = vmatprep.subr.mxu0 0.0
  %3263 = vmatpush1.msra.mxu0 %v1974
  %3264 = vmatprep.subr.mxu0 0.0
  %3265 = vmatpush1.msra.mxu0 %v1973
  %3266 = vmatprep.subr.mxu0 0.0
  %3267 = vmatpush1.msra.mxu0 %v1972
  %3268 = vmatprep.subr.mxu0 0.0
  %3269 = vmatpush1.msra.mxu0 %v1971
  %3270 = vmatprep.subr.mxu0 0.0
  %3271 = vmatpush1.msra.mxu0 %v1970
  %3272 = vmatprep.subr.mxu0 0.0
  %3273 = vmatpush1.msra.mxu0 %v1969
  %3274 = vmatprep.subr.mxu0 0.0
  %3275 = vmatpush1.msra.mxu0 %v1968
  %3276 = vmatprep.subr.mxu0 0.0
  %3277 = vmatpush1.msra.mxu0 %v1967
  %3278 = vmatprep.subr.mxu0 0.0
  %3279 = vmatpush2.msra.mxu0 0.0
  %3280 = vmatprep.subr.mxu0 0.0
  %3281 = vmatpush2.msra.mxu0 0.0
  %3282 = vmatprep.subr.mxu0 0.0
  %3283 = vmatpush2.msra.mxu0 0.0
  %3284 = vmatprep.subr.mxu0 0.0
  %3285 = vmatpush2.msra.mxu0 0.0
  %3286 = vmatprep.subr.mxu0 0.0
  %3287 = vmatpush2.msra.mxu0 0.0
  %3288 = vmatprep.subr.mxu0 0.0
  %3289 = vmatpush2.msra.mxu0 0.0
  %3290 = vmatprep.subr.mxu0 0.0
  %3291 = vmatpush2.msra.mxu0 0.0
  %3292 = vmatprep.subr.mxu0 0.0
  %3293 = vmatpush2.msra.mxu0 0.0
  %3294 = vmatprep.subr.mxu0 0.0
  %3295 = vmatpush2.msra.mxu0 0.0
  %3296 = vmatprep.subr.mxu0 0.0
  %3297 = vmatpush2.msra.mxu0 0.0
  %3298 = vmatprep.subr.mxu0 0.0
  %3299 = vmatpush2.msra.mxu0 0.0
  %3300 = vmatprep.subr.mxu0 0.0
  %3301 = vmatpush2.msra.mxu0 0.0
  %3302 = vmatprep.subr.mxu0 0.0
  %3303 = vmatpush2.msra.mxu0 0.0
  %3304 = vmatprep.subr.mxu0 0.0
  %3305 = vmatpush2.msra.mxu0 0.0
  %3306 = vmatprep.subr.mxu0 0.0
  %3307 = vmatpush2.msra.mxu0 0.0
  %3308 = vmatprep.subr.mxu0 0.0
  %3309 = vmatpush2.msra.mxu0 0.0
  %3310 = vmatprep.mubr.f32.mxu0 0.0
  %3311 = vmatmul.mubr.f32.gmra.mxu0 %v3243
  %v3312 = vpop.f32.mrf.mxu0
  %v3313 = vadd.f32 0.0, %v3312
  %v3314 = vpop.f32.mrf.mxu0
  %3315 = vmatprep.mubr.f32.mxu0 0.0
  %3316 = vmatmul.mubr.f32.gmra.mxu0 %v3244
  %v3317 = vpop.f32.mrf.mxu0
  %v3318 = vadd.f32 0.0, %v3317
  %v3319 = vpop.f32.mrf.mxu0
  %3320 = vmatprep.mubr.f32.mxu0 0.0
  %3321 = vmatmul.mubr.f32.gmra.mxu0 %v3245
  %v3322 = vpop.f32.mrf.mxu0
  %v3323 = vadd.f32 0.0, %v3322
  %v3324 = vpop.f32.mrf.mxu0
  %3325 = vdwg.mxu0
  %s3326 = scalar_lea.vmem %s4, 224
  %v3327 = vld [vmem:[%s3326] sm:$0xff]
  %v3328 = vld [vmem:[%s3326 + $0x8] sm:$0xff]
  %v3329 = vld [vmem:[%s3326 + $0x10] sm:$0xff]
  %v3330 = vld [vmem:[%s3326 + $0x18] sm:$0xff]
  %v3332 = vsel %vm1807, %v3313, 0
  %v3335 = vsel %vm1807, %v3318, 0
  %v3338 = vsel %vm1807, %v3323, 0
  %3340 = vmatprep.subr.mxu0 0.0
  %3341 = vmatpush1.msra.mxu0 0.0
  %3342 = vmatprep.subr.mxu0 0.0
  %3343 = vmatpush1.msra.mxu0 0.0
  %3344 = vmatprep.subr.mxu0 0.0
  %3345 = vmatpush1.msra.mxu0 0.0
  %3346 = vmatprep.subr.mxu0 0.0
  %3347 = vmatpush1.msra.mxu0 0.0
  %3348 = vmatprep.subr.mxu0 0.0
  %3349 = vmatpush1.msra.mxu0 0.0
  %3350 = vmatprep.subr.mxu0 0.0
  %3351 = vmatpush1.msra.mxu0 0.0
  %3352 = vmatprep.subr.mxu0 0.0
  %3353 = vmatpush1.msra.mxu0 0.0
  %3354 = vmatprep.subr.mxu0 0.0
  %3355 = vmatpush1.msra.mxu0 0.0
  %3356 = vmatprep.subr.mxu0 0.0
  %3357 = vmatpush1.msra.mxu0 0.0
  %3358 = vmatprep.subr.mxu0 0.0
  %3359 = vmatpush1.msra.mxu0 0.0
  %3360 = vmatprep.subr.mxu0 0.0
  %3361 = vmatpush1.msra.mxu0 0.0
  %3362 = vmatprep.subr.mxu0 0.0
  %3363 = vmatpush1.msra.mxu0 0.0
  %3364 = vmatprep.subr.mxu0 0.0
  %3365 = vmatpush1.msra.mxu0 %v3330
  %3366 = vmatprep.subr.mxu0 0.0
  %3367 = vmatpush1.msra.mxu0 %v3329
  %3368 = vmatprep.subr.mxu0 0.0
  %3369 = vmatpush1.msra.mxu0 %v3328
  %3370 = vmatprep.subr.mxu0 0.0
  %3371 = vmatpush1.msra.mxu0 %v3327
  %3372 = vmatprep.subr.mxu0 0.0
  %3373 = vmatpush2.msra.mxu0 0.0
  %3374 = vmatprep.subr.mxu0 0.0
  %3375 = vmatpush2.msra.mxu0 0.0
  %3376 = vmatprep.subr.mxu0 0.0
  %3377 = vmatpush2.msra.mxu0 0.0
  %3378 = vmatprep.subr.mxu0 0.0
  %3379 = vmatpush2.msra.mxu0 0.0
  %3380 = vmatprep.subr.mxu0 0.0
  %3381 = vmatpush2.msra.mxu0 0.0
  %3382 = vmatprep.subr.mxu0 0.0
  %3383 = vmatpush2.msra.mxu0 0.0
  %3384 = vmatprep.subr.mxu0 0.0
  %3385 = vmatpush2.msra.mxu0 0.0
  %3386 = vmatprep.subr.mxu0 0.0
  %3387 = vmatpush2.msra.mxu0 0.0
  %3388 = vmatprep.subr.mxu0 0.0
  %3389 = vmatpush2.msra.mxu0 0.0
  %3390 = vmatprep.subr.mxu0 0.0
  %3391 = vmatpush2.msra.mxu0 0.0
  %3392 = vmatprep.subr.mxu0 0.0
  %3393 = vmatpush2.msra.mxu0 0.0
  %3394 = vmatprep.subr.mxu0 0.0
  %3395 = vmatpush2.msra.mxu0 0.0
  %3396 = vmatprep.subr.mxu0 0.0
  %3397 = vmatpush2.msra.mxu0 0.0
  %3398 = vmatprep.subr.mxu0 0.0
  %3399 = vmatpush2.msra.mxu0 0.0
  %3400 = vmatprep.subr.mxu0 0.0
  %3401 = vmatpush2.msra.mxu0 0.0
  %3402 = vmatprep.subr.mxu0 0.0
  %3403 = vmatpush2.msra.mxu0 0.0
  %3404 = vmatprep.mubr.f32.mxu0 0.0
  %3405 = vmatmul.mubr.f32.gmra.mxu0 %v3332
  %v3406 = vpop.f32.mrf.mxu0
  %v3407 = vadd.f32 0.0, %v3406
  %v3408 = vpop.f32.mrf.mxu0
  %3409 = vmatprep.mubr.f32.mxu0 0.0
  %3410 = vmatmul.mubr.f32.gmra.mxu0 %v3335
  %v3411 = vpop.f32.mrf.mxu0
  %v3412 = vadd.f32 0.0, %v3411
  %v3413 = vpop.f32.mrf.mxu0
  %3414 = vmatprep.mubr.f32.mxu0 0.0
  %3415 = vmatmul.mubr.f32.gmra.mxu0 %v3338
  %v3416 = vpop.f32.mrf.mxu0
  %v3417 = vadd.f32 0.0, %v3416
  %v3418 = vpop.f32.mrf.mxu0
  %3419 = vdwg.mxu0
  %v3420 = vadd.f32 %v3239, %v3407
  %v3421 = vadd.f32 %v3240, %v3412
  %v3422 = vadd.f32 %v3241, %v3417
  %s3423 = scalar_lea.vmem %s3, 192
  %v3424 = vld [vmem:[%s3423] sm:$0xff]
  %v3425 = vld [vmem:[%s3423 + $0x8] sm:$0xff]
  %v3426 = vld [vmem:[%s3423 + $0x10] sm:$0x3]
  %3427 = vmatprep.subr.mxu0 0.0
  %3428 = vmatpush1.msra.mxu0 %v1982
  %3429 = vmatprep.subr.mxu0 0.0
  %3430 = vmatpush1.msra.mxu0 %v1981
  %3431 = vmatprep.subr.mxu0 0.0
  %3432 = vmatpush1.msra.mxu0 %v1980
  %3433 = vmatprep.subr.mxu0 0.0
  %3434 = vmatpush1.msra.mxu0 %v1979
  %3435 = vmatprep.subr.mxu0 0.0
  %3436 = vmatpush1.msra.mxu0 %v1978
  %3437 = vmatprep.subr.mxu0 0.0
  %3438 = vmatpush1.msra.mxu0 %v1977
  %3439 = vmatprep.subr.mxu0 0.0
  %3440 = vmatpush1.msra.mxu0 %v1976
  %3441 = vmatprep.subr.mxu0 0.0
  %3442 = vmatpush1.msra.mxu0 %v1975
  %3443 = vmatprep.subr.mxu0 0.0
  %3444 = vmatpush1.msra.mxu0 %v1974
  %3445 = vmatprep.subr.mxu0 0.0
  %3446 = vmatpush1.msra.mxu0 %v1973
  %3447 = vmatprep.subr.mxu0 0.0
  %3448 = vmatpush1.msra.mxu0 %v1972
  %3449 = vmatprep.subr.mxu0 0.0
  %3450 = vmatpush1.msra.mxu0 %v1971
  %3451 = vmatprep.subr.mxu0 0.0
  %3452 = vmatpush1.msra.mxu0 %v1970
  %3453 = vmatprep.subr.mxu0 0.0
  %3454 = vmatpush1.msra.mxu0 %v1969
  %3455 = vmatprep.subr.mxu0 0.0
  %3456 = vmatpush1.msra.mxu0 %v1968
  %3457 = vmatprep.subr.mxu0 0.0
  %3458 = vmatpush1.msra.mxu0 %v1967
  %3459 = vmatprep.subr.mxu0 0.0
  %3460 = vmatpush2.msra.mxu0 0.0
  %3461 = vmatprep.subr.mxu0 0.0
  %3462 = vmatpush2.msra.mxu0 0.0
  %3463 = vmatprep.subr.mxu0 0.0
  %3464 = vmatpush2.msra.mxu0 0.0
  %3465 = vmatprep.subr.mxu0 0.0
  %3466 = vmatpush2.msra.mxu0 0.0
  %3467 = vmatprep.subr.mxu0 0.0
  %3468 = vmatpush2.msra.mxu0 0.0
  %3469 = vmatprep.subr.mxu0 0.0
  %3470 = vmatpush2.msra.mxu0 0.0
  %3471 = vmatprep.subr.mxu0 0.0
  %3472 = vmatpush2.msra.mxu0 0.0
  %3473 = vmatprep.subr.mxu0 0.0
  %3474 = vmatpush2.msra.mxu0 0.0
  %3475 = vmatprep.subr.mxu0 0.0
  %3476 = vmatpush2.msra.mxu0 0.0
  %3477 = vmatprep.subr.mxu0 0.0
  %3478 = vmatpush2.msra.mxu0 0.0
  %3479 = vmatprep.subr.mxu0 0.0
  %3480 = vmatpush2.msra.mxu0 0.0
  %3481 = vmatprep.subr.mxu0 0.0
  %3482 = vmatpush2.msra.mxu0 0.0
  %3483 = vmatprep.subr.mxu0 0.0
  %3484 = vmatpush2.msra.mxu0 0.0
  %3485 = vmatprep.subr.mxu0 0.0
  %3486 = vmatpush2.msra.mxu0 0.0
  %3487 = vmatprep.subr.mxu0 0.0
  %3488 = vmatpush2.msra.mxu0 0.0
  %3489 = vmatprep.subr.mxu0 0.0
  %3490 = vmatpush2.msra.mxu0 0.0
  %3491 = vmatprep.mubr.f32.mxu0 0.0
  %3492 = vmatmul.mubr.f32.gmra.mxu0 %v3424
  %v3493 = vpop.f32.mrf.mxu0
  %v3494 = vadd.f32 0.0, %v3493
  %v3495 = vpop.f32.mrf.mxu0
  %3496 = vmatprep.mubr.f32.mxu0 0.0
  %3497 = vmatmul.mubr.f32.gmra.mxu0 %v3425
  %v3498 = vpop.f32.mrf.mxu0
  %v3499 = vadd.f32 0.0, %v3498
  %v3500 = vpop.f32.mrf.mxu0
  %3501 = vmatprep.mubr.f32.mxu0 0.0
  %3502 = vmatmul.mubr.f32.gmra.mxu0 %v3426
  %v3503 = vpop.f32.mrf.mxu0
  %v3504 = vadd.f32 0.0, %v3503
  %v3505 = vpop.f32.mrf.mxu0
  %3506 = vdwg.mxu0
  %s3507 = scalar_lea.vmem %s4, 256
  %v3508 = vld [vmem:[%s3507] sm:$0xff]
  %v3509 = vld [vmem:[%s3507 + $0x8] sm:$0xff]
  %v3510 = vld [vmem:[%s3507 + $0x10] sm:$0xff]
  %v3511 = vld [vmem:[%s3507 + $0x18] sm:$0xff]
  %v3513 = vsel %vm1807, %v3494, 0
  %v3516 = vsel %vm1807, %v3499, 0
  %v3519 = vsel %vm1807, %v3504, 0
  %3521 = vmatprep.subr.mxu0 0.0
  %3522 = vmatpush1.msra.mxu0 0.0
  %3523 = vmatprep.subr.mxu0 0.0
  %3524 = vmatpush1.msra.mxu0 0.0
  %3525 = vmatprep.subr.mxu0 0.0
  %3526 = vmatpush1.msra.mxu0 0.0
  %3527 = vmatprep.subr.mxu0 0.0
  %3528 = vmatpush1.msra.mxu0 0.0
  %3529 = vmatprep.subr.mxu0 0.0
  %3530 = vmatpush1.msra.mxu0 0.0
  %3531 = vmatprep.subr.mxu0 0.0
  %3532 = vmatpush1.msra.mxu0 0.0
  %3533 = vmatprep.subr.mxu0 0.0
  %3534 = vmatpush1.msra.mxu0 0.0
  %3535 = vmatprep.subr.mxu0 0.0
  %3536 = vmatpush1.msra.mxu0 0.0
  %3537 = vmatprep.subr.mxu0 0.0
  %3538 = vmatpush1.msra.mxu0 0.0
  %3539 = vmatprep.subr.mxu0 0.0
  %3540 = vmatpush1.msra.mxu0 0.0
  %3541 = vmatprep.subr.mxu0 0.0
  %3542 = vmatpush1.msra.mxu0 0.0
  %3543 = vmatprep.subr.mxu0 0.0
  %3544 = vmatpush1.msra.mxu0 0.0
  %3545 = vmatprep.subr.mxu0 0.0
  %3546 = vmatpush1.msra.mxu0 %v3511
  %3547 = vmatprep.subr.mxu0 0.0
  %3548 = vmatpush1.msra.mxu0 %v3510
  %3549 = vmatprep.subr.mxu0 0.0
  %3550 = vmatpush1.msra.mxu0 %v3509
  %3551 = vmatprep.subr.mxu0 0.0
  %3552 = vmatpush1.msra.mxu0 %v3508
  %3553 = vmatprep.subr.mxu0 0.0
  %3554 = vmatpush2.msra.mxu0 0.0
  %3555 = vmatprep.subr.mxu0 0.0
  %3556 = vmatpush2.msra.mxu0 0.0
  %3557 = vmatprep.subr.mxu0 0.0
  %3558 = vmatpush2.msra.mxu0 0.0
  %3559 = vmatprep.subr.mxu0 0.0
  %3560 = vmatpush2.msra.mxu0 0.0
  %3561 = vmatprep.subr.mxu0 0.0
  %3562 = vmatpush2.msra.mxu0 0.0
  %3563 = vmatprep.subr.mxu0 0.0
  %3564 = vmatpush2.msra.mxu0 0.0
  %3565 = vmatprep.subr.mxu0 0.0
  %3566 = vmatpush2.msra.mxu0 0.0
  %3567 = vmatprep.subr.mxu0 0.0
  %3568 = vmatpush2.msra.mxu0 0.0
  %3569 = vmatprep.subr.mxu0 0.0
  %3570 = vmatpush2.msra.mxu0 0.0
  %3571 = vmatprep.subr.mxu0 0.0
  %3572 = vmatpush2.msra.mxu0 0.0
  %3573 = vmatprep.subr.mxu0 0.0
  %3574 = vmatpush2.msra.mxu0 0.0
  %3575 = vmatprep.subr.mxu0 0.0
  %3576 = vmatpush2.msra.mxu0 0.0
  %3577 = vmatprep.subr.mxu0 0.0
  %3578 = vmatpush2.msra.mxu0 0.0
  %3579 = vmatprep.subr.mxu0 0.0
  %3580 = vmatpush2.msra.mxu0 0.0
  %3581 = vmatprep.subr.mxu0 0.0
  %3582 = vmatpush2.msra.mxu0 0.0
  %3583 = vmatprep.subr.mxu0 0.0
  %3584 = vmatpush2.msra.mxu0 0.0
  %3585 = vmatprep.mubr.f32.mxu0 0.0
  %3586 = vmatmul.mubr.f32.gmra.mxu0 %v3513
  %v3587 = vpop.f32.mrf.mxu0
  %v3588 = vadd.f32 0.0, %v3587
  %v3589 = vpop.f32.mrf.mxu0
  %3590 = vmatprep.mubr.f32.mxu0 0.0
  %3591 = vmatmul.mubr.f32.gmra.mxu0 %v3516
  %v3592 = vpop.f32.mrf.mxu0
  %v3593 = vadd.f32 0.0, %v3592
  %v3594 = vpop.f32.mrf.mxu0
  %3595 = vmatprep.mubr.f32.mxu0 0.0
  %3596 = vmatmul.mubr.f32.gmra.mxu0 %v3519
  %v3597 = vpop.f32.mrf.mxu0
  %v3598 = vadd.f32 0.0, %v3597
  %v3599 = vpop.f32.mrf.mxu0
  %3600 = vdwg.mxu0
  %v3601 = vadd.f32 %v3420, %v3588
  %v3602 = vadd.f32 %v3421, %v3593
  %v3603 = vadd.f32 %v3422, %v3598
  %s3604 = scalar_lea.vmem %s3, 216
  %v3605 = vld [vmem:[%s3604] sm:$0xff]
  %v3606 = vld [vmem:[%s3604 + $0x8] sm:$0xff]
  %v3607 = vld [vmem:[%s3604 + $0x10] sm:$0x3]
  %3608 = vmatprep.subr.mxu0 0.0
  %3609 = vmatpush1.msra.mxu0 %v1982
  %3610 = vmatprep.subr.mxu0 0.0
  %3611 = vmatpush1.msra.mxu0 %v1981
  %3612 = vmatprep.subr.mxu0 0.0
  %3613 = vmatpush1.msra.mxu0 %v1980
  %3614 = vmatprep.subr.mxu0 0.0
  %3615 = vmatpush1.msra.mxu0 %v1979
  %3616 = vmatprep.subr.mxu0 0.0
  %3617 = vmatpush1.msra.mxu0 %v1978
  %3618 = vmatprep.subr.mxu0 0.0
  %3619 = vmatpush1.msra.mxu0 %v1977
  %3620 = vmatprep.subr.mxu0 0.0
  %3621 = vmatpush1.msra.mxu0 %v1976
  %3622 = vmatprep.subr.mxu0 0.0
  %3623 = vmatpush1.msra.mxu0 %v1975
  %3624 = vmatprep.subr.mxu0 0.0
  %3625 = vmatpush1.msra.mxu0 %v1974
  %3626 = vmatprep.subr.mxu0 0.0
  %3627 = vmatpush1.msra.mxu0 %v1973
  %3628 = vmatprep.subr.mxu0 0.0
  %3629 = vmatpush1.msra.mxu0 %v1972
  %3630 = vmatprep.subr.mxu0 0.0
  %3631 = vmatpush1.msra.mxu0 %v1971
  %3632 = vmatprep.subr.mxu0 0.0
  %3633 = vmatpush1.msra.mxu0 %v1970
  %3634 = vmatprep.subr.mxu0 0.0
  %3635 = vmatpush1.msra.mxu0 %v1969
  %3636 = vmatprep.subr.mxu0 0.0
  %3637 = vmatpush1.msra.mxu0 %v1968
  %3638 = vmatprep.subr.mxu0 0.0
  %3639 = vmatpush1.msra.mxu0 %v1967
  %3640 = vmatprep.subr.mxu0 0.0
  %3641 = vmatpush2.msra.mxu0 0.0
  %3642 = vmatprep.subr.mxu0 0.0
  %3643 = vmatpush2.msra.mxu0 0.0
  %3644 = vmatprep.subr.mxu0 0.0
  %3645 = vmatpush2.msra.mxu0 0.0
  %3646 = vmatprep.subr.mxu0 0.0
  %3647 = vmatpush2.msra.mxu0 0.0
  %3648 = vmatprep.subr.mxu0 0.0
  %3649 = vmatpush2.msra.mxu0 0.0
  %3650 = vmatprep.subr.mxu0 0.0
  %3651 = vmatpush2.msra.mxu0 0.0
  %3652 = vmatprep.subr.mxu0 0.0
  %3653 = vmatpush2.msra.mxu0 0.0
  %3654 = vmatprep.subr.mxu0 0.0
  %3655 = vmatpush2.msra.mxu0 0.0
  %3656 = vmatprep.subr.mxu0 0.0
  %3657 = vmatpush2.msra.mxu0 0.0
  %3658 = vmatprep.subr.mxu0 0.0
  %3659 = vmatpush2.msra.mxu0 0.0
  %3660 = vmatprep.subr.mxu0 0.0
  %3661 = vmatpush2.msra.mxu0 0.0
  %3662 = vmatprep.subr.mxu0 0.0
  %3663 = vmatpush2.msra.mxu0 0.0
  %3664 = vmatprep.subr.mxu0 0.0
  %3665 = vmatpush2.msra.mxu0 0.0
  %3666 = vmatprep.subr.mxu0 0.0
  %3667 = vmatpush2.msra.mxu0 0.0
  %3668 = vmatprep.subr.mxu0 0.0
  %3669 = vmatpush2.msra.mxu0 0.0
  %3670 = vmatprep.subr.mxu0 0.0
  %3671 = vmatpush2.msra.mxu0 0.0
  %3672 = vmatprep.mubr.f32.mxu0 0.0
  %3673 = vmatmul.mubr.f32.gmra.mxu0 %v3605
  %v3674 = vpop.f32.mrf.mxu0
  %v3675 = vadd.f32 0.0, %v3674
  %v3676 = vpop.f32.mrf.mxu0
  %3677 = vmatprep.mubr.f32.mxu0 0.0
  %3678 = vmatmul.mubr.f32.gmra.mxu0 %v3606
  %v3679 = vpop.f32.mrf.mxu0
  %v3680 = vadd.f32 0.0, %v3679
  %v3681 = vpop.f32.mrf.mxu0
  %3682 = vmatprep.mubr.f32.mxu0 0.0
  %3683 = vmatmul.mubr.f32.gmra.mxu0 %v3607
  %v3684 = vpop.f32.mrf.mxu0
  %v3685 = vadd.f32 0.0, %v3684
  %v3686 = vpop.f32.mrf.mxu0
  %3687 = vdwg.mxu0
  %s3688 = scalar_lea.vmem %s4, 288
  %v3689 = vld [vmem:[%s3688] sm:$0xff]
  %v3690 = vld [vmem:[%s3688 + $0x8] sm:$0xff]
  %v3691 = vld [vmem:[%s3688 + $0x10] sm:$0xff]
  %v3692 = vld [vmem:[%s3688 + $0x18] sm:$0xff]
  %v3694 = vsel %vm1807, %v3675, 0
  %v3697 = vsel %vm1807, %v3680, 0
  %v3700 = vsel %vm1807, %v3685, 0
  %3702 = vmatprep.subr.mxu0 0.0
  %3703 = vmatpush1.msra.mxu0 0.0
  %3704 = vmatprep.subr.mxu0 0.0
  %3705 = vmatpush1.msra.mxu0 0.0
  %3706 = vmatprep.subr.mxu0 0.0
  %3707 = vmatpush1.msra.mxu0 0.0
  %3708 = vmatprep.subr.mxu0 0.0
  %3709 = vmatpush1.msra.mxu0 0.0
  %3710 = vmatprep.subr.mxu0 0.0
  %3711 = vmatpush1.msra.mxu0 0.0
  %3712 = vmatprep.subr.mxu0 0.0
  %3713 = vmatpush1.msra.mxu0 0.0
  %3714 = vmatprep.subr.mxu0 0.0
  %3715 = vmatpush1.msra.mxu0 0.0
  %3716 = vmatprep.subr.mxu0 0.0
  %3717 = vmatpush1.msra.mxu0 0.0
  %3718 = vmatprep.subr.mxu0 0.0
  %3719 = vmatpush1.msra.mxu0 0.0
  %3720 = vmatprep.subr.mxu0 0.0
  %3721 = vmatpush1.msra.mxu0 0.0
  %3722 = vmatprep.subr.mxu0 0.0
  %3723 = vmatpush1.msra.mxu0 0.0
  %3724 = vmatprep.subr.mxu0 0.0
  %3725 = vmatpush1.msra.mxu0 0.0
  %3726 = vmatprep.subr.mxu0 0.0
  %3727 = vmatpush1.msra.mxu0 %v3692
  %3728 = vmatprep.subr.mxu0 0.0
  %3729 = vmatpush1.msra.mxu0 %v3691
  %3730 = vmatprep.subr.mxu0 0.0
  %3731 = vmatpush1.msra.mxu0 %v3690
  %3732 = vmatprep.subr.mxu0 0.0
  %3733 = vmatpush1.msra.mxu0 %v3689
  %3734 = vmatprep.subr.mxu0 0.0
  %3735 = vmatpush2.msra.mxu0 0.0
  %3736 = vmatprep.subr.mxu0 0.0
  %3737 = vmatpush2.msra.mxu0 0.0
  %3738 = vmatprep.subr.mxu0 0.0
  %3739 = vmatpush2.msra.mxu0 0.0
  %3740 = vmatprep.subr.mxu0 0.0
  %3741 = vmatpush2.msra.mxu0 0.0
  %3742 = vmatprep.subr.mxu0 0.0
  %3743 = vmatpush2.msra.mxu0 0.0
  %3744 = vmatprep.subr.mxu0 0.0
  %3745 = vmatpush2.msra.mxu0 0.0
  %3746 = vmatprep.subr.mxu0 0.0
  %3747 = vmatpush2.msra.mxu0 0.0
  %3748 = vmatprep.subr.mxu0 0.0
  %3749 = vmatpush2.msra.mxu0 0.0
  %3750 = vmatprep.subr.mxu0 0.0
  %3751 = vmatpush2.msra.mxu0 0.0
  %3752 = vmatprep.subr.mxu0 0.0
  %3753 = vmatpush2.msra.mxu0 0.0
  %3754 = vmatprep.subr.mxu0 0.0
  %3755 = vmatpush2.msra.mxu0 0.0
  %3756 = vmatprep.subr.mxu0 0.0
  %3757 = vmatpush2.msra.mxu0 0.0
  %3758 = vmatprep.subr.mxu0 0.0
  %3759 = vmatpush2.msra.mxu0 0.0
  %3760 = vmatprep.subr.mxu0 0.0
  %3761 = vmatpush2.msra.mxu0 0.0
  %3762 = vmatprep.subr.mxu0 0.0
  %3763 = vmatpush2.msra.mxu0 0.0
  %3764 = vmatprep.subr.mxu0 0.0
  %3765 = vmatpush2.msra.mxu0 0.0
  %3766 = vmatprep.mubr.f32.mxu0 0.0
  %3767 = vmatmul.mubr.f32.gmra.mxu0 %v3694
  %v3768 = vpop.f32.mrf.mxu0
  %v3769 = vadd.f32 0.0, %v3768
  %v3770 = vpop.f32.mrf.mxu0
  %3771 = vmatprep.mubr.f32.mxu0 0.0
  %3772 = vmatmul.mubr.f32.gmra.mxu0 %v3697
  %v3773 = vpop.f32.mrf.mxu0
  %v3774 = vadd.f32 0.0, %v3773
  %v3775 = vpop.f32.mrf.mxu0
  %3776 = vmatprep.mubr.f32.mxu0 0.0
  %3777 = vmatmul.mubr.f32.gmra.mxu0 %v3700
  %v3778 = vpop.f32.mrf.mxu0
  %v3779 = vadd.f32 0.0, %v3778
  %v3780 = vpop.f32.mrf.mxu0
  %3781 = vdwg.mxu0
  %v3782 = vadd.f32 %v3601, %v3769
  %v3783 = vadd.f32 %v3602, %v3774
  %v3784 = vadd.f32 %v3603, %v3779
  %s3785 = scalar_lea.vmem %s3, 240
  %v3786 = vld [vmem:[%s3785] sm:$0xff]
  %v3787 = vld [vmem:[%s3785 + $0x8] sm:$0xff]
  %v3788 = vld [vmem:[%s3785 + $0x10] sm:$0x3]
  %3789 = vmatprep.subr.mxu0 0.0
  %3790 = vmatpush1.msra.mxu0 %v1982
  %3791 = vmatprep.subr.mxu0 0.0
  %3792 = vmatpush1.msra.mxu0 %v1981
  %3793 = vmatprep.subr.mxu0 0.0
  %3794 = vmatpush1.msra.mxu0 %v1980
  %3795 = vmatprep.subr.mxu0 0.0
  %3796 = vmatpush1.msra.mxu0 %v1979
  %3797 = vmatprep.subr.mxu0 0.0
  %3798 = vmatpush1.msra.mxu0 %v1978
  %3799 = vmatprep.subr.mxu0 0.0
  %3800 = vmatpush1.msra.mxu0 %v1977
  %3801 = vmatprep.subr.mxu0 0.0
  %3802 = vmatpush1.msra.mxu0 %v1976
  %3803 = vmatprep.subr.mxu0 0.0
  %3804 = vmatpush1.msra.mxu0 %v1975
  %3805 = vmatprep.subr.mxu0 0.0
  %3806 = vmatpush1.msra.mxu0 %v1974
  %3807 = vmatprep.subr.mxu0 0.0
  %3808 = vmatpush1.msra.mxu0 %v1973
  %3809 = vmatprep.subr.mxu0 0.0
  %3810 = vmatpush1.msra.mxu0 %v1972
  %3811 = vmatprep.subr.mxu0 0.0
  %3812 = vmatpush1.msra.mxu0 %v1971
  %3813 = vmatprep.subr.mxu0 0.0
  %3814 = vmatpush1.msra.mxu0 %v1970
  %3815 = vmatprep.subr.mxu0 0.0
  %3816 = vmatpush1.msra.mxu0 %v1969
  %3817 = vmatprep.subr.mxu0 0.0
  %3818 = vmatpush1.msra.mxu0 %v1968
  %3819 = vmatprep.subr.mxu0 0.0
  %3820 = vmatpush1.msra.mxu0 %v1967
  %3821 = vmatprep.subr.mxu0 0.0
  %3822 = vmatpush2.msra.mxu0 0.0
  %3823 = vmatprep.subr.mxu0 0.0
  %3824 = vmatpush2.msra.mxu0 0.0
  %3825 = vmatprep.subr.mxu0 0.0
  %3826 = vmatpush2.msra.mxu0 0.0
  %3827 = vmatprep.subr.mxu0 0.0
  %3828 = vmatpush2.msra.mxu0 0.0
  %3829 = vmatprep.subr.mxu0 0.0
  %3830 = vmatpush2.msra.mxu0 0.0
  %3831 = vmatprep.subr.mxu0 0.0
  %3832 = vmatpush2.msra.mxu0 0.0
  %3833 = vmatprep.subr.mxu0 0.0
  %3834 = vmatpush2.msra.mxu0 0.0
  %3835 = vmatprep.subr.mxu0 0.0
  %3836 = vmatpush2.msra.mxu0 0.0
  %3837 = vmatprep.subr.mxu0 0.0
  %3838 = vmatpush2.msra.mxu0 0.0
  %3839 = vmatprep.subr.mxu0 0.0
  %3840 = vmatpush2.msra.mxu0 0.0
  %3841 = vmatprep.subr.mxu0 0.0
  %3842 = vmatpush2.msra.mxu0 0.0
  %3843 = vmatprep.subr.mxu0 0.0
  %3844 = vmatpush2.msra.mxu0 0.0
  %3845 = vmatprep.subr.mxu0 0.0
  %3846 = vmatpush2.msra.mxu0 0.0
  %3847 = vmatprep.subr.mxu0 0.0
  %3848 = vmatpush2.msra.mxu0 0.0
  %3849 = vmatprep.subr.mxu0 0.0
  %3850 = vmatpush2.msra.mxu0 0.0
  %3851 = vmatprep.subr.mxu0 0.0
  %3852 = vmatpush2.msra.mxu0 0.0
  %3853 = vmatprep.mubr.f32.mxu0 0.0
  %3854 = vmatmul.mubr.f32.gmra.mxu0 %v3786
  %v3855 = vpop.f32.mrf.mxu0
  %v3856 = vadd.f32 0.0, %v3855
  %v3857 = vpop.f32.mrf.mxu0
  %3858 = vmatprep.mubr.f32.mxu0 0.0
  %3859 = vmatmul.mubr.f32.gmra.mxu0 %v3787
  %v3860 = vpop.f32.mrf.mxu0
  %v3861 = vadd.f32 0.0, %v3860
  %v3862 = vpop.f32.mrf.mxu0
  %3863 = vmatprep.mubr.f32.mxu0 0.0
  %3864 = vmatmul.mubr.f32.gmra.mxu0 %v3788
  %v3865 = vpop.f32.mrf.mxu0
  %v3866 = vadd.f32 0.0, %v3865
  %v3867 = vpop.f32.mrf.mxu0
  %3868 = vdwg.mxu0
  %s3869 = scalar_lea.vmem %s4, 320
  %v3870 = vld [vmem:[%s3869] sm:$0xff]
  %v3871 = vld [vmem:[%s3869 + $0x8] sm:$0xff]
  %v3872 = vld [vmem:[%s3869 + $0x10] sm:$0xff]
  %v3873 = vld [vmem:[%s3869 + $0x18] sm:$0xff]
  %v3875 = vsel %vm1807, %v3856, 0
  %v3878 = vsel %vm1807, %v3861, 0
  %v3881 = vsel %vm1807, %v3866, 0
  %3883 = vmatprep.subr.mxu0 0.0
  %3884 = vmatpush1.msra.mxu0 0.0
  %3885 = vmatprep.subr.mxu0 0.0
  %3886 = vmatpush1.msra.mxu0 0.0
  %3887 = vmatprep.subr.mxu0 0.0
  %3888 = vmatpush1.msra.mxu0 0.0
  %3889 = vmatprep.subr.mxu0 0.0
  %3890 = vmatpush1.msra.mxu0 0.0
  %3891 = vmatprep.subr.mxu0 0.0
  %3892 = vmatpush1.msra.mxu0 0.0
  %3893 = vmatprep.subr.mxu0 0.0
  %3894 = vmatpush1.msra.mxu0 0.0
  %3895 = vmatprep.subr.mxu0 0.0
  %3896 = vmatpush1.msra.mxu0 0.0
  %3897 = vmatprep.subr.mxu0 0.0
  %3898 = vmatpush1.msra.mxu0 0.0
  %3899 = vmatprep.subr.mxu0 0.0
  %3900 = vmatpush1.msra.mxu0 0.0
  %3901 = vmatprep.subr.mxu0 0.0
  %3902 = vmatpush1.msra.mxu0 0.0
  %3903 = vmatprep.subr.mxu0 0.0
  %3904 = vmatpush1.msra.mxu0 0.0
  %3905 = vmatprep.subr.mxu0 0.0
  %3906 = vmatpush1.msra.mxu0 0.0
  %3907 = vmatprep.subr.mxu0 0.0
  %3908 = vmatpush1.msra.mxu0 %v3873
  %3909 = vmatprep.subr.mxu0 0.0
  %3910 = vmatpush1.msra.mxu0 %v3872
  %3911 = vmatprep.subr.mxu0 0.0
  %3912 = vmatpush1.msra.mxu0 %v3871
  %3913 = vmatprep.subr.mxu0 0.0
  %3914 = vmatpush1.msra.mxu0 %v3870
  %3915 = vmatprep.subr.mxu0 0.0
  %3916 = vmatpush2.msra.mxu0 0.0
  %3917 = vmatprep.subr.mxu0 0.0
  %3918 = vmatpush2.msra.mxu0 0.0
  %3919 = vmatprep.subr.mxu0 0.0
  %3920 = vmatpush2.msra.mxu0 0.0
  %3921 = vmatprep.subr.mxu0 0.0
  %3922 = vmatpush2.msra.mxu0 0.0
  %3923 = vmatprep.subr.mxu0 0.0
  %3924 = vmatpush2.msra.mxu0 0.0
  %3925 = vmatprep.subr.mxu0 0.0
  %3926 = vmatpush2.msra.mxu0 0.0
  %3927 = vmatprep.subr.mxu0 0.0
  %3928 = vmatpush2.msra.mxu0 0.0
  %3929 = vmatprep.subr.mxu0 0.0
  %3930 = vmatpush2.msra.mxu0 0.0
  %3931 = vmatprep.subr.mxu0 0.0
  %3932 = vmatpush2.msra.mxu0 0.0
  %3933 = vmatprep.subr.mxu0 0.0
  %3934 = vmatpush2.msra.mxu0 0.0
  %3935 = vmatprep.subr.mxu0 0.0
  %3936 = vmatpush2.msra.mxu0 0.0
  %3937 = vmatprep.subr.mxu0 0.0
  %3938 = vmatpush2.msra.mxu0 0.0
  %3939 = vmatprep.subr.mxu0 0.0
  %3940 = vmatpush2.msra.mxu0 0.0
  %3941 = vmatprep.subr.mxu0 0.0
  %3942 = vmatpush2.msra.mxu0 0.0
  %3943 = vmatprep.subr.mxu0 0.0
  %3944 = vmatpush2.msra.mxu0 0.0
  %3945 = vmatprep.subr.mxu0 0.0
  %3946 = vmatpush2.msra.mxu0 0.0
  %3947 = vmatprep.mubr.f32.mxu0 0.0
  %3948 = vmatmul.mubr.f32.gmra.mxu0 %v3875
  %v3949 = vpop.f32.mrf.mxu0
  %v3950 = vadd.f32 0.0, %v3949
  %v3951 = vpop.f32.mrf.mxu0
  %3952 = vmatprep.mubr.f32.mxu0 0.0
  %3953 = vmatmul.mubr.f32.gmra.mxu0 %v3878
  %v3954 = vpop.f32.mrf.mxu0
  %v3955 = vadd.f32 0.0, %v3954
  %v3956 = vpop.f32.mrf.mxu0
  %3957 = vmatprep.mubr.f32.mxu0 0.0
  %3958 = vmatmul.mubr.f32.gmra.mxu0 %v3881
  %v3959 = vpop.f32.mrf.mxu0
  %v3960 = vadd.f32 0.0, %v3959
  %v3961 = vpop.f32.mrf.mxu0
  %3962 = vdwg.mxu0
  %v3963 = vadd.f32 %v3782, %v3950
  %v3964 = vadd.f32 %v3783, %v3955
  %v3965 = vadd.f32 %v3784, %v3960
  %s3966 = scalar_lea.vmem %s3, 264
  %v3967 = vld [vmem:[%s3966] sm:$0xff]
  %v3968 = vld [vmem:[%s3966 + $0x8] sm:$0xff]
  %v3969 = vld [vmem:[%s3966 + $0x10] sm:$0x3]
  %3970 = vmatprep.subr.mxu0 0.0
  %3971 = vmatpush1.msra.mxu0 %v1982
  %3972 = vmatprep.subr.mxu0 0.0
  %3973 = vmatpush1.msra.mxu0 %v1981
  %3974 = vmatprep.subr.mxu0 0.0
  %3975 = vmatpush1.msra.mxu0 %v1980
  %3976 = vmatprep.subr.mxu0 0.0
  %3977 = vmatpush1.msra.mxu0 %v1979
  %3978 = vmatprep.subr.mxu0 0.0
  %3979 = vmatpush1.msra.mxu0 %v1978
  %3980 = vmatprep.subr.mxu0 0.0
  %3981 = vmatpush1.msra.mxu0 %v1977
  %3982 = vmatprep.subr.mxu0 0.0
  %3983 = vmatpush1.msra.mxu0 %v1976
  %3984 = vmatprep.subr.mxu0 0.0
  %3985 = vmatpush1.msra.mxu0 %v1975
  %3986 = vmatprep.subr.mxu0 0.0
  %3987 = vmatpush1.msra.mxu0 %v1974
  %3988 = vmatprep.subr.mxu0 0.0
  %3989 = vmatpush1.msra.mxu0 %v1973
  %3990 = vmatprep.subr.mxu0 0.0
  %3991 = vmatpush1.msra.mxu0 %v1972
  %3992 = vmatprep.subr.mxu0 0.0
  %3993 = vmatpush1.msra.mxu0 %v1971
  %3994 = vmatprep.subr.mxu0 0.0
  %3995 = vmatpush1.msra.mxu0 %v1970
  %3996 = vmatprep.subr.mxu0 0.0
  %3997 = vmatpush1.msra.mxu0 %v1969
  %3998 = vmatprep.subr.mxu0 0.0
  %3999 = vmatpush1.msra.mxu0 %v1968
  %4000 = vmatprep.subr.mxu0 0.0
  %4001 = vmatpush1.msra.mxu0 %v1967
  %4002 = vmatprep.subr.mxu0 0.0
  %4003 = vmatpush2.msra.mxu0 0.0
  %4004 = vmatprep.subr.mxu0 0.0
  %4005 = vmatpush2.msra.mxu0 0.0
  %4006 = vmatprep.subr.mxu0 0.0
  %4007 = vmatpush2.msra.mxu0 0.0
  %4008 = vmatprep.subr.mxu0 0.0
  %4009 = vmatpush2.msra.mxu0 0.0
  %4010 = vmatprep.subr.mxu0 0.0
  %4011 = vmatpush2.msra.mxu0 0.0
  %4012 = vmatprep.subr.mxu0 0.0
  %4013 = vmatpush2.msra.mxu0 0.0
  %4014 = vmatprep.subr.mxu0 0.0
  %4015 = vmatpush2.msra.mxu0 0.0
  %4016 = vmatprep.subr.mxu0 0.0
  %4017 = vmatpush2.msra.mxu0 0.0
  %4018 = vmatprep.subr.mxu0 0.0
  %4019 = vmatpush2.msra.mxu0 0.0
  %4020 = vmatprep.subr.mxu0 0.0
  %4021 = vmatpush2.msra.mxu0 0.0
  %4022 = vmatprep.subr.mxu0 0.0
  %4023 = vmatpush2.msra.mxu0 0.0
  %4024 = vmatprep.subr.mxu0 0.0
  %4025 = vmatpush2.msra.mxu0 0.0
  %4026 = vmatprep.subr.mxu0 0.0
  %4027 = vmatpush2.msra.mxu0 0.0
  %4028 = vmatprep.subr.mxu0 0.0
  %4029 = vmatpush2.msra.mxu0 0.0
  %4030 = vmatprep.subr.mxu0 0.0
  %4031 = vmatpush2.msra.mxu0 0.0
  %4032 = vmatprep.subr.mxu0 0.0
  %4033 = vmatpush2.msra.mxu0 0.0
  %4034 = vmatprep.mubr.f32.mxu0 0.0
  %4035 = vmatmul.mubr.f32.gmra.mxu0 %v3967
  %v4036 = vpop.f32.mrf.mxu0
  %v4037 = vadd.f32 0.0, %v4036
  %v4038 = vpop.f32.mrf.mxu0
  %4039 = vmatprep.mubr.f32.mxu0 0.0
  %4040 = vmatmul.mubr.f32.gmra.mxu0 %v3968
  %v4041 = vpop.f32.mrf.mxu0
  %v4042 = vadd.f32 0.0, %v4041
  %v4043 = vpop.f32.mrf.mxu0
  %4044 = vmatprep.mubr.f32.mxu0 0.0
  %4045 = vmatmul.mubr.f32.gmra.mxu0 %v3969
  %v4046 = vpop.f32.mrf.mxu0
  %v4047 = vadd.f32 0.0, %v4046
  %v4048 = vpop.f32.mrf.mxu0
  %4049 = vdwg.mxu0
  %s4050 = scalar_lea.vmem %s4, 352
  %v4051 = vld [vmem:[%s4050] sm:$0xff]
  %v4052 = vld [vmem:[%s4050 + $0x8] sm:$0xff]
  %v4053 = vld [vmem:[%s4050 + $0x10] sm:$0xff]
  %v4054 = vld [vmem:[%s4050 + $0x18] sm:$0xff]
  %v4056 = vsel %vm1807, %v4037, 0
  %v4059 = vsel %vm1807, %v4042, 0
  %v4062 = vsel %vm1807, %v4047, 0
  %4064 = vmatprep.subr.mxu0 0.0
  %4065 = vmatpush1.msra.mxu0 0.0
  %4066 = vmatprep.subr.mxu0 0.0
  %4067 = vmatpush1.msra.mxu0 0.0
  %4068 = vmatprep.subr.mxu0 0.0
  %4069 = vmatpush1.msra.mxu0 0.0
  %4070 = vmatprep.subr.mxu0 0.0
  %4071 = vmatpush1.msra.mxu0 0.0
  %4072 = vmatprep.subr.mxu0 0.0
  %4073 = vmatpush1.msra.mxu0 0.0
  %4074 = vmatprep.subr.mxu0 0.0
  %4075 = vmatpush1.msra.mxu0 0.0
  %4076 = vmatprep.subr.mxu0 0.0
  %4077 = vmatpush1.msra.mxu0 0.0
  %4078 = vmatprep.subr.mxu0 0.0
  %4079 = vmatpush1.msra.mxu0 0.0
  %4080 = vmatprep.subr.mxu0 0.0
  %4081 = vmatpush1.msra.mxu0 0.0
  %4082 = vmatprep.subr.mxu0 0.0
  %4083 = vmatpush1.msra.mxu0 0.0
  %4084 = vmatprep.subr.mxu0 0.0
  %4085 = vmatpush1.msra.mxu0 0.0
  %4086 = vmatprep.subr.mxu0 0.0
  %4087 = vmatpush1.msra.mxu0 0.0
  %4088 = vmatprep.subr.mxu0 0.0
  %4089 = vmatpush1.msra.mxu0 %v4054
  %4090 = vmatprep.subr.mxu0 0.0
  %4091 = vmatpush1.msra.mxu0 %v4053
  %4092 = vmatprep.subr.mxu0 0.0
  %4093 = vmatpush1.msra.mxu0 %v4052
  %4094 = vmatprep.subr.mxu0 0.0
  %4095 = vmatpush1.msra.mxu0 %v4051
  %4096 = vmatprep.subr.mxu0 0.0
  %4097 = vmatpush2.msra.mxu0 0.0
  %4098 = vmatprep.subr.mxu0 0.0
  %4099 = vmatpush2.msra.mxu0 0.0
  %4100 = vmatprep.subr.mxu0 0.0
  %4101 = vmatpush2.msra.mxu0 0.0
  %4102 = vmatprep.subr.mxu0 0.0
  %4103 = vmatpush2.msra.mxu0 0.0
  %4104 = vmatprep.subr.mxu0 0.0
  %4105 = vmatpush2.msra.mxu0 0.0
  %4106 = vmatprep.subr.mxu0 0.0
  %4107 = vmatpush2.msra.mxu0 0.0
  %4108 = vmatprep.subr.mxu0 0.0
  %4109 = vmatpush2.msra.mxu0 0.0
  %4110 = vmatprep.subr.mxu0 0.0
  %4111 = vmatpush2.msra.mxu0 0.0
  %4112 = vmatprep.subr.mxu0 0.0
  %4113 = vmatpush2.msra.mxu0 0.0
  %4114 = vmatprep.subr.mxu0 0.0
  %4115 = vmatpush2.msra.mxu0 0.0
  %4116 = vmatprep.subr.mxu0 0.0
  %4117 = vmatpush2.msra.mxu0 0.0
  %4118 = vmatprep.subr.mxu0 0.0
  %4119 = vmatpush2.msra.mxu0 0.0
  %4120 = vmatprep.subr.mxu0 0.0
  %4121 = vmatpush2.msra.mxu0 0.0
  %4122 = vmatprep.subr.mxu0 0.0
  %4123 = vmatpush2.msra.mxu0 0.0
  %4124 = vmatprep.subr.mxu0 0.0
  %4125 = vmatpush2.msra.mxu0 0.0
  %4126 = vmatprep.subr.mxu0 0.0
  %4127 = vmatpush2.msra.mxu0 0.0
  %4128 = vmatprep.mubr.f32.mxu0 0.0
  %4129 = vmatmul.mubr.f32.gmra.mxu0 %v4056
  %v4130 = vpop.f32.mrf.mxu0
  %v4131 = vadd.f32 0.0, %v4130
  %v4132 = vpop.f32.mrf.mxu0
  %4133 = vmatprep.mubr.f32.mxu0 0.0
  %4134 = vmatmul.mubr.f32.gmra.mxu0 %v4059
  %v4135 = vpop.f32.mrf.mxu0
  %v4136 = vadd.f32 0.0, %v4135
  %v4137 = vpop.f32.mrf.mxu0
  %4138 = vmatprep.mubr.f32.mxu0 0.0
  %4139 = vmatmul.mubr.f32.gmra.mxu0 %v4062
  %v4140 = vpop.f32.mrf.mxu0
  %v4141 = vadd.f32 0.0, %v4140
  %v4142 = vpop.f32.mrf.mxu0
  %4143 = vdwg.mxu0
  %v4144 = vadd.f32 %v3963, %v4131
  %v4145 = vadd.f32 %v3964, %v4136
  %v4146 = vadd.f32 %v3965, %v4141
  %s4147 = scalar_lea.vmem %s3, 288
  %v4148 = vld [vmem:[%s4147] sm:$0xff]
  %v4149 = vld [vmem:[%s4147 + $0x8] sm:$0xff]
  %v4150 = vld [vmem:[%s4147 + $0x10] sm:$0x3]
  %4151 = vmatprep.subr.mxu0 0.0
  %4152 = vmatpush1.msra.mxu0 %v1982
  %4153 = vmatprep.subr.mxu0 0.0
  %4154 = vmatpush1.msra.mxu0 %v1981
  %4155 = vmatprep.subr.mxu0 0.0
  %4156 = vmatpush1.msra.mxu0 %v1980
  %4157 = vmatprep.subr.mxu0 0.0
  %4158 = vmatpush1.msra.mxu0 %v1979
  %4159 = vmatprep.subr.mxu0 0.0
  %4160 = vmatpush1.msra.mxu0 %v1978
  %4161 = vmatprep.subr.mxu0 0.0
  %4162 = vmatpush1.msra.mxu0 %v1977
  %4163 = vmatprep.subr.mxu0 0.0
  %4164 = vmatpush1.msra.mxu0 %v1976
  %4165 = vmatprep.subr.mxu0 0.0
  %4166 = vmatpush1.msra.mxu0 %v1975
  %4167 = vmatprep.subr.mxu0 0.0
  %4168 = vmatpush1.msra.mxu0 %v1974
  %4169 = vmatprep.subr.mxu0 0.0
  %4170 = vmatpush1.msra.mxu0 %v1973
  %4171 = vmatprep.subr.mxu0 0.0
  %4172 = vmatpush1.msra.mxu0 %v1972
  %4173 = vmatprep.subr.mxu0 0.0
  %4174 = vmatpush1.msra.mxu0 %v1971
  %4175 = vmatprep.subr.mxu0 0.0
  %4176 = vmatpush1.msra.mxu0 %v1970
  %4177 = vmatprep.subr.mxu0 0.0
  %4178 = vmatpush1.msra.mxu0 %v1969
  %4179 = vmatprep.subr.mxu0 0.0
  %4180 = vmatpush1.msra.mxu0 %v1968
  %4181 = vmatprep.subr.mxu0 0.0
  %4182 = vmatpush1.msra.mxu0 %v1967
  %4183 = vmatprep.subr.mxu0 0.0
  %4184 = vmatpush2.msra.mxu0 0.0
  %4185 = vmatprep.subr.mxu0 0.0
  %4186 = vmatpush2.msra.mxu0 0.0
  %4187 = vmatprep.subr.mxu0 0.0
  %4188 = vmatpush2.msra.mxu0 0.0
  %4189 = vmatprep.subr.mxu0 0.0
  %4190 = vmatpush2.msra.mxu0 0.0
  %4191 = vmatprep.subr.mxu0 0.0
  %4192 = vmatpush2.msra.mxu0 0.0
  %4193 = vmatprep.subr.mxu0 0.0
  %4194 = vmatpush2.msra.mxu0 0.0
  %4195 = vmatprep.subr.mxu0 0.0
  %4196 = vmatpush2.msra.mxu0 0.0
  %4197 = vmatprep.subr.mxu0 0.0
  %4198 = vmatpush2.msra.mxu0 0.0
  %4199 = vmatprep.subr.mxu0 0.0
  %4200 = vmatpush2.msra.mxu0 0.0
  %4201 = vmatprep.subr.mxu0 0.0
  %4202 = vmatpush2.msra.mxu0 0.0
  %4203 = vmatprep.subr.mxu0 0.0
  %4204 = vmatpush2.msra.mxu0 0.0
  %4205 = vmatprep.subr.mxu0 0.0
  %4206 = vmatpush2.msra.mxu0 0.0
  %4207 = vmatprep.subr.mxu0 0.0
  %4208 = vmatpush2.msra.mxu0 0.0
  %4209 = vmatprep.subr.mxu0 0.0
  %4210 = vmatpush2.msra.mxu0 0.0
  %4211 = vmatprep.subr.mxu0 0.0
  %4212 = vmatpush2.msra.mxu0 0.0
  %4213 = vmatprep.subr.mxu0 0.0
  %4214 = vmatpush2.msra.mxu0 0.0
  %4215 = vmatprep.mubr.f32.mxu0 0.0
  %4216 = vmatmul.mubr.f32.gmra.mxu0 %v4148
  %v4217 = vpop.f32.mrf.mxu0
  %v4218 = vadd.f32 0.0, %v4217
  %v4219 = vpop.f32.mrf.mxu0
  %4220 = vmatprep.mubr.f32.mxu0 0.0
  %4221 = vmatmul.mubr.f32.gmra.mxu0 %v4149
  %v4222 = vpop.f32.mrf.mxu0
  %v4223 = vadd.f32 0.0, %v4222
  %v4224 = vpop.f32.mrf.mxu0
  %4225 = vmatprep.mubr.f32.mxu0 0.0
  %4226 = vmatmul.mubr.f32.gmra.mxu0 %v4150
  %v4227 = vpop.f32.mrf.mxu0
  %v4228 = vadd.f32 0.0, %v4227
  %v4229 = vpop.f32.mrf.mxu0
  %4230 = vdwg.mxu0
  %s4231 = scalar_lea.vmem %s4, 384
  %v4232 = vld [vmem:[%s4231] sm:$0xff]
  %v4233 = vld [vmem:[%s4231 + $0x8] sm:$0xff]
  %v4234 = vld [vmem:[%s4231 + $0x10] sm:$0xff]
  %v4235 = vld [vmem:[%s4231 + $0x18] sm:$0xff]
  %v4237 = vsel %vm1807, %v4218, 0
  %v4240 = vsel %vm1807, %v4223, 0
  %v4243 = vsel %vm1807, %v4228, 0
  %4245 = vmatprep.subr.mxu0 0.0
  %4246 = vmatpush1.msra.mxu0 0.0
  %4247 = vmatprep.subr.mxu0 0.0
  %4248 = vmatpush1.msra.mxu0 0.0
  %4249 = vmatprep.subr.mxu0 0.0
  %4250 = vmatpush1.msra.mxu0 0.0
  %4251 = vmatprep.subr.mxu0 0.0
  %4252 = vmatpush1.msra.mxu0 0.0
  %4253 = vmatprep.subr.mxu0 0.0
  %4254 = vmatpush1.msra.mxu0 0.0
  %4255 = vmatprep.subr.mxu0 0.0
  %4256 = vmatpush1.msra.mxu0 0.0
  %4257 = vmatprep.subr.mxu0 0.0
  %4258 = vmatpush1.msra.mxu0 0.0
  %4259 = vmatprep.subr.mxu0 0.0
  %4260 = vmatpush1.msra.mxu0 0.0
  %4261 = vmatprep.subr.mxu0 0.0
  %4262 = vmatpush1.msra.mxu0 0.0
  %4263 = vmatprep.subr.mxu0 0.0
  %4264 = vmatpush1.msra.mxu0 0.0
  %4265 = vmatprep.subr.mxu0 0.0
  %4266 = vmatpush1.msra.mxu0 0.0
  %4267 = vmatprep.subr.mxu0 0.0
  %4268 = vmatpush1.msra.mxu0 0.0
  %4269 = vmatprep.subr.mxu0 0.0
  %4270 = vmatpush1.msra.mxu0 %v4235
  %4271 = vmatprep.subr.mxu0 0.0
  %4272 = vmatpush1.msra.mxu0 %v4234
  %4273 = vmatprep.subr.mxu0 0.0
  %4274 = vmatpush1.msra.mxu0 %v4233
  %4275 = vmatprep.subr.mxu0 0.0
  %4276 = vmatpush1.msra.mxu0 %v4232
  %4277 = vmatprep.subr.mxu0 0.0
  %4278 = vmatpush2.msra.mxu0 0.0
  %4279 = vmatprep.subr.mxu0 0.0
  %4280 = vmatpush2.msra.mxu0 0.0
  %4281 = vmatprep.subr.mxu0 0.0
  %4282 = vmatpush2.msra.mxu0 0.0
  %4283 = vmatprep.subr.mxu0 0.0
  %4284 = vmatpush2.msra.mxu0 0.0
  %4285 = vmatprep.subr.mxu0 0.0
  %4286 = vmatpush2.msra.mxu0 0.0
  %4287 = vmatprep.subr.mxu0 0.0
  %4288 = vmatpush2.msra.mxu0 0.0
  %4289 = vmatprep.subr.mxu0 0.0
  %4290 = vmatpush2.msra.mxu0 0.0
  %4291 = vmatprep.subr.mxu0 0.0
  %4292 = vmatpush2.msra.mxu0 0.0
  %4293 = vmatprep.subr.mxu0 0.0
  %4294 = vmatpush2.msra.mxu0 0.0
  %4295 = vmatprep.subr.mxu0 0.0
  %4296 = vmatpush2.msra.mxu0 0.0
  %4297 = vmatprep.subr.mxu0 0.0
  %4298 = vmatpush2.msra.mxu0 0.0
  %4299 = vmatprep.subr.mxu0 0.0
  %4300 = vmatpush2.msra.mxu0 0.0
  %4301 = vmatprep.subr.mxu0 0.0
  %4302 = vmatpush2.msra.mxu0 0.0
  %4303 = vmatprep.subr.mxu0 0.0
  %4304 = vmatpush2.msra.mxu0 0.0
  %4305 = vmatprep.subr.mxu0 0.0
  %4306 = vmatpush2.msra.mxu0 0.0
  %4307 = vmatprep.subr.mxu0 0.0
  %4308 = vmatpush2.msra.mxu0 0.0
  %4309 = vmatprep.mubr.f32.mxu0 0.0
  %4310 = vmatmul.mubr.f32.gmra.mxu0 %v4237
  %v4311 = vpop.f32.mrf.mxu0
  %v4312 = vadd.f32 0.0, %v4311
  %v4313 = vpop.f32.mrf.mxu0
  %4314 = vmatprep.mubr.f32.mxu0 0.0
  %4315 = vmatmul.mubr.f32.gmra.mxu0 %v4240
  %v4316 = vpop.f32.mrf.mxu0
  %v4317 = vadd.f32 0.0, %v4316
  %v4318 = vpop.f32.mrf.mxu0
  %4319 = vmatprep.mubr.f32.mxu0 0.0
  %4320 = vmatmul.mubr.f32.gmra.mxu0 %v4243
  %v4321 = vpop.f32.mrf.mxu0
  %v4322 = vadd.f32 0.0, %v4321
  %v4323 = vpop.f32.mrf.mxu0
  %4324 = vdwg.mxu0
  %v4325 = vadd.f32 %v4144, %v4312
  %v4326 = vadd.f32 %v4145, %v4317
  %v4327 = vadd.f32 %v4146, %v4322
  %s4328 = scalar_lea.vmem %s3, 312
  %v4329 = vld [vmem:[%s4328] sm:$0xff]
  %v4330 = vld [vmem:[%s4328 + $0x8] sm:$0xff]
  %v4331 = vld [vmem:[%s4328 + $0x10] sm:$0x3]
  %4332 = vmatprep.subr.mxu0 0.0
  %4333 = vmatpush1.msra.mxu0 %v1982
  %4334 = vmatprep.subr.mxu0 0.0
  %4335 = vmatpush1.msra.mxu0 %v1981
  %4336 = vmatprep.subr.mxu0 0.0
  %4337 = vmatpush1.msra.mxu0 %v1980
  %4338 = vmatprep.subr.mxu0 0.0
  %4339 = vmatpush1.msra.mxu0 %v1979
  %4340 = vmatprep.subr.mxu0 0.0
  %4341 = vmatpush1.msra.mxu0 %v1978
  %4342 = vmatprep.subr.mxu0 0.0
  %4343 = vmatpush1.msra.mxu0 %v1977
  %4344 = vmatprep.subr.mxu0 0.0
  %4345 = vmatpush1.msra.mxu0 %v1976
  %4346 = vmatprep.subr.mxu0 0.0
  %4347 = vmatpush1.msra.mxu0 %v1975
  %4348 = vmatprep.subr.mxu0 0.0
  %4349 = vmatpush1.msra.mxu0 %v1974
  %4350 = vmatprep.subr.mxu0 0.0
  %4351 = vmatpush1.msra.mxu0 %v1973
  %4352 = vmatprep.subr.mxu0 0.0
  %4353 = vmatpush1.msra.mxu0 %v1972
  %4354 = vmatprep.subr.mxu0 0.0
  %4355 = vmatpush1.msra.mxu0 %v1971
  %4356 = vmatprep.subr.mxu0 0.0
  %4357 = vmatpush1.msra.mxu0 %v1970
  %4358 = vmatprep.subr.mxu0 0.0
  %4359 = vmatpush1.msra.mxu0 %v1969
  %4360 = vmatprep.subr.mxu0 0.0
  %4361 = vmatpush1.msra.mxu0 %v1968
  %4362 = vmatprep.subr.mxu0 0.0
  %4363 = vmatpush1.msra.mxu0 %v1967
  %4364 = vmatprep.subr.mxu0 0.0
  %4365 = vmatpush2.msra.mxu0 0.0
  %4366 = vmatprep.subr.mxu0 0.0
  %4367 = vmatpush2.msra.mxu0 0.0
  %4368 = vmatprep.subr.mxu0 0.0
  %4369 = vmatpush2.msra.mxu0 0.0
  %4370 = vmatprep.subr.mxu0 0.0
  %4371 = vmatpush2.msra.mxu0 0.0
  %4372 = vmatprep.subr.mxu0 0.0
  %4373 = vmatpush2.msra.mxu0 0.0
  %4374 = vmatprep.subr.mxu0 0.0
  %4375 = vmatpush2.msra.mxu0 0.0
  %4376 = vmatprep.subr.mxu0 0.0
  %4377 = vmatpush2.msra.mxu0 0.0
  %4378 = vmatprep.subr.mxu0 0.0
  %4379 = vmatpush2.msra.mxu0 0.0
  %4380 = vmatprep.subr.mxu0 0.0
  %4381 = vmatpush2.msra.mxu0 0.0
  %4382 = vmatprep.subr.mxu0 0.0
  %4383 = vmatpush2.msra.mxu0 0.0
  %4384 = vmatprep.subr.mxu0 0.0
  %4385 = vmatpush2.msra.mxu0 0.0
  %4386 = vmatprep.subr.mxu0 0.0
  %4387 = vmatpush2.msra.mxu0 0.0
  %4388 = vmatprep.subr.mxu0 0.0
  %4389 = vmatpush2.msra.mxu0 0.0
  %4390 = vmatprep.subr.mxu0 0.0
  %4391 = vmatpush2.msra.mxu0 0.0
  %4392 = vmatprep.subr.mxu0 0.0
  %4393 = vmatpush2.msra.mxu0 0.0
  %4394 = vmatprep.subr.mxu0 0.0
  %4395 = vmatpush2.msra.mxu0 0.0
  %4396 = vmatprep.mubr.f32.mxu0 0.0
  %4397 = vmatmul.mubr.f32.gmra.mxu0 %v4329
  %v4398 = vpop.f32.mrf.mxu0
  %v4399 = vadd.f32 0.0, %v4398
  %v4400 = vpop.f32.mrf.mxu0
  %4401 = vmatprep.mubr.f32.mxu0 0.0
  %4402 = vmatmul.mubr.f32.gmra.mxu0 %v4330
  %v4403 = vpop.f32.mrf.mxu0
  %v4404 = vadd.f32 0.0, %v4403
  %v4405 = vpop.f32.mrf.mxu0
  %4406 = vmatprep.mubr.f32.mxu0 0.0
  %4407 = vmatmul.mubr.f32.gmra.mxu0 %v4331
  %v4408 = vpop.f32.mrf.mxu0
  %v4409 = vadd.f32 0.0, %v4408
  %v4410 = vpop.f32.mrf.mxu0
  %4411 = vdwg.mxu0
  %s4412 = scalar_lea.vmem %s4, 416
  %v4413 = vld [vmem:[%s4412] sm:$0xff]
  %v4414 = vld [vmem:[%s4412 + $0x8] sm:$0xff]
  %v4415 = vld [vmem:[%s4412 + $0x10] sm:$0xff]
  %v4416 = vld [vmem:[%s4412 + $0x18] sm:$0xff]
  %v4418 = vsel %vm1807, %v4399, 0
  %v4421 = vsel %vm1807, %v4404, 0
  %v4424 = vsel %vm1807, %v4409, 0
  %4426 = vmatprep.subr.mxu0 0.0
  %4427 = vmatpush1.msra.mxu0 0.0
  %4428 = vmatprep.subr.mxu0 0.0
  %4429 = vmatpush1.msra.mxu0 0.0
  %4430 = vmatprep.subr.mxu0 0.0
  %4431 = vmatpush1.msra.mxu0 0.0
  %4432 = vmatprep.subr.mxu0 0.0
  %4433 = vmatpush1.msra.mxu0 0.0
  %4434 = vmatprep.subr.mxu0 0.0
  %4435 = vmatpush1.msra.mxu0 0.0
  %4436 = vmatprep.subr.mxu0 0.0
  %4437 = vmatpush1.msra.mxu0 0.0
  %4438 = vmatprep.subr.mxu0 0.0
  %4439 = vmatpush1.msra.mxu0 0.0
  %4440 = vmatprep.subr.mxu0 0.0
  %4441 = vmatpush1.msra.mxu0 0.0
  %4442 = vmatprep.subr.mxu0 0.0
  %4443 = vmatpush1.msra.mxu0 0.0
  %4444 = vmatprep.subr.mxu0 0.0
  %4445 = vmatpush1.msra.mxu0 0.0
  %4446 = vmatprep.subr.mxu0 0.0
  %4447 = vmatpush1.msra.mxu0 0.0
  %4448 = vmatprep.subr.mxu0 0.0
  %4449 = vmatpush1.msra.mxu0 0.0
  %4450 = vmatprep.subr.mxu0 0.0
  %4451 = vmatpush1.msra.mxu0 %v4416
  %4452 = vmatprep.subr.mxu0 0.0
  %4453 = vmatpush1.msra.mxu0 %v4415
  %4454 = vmatprep.subr.mxu0 0.0
  %4455 = vmatpush1.msra.mxu0 %v4414
  %4456 = vmatprep.subr.mxu0 0.0
  %4457 = vmatpush1.msra.mxu0 %v4413
  %4458 = vmatprep.subr.mxu0 0.0
  %4459 = vmatpush2.msra.mxu0 0.0
  %4460 = vmatprep.subr.mxu0 0.0
  %4461 = vmatpush2.msra.mxu0 0.0
  %4462 = vmatprep.subr.mxu0 0.0
  %4463 = vmatpush2.msra.mxu0 0.0
  %4464 = vmatprep.subr.mxu0 0.0
  %4465 = vmatpush2.msra.mxu0 0.0
  %4466 = vmatprep.subr.mxu0 0.0
  %4467 = vmatpush2.msra.mxu0 0.0
  %4468 = vmatprep.subr.mxu0 0.0
  %4469 = vmatpush2.msra.mxu0 0.0
  %4470 = vmatprep.subr.mxu0 0.0
  %4471 = vmatpush2.msra.mxu0 0.0
  %4472 = vmatprep.subr.mxu0 0.0
  %4473 = vmatpush2.msra.mxu0 0.0
  %4474 = vmatprep.subr.mxu0 0.0
  %4475 = vmatpush2.msra.mxu0 0.0
  %4476 = vmatprep.subr.mxu0 0.0
  %4477 = vmatpush2.msra.mxu0 0.0
  %4478 = vmatprep.subr.mxu0 0.0
  %4479 = vmatpush2.msra.mxu0 0.0
  %4480 = vmatprep.subr.mxu0 0.0
  %4481 = vmatpush2.msra.mxu0 0.0
  %4482 = vmatprep.subr.mxu0 0.0
  %4483 = vmatpush2.msra.mxu0 0.0
  %4484 = vmatprep.subr.mxu0 0.0
  %4485 = vmatpush2.msra.mxu0 0.0
  %4486 = vmatprep.subr.mxu0 0.0
  %4487 = vmatpush2.msra.mxu0 0.0
  %4488 = vmatprep.subr.mxu0 0.0
  %4489 = vmatpush2.msra.mxu0 0.0
  %4490 = vmatprep.mubr.f32.mxu0 0.0
  %4491 = vmatmul.mubr.f32.gmra.mxu0 %v4418
  %v4492 = vpop.f32.mrf.mxu0
  %v4493 = vadd.f32 0.0, %v4492
  %v4494 = vpop.f32.mrf.mxu0
  %4495 = vmatprep.mubr.f32.mxu0 0.0
  %4496 = vmatmul.mubr.f32.gmra.mxu0 %v4421
  %v4497 = vpop.f32.mrf.mxu0
  %v4498 = vadd.f32 0.0, %v4497
  %v4499 = vpop.f32.mrf.mxu0
  %4500 = vmatprep.mubr.f32.mxu0 0.0
  %4501 = vmatmul.mubr.f32.gmra.mxu0 %v4424
  %v4502 = vpop.f32.mrf.mxu0
  %v4503 = vadd.f32 0.0, %v4502
  %v4504 = vpop.f32.mrf.mxu0
  %4505 = vdwg.mxu0
  %v4506 = vadd.f32 %v4325, %v4493
  %v4507 = vadd.f32 %v4326, %v4498
  %v4508 = vadd.f32 %v4327, %v4503
  %s4509 = scalar_lea.vmem %s3, 336
  %v4510 = vld [vmem:[%s4509] sm:$0xff]
  %v4511 = vld [vmem:[%s4509 + $0x8] sm:$0xff]
  %v4512 = vld [vmem:[%s4509 + $0x10] sm:$0x3]
  %4513 = vmatprep.subr.mxu0 0.0
  %4514 = vmatpush1.msra.mxu0 %v1982
  %4515 = vmatprep.subr.mxu0 0.0
  %4516 = vmatpush1.msra.mxu0 %v1981
  %4517 = vmatprep.subr.mxu0 0.0
  %4518 = vmatpush1.msra.mxu0 %v1980
  %4519 = vmatprep.subr.mxu0 0.0
  %4520 = vmatpush1.msra.mxu0 %v1979
  %4521 = vmatprep.subr.mxu0 0.0
  %4522 = vmatpush1.msra.mxu0 %v1978
  %4523 = vmatprep.subr.mxu0 0.0
  %4524 = vmatpush1.msra.mxu0 %v1977
  %4525 = vmatprep.subr.mxu0 0.0
  %4526 = vmatpush1.msra.mxu0 %v1976
  %4527 = vmatprep.subr.mxu0 0.0
  %4528 = vmatpush1.msra.mxu0 %v1975
  %4529 = vmatprep.subr.mxu0 0.0
  %4530 = vmatpush1.msra.mxu0 %v1974
  %4531 = vmatprep.subr.mxu0 0.0
  %4532 = vmatpush1.msra.mxu0 %v1973
  %4533 = vmatprep.subr.mxu0 0.0
  %4534 = vmatpush1.msra.mxu0 %v1972
  %4535 = vmatprep.subr.mxu0 0.0
  %4536 = vmatpush1.msra.mxu0 %v1971
  %4537 = vmatprep.subr.mxu0 0.0
  %4538 = vmatpush1.msra.mxu0 %v1970
  %4539 = vmatprep.subr.mxu0 0.0
  %4540 = vmatpush1.msra.mxu0 %v1969
  %4541 = vmatprep.subr.mxu0 0.0
  %4542 = vmatpush1.msra.mxu0 %v1968
  %4543 = vmatprep.subr.mxu0 0.0
  %4544 = vmatpush1.msra.mxu0 %v1967
  %4545 = vmatprep.subr.mxu0 0.0
  %4546 = vmatpush2.msra.mxu0 0.0
  %4547 = vmatprep.subr.mxu0 0.0
  %4548 = vmatpush2.msra.mxu0 0.0
  %4549 = vmatprep.subr.mxu0 0.0
  %4550 = vmatpush2.msra.mxu0 0.0
  %4551 = vmatprep.subr.mxu0 0.0
  %4552 = vmatpush2.msra.mxu0 0.0
  %4553 = vmatprep.subr.mxu0 0.0
  %4554 = vmatpush2.msra.mxu0 0.0
  %4555 = vmatprep.subr.mxu0 0.0
  %4556 = vmatpush2.msra.mxu0 0.0
  %4557 = vmatprep.subr.mxu0 0.0
  %4558 = vmatpush2.msra.mxu0 0.0
  %4559 = vmatprep.subr.mxu0 0.0
  %4560 = vmatpush2.msra.mxu0 0.0
  %4561 = vmatprep.subr.mxu0 0.0
  %4562 = vmatpush2.msra.mxu0 0.0
  %4563 = vmatprep.subr.mxu0 0.0
  %4564 = vmatpush2.msra.mxu0 0.0
  %4565 = vmatprep.subr.mxu0 0.0
  %4566 = vmatpush2.msra.mxu0 0.0
  %4567 = vmatprep.subr.mxu0 0.0
  %4568 = vmatpush2.msra.mxu0 0.0
  %4569 = vmatprep.subr.mxu0 0.0
  %4570 = vmatpush2.msra.mxu0 0.0
  %4571 = vmatprep.subr.mxu0 0.0
  %4572 = vmatpush2.msra.mxu0 0.0
  %4573 = vmatprep.subr.mxu0 0.0
  %4574 = vmatpush2.msra.mxu0 0.0
  %4575 = vmatprep.subr.mxu0 0.0
  %4576 = vmatpush2.msra.mxu0 0.0
  %4577 = vmatprep.mubr.f32.mxu0 0.0
  %4578 = vmatmul.mubr.f32.gmra.mxu0 %v4510
  %v4579 = vpop.f32.mrf.mxu0
  %v4580 = vadd.f32 0.0, %v4579
  %v4581 = vpop.f32.mrf.mxu0
  %4582 = vmatprep.mubr.f32.mxu0 0.0
  %4583 = vmatmul.mubr.f32.gmra.mxu0 %v4511
  %v4584 = vpop.f32.mrf.mxu0
  %v4585 = vadd.f32 0.0, %v4584
  %v4586 = vpop.f32.mrf.mxu0
  %4587 = vmatprep.mubr.f32.mxu0 0.0
  %4588 = vmatmul.mubr.f32.gmra.mxu0 %v4512
  %v4589 = vpop.f32.mrf.mxu0
  %v4590 = vadd.f32 0.0, %v4589
  %v4591 = vpop.f32.mrf.mxu0
  %4592 = vdwg.mxu0
  %s4593 = scalar_lea.vmem %s4, 448
  %v4594 = vld [vmem:[%s4593] sm:$0xff]
  %v4595 = vld [vmem:[%s4593 + $0x8] sm:$0xff]
  %v4596 = vld [vmem:[%s4593 + $0x10] sm:$0xff]
  %v4597 = vld [vmem:[%s4593 + $0x18] sm:$0xff]
  %v4599 = vsel %vm1807, %v4580, 0
  %v4602 = vsel %vm1807, %v4585, 0
  %v4605 = vsel %vm1807, %v4590, 0
  %4607 = vmatprep.subr.mxu0 0.0
  %4608 = vmatpush1.msra.mxu0 0.0
  %4609 = vmatprep.subr.mxu0 0.0
  %4610 = vmatpush1.msra.mxu0 0.0
  %4611 = vmatprep.subr.mxu0 0.0
  %4612 = vmatpush1.msra.mxu0 0.0
  %4613 = vmatprep.subr.mxu0 0.0
  %4614 = vmatpush1.msra.mxu0 0.0
  %4615 = vmatprep.subr.mxu0 0.0
  %4616 = vmatpush1.msra.mxu0 0.0
  %4617 = vmatprep.subr.mxu0 0.0
  %4618 = vmatpush1.msra.mxu0 0.0
  %4619 = vmatprep.subr.mxu0 0.0
  %4620 = vmatpush1.msra.mxu0 0.0
  %4621 = vmatprep.subr.mxu0 0.0
  %4622 = vmatpush1.msra.mxu0 0.0
  %4623 = vmatprep.subr.mxu0 0.0
  %4624 = vmatpush1.msra.mxu0 0.0
  %4625 = vmatprep.subr.mxu0 0.0
  %4626 = vmatpush1.msra.mxu0 0.0
  %4627 = vmatprep.subr.mxu0 0.0
  %4628 = vmatpush1.msra.mxu0 0.0
  %4629 = vmatprep.subr.mxu0 0.0
  %4630 = vmatpush1.msra.mxu0 0.0
  %4631 = vmatprep.subr.mxu0 0.0
  %4632 = vmatpush1.msra.mxu0 %v4597
  %4633 = vmatprep.subr.mxu0 0.0
  %4634 = vmatpush1.msra.mxu0 %v4596
  %4635 = vmatprep.subr.mxu0 0.0
  %4636 = vmatpush1.msra.mxu0 %v4595
  %4637 = vmatprep.subr.mxu0 0.0
  %4638 = vmatpush1.msra.mxu0 %v4594
  %4639 = vmatprep.subr.mxu0 0.0
  %4640 = vmatpush2.msra.mxu0 0.0
  %4641 = vmatprep.subr.mxu0 0.0
  %4642 = vmatpush2.msra.mxu0 0.0
  %4643 = vmatprep.subr.mxu0 0.0
  %4644 = vmatpush2.msra.mxu0 0.0
  %4645 = vmatprep.subr.mxu0 0.0
  %4646 = vmatpush2.msra.mxu0 0.0
  %4647 = vmatprep.subr.mxu0 0.0
  %4648 = vmatpush2.msra.mxu0 0.0
  %4649 = vmatprep.subr.mxu0 0.0
  %4650 = vmatpush2.msra.mxu0 0.0
  %4651 = vmatprep.subr.mxu0 0.0
  %4652 = vmatpush2.msra.mxu0 0.0
  %4653 = vmatprep.subr.mxu0 0.0
  %4654 = vmatpush2.msra.mxu0 0.0
  %4655 = vmatprep.subr.mxu0 0.0
  %4656 = vmatpush2.msra.mxu0 0.0
  %4657 = vmatprep.subr.mxu0 0.0
  %4658 = vmatpush2.msra.mxu0 0.0
  %4659 = vmatprep.subr.mxu0 0.0
  %4660 = vmatpush2.msra.mxu0 0.0
  %4661 = vmatprep.subr.mxu0 0.0
  %4662 = vmatpush2.msra.mxu0 0.0
  %4663 = vmatprep.subr.mxu0 0.0
  %4664 = vmatpush2.msra.mxu0 0.0
  %4665 = vmatprep.subr.mxu0 0.0
  %4666 = vmatpush2.msra.mxu0 0.0
  %4667 = vmatprep.subr.mxu0 0.0
  %4668 = vmatpush2.msra.mxu0 0.0
  %4669 = vmatprep.subr.mxu0 0.0
  %4670 = vmatpush2.msra.mxu0 0.0
  %4671 = vmatprep.mubr.f32.mxu0 0.0
  %4672 = vmatmul.mubr.f32.gmra.mxu0 %v4599
  %v4673 = vpop.f32.mrf.mxu0
  %v4674 = vadd.f32 0.0, %v4673
  %v4675 = vpop.f32.mrf.mxu0
  %4676 = vmatprep.mubr.f32.mxu0 0.0
  %4677 = vmatmul.mubr.f32.gmra.mxu0 %v4602
  %v4678 = vpop.f32.mrf.mxu0
  %v4679 = vadd.f32 0.0, %v4678
  %v4680 = vpop.f32.mrf.mxu0
  %4681 = vmatprep.mubr.f32.mxu0 0.0
  %4682 = vmatmul.mubr.f32.gmra.mxu0 %v4605
  %v4683 = vpop.f32.mrf.mxu0
  %v4684 = vadd.f32 0.0, %v4683
  %v4685 = vpop.f32.mrf.mxu0
  %4686 = vdwg.mxu0
  %v4687 = vadd.f32 %v4506, %v4674
  %v4688 = vadd.f32 %v4507, %v4679
  %v4689 = vadd.f32 %v4508, %v4684
  %s4690 = scalar_lea.vmem %s3, 360
  %v4691 = vld [vmem:[%s4690] sm:$0xff]
  %v4692 = vld [vmem:[%s4690 + $0x8] sm:$0xff]
  %v4693 = vld [vmem:[%s4690 + $0x10] sm:$0x3]
  %4694 = vmatprep.subr.mxu0 0.0
  %4695 = vmatpush1.msra.mxu0 %v1982
  %4696 = vmatprep.subr.mxu0 0.0
  %4697 = vmatpush1.msra.mxu0 %v1981
  %4698 = vmatprep.subr.mxu0 0.0
  %4699 = vmatpush1.msra.mxu0 %v1980
  %4700 = vmatprep.subr.mxu0 0.0
  %4701 = vmatpush1.msra.mxu0 %v1979
  %4702 = vmatprep.subr.mxu0 0.0
  %4703 = vmatpush1.msra.mxu0 %v1978
  %4704 = vmatprep.subr.mxu0 0.0
  %4705 = vmatpush1.msra.mxu0 %v1977
  %4706 = vmatprep.subr.mxu0 0.0
  %4707 = vmatpush1.msra.mxu0 %v1976
  %4708 = vmatprep.subr.mxu0 0.0
  %4709 = vmatpush1.msra.mxu0 %v1975
  %4710 = vmatprep.subr.mxu0 0.0
  %4711 = vmatpush1.msra.mxu0 %v1974
  %4712 = vmatprep.subr.mxu0 0.0
  %4713 = vmatpush1.msra.mxu0 %v1973
  %4714 = vmatprep.subr.mxu0 0.0
  %4715 = vmatpush1.msra.mxu0 %v1972
  %4716 = vmatprep.subr.mxu0 0.0
  %4717 = vmatpush1.msra.mxu0 %v1971
  %4718 = vmatprep.subr.mxu0 0.0
  %4719 = vmatpush1.msra.mxu0 %v1970
  %4720 = vmatprep.subr.mxu0 0.0
  %4721 = vmatpush1.msra.mxu0 %v1969
  %4722 = vmatprep.subr.mxu0 0.0
  %4723 = vmatpush1.msra.mxu0 %v1968
  %4724 = vmatprep.subr.mxu0 0.0
  %4725 = vmatpush1.msra.mxu0 %v1967
  %4726 = vmatprep.subr.mxu0 0.0
  %4727 = vmatpush2.msra.mxu0 0.0
  %4728 = vmatprep.subr.mxu0 0.0
  %4729 = vmatpush2.msra.mxu0 0.0
  %4730 = vmatprep.subr.mxu0 0.0
  %4731 = vmatpush2.msra.mxu0 0.0
  %4732 = vmatprep.subr.mxu0 0.0
  %4733 = vmatpush2.msra.mxu0 0.0
  %4734 = vmatprep.subr.mxu0 0.0
  %4735 = vmatpush2.msra.mxu0 0.0
  %4736 = vmatprep.subr.mxu0 0.0
  %4737 = vmatpush2.msra.mxu0 0.0
  %4738 = vmatprep.subr.mxu0 0.0
  %4739 = vmatpush2.msra.mxu0 0.0
  %4740 = vmatprep.subr.mxu0 0.0
  %4741 = vmatpush2.msra.mxu0 0.0
  %4742 = vmatprep.subr.mxu0 0.0
  %4743 = vmatpush2.msra.mxu0 0.0
  %4744 = vmatprep.subr.mxu0 0.0
  %4745 = vmatpush2.msra.mxu0 0.0
  %4746 = vmatprep.subr.mxu0 0.0
  %4747 = vmatpush2.msra.mxu0 0.0
  %4748 = vmatprep.subr.mxu0 0.0
  %4749 = vmatpush2.msra.mxu0 0.0
  %4750 = vmatprep.subr.mxu0 0.0
  %4751 = vmatpush2.msra.mxu0 0.0
  %4752 = vmatprep.subr.mxu0 0.0
  %4753 = vmatpush2.msra.mxu0 0.0
  %4754 = vmatprep.subr.mxu0 0.0
  %4755 = vmatpush2.msra.mxu0 0.0
  %4756 = vmatprep.subr.mxu0 0.0
  %4757 = vmatpush2.msra.mxu0 0.0
  %4758 = vmatprep.mubr.f32.mxu0 0.0
  %4759 = vmatmul.mubr.f32.gmra.mxu0 %v4691
  %v4760 = vpop.f32.mrf.mxu0
  %v4761 = vadd.f32 0.0, %v4760
  %v4762 = vpop.f32.mrf.mxu0
  %4763 = vmatprep.mubr.f32.mxu0 0.0
  %4764 = vmatmul.mubr.f32.gmra.mxu0 %v4692
  %v4765 = vpop.f32.mrf.mxu0
  %v4766 = vadd.f32 0.0, %v4765
  %v4767 = vpop.f32.mrf.mxu0
  %4768 = vmatprep.mubr.f32.mxu0 0.0
  %4769 = vmatmul.mubr.f32.gmra.mxu0 %v4693
  %v4770 = vpop.f32.mrf.mxu0
  %v4771 = vadd.f32 0.0, %v4770
  %v4772 = vpop.f32.mrf.mxu0
  %4773 = vdwg.mxu0
  %s4774 = scalar_lea.vmem %s4, 480
  %v4775 = vld [vmem:[%s4774] sm:$0xff]
  %v4776 = vld [vmem:[%s4774 + $0x8] sm:$0xff]
  %v4777 = vld [vmem:[%s4774 + $0x10] sm:$0xff]
  %v4778 = vld [vmem:[%s4774 + $0x18] sm:$0xff]
  %v4780 = vsel %vm1807, %v4761, 0
  %v4783 = vsel %vm1807, %v4766, 0
  %v4786 = vsel %vm1807, %v4771, 0
  %4788 = vmatprep.subr.mxu0 0.0
  %4789 = vmatpush1.msra.mxu0 0.0
  %4790 = vmatprep.subr.mxu0 0.0
  %4791 = vmatpush1.msra.mxu0 0.0
  %4792 = vmatprep.subr.mxu0 0.0
  %4793 = vmatpush1.msra.mxu0 0.0
  %4794 = vmatprep.subr.mxu0 0.0
  %4795 = vmatpush1.msra.mxu0 0.0
  %4796 = vmatprep.subr.mxu0 0.0
  %4797 = vmatpush1.msra.mxu0 0.0
  %4798 = vmatprep.subr.mxu0 0.0
  %4799 = vmatpush1.msra.mxu0 0.0
  %4800 = vmatprep.subr.mxu0 0.0
  %4801 = vmatpush1.msra.mxu0 0.0
  %4802 = vmatprep.subr.mxu0 0.0
  %4803 = vmatpush1.msra.mxu0 0.0
  %4804 = vmatprep.subr.mxu0 0.0
  %4805 = vmatpush1.msra.mxu0 0.0
  %4806 = vmatprep.subr.mxu0 0.0
  %4807 = vmatpush1.msra.mxu0 0.0
  %4808 = vmatprep.subr.mxu0 0.0
  %4809 = vmatpush1.msra.mxu0 0.0
  %4810 = vmatprep.subr.mxu0 0.0
  %4811 = vmatpush1.msra.mxu0 0.0
  %4812 = vmatprep.subr.mxu0 0.0
  %4813 = vmatpush1.msra.mxu0 %v4778
  %4814 = vmatprep.subr.mxu0 0.0
  %4815 = vmatpush1.msra.mxu0 %v4777
  %4816 = vmatprep.subr.mxu0 0.0
  %4817 = vmatpush1.msra.mxu0 %v4776
  %4818 = vmatprep.subr.mxu0 0.0
  %4819 = vmatpush1.msra.mxu0 %v4775
  %4820 = vmatprep.subr.mxu0 0.0
  %4821 = vmatpush2.msra.mxu0 0.0
  %4822 = vmatprep.subr.mxu0 0.0
  %4823 = vmatpush2.msra.mxu0 0.0
  %4824 = vmatprep.subr.mxu0 0.0
  %4825 = vmatpush2.msra.mxu0 0.0
  %4826 = vmatprep.subr.mxu0 0.0
  %4827 = vmatpush2.msra.mxu0 0.0
  %4828 = vmatprep.subr.mxu0 0.0
  %4829 = vmatpush2.msra.mxu0 0.0
  %4830 = vmatprep.subr.mxu0 0.0
  %4831 = vmatpush2.msra.mxu0 0.0
  %4832 = vmatprep.subr.mxu0 0.0
  %4833 = vmatpush2.msra.mxu0 0.0
  %4834 = vmatprep.subr.mxu0 0.0
  %4835 = vmatpush2.msra.mxu0 0.0
  %4836 = vmatprep.subr.mxu0 0.0
  %4837 = vmatpush2.msra.mxu0 0.0
  %4838 = vmatprep.subr.mxu0 0.0
  %4839 = vmatpush2.msra.mxu0 0.0
  %4840 = vmatprep.subr.mxu0 0.0
  %4841 = vmatpush2.msra.mxu0 0.0
  %4842 = vmatprep.subr.mxu0 0.0
  %4843 = vmatpush2.msra.mxu0 0.0
  %4844 = vmatprep.subr.mxu0 0.0
  %4845 = vmatpush2.msra.mxu0 0.0
  %4846 = vmatprep.subr.mxu0 0.0
  %4847 = vmatpush2.msra.mxu0 0.0
  %4848 = vmatprep.subr.mxu0 0.0
  %4849 = vmatpush2.msra.mxu0 0.0
  %4850 = vmatprep.subr.mxu0 0.0
  %4851 = vmatpush2.msra.mxu0 0.0
  %4852 = vmatprep.mubr.f32.mxu0 0.0
  %4853 = vmatmul.mubr.f32.gmra.mxu0 %v4780
  %v4854 = vpop.f32.mrf.mxu0
  %v4855 = vadd.f32 0.0, %v4854
  %v4856 = vpop.f32.mrf.mxu0
  %4857 = vmatprep.mubr.f32.mxu0 0.0
  %4858 = vmatmul.mubr.f32.gmra.mxu0 %v4783
  %v4859 = vpop.f32.mrf.mxu0
  %v4860 = vadd.f32 0.0, %v4859
  %v4861 = vpop.f32.mrf.mxu0
  %4862 = vmatprep.mubr.f32.mxu0 0.0
  %4863 = vmatmul.mubr.f32.gmra.mxu0 %v4786
  %v4864 = vpop.f32.mrf.mxu0
  %v4865 = vadd.f32 0.0, %v4864
  %v4866 = vpop.f32.mrf.mxu0
  %4867 = vdwg.mxu0
  %v4868 = vadd.f32 %v4687, %v4855
  %v4869 = vadd.f32 %v4688, %v4860
  %v4870 = vadd.f32 %v4689, %v4865
  %v4871 = vsel %vm532, %v4868, 0.0
  %v4872 = vsel %vm532, %v4869, 0.0
  %v4873 = vadd.f32 %v4871, %v4872
  %vm4874 = vcmask 517120
  %v4875 = vsel %vm4874, %v4870, 0.0
  %v4876 = vadd.f32 %v4873, %v4875
  %v4877 = vrot.slane %v4876, 4
  %v4878 = vadd.f32 %v4876, %v4877
  %v4879 = vrot.slane %v4878, 2
  %v4880 = vadd.f32 %v4878, %v4879
  %v4881 = vrot.slane %v4880, 1
  %v4882 = vadd.f32 %v4880, %v4881
  %v4883 = vrcp.pop 18.0
  %v4884 = vmul.f32 %v4882, %v4883
  %v4885 = vsub.f32 %v4868, %v4884
  %v4886 = vsub.f32 %v4869, %v4884
  %v4887 = vsub.f32 %v4870, %v4884
  %v4888 = vmul.f32 %v4885, %v4885
  %v4889 = vmul.f32 %v4886, %v4886
  %v4890 = vmul.f32 %v4887, %v4887
  %v4891 = vsel %vm532, %v4888, 0.0
  %v4892 = vsel %vm532, %v4889, 0.0
  %v4893 = vadd.f32 %v4891, %v4892
  %v4894 = vsel %vm4874, %v4890, 0.0
  %v4895 = vadd.f32 %v4893, %v4894
  %v4896 = vrot.slane %v4895, 4
  %v4897 = vadd.f32 %v4895, %v4896
  %v4898 = vrot.slane %v4897, 2
  %v4899 = vadd.f32 %v4897, %v4898
  %v4900 = vrot.slane %v4899, 1
  %v4901 = vadd.f32 %v4899, %v4900
  %v4902 = vmul.f32 %v4901, %v4883
  %v4903 = vadd.f32 %v4902, 1e-05
  %v4904 = vrsqrt.pop %v4903
  %v4905 = vmul.f32 %v4885, %v4904
  %v4906 = vmul.f32 %v4886, %v4904
  %v4907 = vmul.f32 %v4887, %v4904
  %vm4908 = vcmp.ge.f32.partialorder %v4905, 0.0
  %vm4909 = vcmp.ge.f32.partialorder %v4906, 0.0
  %vm4910 = vcmp.ge.f32.partialorder %v4907, 0.0
  %v4911 = vmul.f32 %v4905, 0.01
  %v4912 = vmul.f32 %v4906, 0.01
  %v4913 = vmul.f32 %v4907, 0.01
  %v4914 = vsel %vm4908, %v4905, %v4911
  %v4915 = vsel %vm4909, %v4906, %v4912
  %v4916 = vsel %vm4910, %v4907, %v4913
  %v4917 = vld [vmem:[%s5] sm:$0x3]
  %vm4918 = vcmask 146432
  %v4920 = vsel %vm4918, %v4917, 0
  %v4923 = vsel %vm140, %v4916, 0
  %4925 = vmatprep.subr.mxu0 0.0
  %4926 = vmatpush1.msra.mxu0 0.0
  %4927 = vmatprep.subr.mxu0 0.0
  %4928 = vmatpush1.msra.mxu0 0.0
  %4929 = vmatprep.subr.mxu0 0.0
  %4930 = vmatpush1.msra.mxu0 0.0
  %4931 = vmatprep.subr.mxu0 0.0
  %4932 = vmatpush1.msra.mxu0 0.0
  %4933 = vmatprep.subr.mxu0 0.0
  %4934 = vmatpush1.msra.mxu0 0.0
  %4935 = vmatprep.subr.mxu0 0.0
  %4936 = vmatpush1.msra.mxu0 0.0
  %4937 = vmatprep.subr.mxu0 0.0
  %4938 = vmatpush1.msra.mxu0 0.0
  %4939 = vmatprep.subr.mxu0 0.0
  %4940 = vmatpush1.msra.mxu0 0.0
  %4941 = vmatprep.subr.mxu0 0.0
  %4942 = vmatpush1.msra.mxu0 0.0
  %4943 = vmatprep.subr.mxu0 0.0
  %4944 = vmatpush1.msra.mxu0 0.0
  %4945 = vmatprep.subr.mxu0 0.0
  %4946 = vmatpush1.msra.mxu0 0.0
  %4947 = vmatprep.subr.mxu0 0.0
  %4948 = vmatpush1.msra.mxu0 0.0
  %4949 = vmatprep.subr.mxu0 0.0
  %4950 = vmatpush1.msra.mxu0 0.0
  %4951 = vmatprep.subr.mxu0 0.0
  %4952 = vmatpush1.msra.mxu0 %v4923
  %4953 = vmatprep.subr.mxu0 0.0
  %4954 = vmatpush1.msra.mxu0 %v4915
  %4955 = vmatprep.subr.mxu0 0.0
  %4956 = vmatpush1.msra.mxu0 %v4914
  %4957 = vmatprep.subr.mxu0 0.0
  %4958 = vmatpush2.msra.mxu0 0.0
  %4959 = vmatprep.subr.mxu0 0.0
  %4960 = vmatpush2.msra.mxu0 0.0
  %4961 = vmatprep.subr.mxu0 0.0
  %4962 = vmatpush2.msra.mxu0 0.0
  %4963 = vmatprep.subr.mxu0 0.0
  %4964 = vmatpush2.msra.mxu0 0.0
  %4965 = vmatprep.subr.mxu0 0.0
  %4966 = vmatpush2.msra.mxu0 0.0
  %4967 = vmatprep.subr.mxu0 0.0
  %4968 = vmatpush2.msra.mxu0 0.0
  %4969 = vmatprep.subr.mxu0 0.0
  %4970 = vmatpush2.msra.mxu0 0.0
  %4971 = vmatprep.subr.mxu0 0.0
  %4972 = vmatpush2.msra.mxu0 0.0
  %4973 = vmatprep.subr.mxu0 0.0
  %4974 = vmatpush2.msra.mxu0 0.0
  %4975 = vmatprep.subr.mxu0 0.0
  %4976 = vmatpush2.msra.mxu0 0.0
  %4977 = vmatprep.subr.mxu0 0.0
  %4978 = vmatpush2.msra.mxu0 0.0
  %4979 = vmatprep.subr.mxu0 0.0
  %4980 = vmatpush2.msra.mxu0 0.0
  %4981 = vmatprep.subr.mxu0 0.0
  %4982 = vmatpush2.msra.mxu0 0.0
  %4983 = vmatprep.subr.mxu0 0.0
  %4984 = vmatpush2.msra.mxu0 0.0
  %4985 = vmatprep.subr.mxu0 0.0
  %4986 = vmatpush2.msra.mxu0 0.0
  %4987 = vmatprep.subr.mxu0 0.0
  %4988 = vmatpush2.msra.mxu0 0.0
  %4989 = vmatprep.mubr.f32.mxu0 0.0
  %4990 = vmatmul.mubr.f32.gmra.mxu0 %v4920
  %v4991 = vpop.f32.mrf.mxu0
  %v4992 = vadd.f32 0.0, %v4991
  %v4993 = vpop.f32.mrf.mxu0
  %4994 = vdwg.mxu0
  %v4995 = vld [vmem:[%s6] sm:$0xff]
  %v4996 = vld [vmem:[%s6 + $0x8] sm:$0xff]
  %v4997 = vld [vmem:[%s6 + $0x10] sm:$0xff]
  %v4998 = vld [vmem:[%s6 + $0x18] sm:$0xff]
  %v4999 = vld [vmem:[%s6 + $0x20] sm:$0xff]
  %v5000 = vld [vmem:[%s6 + $0x28] sm:$0xff]
  %v5001 = vld [vmem:[%s6 + $0x30] sm:$0xff]
  %v5002 = vld [vmem:[%s6 + $0x38] sm:$0xff]
  %s5003 = scalar_lea.vmem %s5, 2
  %v5004 = vld [vmem:[%s5003] sm:$0x3]
  %v5006 = vsel %vm4918, %v5004, 0
  %5008 = vmatprep.subr.mxu0 0.0
  %5009 = vmatpush1.msra.mxu0 0.0
  %5010 = vmatprep.subr.mxu0 0.0
  %5011 = vmatpush1.msra.mxu0 0.0
  %5012 = vmatprep.subr.mxu0 0.0
  %5013 = vmatpush1.msra.mxu0 0.0
  %5014 = vmatprep.subr.mxu0 0.0
  %5015 = vmatpush1.msra.mxu0 0.0
  %5016 = vmatprep.subr.mxu0 0.0
  %5017 = vmatpush1.msra.mxu0 0.0
  %5018 = vmatprep.subr.mxu0 0.0
  %5019 = vmatpush1.msra.mxu0 0.0
  %5020 = vmatprep.subr.mxu0 0.0
  %5021 = vmatpush1.msra.mxu0 0.0
  %5022 = vmatprep.subr.mxu0 0.0
  %5023 = vmatpush1.msra.mxu0 0.0
  %5024 = vmatprep.subr.mxu0 0.0
  %5025 = vmatpush1.msra.mxu0 0.0
  %5026 = vmatprep.subr.mxu0 0.0
  %5027 = vmatpush1.msra.mxu0 0.0
  %5028 = vmatprep.subr.mxu0 0.0
  %5029 = vmatpush1.msra.mxu0 0.0
  %5030 = vmatprep.subr.mxu0 0.0
  %5031 = vmatpush1.msra.mxu0 0.0
  %5032 = vmatprep.subr.mxu0 0.0
  %5033 = vmatpush1.msra.mxu0 0.0
  %5034 = vmatprep.subr.mxu0 0.0
  %5035 = vmatpush1.msra.mxu0 %v4923
  %5036 = vmatprep.subr.mxu0 0.0
  %5037 = vmatpush1.msra.mxu0 %v4915
  %5038 = vmatprep.subr.mxu0 0.0
  %5039 = vmatpush1.msra.mxu0 %v4914
  %5040 = vmatprep.subr.mxu0 0.0
  %5041 = vmatpush2.msra.mxu0 0.0
  %5042 = vmatprep.subr.mxu0 0.0
  %5043 = vmatpush2.msra.mxu0 0.0
  %5044 = vmatprep.subr.mxu0 0.0
  %5045 = vmatpush2.msra.mxu0 0.0
  %5046 = vmatprep.subr.mxu0 0.0
  %5047 = vmatpush2.msra.mxu0 0.0
  %5048 = vmatprep.subr.mxu0 0.0
  %5049 = vmatpush2.msra.mxu0 0.0
  %5050 = vmatprep.subr.mxu0 0.0
  %5051 = vmatpush2.msra.mxu0 0.0
  %5052 = vmatprep.subr.mxu0 0.0
  %5053 = vmatpush2.msra.mxu0 0.0
  %5054 = vmatprep.subr.mxu0 0.0
  %5055 = vmatpush2.msra.mxu0 0.0
  %5056 = vmatprep.subr.mxu0 0.0
  %5057 = vmatpush2.msra.mxu0 0.0
  %5058 = vmatprep.subr.mxu0 0.0
  %5059 = vmatpush2.msra.mxu0 0.0
  %5060 = vmatprep.subr.mxu0 0.0
  %5061 = vmatpush2.msra.mxu0 0.0
  %5062 = vmatprep.subr.mxu0 0.0
  %5063 = vmatpush2.msra.mxu0 0.0
  %5064 = vmatprep.subr.mxu0 0.0
  %5065 = vmatpush2.msra.mxu0 0.0
  %5066 = vmatprep.subr.mxu0 0.0
  %5067 = vmatpush2.msra.mxu0 0.0
  %5068 = vmatprep.subr.mxu0 0.0
  %5069 = vmatpush2.msra.mxu0 0.0
  %5070 = vmatprep.subr.mxu0 0.0
  %5071 = vmatpush2.msra.mxu0 0.0
  %5072 = vmatprep.mubr.f32.mxu0 0.0
  %5073 = vmatmul.mubr.f32.gmra.mxu0 %v5006
  %v5074 = vpop.f32.mrf.mxu0
  %v5075 = vadd.f32 0.0, %v5074
  %v5076 = vpop.f32.mrf.mxu0
  %5077 = vdwg.mxu0
  %s5078 = scalar_lea.vmem %s6, 64
  %v5079 = vld [vmem:[%s5078] sm:$0xff]
  %v5080 = vld [vmem:[%s5078 + $0x8] sm:$0xff]
  %v5081 = vld [vmem:[%s5078 + $0x10] sm:$0xff]
  %v5082 = vld [vmem:[%s5078 + $0x18] sm:$0xff]
  %v5083 = vld [vmem:[%s5078 + $0x20] sm:$0xff]
  %v5084 = vld [vmem:[%s5078 + $0x28] sm:$0xff]
  %v5085 = vld [vmem:[%s5078 + $0x30] sm:$0xff]
  %v5086 = vld [vmem:[%s5078 + $0x38] sm:$0xff]
  %v5088 = vsel %vm532, %v5075, 0
  %5090 = vmatprep.subr.mxu0 0.0
  %5091 = vmatpush1.msra.mxu0 0.0
  %5092 = vmatprep.subr.mxu0 0.0
  %5093 = vmatpush1.msra.mxu0 0.0
  %5094 = vmatprep.subr.mxu0 0.0
  %5095 = vmatpush1.msra.mxu0 0.0
  %5096 = vmatprep.subr.mxu0 0.0
  %5097 = vmatpush1.msra.mxu0 0.0
  %5098 = vmatprep.subr.mxu0 0.0
  %5099 = vmatpush1.msra.mxu0 0.0
  %5100 = vmatprep.subr.mxu0 0.0
  %5101 = vmatpush1.msra.mxu0 0.0
  %5102 = vmatprep.subr.mxu0 0.0
  %5103 = vmatpush1.msra.mxu0 0.0
  %5104 = vmatprep.subr.mxu0 0.0
  %5105 = vmatpush1.msra.mxu0 0.0
  %5106 = vmatprep.subr.mxu0 0.0
  %5107 = vmatpush1.msra.mxu0 %v5086
  %5108 = vmatprep.subr.mxu0 0.0
  %5109 = vmatpush1.msra.mxu0 %v5085
  %5110 = vmatprep.subr.mxu0 0.0
  %5111 = vmatpush1.msra.mxu0 %v5084
  %5112 = vmatprep.subr.mxu0 0.0
  %5113 = vmatpush1.msra.mxu0 %v5083
  %5114 = vmatprep.subr.mxu0 0.0
  %5115 = vmatpush1.msra.mxu0 %v5082
  %5116 = vmatprep.subr.mxu0 0.0
  %5117 = vmatpush1.msra.mxu0 %v5081
  %5118 = vmatprep.subr.mxu0 0.0
  %5119 = vmatpush1.msra.mxu0 %v5080
  %5120 = vmatprep.subr.mxu0 0.0
  %5121 = vmatpush1.msra.mxu0 %v5079
  %5122 = vmatprep.subr.mxu0 0.0
  %5123 = vmatpush2.msra.mxu0 0.0
  %5124 = vmatprep.subr.mxu0 0.0
  %5125 = vmatpush2.msra.mxu0 0.0
  %5126 = vmatprep.subr.mxu0 0.0
  %5127 = vmatpush2.msra.mxu0 0.0
  %5128 = vmatprep.subr.mxu0 0.0
  %5129 = vmatpush2.msra.mxu0 0.0
  %5130 = vmatprep.subr.mxu0 0.0
  %5131 = vmatpush2.msra.mxu0 0.0
  %5132 = vmatprep.subr.mxu0 0.0
  %5133 = vmatpush2.msra.mxu0 0.0
  %5134 = vmatprep.subr.mxu0 0.0
  %5135 = vmatpush2.msra.mxu0 0.0
  %5136 = vmatprep.subr.mxu0 0.0
  %5137 = vmatpush2.msra.mxu0 0.0
  %5138 = vmatprep.subr.mxu0 0.0
  %5139 = vmatpush2.msra.mxu0 0.0
  %5140 = vmatprep.subr.mxu0 0.0
  %5141 = vmatpush2.msra.mxu0 0.0
  %5142 = vmatprep.subr.mxu0 0.0
  %5143 = vmatpush2.msra.mxu0 0.0
  %5144 = vmatprep.subr.mxu0 0.0
  %5145 = vmatpush2.msra.mxu0 0.0
  %5146 = vmatprep.subr.mxu0 0.0
  %5147 = vmatpush2.msra.mxu0 0.0
  %5148 = vmatprep.subr.mxu0 0.0
  %5149 = vmatpush2.msra.mxu0 0.0
  %5150 = vmatprep.subr.mxu0 0.0
  %5151 = vmatpush2.msra.mxu0 0.0
  %5152 = vmatprep.subr.mxu0 0.0
  %5153 = vmatpush2.msra.mxu0 0.0
  %5154 = vmatprep.mubr.f32.mxu0 0.0
  %5155 = vmatmul.mubr.f32.gmra.mxu0 %v5088
  %v5156 = vpop.f32.mrf.mxu0
  %v5157 = vadd.f32 0.0, %v5156
  %v5158 = vpop.f32.mrf.mxu0
  %5159 = vdwg.mxu0
  %v5161 = vsel %vm532, %v4992, 0
  %5163 = vmatprep.subr.mxu0 0.0
  %5164 = vmatpush1.msra.mxu0 0.0
  %5165 = vmatprep.subr.mxu0 0.0
  %5166 = vmatpush1.msra.mxu0 0.0
  %5167 = vmatprep.subr.mxu0 0.0
  %5168 = vmatpush1.msra.mxu0 0.0
  %5169 = vmatprep.subr.mxu0 0.0
  %5170 = vmatpush1.msra.mxu0 0.0
  %5171 = vmatprep.subr.mxu0 0.0
  %5172 = vmatpush1.msra.mxu0 0.0
  %5173 = vmatprep.subr.mxu0 0.0
  %5174 = vmatpush1.msra.mxu0 0.0
  %5175 = vmatprep.subr.mxu0 0.0
  %5176 = vmatpush1.msra.mxu0 0.0
  %5177 = vmatprep.subr.mxu0 0.0
  %5178 = vmatpush1.msra.mxu0 0.0
  %5179 = vmatprep.subr.mxu0 0.0
  %5180 = vmatpush1.msra.mxu0 %v5002
  %5181 = vmatprep.subr.mxu0 0.0
  %5182 = vmatpush1.msra.mxu0 %v5001
  %5183 = vmatprep.subr.mxu0 0.0
  %5184 = vmatpush1.msra.mxu0 %v5000
  %5185 = vmatprep.subr.mxu0 0.0
  %5186 = vmatpush1.msra.mxu0 %v4999
  %5187 = vmatprep.subr.mxu0 0.0
  %5188 = vmatpush1.msra.mxu0 %v4998
  %5189 = vmatprep.subr.mxu0 0.0
  %5190 = vmatpush1.msra.mxu0 %v4997
  %5191 = vmatprep.subr.mxu0 0.0
  %5192 = vmatpush1.msra.mxu0 %v4996
  %5193 = vmatprep.subr.mxu0 0.0
  %5194 = vmatpush1.msra.mxu0 %v4995
  %5195 = vmatprep.subr.mxu0 0.0
  %5196 = vmatpush2.msra.mxu0 0.0
  %5197 = vmatprep.subr.mxu0 0.0
  %5198 = vmatpush2.msra.mxu0 0.0
  %5199 = vmatprep.subr.mxu0 0.0
  %5200 = vmatpush2.msra.mxu0 0.0
  %5201 = vmatprep.subr.mxu0 0.0
  %5202 = vmatpush2.msra.mxu0 0.0
  %5203 = vmatprep.subr.mxu0 0.0
  %5204 = vmatpush2.msra.mxu0 0.0
  %5205 = vmatprep.subr.mxu0 0.0
  %5206 = vmatpush2.msra.mxu0 0.0
  %5207 = vmatprep.subr.mxu0 0.0
  %5208 = vmatpush2.msra.mxu0 0.0
  %5209 = vmatprep.subr.mxu0 0.0
  %5210 = vmatpush2.msra.mxu0 0.0
  %5211 = vmatprep.subr.mxu0 0.0
  %5212 = vmatpush2.msra.mxu0 0.0
  %5213 = vmatprep.subr.mxu0 0.0
  %5214 = vmatpush2.msra.mxu0 0.0
  %5215 = vmatprep.subr.mxu0 0.0
  %5216 = vmatpush2.msra.mxu0 0.0
  %5217 = vmatprep.subr.mxu0 0.0
  %5218 = vmatpush2.msra.mxu0 0.0
  %5219 = vmatprep.subr.mxu0 0.0
  %5220 = vmatpush2.msra.mxu0 0.0
  %5221 = vmatprep.subr.mxu0 0.0
  %5222 = vmatpush2.msra.mxu0 0.0
  %5223 = vmatprep.subr.mxu0 0.0
  %5224 = vmatpush2.msra.mxu0 0.0
  %5225 = vmatprep.subr.mxu0 0.0
  %5226 = vmatpush2.msra.mxu0 0.0
  %5227 = vmatprep.mubr.f32.mxu0 0.0
  %5228 = vmatmul.mubr.f32.gmra.mxu0 %v5161
  %v5229 = vpop.f32.mrf.mxu0
  %v5230 = vadd.f32 %v5157, %v5229
  %v5231 = vpop.f32.mrf.mxu0
  %5232 = vdwg.mxu0
  %s5233 = scalar_lea.vmem %s5, 4
  %v5234 = vld [vmem:[%s5233] sm:$0x3]
  %v5236 = vsel %vm4918, %v5234, 0
  %5238 = vmatprep.subr.mxu0 0.0
  %5239 = vmatpush1.msra.mxu0 0.0
  %5240 = vmatprep.subr.mxu0 0.0
  %5241 = vmatpush1.msra.mxu0 0.0
  %5242 = vmatprep.subr.mxu0 0.0
  %5243 = vmatpush1.msra.mxu0 0.0
  %5244 = vmatprep.subr.mxu0 0.0
  %5245 = vmatpush1.msra.mxu0 0.0
  %5246 = vmatprep.subr.mxu0 0.0
  %5247 = vmatpush1.msra.mxu0 0.0
  %5248 = vmatprep.subr.mxu0 0.0
  %5249 = vmatpush1.msra.mxu0 0.0
  %5250 = vmatprep.subr.mxu0 0.0
  %5251 = vmatpush1.msra.mxu0 0.0
  %5252 = vmatprep.subr.mxu0 0.0
  %5253 = vmatpush1.msra.mxu0 0.0
  %5254 = vmatprep.subr.mxu0 0.0
  %5255 = vmatpush1.msra.mxu0 0.0
  %5256 = vmatprep.subr.mxu0 0.0
  %5257 = vmatpush1.msra.mxu0 0.0
  %5258 = vmatprep.subr.mxu0 0.0
  %5259 = vmatpush1.msra.mxu0 0.0
  %5260 = vmatprep.subr.mxu0 0.0
  %5261 = vmatpush1.msra.mxu0 0.0
  %5262 = vmatprep.subr.mxu0 0.0
  %5263 = vmatpush1.msra.mxu0 0.0
  %5264 = vmatprep.subr.mxu0 0.0
  %5265 = vmatpush1.msra.mxu0 %v4923
  %5266 = vmatprep.subr.mxu0 0.0
  %5267 = vmatpush1.msra.mxu0 %v4915
  %5268 = vmatprep.subr.mxu0 0.0
  %5269 = vmatpush1.msra.mxu0 %v4914
  %5270 = vmatprep.subr.mxu0 0.0
  %5271 = vmatpush2.msra.mxu0 0.0
  %5272 = vmatprep.subr.mxu0 0.0
  %5273 = vmatpush2.msra.mxu0 0.0
  %5274 = vmatprep.subr.mxu0 0.0
  %5275 = vmatpush2.msra.mxu0 0.0
  %5276 = vmatprep.subr.mxu0 0.0
  %5277 = vmatpush2.msra.mxu0 0.0
  %5278 = vmatprep.subr.mxu0 0.0
  %5279 = vmatpush2.msra.mxu0 0.0
  %5280 = vmatprep.subr.mxu0 0.0
  %5281 = vmatpush2.msra.mxu0 0.0
  %5282 = vmatprep.subr.mxu0 0.0
  %5283 = vmatpush2.msra.mxu0 0.0
  %5284 = vmatprep.subr.mxu0 0.0
  %5285 = vmatpush2.msra.mxu0 0.0
  %5286 = vmatprep.subr.mxu0 0.0
  %5287 = vmatpush2.msra.mxu0 0.0
  %5288 = vmatprep.subr.mxu0 0.0
  %5289 = vmatpush2.msra.mxu0 0.0
  %5290 = vmatprep.subr.mxu0 0.0
  %5291 = vmatpush2.msra.mxu0 0.0
  %5292 = vmatprep.subr.mxu0 0.0
  %5293 = vmatpush2.msra.mxu0 0.0
  %5294 = vmatprep.subr.mxu0 0.0
  %5295 = vmatpush2.msra.mxu0 0.0
  %5296 = vmatprep.subr.mxu0 0.0
  %5297 = vmatpush2.msra.mxu0 0.0
  %5298 = vmatprep.subr.mxu0 0.0
  %5299 = vmatpush2.msra.mxu0 0.0
  %5300 = vmatprep.subr.mxu0 0.0
  %5301 = vmatpush2.msra.mxu0 0.0
  %5302 = vmatprep.mubr.f32.mxu0 0.0
  %5303 = vmatmul.mubr.f32.gmra.mxu0 %v5236
  %v5304 = vpop.f32.mrf.mxu0
  %v5305 = vadd.f32 0.0, %v5304
  %v5306 = vpop.f32.mrf.mxu0
  %5307 = vdwg.mxu0
  %s5308 = scalar_lea.vmem %s6, 128
  %v5309 = vld [vmem:[%s5308] sm:$0xff]
  %v5310 = vld [vmem:[%s5308 + $0x8] sm:$0xff]
  %v5311 = vld [vmem:[%s5308 + $0x10] sm:$0xff]
  %v5312 = vld [vmem:[%s5308 + $0x18] sm:$0xff]
  %v5313 = vld [vmem:[%s5308 + $0x20] sm:$0xff]
  %v5314 = vld [vmem:[%s5308 + $0x28] sm:$0xff]
  %v5315 = vld [vmem:[%s5308 + $0x30] sm:$0xff]
  %v5316 = vld [vmem:[%s5308 + $0x38] sm:$0xff]
  %v5318 = vsel %vm532, %v5305, 0
  %5320 = vmatprep.subr.mxu0 0.0
  %5321 = vmatpush1.msra.mxu0 0.0
  %5322 = vmatprep.subr.mxu0 0.0
  %5323 = vmatpush1.msra.mxu0 0.0
  %5324 = vmatprep.subr.mxu0 0.0
  %5325 = vmatpush1.msra.mxu0 0.0
  %5326 = vmatprep.subr.mxu0 0.0
  %5327 = vmatpush1.msra.mxu0 0.0
  %5328 = vmatprep.subr.mxu0 0.0
  %5329 = vmatpush1.msra.mxu0 0.0
  %5330 = vmatprep.subr.mxu0 0.0
  %5331 = vmatpush1.msra.mxu0 0.0
  %5332 = vmatprep.subr.mxu0 0.0
  %5333 = vmatpush1.msra.mxu0 0.0
  %5334 = vmatprep.subr.mxu0 0.0
  %5335 = vmatpush1.msra.mxu0 0.0
  %5336 = vmatprep.subr.mxu0 0.0
  %5337 = vmatpush1.msra.mxu0 %v5316
  %5338 = vmatprep.subr.mxu0 0.0
  %5339 = vmatpush1.msra.mxu0 %v5315
  %5340 = vmatprep.subr.mxu0 0.0
  %5341 = vmatpush1.msra.mxu0 %v5314
  %5342 = vmatprep.subr.mxu0 0.0
  %5343 = vmatpush1.msra.mxu0 %v5313
  %5344 = vmatprep.subr.mxu0 0.0
  %5345 = vmatpush1.msra.mxu0 %v5312
  %5346 = vmatprep.subr.mxu0 0.0
  %5347 = vmatpush1.msra.mxu0 %v5311
  %5348 = vmatprep.subr.mxu0 0.0
  %5349 = vmatpush1.msra.mxu0 %v5310
  %5350 = vmatprep.subr.mxu0 0.0
  %5351 = vmatpush1.msra.mxu0 %v5309
  %5352 = vmatprep.subr.mxu0 0.0
  %5353 = vmatpush2.msra.mxu0 0.0
  %5354 = vmatprep.subr.mxu0 0.0
  %5355 = vmatpush2.msra.mxu0 0.0
  %5356 = vmatprep.subr.mxu0 0.0
  %5357 = vmatpush2.msra.mxu0 0.0
  %5358 = vmatprep.subr.mxu0 0.0
  %5359 = vmatpush2.msra.mxu0 0.0
  %5360 = vmatprep.subr.mxu0 0.0
  %5361 = vmatpush2.msra.mxu0 0.0
  %5362 = vmatprep.subr.mxu0 0.0
  %5363 = vmatpush2.msra.mxu0 0.0
  %5364 = vmatprep.subr.mxu0 0.0
  %5365 = vmatpush2.msra.mxu0 0.0
  %5366 = vmatprep.subr.mxu0 0.0
  %5367 = vmatpush2.msra.mxu0 0.0
  %5368 = vmatprep.subr.mxu0 0.0
  %5369 = vmatpush2.msra.mxu0 0.0
  %5370 = vmatprep.subr.mxu0 0.0
  %5371 = vmatpush2.msra.mxu0 0.0
  %5372 = vmatprep.subr.mxu0 0.0
  %5373 = vmatpush2.msra.mxu0 0.0
  %5374 = vmatprep.subr.mxu0 0.0
  %5375 = vmatpush2.msra.mxu0 0.0
  %5376 = vmatprep.subr.mxu0 0.0
  %5377 = vmatpush2.msra.mxu0 0.0
  %5378 = vmatprep.subr.mxu0 0.0
  %5379 = vmatpush2.msra.mxu0 0.0
  %5380 = vmatprep.subr.mxu0 0.0
  %5381 = vmatpush2.msra.mxu0 0.0
  %5382 = vmatprep.subr.mxu0 0.0
  %5383 = vmatpush2.msra.mxu0 0.0
  %5384 = vmatprep.mubr.f32.mxu0 0.0
  %5385 = vmatmul.mubr.f32.gmra.mxu0 %v5318
  %v5386 = vpop.f32.mrf.mxu0
  %v5387 = vadd.f32 0.0, %v5386
  %v5388 = vpop.f32.mrf.mxu0
  %5389 = vdwg.mxu0
  %v5390 = vadd.f32 %v5230, %v5387
  %s5391 = scalar_lea.vmem %s5, 6
  %v5392 = vld [vmem:[%s5391] sm:$0x3]
  %v5394 = vsel %vm4918, %v5392, 0
  %5396 = vmatprep.subr.mxu0 0.0
  %5397 = vmatpush1.msra.mxu0 0.0
  %5398 = vmatprep.subr.mxu0 0.0
  %5399 = vmatpush1.msra.mxu0 0.0
  %5400 = vmatprep.subr.mxu0 0.0
  %5401 = vmatpush1.msra.mxu0 0.0
  %5402 = vmatprep.subr.mxu0 0.0
  %5403 = vmatpush1.msra.mxu0 0.0
  %5404 = vmatprep.subr.mxu0 0.0
  %5405 = vmatpush1.msra.mxu0 0.0
  %5406 = vmatprep.subr.mxu0 0.0
  %5407 = vmatpush1.msra.mxu0 0.0
  %5408 = vmatprep.subr.mxu0 0.0
  %5409 = vmatpush1.msra.mxu0 0.0
  %5410 = vmatprep.subr.mxu0 0.0
  %5411 = vmatpush1.msra.mxu0 0.0
  %5412 = vmatprep.subr.mxu0 0.0
  %5413 = vmatpush1.msra.mxu0 0.0
  %5414 = vmatprep.subr.mxu0 0.0
  %5415 = vmatpush1.msra.mxu0 0.0
  %5416 = vmatprep.subr.mxu0 0.0
  %5417 = vmatpush1.msra.mxu0 0.0
  %5418 = vmatprep.subr.mxu0 0.0
  %5419 = vmatpush1.msra.mxu0 0.0
  %5420 = vmatprep.subr.mxu0 0.0
  %5421 = vmatpush1.msra.mxu0 0.0
  %5422 = vmatprep.subr.mxu0 0.0
  %5423 = vmatpush1.msra.mxu0 %v4923
  %5424 = vmatprep.subr.mxu0 0.0
  %5425 = vmatpush1.msra.mxu0 %v4915
  %5426 = vmatprep.subr.mxu0 0.0
  %5427 = vmatpush1.msra.mxu0 %v4914
  %5428 = vmatprep.subr.mxu0 0.0
  %5429 = vmatpush2.msra.mxu0 0.0
  %5430 = vmatprep.subr.mxu0 0.0
  %5431 = vmatpush2.msra.mxu0 0.0
  %5432 = vmatprep.subr.mxu0 0.0
  %5433 = vmatpush2.msra.mxu0 0.0
  %5434 = vmatprep.subr.mxu0 0.0
  %5435 = vmatpush2.msra.mxu0 0.0
  %5436 = vmatprep.subr.mxu0 0.0
  %5437 = vmatpush2.msra.mxu0 0.0
  %5438 = vmatprep.subr.mxu0 0.0
  %5439 = vmatpush2.msra.mxu0 0.0
  %5440 = vmatprep.subr.mxu0 0.0
  %5441 = vmatpush2.msra.mxu0 0.0
  %5442 = vmatprep.subr.mxu0 0.0
  %5443 = vmatpush2.msra.mxu0 0.0
  %5444 = vmatprep.subr.mxu0 0.0
  %5445 = vmatpush2.msra.mxu0 0.0
  %5446 = vmatprep.subr.mxu0 0.0
  %5447 = vmatpush2.msra.mxu0 0.0
  %5448 = vmatprep.subr.mxu0 0.0
  %5449 = vmatpush2.msra.mxu0 0.0
  %5450 = vmatprep.subr.mxu0 0.0
  %5451 = vmatpush2.msra.mxu0 0.0
  %5452 = vmatprep.subr.mxu0 0.0
  %5453 = vmatpush2.msra.mxu0 0.0
  %5454 = vmatprep.subr.mxu0 0.0
  %5455 = vmatpush2.msra.mxu0 0.0
  %5456 = vmatprep.subr.mxu0 0.0
  %5457 = vmatpush2.msra.mxu0 0.0
  %5458 = vmatprep.subr.mxu0 0.0
  %5459 = vmatpush2.msra.mxu0 0.0
  %5460 = vmatprep.mubr.f32.mxu0 0.0
  %5461 = vmatmul.mubr.f32.gmra.mxu0 %v5394
  %v5462 = vpop.f32.mrf.mxu0
  %v5463 = vadd.f32 0.0, %v5462
  %v5464 = vpop.f32.mrf.mxu0
  %5465 = vdwg.mxu0
  %s5466 = scalar_lea.vmem %s6, 192
  %v5467 = vld [vmem:[%s5466] sm:$0xff]
  %v5468 = vld [vmem:[%s5466 + $0x8] sm:$0xff]
  %v5469 = vld [vmem:[%s5466 + $0x10] sm:$0xff]
  %v5470 = vld [vmem:[%s5466 + $0x18] sm:$0xff]
  %v5471 = vld [vmem:[%s5466 + $0x20] sm:$0xff]
  %v5472 = vld [vmem:[%s5466 + $0x28] sm:$0xff]
  %v5473 = vld [vmem:[%s5466 + $0x30] sm:$0xff]
  %v5474 = vld [vmem:[%s5466 + $0x38] sm:$0xff]
  %v5476 = vsel %vm532, %v5463, 0
  %5478 = vmatprep.subr.mxu0 0.0
  %5479 = vmatpush1.msra.mxu0 0.0
  %5480 = vmatprep.subr.mxu0 0.0
  %5481 = vmatpush1.msra.mxu0 0.0
  %5482 = vmatprep.subr.mxu0 0.0
  %5483 = vmatpush1.msra.mxu0 0.0
  %5484 = vmatprep.subr.mxu0 0.0
  %5485 = vmatpush1.msra.mxu0 0.0
  %5486 = vmatprep.subr.mxu0 0.0
  %5487 = vmatpush1.msra.mxu0 0.0
  %5488 = vmatprep.subr.mxu0 0.0
  %5489 = vmatpush1.msra.mxu0 0.0
  %5490 = vmatprep.subr.mxu0 0.0
  %5491 = vmatpush1.msra.mxu0 0.0
  %5492 = vmatprep.subr.mxu0 0.0
  %5493 = vmatpush1.msra.mxu0 0.0
  %5494 = vmatprep.subr.mxu0 0.0
  %5495 = vmatpush1.msra.mxu0 %v5474
  %5496 = vmatprep.subr.mxu0 0.0
  %5497 = vmatpush1.msra.mxu0 %v5473
  %5498 = vmatprep.subr.mxu0 0.0
  %5499 = vmatpush1.msra.mxu0 %v5472
  %5500 = vmatprep.subr.mxu0 0.0
  %5501 = vmatpush1.msra.mxu0 %v5471
  %5502 = vmatprep.subr.mxu0 0.0
  %5503 = vmatpush1.msra.mxu0 %v5470
  %5504 = vmatprep.subr.mxu0 0.0
  %5505 = vmatpush1.msra.mxu0 %v5469
  %5506 = vmatprep.subr.mxu0 0.0
  %5507 = vmatpush1.msra.mxu0 %v5468
  %5508 = vmatprep.subr.mxu0 0.0
  %5509 = vmatpush1.msra.mxu0 %v5467
  %5510 = vmatprep.subr.mxu0 0.0
  %5511 = vmatpush2.msra.mxu0 0.0
  %5512 = vmatprep.subr.mxu0 0.0
  %5513 = vmatpush2.msra.mxu0 0.0
  %5514 = vmatprep.subr.mxu0 0.0
  %5515 = vmatpush2.msra.mxu0 0.0
  %5516 = vmatprep.subr.mxu0 0.0
  %5517 = vmatpush2.msra.mxu0 0.0
  %5518 = vmatprep.subr.mxu0 0.0
  %5519 = vmatpush2.msra.mxu0 0.0
  %5520 = vmatprep.subr.mxu0 0.0
  %5521 = vmatpush2.msra.mxu0 0.0
  %5522 = vmatprep.subr.mxu0 0.0
  %5523 = vmatpush2.msra.mxu0 0.0
  %5524 = vmatprep.subr.mxu0 0.0
  %5525 = vmatpush2.msra.mxu0 0.0
  %5526 = vmatprep.subr.mxu0 0.0
  %5527 = vmatpush2.msra.mxu0 0.0
  %5528 = vmatprep.subr.mxu0 0.0
  %5529 = vmatpush2.msra.mxu0 0.0
  %5530 = vmatprep.subr.mxu0 0.0
  %5531 = vmatpush2.msra.mxu0 0.0
  %5532 = vmatprep.subr.mxu0 0.0
  %5533 = vmatpush2.msra.mxu0 0.0
  %5534 = vmatprep.subr.mxu0 0.0
  %5535 = vmatpush2.msra.mxu0 0.0
  %5536 = vmatprep.subr.mxu0 0.0
  %5537 = vmatpush2.msra.mxu0 0.0
  %5538 = vmatprep.subr.mxu0 0.0
  %5539 = vmatpush2.msra.mxu0 0.0
  %5540 = vmatprep.subr.mxu0 0.0
  %5541 = vmatpush2.msra.mxu0 0.0
  %5542 = vmatprep.mubr.f32.mxu0 0.0
  %5543 = vmatmul.mubr.f32.gmra.mxu0 %v5476
  %v5544 = vpop.f32.mrf.mxu0
  %v5545 = vadd.f32 0.0, %v5544
  %v5546 = vpop.f32.mrf.mxu0
  %5547 = vdwg.mxu0
  %v5548 = vadd.f32 %v5390, %v5545
  %s5549 = scalar_lea.vmem %s5, 8
  %v5550 = vld [vmem:[%s5549] sm:$0x3]
  %v5552 = vsel %vm4918, %v5550, 0
  %5554 = vmatprep.subr.mxu0 0.0
  %5555 = vmatpush1.msra.mxu0 0.0
  %5556 = vmatprep.subr.mxu0 0.0
  %5557 = vmatpush1.msra.mxu0 0.0
  %5558 = vmatprep.subr.mxu0 0.0
  %5559 = vmatpush1.msra.mxu0 0.0
  %5560 = vmatprep.subr.mxu0 0.0
  %5561 = vmatpush1.msra.mxu0 0.0
  %5562 = vmatprep.subr.mxu0 0.0
  %5563 = vmatpush1.msra.mxu0 0.0
  %5564 = vmatprep.subr.mxu0 0.0
  %5565 = vmatpush1.msra.mxu0 0.0
  %5566 = vmatprep.subr.mxu0 0.0
  %5567 = vmatpush1.msra.mxu0 0.0
  %5568 = vmatprep.subr.mxu0 0.0
  %5569 = vmatpush1.msra.mxu0 0.0
  %5570 = vmatprep.subr.mxu0 0.0
  %5571 = vmatpush1.msra.mxu0 0.0
  %5572 = vmatprep.subr.mxu0 0.0
  %5573 = vmatpush1.msra.mxu0 0.0
  %5574 = vmatprep.subr.mxu0 0.0
  %5575 = vmatpush1.msra.mxu0 0.0
  %5576 = vmatprep.subr.mxu0 0.0
  %5577 = vmatpush1.msra.mxu0 0.0
  %5578 = vmatprep.subr.mxu0 0.0
  %5579 = vmatpush1.msra.mxu0 0.0
  %5580 = vmatprep.subr.mxu0 0.0
  %5581 = vmatpush1.msra.mxu0 %v4923
  %5582 = vmatprep.subr.mxu0 0.0
  %5583 = vmatpush1.msra.mxu0 %v4915
  %5584 = vmatprep.subr.mxu0 0.0
  %5585 = vmatpush1.msra.mxu0 %v4914
  %5586 = vmatprep.subr.mxu0 0.0
  %5587 = vmatpush2.msra.mxu0 0.0
  %5588 = vmatprep.subr.mxu0 0.0
  %5589 = vmatpush2.msra.mxu0 0.0
  %5590 = vmatprep.subr.mxu0 0.0
  %5591 = vmatpush2.msra.mxu0 0.0
  %5592 = vmatprep.subr.mxu0 0.0
  %5593 = vmatpush2.msra.mxu0 0.0
  %5594 = vmatprep.subr.mxu0 0.0
  %5595 = vmatpush2.msra.mxu0 0.0
  %5596 = vmatprep.subr.mxu0 0.0
  %5597 = vmatpush2.msra.mxu0 0.0
  %5598 = vmatprep.subr.mxu0 0.0
  %5599 = vmatpush2.msra.mxu0 0.0
  %5600 = vmatprep.subr.mxu0 0.0
  %5601 = vmatpush2.msra.mxu0 0.0
  %5602 = vmatprep.subr.mxu0 0.0
  %5603 = vmatpush2.msra.mxu0 0.0
  %5604 = vmatprep.subr.mxu0 0.0
  %5605 = vmatpush2.msra.mxu0 0.0
  %5606 = vmatprep.subr.mxu0 0.0
  %5607 = vmatpush2.msra.mxu0 0.0
  %5608 = vmatprep.subr.mxu0 0.0
  %5609 = vmatpush2.msra.mxu0 0.0
  %5610 = vmatprep.subr.mxu0 0.0
  %5611 = vmatpush2.msra.mxu0 0.0
  %5612 = vmatprep.subr.mxu0 0.0
  %5613 = vmatpush2.msra.mxu0 0.0
  %5614 = vmatprep.subr.mxu0 0.0
  %5615 = vmatpush2.msra.mxu0 0.0
  %5616 = vmatprep.subr.mxu0 0.0
  %5617 = vmatpush2.msra.mxu0 0.0
  %5618 = vmatprep.mubr.f32.mxu0 0.0
  %5619 = vmatmul.mubr.f32.gmra.mxu0 %v5552
  %v5620 = vpop.f32.mrf.mxu0
  %v5621 = vadd.f32 0.0, %v5620
  %v5622 = vpop.f32.mrf.mxu0
  %5623 = vdwg.mxu0
  %s5624 = scalar_lea.vmem %s6, 256
  %v5625 = vld [vmem:[%s5624] sm:$0xff]
  %v5626 = vld [vmem:[%s5624 + $0x8] sm:$0xff]
  %v5627 = vld [vmem:[%s5624 + $0x10] sm:$0xff]
  %v5628 = vld [vmem:[%s5624 + $0x18] sm:$0xff]
  %v5629 = vld [vmem:[%s5624 + $0x20] sm:$0xff]
  %v5630 = vld [vmem:[%s5624 + $0x28] sm:$0xff]
  %v5631 = vld [vmem:[%s5624 + $0x30] sm:$0xff]
  %v5632 = vld [vmem:[%s5624 + $0x38] sm:$0xff]
  %v5634 = vsel %vm532, %v5621, 0
  %5636 = vmatprep.subr.mxu0 0.0
  %5637 = vmatpush1.msra.mxu0 0.0
  %5638 = vmatprep.subr.mxu0 0.0
  %5639 = vmatpush1.msra.mxu0 0.0
  %5640 = vmatprep.subr.mxu0 0.0
  %5641 = vmatpush1.msra.mxu0 0.0
  %5642 = vmatprep.subr.mxu0 0.0
  %5643 = vmatpush1.msra.mxu0 0.0
  %5644 = vmatprep.subr.mxu0 0.0
  %5645 = vmatpush1.msra.mxu0 0.0
  %5646 = vmatprep.subr.mxu0 0.0
  %5647 = vmatpush1.msra.mxu0 0.0
  %5648 = vmatprep.subr.mxu0 0.0
  %5649 = vmatpush1.msra.mxu0 0.0
  %5650 = vmatprep.subr.mxu0 0.0
  %5651 = vmatpush1.msra.mxu0 0.0
  %5652 = vmatprep.subr.mxu0 0.0
  %5653 = vmatpush1.msra.mxu0 %v5632
  %5654 = vmatprep.subr.mxu0 0.0
  %5655 = vmatpush1.msra.mxu0 %v5631
  %5656 = vmatprep.subr.mxu0 0.0
  %5657 = vmatpush1.msra.mxu0 %v5630
  %5658 = vmatprep.subr.mxu0 0.0
  %5659 = vmatpush1.msra.mxu0 %v5629
  %5660 = vmatprep.subr.mxu0 0.0
  %5661 = vmatpush1.msra.mxu0 %v5628
  %5662 = vmatprep.subr.mxu0 0.0
  %5663 = vmatpush1.msra.mxu0 %v5627
  %5664 = vmatprep.subr.mxu0 0.0
  %5665 = vmatpush1.msra.mxu0 %v5626
  %5666 = vmatprep.subr.mxu0 0.0
  %5667 = vmatpush1.msra.mxu0 %v5625
  %5668 = vmatprep.subr.mxu0 0.0
  %5669 = vmatpush2.msra.mxu0 0.0
  %5670 = vmatprep.subr.mxu0 0.0
  %5671 = vmatpush2.msra.mxu0 0.0
  %5672 = vmatprep.subr.mxu0 0.0
  %5673 = vmatpush2.msra.mxu0 0.0
  %5674 = vmatprep.subr.mxu0 0.0
  %5675 = vmatpush2.msra.mxu0 0.0
  %5676 = vmatprep.subr.mxu0 0.0
  %5677 = vmatpush2.msra.mxu0 0.0
  %5678 = vmatprep.subr.mxu0 0.0
  %5679 = vmatpush2.msra.mxu0 0.0
  %5680 = vmatprep.subr.mxu0 0.0
  %5681 = vmatpush2.msra.mxu0 0.0
  %5682 = vmatprep.subr.mxu0 0.0
  %5683 = vmatpush2.msra.mxu0 0.0
  %5684 = vmatprep.subr.mxu0 0.0
  %5685 = vmatpush2.msra.mxu0 0.0
  %5686 = vmatprep.subr.mxu0 0.0
  %5687 = vmatpush2.msra.mxu0 0.0
  %5688 = vmatprep.subr.mxu0 0.0
  %5689 = vmatpush2.msra.mxu0 0.0
  %5690 = vmatprep.subr.mxu0 0.0
  %5691 = vmatpush2.msra.mxu0 0.0
  %5692 = vmatprep.subr.mxu0 0.0
  %5693 = vmatpush2.msra.mxu0 0.0
  %5694 = vmatprep.subr.mxu0 0.0
  %5695 = vmatpush2.msra.mxu0 0.0
  %5696 = vmatprep.subr.mxu0 0.0
  %5697 = vmatpush2.msra.mxu0 0.0
  %5698 = vmatprep.subr.mxu0 0.0
  %5699 = vmatpush2.msra.mxu0 0.0
  %5700 = vmatprep.mubr.f32.mxu0 0.0
  %5701 = vmatmul.mubr.f32.gmra.mxu0 %v5634
  %v5702 = vpop.f32.mrf.mxu0
  %v5703 = vadd.f32 0.0, %v5702
  %v5704 = vpop.f32.mrf.mxu0
  %5705 = vdwg.mxu0
  %v5706 = vadd.f32 %v5548, %v5703
  %s5707 = scalar_lea.vmem %s5, 10
  %v5708 = vld [vmem:[%s5707] sm:$0x3]
  %v5710 = vsel %vm4918, %v5708, 0
  %5712 = vmatprep.subr.mxu0 0.0
  %5713 = vmatpush1.msra.mxu0 0.0
  %5714 = vmatprep.subr.mxu0 0.0
  %5715 = vmatpush1.msra.mxu0 0.0
  %5716 = vmatprep.subr.mxu0 0.0
  %5717 = vmatpush1.msra.mxu0 0.0
  %5718 = vmatprep.subr.mxu0 0.0
  %5719 = vmatpush1.msra.mxu0 0.0
  %5720 = vmatprep.subr.mxu0 0.0
  %5721 = vmatpush1.msra.mxu0 0.0
  %5722 = vmatprep.subr.mxu0 0.0
  %5723 = vmatpush1.msra.mxu0 0.0
  %5724 = vmatprep.subr.mxu0 0.0
  %5725 = vmatpush1.msra.mxu0 0.0
  %5726 = vmatprep.subr.mxu0 0.0
  %5727 = vmatpush1.msra.mxu0 0.0
  %5728 = vmatprep.subr.mxu0 0.0
  %5729 = vmatpush1.msra.mxu0 0.0
  %5730 = vmatprep.subr.mxu0 0.0
  %5731 = vmatpush1.msra.mxu0 0.0
  %5732 = vmatprep.subr.mxu0 0.0
  %5733 = vmatpush1.msra.mxu0 0.0
  %5734 = vmatprep.subr.mxu0 0.0
  %5735 = vmatpush1.msra.mxu0 0.0
  %5736 = vmatprep.subr.mxu0 0.0
  %5737 = vmatpush1.msra.mxu0 0.0
  %5738 = vmatprep.subr.mxu0 0.0
  %5739 = vmatpush1.msra.mxu0 %v4923
  %5740 = vmatprep.subr.mxu0 0.0
  %5741 = vmatpush1.msra.mxu0 %v4915
  %5742 = vmatprep.subr.mxu0 0.0
  %5743 = vmatpush1.msra.mxu0 %v4914
  %5744 = vmatprep.subr.mxu0 0.0
  %5745 = vmatpush2.msra.mxu0 0.0
  %5746 = vmatprep.subr.mxu0 0.0
  %5747 = vmatpush2.msra.mxu0 0.0
  %5748 = vmatprep.subr.mxu0 0.0
  %5749 = vmatpush2.msra.mxu0 0.0
  %5750 = vmatprep.subr.mxu0 0.0
  %5751 = vmatpush2.msra.mxu0 0.0
  %5752 = vmatprep.subr.mxu0 0.0
  %5753 = vmatpush2.msra.mxu0 0.0
  %5754 = vmatprep.subr.mxu0 0.0
  %5755 = vmatpush2.msra.mxu0 0.0
  %5756 = vmatprep.subr.mxu0 0.0
  %5757 = vmatpush2.msra.mxu0 0.0
  %5758 = vmatprep.subr.mxu0 0.0
  %5759 = vmatpush2.msra.mxu0 0.0
  %5760 = vmatprep.subr.mxu0 0.0
  %5761 = vmatpush2.msra.mxu0 0.0
  %5762 = vmatprep.subr.mxu0 0.0
  %5763 = vmatpush2.msra.mxu0 0.0
  %5764 = vmatprep.subr.mxu0 0.0
  %5765 = vmatpush2.msra.mxu0 0.0
  %5766 = vmatprep.subr.mxu0 0.0
  %5767 = vmatpush2.msra.mxu0 0.0
  %5768 = vmatprep.subr.mxu0 0.0
  %5769 = vmatpush2.msra.mxu0 0.0
  %5770 = vmatprep.subr.mxu0 0.0
  %5771 = vmatpush2.msra.mxu0 0.0
  %5772 = vmatprep.subr.mxu0 0.0
  %5773 = vmatpush2.msra.mxu0 0.0
  %5774 = vmatprep.subr.mxu0 0.0
  %5775 = vmatpush2.msra.mxu0 0.0
  %5776 = vmatprep.mubr.f32.mxu0 0.0
  %5777 = vmatmul.mubr.f32.gmra.mxu0 %v5710
  %v5778 = vpop.f32.mrf.mxu0
  %v5779 = vadd.f32 0.0, %v5778
  %v5780 = vpop.f32.mrf.mxu0
  %5781 = vdwg.mxu0
  %s5782 = scalar_lea.vmem %s6, 320
  %v5783 = vld [vmem:[%s5782] sm:$0xff]
  %v5784 = vld [vmem:[%s5782 + $0x8] sm:$0xff]
  %v5785 = vld [vmem:[%s5782 + $0x10] sm:$0xff]
  %v5786 = vld [vmem:[%s5782 + $0x18] sm:$0xff]
  %v5787 = vld [vmem:[%s5782 + $0x20] sm:$0xff]
  %v5788 = vld [vmem:[%s5782 + $0x28] sm:$0xff]
  %v5789 = vld [vmem:[%s5782 + $0x30] sm:$0xff]
  %v5790 = vld [vmem:[%s5782 + $0x38] sm:$0xff]
  %v5792 = vsel %vm532, %v5779, 0
  %5794 = vmatprep.subr.mxu0 0.0
  %5795 = vmatpush1.msra.mxu0 0.0
  %5796 = vmatprep.subr.mxu0 0.0
  %5797 = vmatpush1.msra.mxu0 0.0
  %5798 = vmatprep.subr.mxu0 0.0
  %5799 = vmatpush1.msra.mxu0 0.0
  %5800 = vmatprep.subr.mxu0 0.0
  %5801 = vmatpush1.msra.mxu0 0.0
  %5802 = vmatprep.subr.mxu0 0.0
  %5803 = vmatpush1.msra.mxu0 0.0
  %5804 = vmatprep.subr.mxu0 0.0
  %5805 = vmatpush1.msra.mxu0 0.0
  %5806 = vmatprep.subr.mxu0 0.0
  %5807 = vmatpush1.msra.mxu0 0.0
  %5808 = vmatprep.subr.mxu0 0.0
  %5809 = vmatpush1.msra.mxu0 0.0
  %5810 = vmatprep.subr.mxu0 0.0
  %5811 = vmatpush1.msra.mxu0 %v5790
  %5812 = vmatprep.subr.mxu0 0.0
  %5813 = vmatpush1.msra.mxu0 %v5789
  %5814 = vmatprep.subr.mxu0 0.0
  %5815 = vmatpush1.msra.mxu0 %v5788
  %5816 = vmatprep.subr.mxu0 0.0
  %5817 = vmatpush1.msra.mxu0 %v5787
  %5818 = vmatprep.subr.mxu0 0.0
  %5819 = vmatpush1.msra.mxu0 %v5786
  %5820 = vmatprep.subr.mxu0 0.0
  %5821 = vmatpush1.msra.mxu0 %v5785
  %5822 = vmatprep.subr.mxu0 0.0
  %5823 = vmatpush1.msra.mxu0 %v5784
  %5824 = vmatprep.subr.mxu0 0.0
  %5825 = vmatpush1.msra.mxu0 %v5783
  %5826 = vmatprep.subr.mxu0 0.0
  %5827 = vmatpush2.msra.mxu0 0.0
  %5828 = vmatprep.subr.mxu0 0.0
  %5829 = vmatpush2.msra.mxu0 0.0
  %5830 = vmatprep.subr.mxu0 0.0
  %5831 = vmatpush2.msra.mxu0 0.0
  %5832 = vmatprep.subr.mxu0 0.0
  %5833 = vmatpush2.msra.mxu0 0.0
  %5834 = vmatprep.subr.mxu0 0.0
  %5835 = vmatpush2.msra.mxu0 0.0
  %5836 = vmatprep.subr.mxu0 0.0
  %5837 = vmatpush2.msra.mxu0 0.0
  %5838 = vmatprep.subr.mxu0 0.0
  %5839 = vmatpush2.msra.mxu0 0.0
  %5840 = vmatprep.subr.mxu0 0.0
  %5841 = vmatpush2.msra.mxu0 0.0
  %5842 = vmatprep.subr.mxu0 0.0
  %5843 = vmatpush2.msra.mxu0 0.0
  %5844 = vmatprep.subr.mxu0 0.0
  %5845 = vmatpush2.msra.mxu0 0.0
  %5846 = vmatprep.subr.mxu0 0.0
  %5847 = vmatpush2.msra.mxu0 0.0
  %5848 = vmatprep.subr.mxu0 0.0
  %5849 = vmatpush2.msra.mxu0 0.0
  %5850 = vmatprep.subr.mxu0 0.0
  %5851 = vmatpush2.msra.mxu0 0.0
  %5852 = vmatprep.subr.mxu0 0.0
  %5853 = vmatpush2.msra.mxu0 0.0
  %5854 = vmatprep.subr.mxu0 0.0
  %5855 = vmatpush2.msra.mxu0 0.0
  %5856 = vmatprep.subr.mxu0 0.0
  %5857 = vmatpush2.msra.mxu0 0.0
  %5858 = vmatprep.mubr.f32.mxu0 0.0
  %5859 = vmatmul.mubr.f32.gmra.mxu0 %v5792
  %v5860 = vpop.f32.mrf.mxu0
  %v5861 = vadd.f32 0.0, %v5860
  %v5862 = vpop.f32.mrf.mxu0
  %5863 = vdwg.mxu0
  %v5864 = vadd.f32 %v5706, %v5861
  %s5865 = scalar_lea.vmem %s5, 12
  %v5866 = vld [vmem:[%s5865] sm:$0x3]
  %v5868 = vsel %vm4918, %v5866, 0
  %5870 = vmatprep.subr.mxu0 0.0
  %5871 = vmatpush1.msra.mxu0 0.0
  %5872 = vmatprep.subr.mxu0 0.0
  %5873 = vmatpush1.msra.mxu0 0.0
  %5874 = vmatprep.subr.mxu0 0.0
  %5875 = vmatpush1.msra.mxu0 0.0
  %5876 = vmatprep.subr.mxu0 0.0
  %5877 = vmatpush1.msra.mxu0 0.0
  %5878 = vmatprep.subr.mxu0 0.0
  %5879 = vmatpush1.msra.mxu0 0.0
  %5880 = vmatprep.subr.mxu0 0.0
  %5881 = vmatpush1.msra.mxu0 0.0
  %5882 = vmatprep.subr.mxu0 0.0
  %5883 = vmatpush1.msra.mxu0 0.0
  %5884 = vmatprep.subr.mxu0 0.0
  %5885 = vmatpush1.msra.mxu0 0.0
  %5886 = vmatprep.subr.mxu0 0.0
  %5887 = vmatpush1.msra.mxu0 0.0
  %5888 = vmatprep.subr.mxu0 0.0
  %5889 = vmatpush1.msra.mxu0 0.0
  %5890 = vmatprep.subr.mxu0 0.0
  %5891 = vmatpush1.msra.mxu0 0.0
  %5892 = vmatprep.subr.mxu0 0.0
  %5893 = vmatpush1.msra.mxu0 0.0
  %5894 = vmatprep.subr.mxu0 0.0
  %5895 = vmatpush1.msra.mxu0 0.0
  %5896 = vmatprep.subr.mxu0 0.0
  %5897 = vmatpush1.msra.mxu0 %v4923
  %5898 = vmatprep.subr.mxu0 0.0
  %5899 = vmatpush1.msra.mxu0 %v4915
  %5900 = vmatprep.subr.mxu0 0.0
  %5901 = vmatpush1.msra.mxu0 %v4914
  %5902 = vmatprep.subr.mxu0 0.0
  %5903 = vmatpush2.msra.mxu0 0.0
  %5904 = vmatprep.subr.mxu0 0.0
  %5905 = vmatpush2.msra.mxu0 0.0
  %5906 = vmatprep.subr.mxu0 0.0
  %5907 = vmatpush2.msra.mxu0 0.0
  %5908 = vmatprep.subr.mxu0 0.0
  %5909 = vmatpush2.msra.mxu0 0.0
  %5910 = vmatprep.subr.mxu0 0.0
  %5911 = vmatpush2.msra.mxu0 0.0
  %5912 = vmatprep.subr.mxu0 0.0
  %5913 = vmatpush2.msra.mxu0 0.0
  %5914 = vmatprep.subr.mxu0 0.0
  %5915 = vmatpush2.msra.mxu0 0.0
  %5916 = vmatprep.subr.mxu0 0.0
  %5917 = vmatpush2.msra.mxu0 0.0
  %5918 = vmatprep.subr.mxu0 0.0
  %5919 = vmatpush2.msra.mxu0 0.0
  %5920 = vmatprep.subr.mxu0 0.0
  %5921 = vmatpush2.msra.mxu0 0.0
  %5922 = vmatprep.subr.mxu0 0.0
  %5923 = vmatpush2.msra.mxu0 0.0
  %5924 = vmatprep.subr.mxu0 0.0
  %5925 = vmatpush2.msra.mxu0 0.0
  %5926 = vmatprep.subr.mxu0 0.0
  %5927 = vmatpush2.msra.mxu0 0.0
  %5928 = vmatprep.subr.mxu0 0.0
  %5929 = vmatpush2.msra.mxu0 0.0
  %5930 = vmatprep.subr.mxu0 0.0
  %5931 = vmatpush2.msra.mxu0 0.0
  %5932 = vmatprep.subr.mxu0 0.0
  %5933 = vmatpush2.msra.mxu0 0.0
  %5934 = vmatprep.mubr.f32.mxu0 0.0
  %5935 = vmatmul.mubr.f32.gmra.mxu0 %v5868
  %v5936 = vpop.f32.mrf.mxu0
  %v5937 = vadd.f32 0.0, %v5936
  %v5938 = vpop.f32.mrf.mxu0
  %5939 = vdwg.mxu0
  %s5940 = scalar_lea.vmem %s6, 384
  %v5941 = vld [vmem:[%s5940] sm:$0xff]
  %v5942 = vld [vmem:[%s5940 + $0x8] sm:$0xff]
  %v5943 = vld [vmem:[%s5940 + $0x10] sm:$0xff]
  %v5944 = vld [vmem:[%s5940 + $0x18] sm:$0xff]
  %v5945 = vld [vmem:[%s5940 + $0x20] sm:$0xff]
  %v5946 = vld [vmem:[%s5940 + $0x28] sm:$0xff]
  %v5947 = vld [vmem:[%s5940 + $0x30] sm:$0xff]
  %v5948 = vld [vmem:[%s5940 + $0x38] sm:$0xff]
  %v5950 = vsel %vm532, %v5937, 0
  %5952 = vmatprep.subr.mxu0 0.0
  %5953 = vmatpush1.msra.mxu0 0.0
  %5954 = vmatprep.subr.mxu0 0.0
  %5955 = vmatpush1.msra.mxu0 0.0
  %5956 = vmatprep.subr.mxu0 0.0
  %5957 = vmatpush1.msra.mxu0 0.0
  %5958 = vmatprep.subr.mxu0 0.0
  %5959 = vmatpush1.msra.mxu0 0.0
  %5960 = vmatprep.subr.mxu0 0.0
  %5961 = vmatpush1.msra.mxu0 0.0
  %5962 = vmatprep.subr.mxu0 0.0
  %5963 = vmatpush1.msra.mxu0 0.0
  %5964 = vmatprep.subr.mxu0 0.0
  %5965 = vmatpush1.msra.mxu0 0.0
  %5966 = vmatprep.subr.mxu0 0.0
  %5967 = vmatpush1.msra.mxu0 0.0
  %5968 = vmatprep.subr.mxu0 0.0
  %5969 = vmatpush1.msra.mxu0 %v5948
  %5970 = vmatprep.subr.mxu0 0.0
  %5971 = vmatpush1.msra.mxu0 %v5947
  %5972 = vmatprep.subr.mxu0 0.0
  %5973 = vmatpush1.msra.mxu0 %v5946
  %5974 = vmatprep.subr.mxu0 0.0
  %5975 = vmatpush1.msra.mxu0 %v5945
  %5976 = vmatprep.subr.mxu0 0.0
  %5977 = vmatpush1.msra.mxu0 %v5944
  %5978 = vmatprep.subr.mxu0 0.0
  %5979 = vmatpush1.msra.mxu0 %v5943
  %5980 = vmatprep.subr.mxu0 0.0
  %5981 = vmatpush1.msra.mxu0 %v5942
  %5982 = vmatprep.subr.mxu0 0.0
  %5983 = vmatpush1.msra.mxu0 %v5941
  %5984 = vmatprep.subr.mxu0 0.0
  %5985 = vmatpush2.msra.mxu0 0.0
  %5986 = vmatprep.subr.mxu0 0.0
  %5987 = vmatpush2.msra.mxu0 0.0
  %5988 = vmatprep.subr.mxu0 0.0
  %5989 = vmatpush2.msra.mxu0 0.0
  %5990 = vmatprep.subr.mxu0 0.0
  %5991 = vmatpush2.msra.mxu0 0.0
  %5992 = vmatprep.subr.mxu0 0.0
  %5993 = vmatpush2.msra.mxu0 0.0
  %5994 = vmatprep.subr.mxu0 0.0
  %5995 = vmatpush2.msra.mxu0 0.0
  %5996 = vmatprep.subr.mxu0 0.0
  %5997 = vmatpush2.msra.mxu0 0.0
  %5998 = vmatprep.subr.mxu0 0.0
  %5999 = vmatpush2.msra.mxu0 0.0
  %6000 = vmatprep.subr.mxu0 0.0
  %6001 = vmatpush2.msra.mxu0 0.0
  %6002 = vmatprep.subr.mxu0 0.0
  %6003 = vmatpush2.msra.mxu0 0.0
  %6004 = vmatprep.subr.mxu0 0.0
  %6005 = vmatpush2.msra.mxu0 0.0
  %6006 = vmatprep.subr.mxu0 0.0
  %6007 = vmatpush2.msra.mxu0 0.0
  %6008 = vmatprep.subr.mxu0 0.0
  %6009 = vmatpush2.msra.mxu0 0.0
  %6010 = vmatprep.subr.mxu0 0.0
  %6011 = vmatpush2.msra.mxu0 0.0
  %6012 = vmatprep.subr.mxu0 0.0
  %6013 = vmatpush2.msra.mxu0 0.0
  %6014 = vmatprep.subr.mxu0 0.0
  %6015 = vmatpush2.msra.mxu0 0.0
  %6016 = vmatprep.mubr.f32.mxu0 0.0
  %6017 = vmatmul.mubr.f32.gmra.mxu0 %v5950
  %v6018 = vpop.f32.mrf.mxu0
  %v6019 = vadd.f32 0.0, %v6018
  %v6020 = vpop.f32.mrf.mxu0
  %6021 = vdwg.mxu0
  %v6022 = vadd.f32 %v5864, %v6019
  %s6023 = scalar_lea.vmem %s5, 14
  %v6024 = vld [vmem:[%s6023] sm:$0x3]
  %v6026 = vsel %vm4918, %v6024, 0
  %6028 = vmatprep.subr.mxu0 0.0
  %6029 = vmatpush1.msra.mxu0 0.0
  %6030 = vmatprep.subr.mxu0 0.0
  %6031 = vmatpush1.msra.mxu0 0.0
  %6032 = vmatprep.subr.mxu0 0.0
  %6033 = vmatpush1.msra.mxu0 0.0
  %6034 = vmatprep.subr.mxu0 0.0
  %6035 = vmatpush1.msra.mxu0 0.0
  %6036 = vmatprep.subr.mxu0 0.0
  %6037 = vmatpush1.msra.mxu0 0.0
  %6038 = vmatprep.subr.mxu0 0.0
  %6039 = vmatpush1.msra.mxu0 0.0
  %6040 = vmatprep.subr.mxu0 0.0
  %6041 = vmatpush1.msra.mxu0 0.0
  %6042 = vmatprep.subr.mxu0 0.0
  %6043 = vmatpush1.msra.mxu0 0.0
  %6044 = vmatprep.subr.mxu0 0.0
  %6045 = vmatpush1.msra.mxu0 0.0
  %6046 = vmatprep.subr.mxu0 0.0
  %6047 = vmatpush1.msra.mxu0 0.0
  %6048 = vmatprep.subr.mxu0 0.0
  %6049 = vmatpush1.msra.mxu0 0.0
  %6050 = vmatprep.subr.mxu0 0.0
  %6051 = vmatpush1.msra.mxu0 0.0
  %6052 = vmatprep.subr.mxu0 0.0
  %6053 = vmatpush1.msra.mxu0 0.0
  %6054 = vmatprep.subr.mxu0 0.0
  %6055 = vmatpush1.msra.mxu0 %v4923
  %6056 = vmatprep.subr.mxu0 0.0
  %6057 = vmatpush1.msra.mxu0 %v4915
  %6058 = vmatprep.subr.mxu0 0.0
  %6059 = vmatpush1.msra.mxu0 %v4914
  %6060 = vmatprep.subr.mxu0 0.0
  %6061 = vmatpush2.msra.mxu0 0.0
  %6062 = vmatprep.subr.mxu0 0.0
  %6063 = vmatpush2.msra.mxu0 0.0
  %6064 = vmatprep.subr.mxu0 0.0
  %6065 = vmatpush2.msra.mxu0 0.0
  %6066 = vmatprep.subr.mxu0 0.0
  %6067 = vmatpush2.msra.mxu0 0.0
  %6068 = vmatprep.subr.mxu0 0.0
  %6069 = vmatpush2.msra.mxu0 0.0
  %6070 = vmatprep.subr.mxu0 0.0
  %6071 = vmatpush2.msra.mxu0 0.0
  %6072 = vmatprep.subr.mxu0 0.0
  %6073 = vmatpush2.msra.mxu0 0.0
  %6074 = vmatprep.subr.mxu0 0.0
  %6075 = vmatpush2.msra.mxu0 0.0
  %6076 = vmatprep.subr.mxu0 0.0
  %6077 = vmatpush2.msra.mxu0 0.0
  %6078 = vmatprep.subr.mxu0 0.0
  %6079 = vmatpush2.msra.mxu0 0.0
  %6080 = vmatprep.subr.mxu0 0.0
  %6081 = vmatpush2.msra.mxu0 0.0
  %6082 = vmatprep.subr.mxu0 0.0
  %6083 = vmatpush2.msra.mxu0 0.0
  %6084 = vmatprep.subr.mxu0 0.0
  %6085 = vmatpush2.msra.mxu0 0.0
  %6086 = vmatprep.subr.mxu0 0.0
  %6087 = vmatpush2.msra.mxu0 0.0
  %6088 = vmatprep.subr.mxu0 0.0
  %6089 = vmatpush2.msra.mxu0 0.0
  %6090 = vmatprep.subr.mxu0 0.0
  %6091 = vmatpush2.msra.mxu0 0.0
  %6092 = vmatprep.mubr.f32.mxu0 0.0
  %6093 = vmatmul.mubr.f32.gmra.mxu0 %v6026
  %v6094 = vpop.f32.mrf.mxu0
  %v6095 = vadd.f32 0.0, %v6094
  %v6096 = vpop.f32.mrf.mxu0
  %6097 = vdwg.mxu0
  %s6098 = scalar_lea.vmem %s6, 448
  %v6099 = vld [vmem:[%s6098] sm:$0xff]
  %v6100 = vld [vmem:[%s6098 + $0x8] sm:$0xff]
  %v6101 = vld [vmem:[%s6098 + $0x10] sm:$0xff]
  %v6102 = vld [vmem:[%s6098 + $0x18] sm:$0xff]
  %v6103 = vld [vmem:[%s6098 + $0x20] sm:$0xff]
  %v6104 = vld [vmem:[%s6098 + $0x28] sm:$0xff]
  %v6105 = vld [vmem:[%s6098 + $0x30] sm:$0xff]
  %v6106 = vld [vmem:[%s6098 + $0x38] sm:$0xff]
  %v6108 = vsel %vm532, %v6095, 0
  %6110 = vmatprep.subr.mxu0 0.0
  %6111 = vmatpush1.msra.mxu0 0.0
  %6112 = vmatprep.subr.mxu0 0.0
  %6113 = vmatpush1.msra.mxu0 0.0
  %6114 = vmatprep.subr.mxu0 0.0
  %6115 = vmatpush1.msra.mxu0 0.0
  %6116 = vmatprep.subr.mxu0 0.0
  %6117 = vmatpush1.msra.mxu0 0.0
  %6118 = vmatprep.subr.mxu0 0.0
  %6119 = vmatpush1.msra.mxu0 0.0
  %6120 = vmatprep.subr.mxu0 0.0
  %6121 = vmatpush1.msra.mxu0 0.0
  %6122 = vmatprep.subr.mxu0 0.0
  %6123 = vmatpush1.msra.mxu0 0.0
  %6124 = vmatprep.subr.mxu0 0.0
  %6125 = vmatpush1.msra.mxu0 0.0
  %6126 = vmatprep.subr.mxu0 0.0
  %6127 = vmatpush1.msra.mxu0 %v6106
  %6128 = vmatprep.subr.mxu0 0.0
  %6129 = vmatpush1.msra.mxu0 %v6105
  %6130 = vmatprep.subr.mxu0 0.0
  %6131 = vmatpush1.msra.mxu0 %v6104
  %6132 = vmatprep.subr.mxu0 0.0
  %6133 = vmatpush1.msra.mxu0 %v6103
  %6134 = vmatprep.subr.mxu0 0.0
  %6135 = vmatpush1.msra.mxu0 %v6102
  %6136 = vmatprep.subr.mxu0 0.0
  %6137 = vmatpush1.msra.mxu0 %v6101
  %6138 = vmatprep.subr.mxu0 0.0
  %6139 = vmatpush1.msra.mxu0 %v6100
  %6140 = vmatprep.subr.mxu0 0.0
  %6141 = vmatpush1.msra.mxu0 %v6099
  %6142 = vmatprep.subr.mxu0 0.0
  %6143 = vmatpush2.msra.mxu0 0.0
  %6144 = vmatprep.subr.mxu0 0.0
  %6145 = vmatpush2.msra.mxu0 0.0
  %6146 = vmatprep.subr.mxu0 0.0
  %6147 = vmatpush2.msra.mxu0 0.0
  %6148 = vmatprep.subr.mxu0 0.0
  %6149 = vmatpush2.msra.mxu0 0.0
  %6150 = vmatprep.subr.mxu0 0.0
  %6151 = vmatpush2.msra.mxu0 0.0
  %6152 = vmatprep.subr.mxu0 0.0
  %6153 = vmatpush2.msra.mxu0 0.0
  %6154 = vmatprep.subr.mxu0 0.0
  %6155 = vmatpush2.msra.mxu0 0.0
  %6156 = vmatprep.subr.mxu0 0.0
  %6157 = vmatpush2.msra.mxu0 0.0
  %6158 = vmatprep.subr.mxu0 0.0
  %6159 = vmatpush2.msra.mxu0 0.0
  %6160 = vmatprep.subr.mxu0 0.0
  %6161 = vmatpush2.msra.mxu0 0.0
  %6162 = vmatprep.subr.mxu0 0.0
  %6163 = vmatpush2.msra.mxu0 0.0
  %6164 = vmatprep.subr.mxu0 0.0
  %6165 = vmatpush2.msra.mxu0 0.0
  %6166 = vmatprep.subr.mxu0 0.0
  %6167 = vmatpush2.msra.mxu0 0.0
  %6168 = vmatprep.subr.mxu0 0.0
  %6169 = vmatpush2.msra.mxu0 0.0
  %6170 = vmatprep.subr.mxu0 0.0
  %6171 = vmatpush2.msra.mxu0 0.0
  %6172 = vmatprep.subr.mxu0 0.0
  %6173 = vmatpush2.msra.mxu0 0.0
  %6174 = vmatprep.mubr.f32.mxu0 0.0
  %6175 = vmatmul.mubr.f32.gmra.mxu0 %v6108
  %v6176 = vpop.f32.mrf.mxu0
  %v6177 = vadd.f32 0.0, %v6176
  %v6178 = vpop.f32.mrf.mxu0
  %6179 = vdwg.mxu0
  %v6180 = vadd.f32 %v6022, %v6177
  %s6181 = scalar_lea.vmem %s5, 16
  %v6182 = vld [vmem:[%s6181] sm:$0x3]
  %v6184 = vsel %vm4918, %v6182, 0
  %6186 = vmatprep.subr.mxu0 0.0
  %6187 = vmatpush1.msra.mxu0 0.0
  %6188 = vmatprep.subr.mxu0 0.0
  %6189 = vmatpush1.msra.mxu0 0.0
  %6190 = vmatprep.subr.mxu0 0.0
  %6191 = vmatpush1.msra.mxu0 0.0
  %6192 = vmatprep.subr.mxu0 0.0
  %6193 = vmatpush1.msra.mxu0 0.0
  %6194 = vmatprep.subr.mxu0 0.0
  %6195 = vmatpush1.msra.mxu0 0.0
  %6196 = vmatprep.subr.mxu0 0.0
  %6197 = vmatpush1.msra.mxu0 0.0
  %6198 = vmatprep.subr.mxu0 0.0
  %6199 = vmatpush1.msra.mxu0 0.0
  %6200 = vmatprep.subr.mxu0 0.0
  %6201 = vmatpush1.msra.mxu0 0.0
  %6202 = vmatprep.subr.mxu0 0.0
  %6203 = vmatpush1.msra.mxu0 0.0
  %6204 = vmatprep.subr.mxu0 0.0
  %6205 = vmatpush1.msra.mxu0 0.0
  %6206 = vmatprep.subr.mxu0 0.0
  %6207 = vmatpush1.msra.mxu0 0.0
  %6208 = vmatprep.subr.mxu0 0.0
  %6209 = vmatpush1.msra.mxu0 0.0
  %6210 = vmatprep.subr.mxu0 0.0
  %6211 = vmatpush1.msra.mxu0 0.0
  %6212 = vmatprep.subr.mxu0 0.0
  %6213 = vmatpush1.msra.mxu0 %v4923
  %6214 = vmatprep.subr.mxu0 0.0
  %6215 = vmatpush1.msra.mxu0 %v4915
  %6216 = vmatprep.subr.mxu0 0.0
  %6217 = vmatpush1.msra.mxu0 %v4914
  %6218 = vmatprep.subr.mxu0 0.0
  %6219 = vmatpush2.msra.mxu0 0.0
  %6220 = vmatprep.subr.mxu0 0.0
  %6221 = vmatpush2.msra.mxu0 0.0
  %6222 = vmatprep.subr.mxu0 0.0
  %6223 = vmatpush2.msra.mxu0 0.0
  %6224 = vmatprep.subr.mxu0 0.0
  %6225 = vmatpush2.msra.mxu0 0.0
  %6226 = vmatprep.subr.mxu0 0.0
  %6227 = vmatpush2.msra.mxu0 0.0
  %6228 = vmatprep.subr.mxu0 0.0
  %6229 = vmatpush2.msra.mxu0 0.0
  %6230 = vmatprep.subr.mxu0 0.0
  %6231 = vmatpush2.msra.mxu0 0.0
  %6232 = vmatprep.subr.mxu0 0.0
  %6233 = vmatpush2.msra.mxu0 0.0
  %6234 = vmatprep.subr.mxu0 0.0
  %6235 = vmatpush2.msra.mxu0 0.0
  %6236 = vmatprep.subr.mxu0 0.0
  %6237 = vmatpush2.msra.mxu0 0.0
  %6238 = vmatprep.subr.mxu0 0.0
  %6239 = vmatpush2.msra.mxu0 0.0
  %6240 = vmatprep.subr.mxu0 0.0
  %6241 = vmatpush2.msra.mxu0 0.0
  %6242 = vmatprep.subr.mxu0 0.0
  %6243 = vmatpush2.msra.mxu0 0.0
  %6244 = vmatprep.subr.mxu0 0.0
  %6245 = vmatpush2.msra.mxu0 0.0
  %6246 = vmatprep.subr.mxu0 0.0
  %6247 = vmatpush2.msra.mxu0 0.0
  %6248 = vmatprep.subr.mxu0 0.0
  %6249 = vmatpush2.msra.mxu0 0.0
  %6250 = vmatprep.mubr.f32.mxu0 0.0
  %6251 = vmatmul.mubr.f32.gmra.mxu0 %v6184
  %v6252 = vpop.f32.mrf.mxu0
  %v6253 = vadd.f32 0.0, %v6252
  %v6254 = vpop.f32.mrf.mxu0
  %6255 = vdwg.mxu0
  %s6256 = scalar_lea.vmem %s6, 512
  %v6257 = vld [vmem:[%s6256] sm:$0xff]
  %v6258 = vld [vmem:[%s6256 + $0x8] sm:$0xff]
  %v6259 = vld [vmem:[%s6256 + $0x10] sm:$0xff]
  %v6260 = vld [vmem:[%s6256 + $0x18] sm:$0xff]
  %v6261 = vld [vmem:[%s6256 + $0x20] sm:$0xff]
  %v6262 = vld [vmem:[%s6256 + $0x28] sm:$0xff]
  %v6263 = vld [vmem:[%s6256 + $0x30] sm:$0xff]
  %v6264 = vld [vmem:[%s6256 + $0x38] sm:$0xff]
  %v6266 = vsel %vm532, %v6253, 0
  %6268 = vmatprep.subr.mxu0 0.0
  %6269 = vmatpush1.msra.mxu0 0.0
  %6270 = vmatprep.subr.mxu0 0.0
  %6271 = vmatpush1.msra.mxu0 0.0
  %6272 = vmatprep.subr.mxu0 0.0
  %6273 = vmatpush1.msra.mxu0 0.0
  %6274 = vmatprep.subr.mxu0 0.0
  %6275 = vmatpush1.msra.mxu0 0.0
  %6276 = vmatprep.subr.mxu0 0.0
  %6277 = vmatpush1.msra.mxu0 0.0
  %6278 = vmatprep.subr.mxu0 0.0
  %6279 = vmatpush1.msra.mxu0 0.0
  %6280 = vmatprep.subr.mxu0 0.0
  %6281 = vmatpush1.msra.mxu0 0.0
  %6282 = vmatprep.subr.mxu0 0.0
  %6283 = vmatpush1.msra.mxu0 0.0
  %6284 = vmatprep.subr.mxu0 0.0
  %6285 = vmatpush1.msra.mxu0 %v6264
  %6286 = vmatprep.subr.mxu0 0.0
  %6287 = vmatpush1.msra.mxu0 %v6263
  %6288 = vmatprep.subr.mxu0 0.0
  %6289 = vmatpush1.msra.mxu0 %v6262
  %6290 = vmatprep.subr.mxu0 0.0
  %6291 = vmatpush1.msra.mxu0 %v6261
  %6292 = vmatprep.subr.mxu0 0.0
  %6293 = vmatpush1.msra.mxu0 %v6260
  %6294 = vmatprep.subr.mxu0 0.0
  %6295 = vmatpush1.msra.mxu0 %v6259
  %6296 = vmatprep.subr.mxu0 0.0
  %6297 = vmatpush1.msra.mxu0 %v6258
  %6298 = vmatprep.subr.mxu0 0.0
  %6299 = vmatpush1.msra.mxu0 %v6257
  %6300 = vmatprep.subr.mxu0 0.0
  %6301 = vmatpush2.msra.mxu0 0.0
  %6302 = vmatprep.subr.mxu0 0.0
  %6303 = vmatpush2.msra.mxu0 0.0
  %6304 = vmatprep.subr.mxu0 0.0
  %6305 = vmatpush2.msra.mxu0 0.0
  %6306 = vmatprep.subr.mxu0 0.0
  %6307 = vmatpush2.msra.mxu0 0.0
  %6308 = vmatprep.subr.mxu0 0.0
  %6309 = vmatpush2.msra.mxu0 0.0
  %6310 = vmatprep.subr.mxu0 0.0
  %6311 = vmatpush2.msra.mxu0 0.0
  %6312 = vmatprep.subr.mxu0 0.0
  %6313 = vmatpush2.msra.mxu0 0.0
  %6314 = vmatprep.subr.mxu0 0.0
  %6315 = vmatpush2.msra.mxu0 0.0
  %6316 = vmatprep.subr.mxu0 0.0
  %6317 = vmatpush2.msra.mxu0 0.0
  %6318 = vmatprep.subr.mxu0 0.0
  %6319 = vmatpush2.msra.mxu0 0.0
  %6320 = vmatprep.subr.mxu0 0.0
  %6321 = vmatpush2.msra.mxu0 0.0
  %6322 = vmatprep.subr.mxu0 0.0
  %6323 = vmatpush2.msra.mxu0 0.0
  %6324 = vmatprep.subr.mxu0 0.0
  %6325 = vmatpush2.msra.mxu0 0.0
  %6326 = vmatprep.subr.mxu0 0.0
  %6327 = vmatpush2.msra.mxu0 0.0
  %6328 = vmatprep.subr.mxu0 0.0
  %6329 = vmatpush2.msra.mxu0 0.0
  %6330 = vmatprep.subr.mxu0 0.0
  %6331 = vmatpush2.msra.mxu0 0.0
  %6332 = vmatprep.mubr.f32.mxu0 0.0
  %6333 = vmatmul.mubr.f32.gmra.mxu0 %v6266
  %v6334 = vpop.f32.mrf.mxu0
  %v6335 = vadd.f32 0.0, %v6334
  %v6336 = vpop.f32.mrf.mxu0
  %6337 = vdwg.mxu0
  %v6338 = vadd.f32 %v6180, %v6335
  %v6339 = vsel %vm4874, %v6338, 0.0
  %v6340 = vrot.slane %v6339, 4
  %v6341 = vadd.f32 %v6339, %v6340
  %v6342 = vrot.slane %v6341, 2
  %v6343 = vadd.f32 %v6341, %v6342
  %v6344 = vrot.slane %v6343, 1
  %v6345 = vadd.f32 %v6343, %v6344
  %v6346 = vrcp.pop 2.0
  %v6347 = vmul.f32 %v6345, %v6346
  %v6348 = vsub.f32 %v6338, %v6347
  %v6349 = vmul.f32 %v6348, %v6348
  %v6350 = vsel %vm4874, %v6349, 0.0
  %v6351 = vrot.slane %v6350, 4
  %v6352 = vadd.f32 %v6350, %v6351
  %v6353 = vrot.slane %v6352, 2
  %v6354 = vadd.f32 %v6352, %v6353
  %v6355 = vrot.slane %v6354, 1
  %v6356 = vadd.f32 %v6354, %v6355
  %v6357 = vmul.f32 %v6356, %v6346
  %v6358 = vadd.f32 %v6357, 1e-05
  %v6359 = vrsqrt.pop %v6358
  %v6360 = vmul.f32 %v6348, %v6359
  %vm6361 = vcmp.ge.f32.partialorder %v6360, 0.0
  %v6362 = vmul.f32 %v6360, 0.01
  %v6363 = vsel %vm6361, %v6360, %v6362
  %v6364 = vld [vmem:[%s7] sm:$0xff]
  %v6365 = vld [vmem:[%s7 + $0x8] sm:$0xff]
  %v6366 = vld [vmem:[%s7 + $0x10] sm:$0xff]
  %v6367 = vld [vmem:[%s7 + $0x18] sm:$0xff]
  %v6368 = vld [vmem:[%s7 + $0x20] sm:$0xff]
  %v6369 = vld [vmem:[%s7 + $0x28] sm:$0xff]
  %v6370 = vld [vmem:[%s7 + $0x30] sm:$0xff]
  %v6371 = vld [vmem:[%s7 + $0x38] sm:$0xff]
  %v6372 = vld [vmem:[%s7 + $0x40] sm:$0xff]
  %v6373 = vld [vmem:[%s7 + $0x48] sm:$0xff]
  %v6374 = vld [vmem:[%s7 + $0x50] sm:$0xff]
  %v6375 = vld [vmem:[%s7 + $0x58] sm:$0xff]
  %v6376 = vld [vmem:[%s7 + $0x60] sm:$0xff]
  %v6377 = vld [vmem:[%s7 + $0x68] sm:$0xff]
  %v6378 = vld [vmem:[%s7 + $0x70] sm:$0xff]
  %v6379 = vld [vmem:[%s7 + $0x78] sm:$0xff]
  %v6380 = vld [vmem:[%s7 + $0x80] sm:$0xff]
  %v6381 = vld [vmem:[%s7 + $0x88] sm:$0xff]
  %v6382 = vld [vmem:[%s7 + $0x90] sm:$0xff]
  %v6383 = vld [vmem:[%s7 + $0x98] sm:$0xff]
  %v6384 = vld [vmem:[%s7 + $0xa0] sm:$0xff]
  %v6385 = vld [vmem:[%s7 + $0xa8] sm:$0xff]
  %v6386 = vld [vmem:[%s7 + $0xb0] sm:$0xff]
  %v6387 = vld [vmem:[%s7 + $0xb8] sm:$0xff]
  %v6388 = vld [vmem:[%s7 + $0xc0] sm:$0xff]
  %v6389 = vld [vmem:[%s7 + $0xc8] sm:$0xff]
  %v6390 = vld [vmem:[%s7 + $0xd0] sm:$0xff]
  %v6391 = vld [vmem:[%s7 + $0xd8] sm:$0xff]
  %v6392 = vld [vmem:[%s7 + $0xe0] sm:$0xff]
  %v6393 = vld [vmem:[%s7 + $0xe8] sm:$0xff]
  %v6394 = vld [vmem:[%s7 + $0xf0] sm:$0xff]
  %v6395 = vld [vmem:[%s7 + $0xf8] sm:$0xff]
  %v6396 = vld [vmem:[%s7 + $0x100] sm:$0xff]
  %v6397 = vld [vmem:[%s7 + $0x108] sm:$0xff]
  %v6398 = vld [vmem:[%s7 + $0x110] sm:$0xff]
  %v6399 = vld [vmem:[%s7 + $0x118] sm:$0xff]
  %v6400 = vld [vmem:[%s7 + $0x120] sm:$0xff]
  %v6401 = vld [vmem:[%s7 + $0x128] sm:$0xff]
  %v6402 = vld [vmem:[%s7 + $0x130] sm:$0xff]
  %v6403 = vld [vmem:[%s7 + $0x138] sm:$0xff]
  %v6404 = vld [vmem:[%s7 + $0x140] sm:$0xff]
  %v6405 = vld [vmem:[%s7 + $0x148] sm:$0xff]
  %v6406 = vld [vmem:[%s7 + $0x150] sm:$0xff]
  %v6407 = vld [vmem:[%s7 + $0x158] sm:$0xff]
  %v6408 = vld [vmem:[%s7 + $0x160] sm:$0xff]
  %v6409 = vld [vmem:[%s7 + $0x168] sm:$0xff]
  %v6410 = vld [vmem:[%s7 + $0x170] sm:$0xff]
  %v6411 = vld [vmem:[%s7 + $0x178] sm:$0xff]
  %v6412 = vld [vmem:[%s7 + $0x180] sm:$0xff]
  %v6413 = vld [vmem:[%s7 + $0x188] sm:$0xff]
  %v6414 = vld [vmem:[%s7 + $0x190] sm:$0xff]
  %v6415 = vld [vmem:[%s7 + $0x198] sm:$0xff]
  %v6416 = vld [vmem:[%s7 + $0x1a0] sm:$0xff]
  %v6417 = vld [vmem:[%s7 + $0x1a8] sm:$0xff]
  %v6418 = vld [vmem:[%s7 + $0x1b0] sm:$0xff]
  %v6419 = vld [vmem:[%s7 + $0x1b8] sm:$0xff]
  %v6420 = vld [vmem:[%s7 + $0x1c0] sm:$0xff]
  %v6421 = vld [vmem:[%s7 + $0x1c8] sm:$0xff]
  %v6422 = vld [vmem:[%s7 + $0x1d0] sm:$0xff]
  %v6423 = vld [vmem:[%s7 + $0x1d8] sm:$0xff]
  %v6424 = vld [vmem:[%s7 + $0x1e0] sm:$0xff]
  %v6425 = vld [vmem:[%s7 + $0x1e8] sm:$0xff]
  %v6426 = vld [vmem:[%s7 + $0x1f0] sm:$0xff]
  %v6427 = vld [vmem:[%s7 + $0x1f8] sm:$0xff]
  %v6428 = vld [vmem:[%s8] sm:$0xff]
  %v6430 = vlaneseq
  %v6431 = vshrl.u32 %v6430, 7
  %v6432 = vsub.s32 0, %v6431
  %v6433 = vrot.slane %v6428, %v6432
  %v6434 = vlaneseq
  %v6435 = vshrl.u32 %v6434, 7
  %v6436 = vsub.s32 1, %v6435
  %v6437 = vrot.slane %v6428, %v6436
  %v6438 = vlaneseq
  %v6439 = vshrl.u32 %v6438, 7
  %v6440 = vsub.s32 2, %v6439
  %v6441 = vrot.slane %v6428, %v6440
  %v6442 = vlaneseq
  %v6443 = vshrl.u32 %v6442, 7
  %v6444 = vsub.s32 3, %v6443
  %v6445 = vrot.slane %v6428, %v6444
  %v6446 = vlaneseq
  %v6447 = vshrl.u32 %v6446, 7
  %v6448 = vsub.s32 4, %v6447
  %v6449 = vrot.slane %v6428, %v6448
  %v6450 = vlaneseq
  %v6451 = vshrl.u32 %v6450, 7
  %v6452 = vsub.s32 5, %v6451
  %v6453 = vrot.slane %v6428, %v6452
  %v6454 = vlaneseq
  %v6455 = vshrl.u32 %v6454, 7
  %v6456 = vsub.s32 6, %v6455
  %v6457 = vrot.slane %v6428, %v6456
  %v6458 = vlaneseq
  %v6459 = vshrl.u32 %v6458, 7
  %v6460 = vsub.s32 7, %v6459
  %v6461 = vrot.slane %v6428, %v6460
  %v6471 = vsel %vm532, %v6363, 0
  %6473 = vmatprep.subr.mxu0 0.0
  %6474 = vmatpush1.msra.mxu0 0.0
  %6475 = vmatprep.subr.mxu0 0.0
  %6476 = vmatpush1.msra.mxu0 0.0
  %6477 = vmatprep.subr.mxu0 0.0
  %6478 = vmatpush1.msra.mxu0 0.0
  %6479 = vmatprep.subr.mxu0 0.0
  %6480 = vmatpush1.msra.mxu0 0.0
  %6481 = vmatprep.subr.mxu0 0.0
  %6482 = vmatpush1.msra.mxu0 0.0
  %6483 = vmatprep.subr.mxu0 0.0
  %6484 = vmatpush1.msra.mxu0 0.0
  %6485 = vmatprep.subr.mxu0 0.0
  %6486 = vmatpush1.msra.mxu0 0.0
  %6487 = vmatprep.subr.mxu0 0.0
  %6488 = vmatpush1.msra.mxu0 0.0
  %6489 = vmatprep.subr.mxu0 %v6421
  %6490 = vmatpush1.msra.mxu0 %v6420
  %6491 = vmatprep.subr.mxu0 %v6413
  %6492 = vmatpush1.msra.mxu0 %v6412
  %6493 = vmatprep.subr.mxu0 %v6405
  %6494 = vmatpush1.msra.mxu0 %v6404
  %6495 = vmatprep.subr.mxu0 %v6397
  %6496 = vmatpush1.msra.mxu0 %v6396
  %6497 = vmatprep.subr.mxu0 %v6389
  %6498 = vmatpush1.msra.mxu0 %v6388
  %6499 = vmatprep.subr.mxu0 %v6381
  %6500 = vmatpush1.msra.mxu0 %v6380
  %6501 = vmatprep.subr.mxu0 %v6373
  %6502 = vmatpush1.msra.mxu0 %v6372
  %6503 = vmatprep.subr.mxu0 %v6365
  %6504 = vmatpush1.msra.mxu0 %v6364
  %6505 = vmatprep.subr.mxu0 0.0
  %6506 = vmatpush2.msra.mxu0 0.0
  %6507 = vmatprep.subr.mxu0 0.0
  %6508 = vmatpush2.msra.mxu0 0.0
  %6509 = vmatprep.subr.mxu0 0.0
  %6510 = vmatpush2.msra.mxu0 0.0
  %6511 = vmatprep.subr.mxu0 0.0
  %6512 = vmatpush2.msra.mxu0 0.0
  %6513 = vmatprep.subr.mxu0 0.0
  %6514 = vmatpush2.msra.mxu0 0.0
  %6515 = vmatprep.subr.mxu0 0.0
  %6516 = vmatpush2.msra.mxu0 0.0
  %6517 = vmatprep.subr.mxu0 0.0
  %6518 = vmatpush2.msra.mxu0 0.0
  %6519 = vmatprep.subr.mxu0 0.0
  %6520 = vmatpush2.msra.mxu0 0.0
  %6521 = vmatprep.subr.mxu0 0.0
  %6522 = vmatpush2.msra.mxu0 0.0
  %6523 = vmatprep.subr.mxu0 0.0
  %6524 = vmatpush2.msra.mxu0 0.0
  %6525 = vmatprep.subr.mxu0 0.0
  %6526 = vmatpush2.msra.mxu0 0.0
  %6527 = vmatprep.subr.mxu0 0.0
  %6528 = vmatpush2.msra.mxu0 0.0
  %6529 = vmatprep.subr.mxu0 0.0
  %6530 = vmatpush2.msra.mxu0 0.0
  %6531 = vmatprep.subr.mxu0 0.0
  %6532 = vmatpush2.msra.mxu0 0.0
  %6533 = vmatprep.subr.mxu0 0.0
  %6534 = vmatpush2.msra.mxu0 0.0
  %6535 = vmatprep.subr.mxu0 0.0
  %6536 = vmatpush2.msra.mxu0 0.0
  %6537 = vmatprep.mubr.f32.mxu0 0.0
  %6538 = vmatmul.mubr.f32.gmra.mxu0 %v6471
  %v6539 = vpop.f32.mrf.mxu0
  %v6540 = vadd.f32 %v6433, %v6539
  %v6541 = vpop.f32.mrf.mxu0
  %v6542 = vadd.f32 %v6437, %v6541
  %6543 = vdwg.mxu0
  %6544 = vmatprep.subr.mxu0 0.0
  %6545 = vmatpush1.msra.mxu0 0.0
  %6546 = vmatprep.subr.mxu0 0.0
  %6547 = vmatpush1.msra.mxu0 0.0
  %6548 = vmatprep.subr.mxu0 0.0
  %6549 = vmatpush1.msra.mxu0 0.0
  %6550 = vmatprep.subr.mxu0 0.0
  %6551 = vmatpush1.msra.mxu0 0.0
  %6552 = vmatprep.subr.mxu0 0.0
  %6553 = vmatpush1.msra.mxu0 0.0
  %6554 = vmatprep.subr.mxu0 0.0
  %6555 = vmatpush1.msra.mxu0 0.0
  %6556 = vmatprep.subr.mxu0 0.0
  %6557 = vmatpush1.msra.mxu0 0.0
  %6558 = vmatprep.subr.mxu0 0.0
  %6559 = vmatpush1.msra.mxu0 0.0
  %6560 = vmatprep.subr.mxu0 %v6423
  %6561 = vmatpush1.msra.mxu0 %v6422
  %6562 = vmatprep.subr.mxu0 %v6415
  %6563 = vmatpush1.msra.mxu0 %v6414
  %6564 = vmatprep.subr.mxu0 %v6407
  %6565 = vmatpush1.msra.mxu0 %v6406
  %6566 = vmatprep.subr.mxu0 %v6399
  %6567 = vmatpush1.msra.mxu0 %v6398
  %6568 = vmatprep.subr.mxu0 %v6391
  %6569 = vmatpush1.msra.mxu0 %v6390
  %6570 = vmatprep.subr.mxu0 %v6383
  %6571 = vmatpush1.msra.mxu0 %v6382
  %6572 = vmatprep.subr.mxu0 %v6375
  %6573 = vmatpush1.msra.mxu0 %v6374
  %6574 = vmatprep.subr.mxu0 %v6367
  %6575 = vmatpush1.msra.mxu0 %v6366
  %6576 = vmatprep.subr.mxu0 0.0
  %6577 = vmatpush2.msra.mxu0 0.0
  %6578 = vmatprep.subr.mxu0 0.0
  %6579 = vmatpush2.msra.mxu0 0.0
  %6580 = vmatprep.subr.mxu0 0.0
  %6581 = vmatpush2.msra.mxu0 0.0
  %6582 = vmatprep.subr.mxu0 0.0
  %6583 = vmatpush2.msra.mxu0 0.0
  %6584 = vmatprep.subr.mxu0 0.0
  %6585 = vmatpush2.msra.mxu0 0.0
  %6586 = vmatprep.subr.mxu0 0.0
  %6587 = vmatpush2.msra.mxu0 0.0
  %6588 = vmatprep.subr.mxu0 0.0
  %6589 = vmatpush2.msra.mxu0 0.0
  %6590 = vmatprep.subr.mxu0 0.0
  %6591 = vmatpush2.msra.mxu0 0.0
  %6592 = vmatprep.subr.mxu0 0.0
  %6593 = vmatpush2.msra.mxu0 0.0
  %6594 = vmatprep.subr.mxu0 0.0
  %6595 = vmatpush2.msra.mxu0 0.0
  %6596 = vmatprep.subr.mxu0 0.0
  %6597 = vmatpush2.msra.mxu0 0.0
  %6598 = vmatprep.subr.mxu0 0.0
  %6599 = vmatpush2.msra.mxu0 0.0
  %6600 = vmatprep.subr.mxu0 0.0
  %6601 = vmatpush2.msra.mxu0 0.0
  %6602 = vmatprep.subr.mxu0 0.0
  %6603 = vmatpush2.msra.mxu0 0.0
  %6604 = vmatprep.subr.mxu0 0.0
  %6605 = vmatpush2.msra.mxu0 0.0
  %6606 = vmatprep.subr.mxu0 0.0
  %6607 = vmatpush2.msra.mxu0 0.0
  %6608 = vmatprep.mubr.f32.mxu0 0.0
  %6609 = vmatmul.mubr.f32.gmra.mxu0 %v6471
  %v6610 = vpop.f32.mrf.mxu0
  %v6611 = vadd.f32 %v6441, %v6610
  %v6612 = vpop.f32.mrf.mxu0
  %v6613 = vadd.f32 %v6445, %v6612
  %6614 = vdwg.mxu0
  %6615 = vmatprep.subr.mxu0 0.0
  %6616 = vmatpush1.msra.mxu0 0.0
  %6617 = vmatprep.subr.mxu0 0.0
  %6618 = vmatpush1.msra.mxu0 0.0
  %6619 = vmatprep.subr.mxu0 0.0
  %6620 = vmatpush1.msra.mxu0 0.0
  %6621 = vmatprep.subr.mxu0 0.0
  %6622 = vmatpush1.msra.mxu0 0.0
  %6623 = vmatprep.subr.mxu0 0.0
  %6624 = vmatpush1.msra.mxu0 0.0
  %6625 = vmatprep.subr.mxu0 0.0
  %6626 = vmatpush1.msra.mxu0 0.0
  %6627 = vmatprep.subr.mxu0 0.0
  %6628 = vmatpush1.msra.mxu0 0.0
  %6629 = vmatprep.subr.mxu0 0.0
  %6630 = vmatpush1.msra.mxu0 0.0
  %6631 = vmatprep.subr.mxu0 %v6425
  %6632 = vmatpush1.msra.mxu0 %v6424
  %6633 = vmatprep.subr.mxu0 %v6417
  %6634 = vmatpush1.msra.mxu0 %v6416
  %6635 = vmatprep.subr.mxu0 %v6409
  %6636 = vmatpush1.msra.mxu0 %v6408
  %6637 = vmatprep.subr.mxu0 %v6401
  %6638 = vmatpush1.msra.mxu0 %v6400
  %6639 = vmatprep.subr.mxu0 %v6393
  %6640 = vmatpush1.msra.mxu0 %v6392
  %6641 = vmatprep.subr.mxu0 %v6385
  %6642 = vmatpush1.msra.mxu0 %v6384
  %6643 = vmatprep.subr.mxu0 %v6377
  %6644 = vmatpush1.msra.mxu0 %v6376
  %6645 = vmatprep.subr.mxu0 %v6369
  %6646 = vmatpush1.msra.mxu0 %v6368
  %6647 = vmatprep.subr.mxu0 0.0
  %6648 = vmatpush2.msra.mxu0 0.0
  %6649 = vmatprep.subr.mxu0 0.0
  %6650 = vmatpush2.msra.mxu0 0.0
  %6651 = vmatprep.subr.mxu0 0.0
  %6652 = vmatpush2.msra.mxu0 0.0
  %6653 = vmatprep.subr.mxu0 0.0
  %6654 = vmatpush2.msra.mxu0 0.0
  %6655 = vmatprep.subr.mxu0 0.0
  %6656 = vmatpush2.msra.mxu0 0.0
  %6657 = vmatprep.subr.mxu0 0.0
  %6658 = vmatpush2.msra.mxu0 0.0
  %6659 = vmatprep.subr.mxu0 0.0
  %6660 = vmatpush2.msra.mxu0 0.0
  %6661 = vmatprep.subr.mxu0 0.0
  %6662 = vmatpush2.msra.mxu0 0.0
  %6663 = vmatprep.subr.mxu0 0.0
  %6664 = vmatpush2.msra.mxu0 0.0
  %6665 = vmatprep.subr.mxu0 0.0
  %6666 = vmatpush2.msra.mxu0 0.0
  %6667 = vmatprep.subr.mxu0 0.0
  %6668 = vmatpush2.msra.mxu0 0.0
  %6669 = vmatprep.subr.mxu0 0.0
  %6670 = vmatpush2.msra.mxu0 0.0
  %6671 = vmatprep.subr.mxu0 0.0
  %6672 = vmatpush2.msra.mxu0 0.0
  %6673 = vmatprep.subr.mxu0 0.0
  %6674 = vmatpush2.msra.mxu0 0.0
  %6675 = vmatprep.subr.mxu0 0.0
  %6676 = vmatpush2.msra.mxu0 0.0
  %6677 = vmatprep.subr.mxu0 0.0
  %6678 = vmatpush2.msra.mxu0 0.0
  %6679 = vmatprep.mubr.f32.mxu0 0.0
  %6680 = vmatmul.mubr.f32.gmra.mxu0 %v6471
  %v6681 = vpop.f32.mrf.mxu0
  %v6682 = vadd.f32 %v6449, %v6681
  %v6683 = vpop.f32.mrf.mxu0
  %v6684 = vadd.f32 %v6453, %v6683
  %6685 = vdwg.mxu0
  %6686 = vmatprep.subr.mxu0 0.0
  %6687 = vmatpush1.msra.mxu0 0.0
  %6688 = vmatprep.subr.mxu0 0.0
  %6689 = vmatpush1.msra.mxu0 0.0
  %6690 = vmatprep.subr.mxu0 0.0
  %6691 = vmatpush1.msra.mxu0 0.0
  %6692 = vmatprep.subr.mxu0 0.0
  %6693 = vmatpush1.msra.mxu0 0.0
  %6694 = vmatprep.subr.mxu0 0.0
  %6695 = vmatpush1.msra.mxu0 0.0
  %6696 = vmatprep.subr.mxu0 0.0
  %6697 = vmatpush1.msra.mxu0 0.0
  %6698 = vmatprep.subr.mxu0 0.0
  %6699 = vmatpush1.msra.mxu0 0.0
  %6700 = vmatprep.subr.mxu0 0.0
  %6701 = vmatpush1.msra.mxu0 0.0
  %6702 = vmatprep.subr.mxu0 %v6427
  %6703 = vmatpush1.msra.mxu0 %v6426
  %6704 = vmatprep.subr.mxu0 %v6419
  %6705 = vmatpush1.msra.mxu0 %v6418
  %6706 = vmatprep.subr.mxu0 %v6411
  %6707 = vmatpush1.msra.mxu0 %v6410
  %6708 = vmatprep.subr.mxu0 %v6403
  %6709 = vmatpush1.msra.mxu0 %v6402
  %6710 = vmatprep.subr.mxu0 %v6395
  %6711 = vmatpush1.msra.mxu0 %v6394
  %6712 = vmatprep.subr.mxu0 %v6387
  %6713 = vmatpush1.msra.mxu0 %v6386
  %6714 = vmatprep.subr.mxu0 %v6379
  %6715 = vmatpush1.msra.mxu0 %v6378
  %6716 = vmatprep.subr.mxu0 %v6371
  %6717 = vmatpush1.msra.mxu0 %v6370
  %6718 = vmatprep.subr.mxu0 0.0
  %6719 = vmatpush2.msra.mxu0 0.0
  %6720 = vmatprep.subr.mxu0 0.0
  %6721 = vmatpush2.msra.mxu0 0.0
  %6722 = vmatprep.subr.mxu0 0.0
  %6723 = vmatpush2.msra.mxu0 0.0
  %6724 = vmatprep.subr.mxu0 0.0
  %6725 = vmatpush2.msra.mxu0 0.0
  %6726 = vmatprep.subr.mxu0 0.0
  %6727 = vmatpush2.msra.mxu0 0.0
  %6728 = vmatprep.subr.mxu0 0.0
  %6729 = vmatpush2.msra.mxu0 0.0
  %6730 = vmatprep.subr.mxu0 0.0
  %6731 = vmatpush2.msra.mxu0 0.0
  %6732 = vmatprep.subr.mxu0 0.0
  %6733 = vmatpush2.msra.mxu0 0.0
  %6734 = vmatprep.subr.mxu0 0.0
  %6735 = vmatpush2.msra.mxu0 0.0
  %6736 = vmatprep.subr.mxu0 0.0
  %6737 = vmatpush2.msra.mxu0 0.0
  %6738 = vmatprep.subr.mxu0 0.0
  %6739 = vmatpush2.msra.mxu0 0.0
  %6740 = vmatprep.subr.mxu0 0.0
  %6741 = vmatpush2.msra.mxu0 0.0
  %6742 = vmatprep.subr.mxu0 0.0
  %6743 = vmatpush2.msra.mxu0 0.0
  %6744 = vmatprep.subr.mxu0 0.0
  %6745 = vmatpush2.msra.mxu0 0.0
  %6746 = vmatprep.subr.mxu0 0.0
  %6747 = vmatpush2.msra.mxu0 0.0
  %6748 = vmatprep.subr.mxu0 0.0
  %6749 = vmatpush2.msra.mxu0 0.0
  %6750 = vmatprep.mubr.f32.mxu0 0.0
  %6751 = vmatmul.mubr.f32.gmra.mxu0 %v6471
  %v6752 = vpop.f32.mrf.mxu0
  %v6753 = vadd.f32 %v6457, %v6752
  %v6754 = vpop.f32.mrf.mxu0
  %v6755 = vadd.f32 %v6461, %v6754
  %6756 = vdwg.mxu0
  %vm6757 = vcmp.ge.f32.partialorder %v6540, 0.0
  %vm6758 = vcmp.ge.f32.partialorder %v6542, 0.0
  %vm6759 = vcmp.ge.f32.partialorder %v6611, 0.0
  %vm6760 = vcmp.ge.f32.partialorder %v6613, 0.0
  %vm6761 = vcmp.ge.f32.partialorder %v6682, 0.0
  %vm6762 = vcmp.ge.f32.partialorder %v6684, 0.0
  %vm6763 = vcmp.ge.f32.partialorder %v6753, 0.0
  %vm6764 = vcmp.ge.f32.partialorder %v6755, 0.0
  %v6765 = vmul.f32 %v6540, 0.01
  %v6766 = vmul.f32 %v6542, 0.01
  %v6767 = vmul.f32 %v6611, 0.01
  %v6768 = vmul.f32 %v6613, 0.01
  %v6769 = vmul.f32 %v6682, 0.01
  %v6770 = vmul.f32 %v6684, 0.01
  %v6771 = vmul.f32 %v6753, 0.01
  %v6772 = vmul.f32 %v6755, 0.01
  %v6773 = vsel %vm6757, %v6540, %v6765
  %v6774 = vsel %vm6758, %v6542, %v6766
  %v6775 = vsel %vm6759, %v6611, %v6767
  %v6776 = vsel %vm6760, %v6613, %v6768
  %v6777 = vsel %vm6761, %v6682, %v6769
  %v6778 = vsel %vm6762, %v6684, %v6770
  %v6779 = vsel %vm6763, %v6753, %v6771
  %v6780 = vsel %vm6764, %v6755, %v6772
  %v6781 = vld [vmem:[%s9] sm:$0xff]
  %v6782 = vld [vmem:[%s9 + $0x8] sm:$0xff]
  %v6783 = vld [vmem:[%s9 + $0x10] sm:$0xff]
  %v6784 = vld [vmem:[%s9 + $0x18] sm:$0xff]
  %v6785 = vld [vmem:[%s9 + $0x20] sm:$0xff]
  %v6786 = vld [vmem:[%s9 + $0x28] sm:$0xff]
  %v6787 = vld [vmem:[%s9 + $0x30] sm:$0xff]
  %v6788 = vld [vmem:[%s9 + $0x38] sm:$0xff]
  %v6789 = vld [vmem:[%s9 + $0x40] sm:$0xff]
  %v6790 = vld [vmem:[%s9 + $0x48] sm:$0xff]
  %v6791 = vld [vmem:[%s9 + $0x50] sm:$0xff]
  %v6792 = vld [vmem:[%s9 + $0x58] sm:$0xff]
  %v6793 = vld [vmem:[%s9 + $0x60] sm:$0xff]
  %v6794 = vld [vmem:[%s9 + $0x68] sm:$0xff]
  %v6795 = vld [vmem:[%s9 + $0x70] sm:$0xff]
  %v6796 = vld [vmem:[%s9 + $0x78] sm:$0xff]
  %v6797 = vld [vmem:[%s9 + $0x80] sm:$0xff]
  %v6798 = vld [vmem:[%s9 + $0x88] sm:$0xff]
  %v6799 = vld [vmem:[%s9 + $0x90] sm:$0xff]
  %v6800 = vld [vmem:[%s9 + $0x98] sm:$0xff]
  %v6801 = vld [vmem:[%s9 + $0xa0] sm:$0xff]
  %v6802 = vld [vmem:[%s9 + $0xa8] sm:$0xff]
  %v6803 = vld [vmem:[%s9 + $0xb0] sm:$0xff]
  %v6804 = vld [vmem:[%s9 + $0xb8] sm:$0xff]
  %v6805 = vld [vmem:[%s9 + $0xc0] sm:$0xff]
  %v6806 = vld [vmem:[%s9 + $0xc8] sm:$0xff]
  %v6807 = vld [vmem:[%s9 + $0xd0] sm:$0xff]
  %v6808 = vld [vmem:[%s9 + $0xd8] sm:$0xff]
  %v6809 = vld [vmem:[%s9 + $0xe0] sm:$0xff]
  %v6810 = vld [vmem:[%s9 + $0xe8] sm:$0xff]
  %v6811 = vld [vmem:[%s9 + $0xf0] sm:$0xff]
  %v6812 = vld [vmem:[%s9 + $0xf8] sm:$0xff]
  %v6813 = vld [vmem:[%s9 + $0x100] sm:$0xff]
  %v6814 = vld [vmem:[%s9 + $0x108] sm:$0xff]
  %v6815 = vld [vmem:[%s9 + $0x110] sm:$0xff]
  %v6816 = vld [vmem:[%s9 + $0x118] sm:$0xff]
  %v6817 = vld [vmem:[%s9 + $0x120] sm:$0xff]
  %v6818 = vld [vmem:[%s9 + $0x128] sm:$0xff]
  %v6819 = vld [vmem:[%s9 + $0x130] sm:$0xff]
  %v6820 = vld [vmem:[%s9 + $0x138] sm:$0xff]
  %v6821 = vld [vmem:[%s9 + $0x140] sm:$0xff]
  %v6822 = vld [vmem:[%s9 + $0x148] sm:$0xff]
  %v6823 = vld [vmem:[%s9 + $0x150] sm:$0xff]
  %v6824 = vld [vmem:[%s9 + $0x158] sm:$0xff]
  %v6825 = vld [vmem:[%s9 + $0x160] sm:$0xff]
  %v6826 = vld [vmem:[%s9 + $0x168] sm:$0xff]
  %v6827 = vld [vmem:[%s9 + $0x170] sm:$0xff]
  %v6828 = vld [vmem:[%s9 + $0x178] sm:$0xff]
  %v6829 = vld [vmem:[%s9 + $0x180] sm:$0xff]
  %v6830 = vld [vmem:[%s9 + $0x188] sm:$0xff]
  %v6831 = vld [vmem:[%s9 + $0x190] sm:$0xff]
  %v6832 = vld [vmem:[%s9 + $0x198] sm:$0xff]
  %v6833 = vld [vmem:[%s9 + $0x1a0] sm:$0xff]
  %v6834 = vld [vmem:[%s9 + $0x1a8] sm:$0xff]
  %v6835 = vld [vmem:[%s9 + $0x1b0] sm:$0xff]
  %v6836 = vld [vmem:[%s9 + $0x1b8] sm:$0xff]
  %v6837 = vld [vmem:[%s9 + $0x1c0] sm:$0xff]
  %v6838 = vld [vmem:[%s9 + $0x1c8] sm:$0xff]
  %v6839 = vld [vmem:[%s9 + $0x1d0] sm:$0xff]
  %v6840 = vld [vmem:[%s9 + $0x1d8] sm:$0xff]
  %v6841 = vld [vmem:[%s9 + $0x1e0] sm:$0xff]
  %v6842 = vld [vmem:[%s9 + $0x1e8] sm:$0xff]
  %v6843 = vld [vmem:[%s9 + $0x1f0] sm:$0xff]
  %v6844 = vld [vmem:[%s9 + $0x1f8] sm:$0xff]
  %v6845 = vld [vmem:[%s9 + $0x200] sm:$0xff]
  %v6846 = vld [vmem:[%s9 + $0x208] sm:$0xff]
  %v6847 = vld [vmem:[%s9 + $0x210] sm:$0xff]
  %v6848 = vld [vmem:[%s9 + $0x218] sm:$0xff]
  %v6849 = vld [vmem:[%s9 + $0x220] sm:$0xff]
  %v6850 = vld [vmem:[%s9 + $0x228] sm:$0xff]
  %v6851 = vld [vmem:[%s9 + $0x230] sm:$0xff]
  %v6852 = vld [vmem:[%s9 + $0x238] sm:$0xff]
  %v6853 = vld [vmem:[%s9 + $0x240] sm:$0xff]
  %v6854 = vld [vmem:[%s9 + $0x248] sm:$0xff]
  %v6855 = vld [vmem:[%s9 + $0x250] sm:$0xff]
  %v6856 = vld [vmem:[%s9 + $0x258] sm:$0xff]
  %v6857 = vld [vmem:[%s9 + $0x260] sm:$0xff]
  %v6858 = vld [vmem:[%s9 + $0x268] sm:$0xff]
  %v6859 = vld [vmem:[%s9 + $0x270] sm:$0xff]
  %v6860 = vld [vmem:[%s9 + $0x278] sm:$0xff]
  %v6861 = vld [vmem:[%s9 + $0x280] sm:$0xff]
  %v6862 = vld [vmem:[%s9 + $0x288] sm:$0xff]
  %v6863 = vld [vmem:[%s9 + $0x290] sm:$0xff]
  %v6864 = vld [vmem:[%s9 + $0x298] sm:$0xff]
  %v6865 = vld [vmem:[%s9 + $0x2a0] sm:$0xff]
  %v6866 = vld [vmem:[%s9 + $0x2a8] sm:$0xff]
  %v6867 = vld [vmem:[%s9 + $0x2b0] sm:$0xff]
  %v6868 = vld [vmem:[%s9 + $0x2b8] sm:$0xff]
  %v6869 = vld [vmem:[%s9 + $0x2c0] sm:$0xff]
  %v6870 = vld [vmem:[%s9 + $0x2c8] sm:$0xff]
  %v6871 = vld [vmem:[%s9 + $0x2d0] sm:$0xff]
  %v6872 = vld [vmem:[%s9 + $0x2d8] sm:$0xff]
  %v6873 = vld [vmem:[%s9 + $0x2e0] sm:$0xff]
  %v6874 = vld [vmem:[%s9 + $0x2e8] sm:$0xff]
  %v6875 = vld [vmem:[%s9 + $0x2f0] sm:$0xff]
  %v6876 = vld [vmem:[%s9 + $0x2f8] sm:$0xff]
  %v6877 = vld [vmem:[%s9 + $0x300] sm:$0xff]
  %v6878 = vld [vmem:[%s9 + $0x308] sm:$0xff]
  %v6879 = vld [vmem:[%s9 + $0x310] sm:$0xff]
  %v6880 = vld [vmem:[%s9 + $0x318] sm:$0xff]
  %v6881 = vld [vmem:[%s9 + $0x320] sm:$0xff]
  %v6882 = vld [vmem:[%s9 + $0x328] sm:$0xff]
  %v6883 = vld [vmem:[%s9 + $0x330] sm:$0xff]
  %v6884 = vld [vmem:[%s9 + $0x338] sm:$0xff]
  %v6885 = vld [vmem:[%s9 + $0x340] sm:$0xff]
  %v6886 = vld [vmem:[%s9 + $0x348] sm:$0xff]
  %v6887 = vld [vmem:[%s9 + $0x350] sm:$0xff]
  %v6888 = vld [vmem:[%s9 + $0x358] sm:$0xff]
  %v6889 = vld [vmem:[%s9 + $0x360] sm:$0xff]
  %v6890 = vld [vmem:[%s9 + $0x368] sm:$0xff]
  %v6891 = vld [vmem:[%s9 + $0x370] sm:$0xff]
  %v6892 = vld [vmem:[%s9 + $0x378] sm:$0xff]
  %v6893 = vld [vmem:[%s9 + $0x380] sm:$0xff]
  %v6894 = vld [vmem:[%s9 + $0x388] sm:$0xff]
  %v6895 = vld [vmem:[%s9 + $0x390] sm:$0xff]
  %v6896 = vld [vmem:[%s9 + $0x398] sm:$0xff]
  %v6897 = vld [vmem:[%s9 + $0x3a0] sm:$0xff]
  %v6898 = vld [vmem:[%s9 + $0x3a8] sm:$0xff]
  %v6899 = vld [vmem:[%s9 + $0x3b0] sm:$0xff]
  %v6900 = vld [vmem:[%s9 + $0x3b8] sm:$0xff]
  %v6901 = vld [vmem:[%s9 + $0x3c0] sm:$0xff]
  %v6902 = vld [vmem:[%s9 + $0x3c8] sm:$0xff]
  %v6903 = vld [vmem:[%s9 + $0x3d0] sm:$0xff]
  %v6904 = vld [vmem:[%s9 + $0x3d8] sm:$0xff]
  %v6905 = vld [vmem:[%s9 + $0x3e0] sm:$0xff]
  %v6906 = vld [vmem:[%s9 + $0x3e8] sm:$0xff]
  %v6907 = vld [vmem:[%s9 + $0x3f0] sm:$0xff]
  %v6908 = vld [vmem:[%s9 + $0x3f8] sm:$0xff]
  %v6909 = vld [vmem:[%s10] sm:$0x1]
  %v6911 = vlaneseq
  %v6912 = vshrl.u32 %v6911, 7
  %v6913 = vsub.s32 0, %v6912
  %v6914 = vrot.slane %v6909, %v6913
  %6916 = vmatprep.subr.mxu0 0.0
  %6917 = vmatpush1.msra.mxu0 %v6796
  %6918 = vmatprep.subr.mxu0 0.0
  %6919 = vmatpush1.msra.mxu0 %v6795
  %6920 = vmatprep.subr.mxu0 0.0
  %6921 = vmatpush1.msra.mxu0 %v6794
  %6922 = vmatprep.subr.mxu0 0.0
  %6923 = vmatpush1.msra.mxu0 %v6793
  %6924 = vmatprep.subr.mxu0 0.0
  %6925 = vmatpush1.msra.mxu0 %v6792
  %6926 = vmatprep.subr.mxu0 0.0
  %6927 = vmatpush1.msra.mxu0 %v6791
  %6928 = vmatprep.subr.mxu0 0.0
  %6929 = vmatpush1.msra.mxu0 %v6790
  %6930 = vmatprep.subr.mxu0 0.0
  %6931 = vmatpush1.msra.mxu0 %v6789
  %6932 = vmatprep.subr.mxu0 0.0
  %6933 = vmatpush1.msra.mxu0 %v6788
  %6934 = vmatprep.subr.mxu0 0.0
  %6935 = vmatpush1.msra.mxu0 %v6787
  %6936 = vmatprep.subr.mxu0 0.0
  %6937 = vmatpush1.msra.mxu0 %v6786
  %6938 = vmatprep.subr.mxu0 0.0
  %6939 = vmatpush1.msra.mxu0 %v6785
  %6940 = vmatprep.subr.mxu0 0.0
  %6941 = vmatpush1.msra.mxu0 %v6784
  %6942 = vmatprep.subr.mxu0 0.0
  %6943 = vmatpush1.msra.mxu0 %v6783
  %6944 = vmatprep.subr.mxu0 0.0
  %6945 = vmatpush1.msra.mxu0 %v6782
  %6946 = vmatprep.subr.mxu0 0.0
  %6947 = vmatpush1.msra.mxu0 %v6781
  %6948 = vmatprep.subr.mxu0 0.0
  %6949 = vmatpush2.msra.mxu0 %v6812
  %6950 = vmatprep.subr.mxu0 0.0
  %6951 = vmatpush2.msra.mxu0 %v6811
  %6952 = vmatprep.subr.mxu0 0.0
  %6953 = vmatpush2.msra.mxu0 %v6810
  %6954 = vmatprep.subr.mxu0 0.0
  %6955 = vmatpush2.msra.mxu0 %v6809
  %6956 = vmatprep.subr.mxu0 0.0
  %6957 = vmatpush2.msra.mxu0 %v6808
  %6958 = vmatprep.subr.mxu0 0.0
  %6959 = vmatpush2.msra.mxu0 %v6807
  %6960 = vmatprep.subr.mxu0 0.0
  %6961 = vmatpush2.msra.mxu0 %v6806
  %6962 = vmatprep.subr.mxu0 0.0
  %6963 = vmatpush2.msra.mxu0 %v6805
  %6964 = vmatprep.subr.mxu0 0.0
  %6965 = vmatpush2.msra.mxu0 %v6804
  %6966 = vmatprep.subr.mxu0 0.0
  %6967 = vmatpush2.msra.mxu0 %v6803
  %6968 = vmatprep.subr.mxu0 0.0
  %6969 = vmatpush2.msra.mxu0 %v6802
  %6970 = vmatprep.subr.mxu0 0.0
  %6971 = vmatpush2.msra.mxu0 %v6801
  %6972 = vmatprep.subr.mxu0 0.0
  %6973 = vmatpush2.msra.mxu0 %v6800
  %6974 = vmatprep.subr.mxu0 0.0
  %6975 = vmatpush2.msra.mxu0 %v6799
  %6976 = vmatprep.subr.mxu0 0.0
  %6977 = vmatpush2.msra.mxu0 %v6798
  %6978 = vmatprep.subr.mxu0 0.0
  %6979 = vmatpush2.msra.mxu0 %v6797
  %6980 = vmatprep.mubr.f32.mxu0 %v6774
  %6981 = vmatmul.mubr.f32.gmra.mxu0 %v6773
  %v6982 = vpop.f32.mrf.mxu0
  %v6983 = vadd.f32 %v6914, %v6982
  %v6984 = vpop.f32.mrf.mxu0
  %6985 = vdwg.mxu0
  %6986 = vmatprep.subr.mxu0 0.0
  %6987 = vmatpush1.msra.mxu0 %v6828
  %6988 = vmatprep.subr.mxu0 0.0
  %6989 = vmatpush1.msra.mxu0 %v6827
  %6990 = vmatprep.subr.mxu0 0.0
  %6991 = vmatpush1.msra.mxu0 %v6826
  %6992 = vmatprep.subr.mxu0 0.0
  %6993 = vmatpush1.msra.mxu0 %v6825
  %6994 = vmatprep.subr.mxu0 0.0
  %6995 = vmatpush1.msra.mxu0 %v6824
  %6996 = vmatprep.subr.mxu0 0.0
  %6997 = vmatpush1.msra.mxu0 %v6823
  %6998 = vmatprep.subr.mxu0 0.0
  %6999 = vmatpush1.msra.mxu0 %v6822
  %7000 = vmatprep.subr.mxu0 0.0
  %7001 = vmatpush1.msra.mxu0 %v6821
  %7002 = vmatprep.subr.mxu0 0.0
  %7003 = vmatpush1.msra.mxu0 %v6820
  %7004 = vmatprep.subr.mxu0 0.0
  %7005 = vmatpush1.msra.mxu0 %v6819
  %7006 = vmatprep.subr.mxu0 0.0
  %7007 = vmatpush1.msra.mxu0 %v6818
  %7008 = vmatprep.subr.mxu0 0.0
  %7009 = vmatpush1.msra.mxu0 %v6817
  %7010 = vmatprep.subr.mxu0 0.0
  %7011 = vmatpush1.msra.mxu0 %v6816
  %7012 = vmatprep.subr.mxu0 0.0
  %7013 = vmatpush1.msra.mxu0 %v6815
  %7014 = vmatprep.subr.mxu0 0.0
  %7015 = vmatpush1.msra.mxu0 %v6814
  %7016 = vmatprep.subr.mxu0 0.0
  %7017 = vmatpush1.msra.mxu0 %v6813
  %7018 = vmatprep.subr.mxu0 0.0
  %7019 = vmatpush2.msra.mxu0 %v6844
  %7020 = vmatprep.subr.mxu0 0.0
  %7021 = vmatpush2.msra.mxu0 %v6843
  %7022 = vmatprep.subr.mxu0 0.0
  %7023 = vmatpush2.msra.mxu0 %v6842
  %7024 = vmatprep.subr.mxu0 0.0
  %7025 = vmatpush2.msra.mxu0 %v6841
  %7026 = vmatprep.subr.mxu0 0.0
  %7027 = vmatpush2.msra.mxu0 %v6840
  %7028 = vmatprep.subr.mxu0 0.0
  %7029 = vmatpush2.msra.mxu0 %v6839
  %7030 = vmatprep.subr.mxu0 0.0
  %7031 = vmatpush2.msra.mxu0 %v6838
  %7032 = vmatprep.subr.mxu0 0.0
  %7033 = vmatpush2.msra.mxu0 %v6837
  %7034 = vmatprep.subr.mxu0 0.0
  %7035 = vmatpush2.msra.mxu0 %v6836
  %7036 = vmatprep.subr.mxu0 0.0
  %7037 = vmatpush2.msra.mxu0 %v6835
  %7038 = vmatprep.subr.mxu0 0.0
  %7039 = vmatpush2.msra.mxu0 %v6834
  %7040 = vmatprep.subr.mxu0 0.0
  %7041 = vmatpush2.msra.mxu0 %v6833
  %7042 = vmatprep.subr.mxu0 0.0
  %7043 = vmatpush2.msra.mxu0 %v6832
  %7044 = vmatprep.subr.mxu0 0.0
  %7045 = vmatpush2.msra.mxu0 %v6831
  %7046 = vmatprep.subr.mxu0 0.0
  %7047 = vmatpush2.msra.mxu0 %v6830
  %7048 = vmatprep.subr.mxu0 0.0
  %7049 = vmatpush2.msra.mxu0 %v6829
  %7050 = vmatprep.mubr.f32.mxu0 %v6776
  %7051 = vmatmul.mubr.f32.gmra.mxu0 %v6775
  %v7052 = vpop.f32.mrf.mxu0
  %v7053 = vadd.f32 %v6983, %v7052
  %v7054 = vpop.f32.mrf.mxu0
  %7055 = vdwg.mxu0
  %7056 = vmatprep.subr.mxu0 0.0
  %7057 = vmatpush1.msra.mxu0 %v6860
  %7058 = vmatprep.subr.mxu0 0.0
  %7059 = vmatpush1.msra.mxu0 %v6859
  %7060 = vmatprep.subr.mxu0 0.0
  %7061 = vmatpush1.msra.mxu0 %v6858
  %7062 = vmatprep.subr.mxu0 0.0
  %7063 = vmatpush1.msra.mxu0 %v6857
  %7064 = vmatprep.subr.mxu0 0.0
  %7065 = vmatpush1.msra.mxu0 %v6856
  %7066 = vmatprep.subr.mxu0 0.0
  %7067 = vmatpush1.msra.mxu0 %v6855
  %7068 = vmatprep.subr.mxu0 0.0
  %7069 = vmatpush1.msra.mxu0 %v6854
  %7070 = vmatprep.subr.mxu0 0.0
  %7071 = vmatpush1.msra.mxu0 %v6853
  %7072 = vmatprep.subr.mxu0 0.0
  %7073 = vmatpush1.msra.mxu0 %v6852
  %7074 = vmatprep.subr.mxu0 0.0
  %7075 = vmatpush1.msra.mxu0 %v6851
  %7076 = vmatprep.subr.mxu0 0.0
  %7077 = vmatpush1.msra.mxu0 %v6850
  %7078 = vmatprep.subr.mxu0 0.0
  %7079 = vmatpush1.msra.mxu0 %v6849
  %7080 = vmatprep.subr.mxu0 0.0
  %7081 = vmatpush1.msra.mxu0 %v6848
  %7082 = vmatprep.subr.mxu0 0.0
  %7083 = vmatpush1.msra.mxu0 %v6847
  %7084 = vmatprep.subr.mxu0 0.0
  %7085 = vmatpush1.msra.mxu0 %v6846
  %7086 = vmatprep.subr.mxu0 0.0
  %7087 = vmatpush1.msra.mxu0 %v6845
  %7088 = vmatprep.subr.mxu0 0.0
  %7089 = vmatpush2.msra.mxu0 %v6876
  %7090 = vmatprep.subr.mxu0 0.0
  %7091 = vmatpush2.msra.mxu0 %v6875
  %7092 = vmatprep.subr.mxu0 0.0
  %7093 = vmatpush2.msra.mxu0 %v6874
  %7094 = vmatprep.subr.mxu0 0.0
  %7095 = vmatpush2.msra.mxu0 %v6873
  %7096 = vmatprep.subr.mxu0 0.0
  %7097 = vmatpush2.msra.mxu0 %v6872
  %7098 = vmatprep.subr.mxu0 0.0
  %7099 = vmatpush2.msra.mxu0 %v6871
  %7100 = vmatprep.subr.mxu0 0.0
  %7101 = vmatpush2.msra.mxu0 %v6870
  %7102 = vmatprep.subr.mxu0 0.0
  %7103 = vmatpush2.msra.mxu0 %v6869
  %7104 = vmatprep.subr.mxu0 0.0
  %7105 = vmatpush2.msra.mxu0 %v6868
  %7106 = vmatprep.subr.mxu0 0.0
  %7107 = vmatpush2.msra.mxu0 %v6867
  %7108 = vmatprep.subr.mxu0 0.0
  %7109 = vmatpush2.msra.mxu0 %v6866
  %7110 = vmatprep.subr.mxu0 0.0
  %7111 = vmatpush2.msra.mxu0 %v6865
  %7112 = vmatprep.subr.mxu0 0.0
  %7113 = vmatpush2.msra.mxu0 %v6864
  %7114 = vmatprep.subr.mxu0 0.0
  %7115 = vmatpush2.msra.mxu0 %v6863
  %7116 = vmatprep.subr.mxu0 0.0
  %7117 = vmatpush2.msra.mxu0 %v6862
  %7118 = vmatprep.subr.mxu0 0.0
  %7119 = vmatpush2.msra.mxu0 %v6861
  %7120 = vmatprep.mubr.f32.mxu0 %v6778
  %7121 = vmatmul.mubr.f32.gmra.mxu0 %v6777
  %v7122 = vpop.f32.mrf.mxu0
  %v7123 = vadd.f32 %v7053, %v7122
  %v7124 = vpop.f32.mrf.mxu0
  %7125 = vdwg.mxu0
  %7126 = vmatprep.subr.mxu0 0.0
  %7127 = vmatpush1.msra.mxu0 %v6892
  %7128 = vmatprep.subr.mxu0 0.0
  %7129 = vmatpush1.msra.mxu0 %v6891
  %7130 = vmatprep.subr.mxu0 0.0
  %7131 = vmatpush1.msra.mxu0 %v6890
  %7132 = vmatprep.subr.mxu0 0.0
  %7133 = vmatpush1.msra.mxu0 %v6889
  %7134 = vmatprep.subr.mxu0 0.0
  %7135 = vmatpush1.msra.mxu0 %v6888
  %7136 = vmatprep.subr.mxu0 0.0
  %7137 = vmatpush1.msra.mxu0 %v6887
  %7138 = vmatprep.subr.mxu0 0.0
  %7139 = vmatpush1.msra.mxu0 %v6886
  %7140 = vmatprep.subr.mxu0 0.0
  %7141 = vmatpush1.msra.mxu0 %v6885
  %7142 = vmatprep.subr.mxu0 0.0
  %7143 = vmatpush1.msra.mxu0 %v6884
  %7144 = vmatprep.subr.mxu0 0.0
  %7145 = vmatpush1.msra.mxu0 %v6883
  %7146 = vmatprep.subr.mxu0 0.0
  %7147 = vmatpush1.msra.mxu0 %v6882
  %7148 = vmatprep.subr.mxu0 0.0
  %7149 = vmatpush1.msra.mxu0 %v6881
  %7150 = vmatprep.subr.mxu0 0.0
  %7151 = vmatpush1.msra.mxu0 %v6880
  %7152 = vmatprep.subr.mxu0 0.0
  %7153 = vmatpush1.msra.mxu0 %v6879
  %7154 = vmatprep.subr.mxu0 0.0
  %7155 = vmatpush1.msra.mxu0 %v6878
  %7156 = vmatprep.subr.mxu0 0.0
  %7157 = vmatpush1.msra.mxu0 %v6877
  %7158 = vmatprep.subr.mxu0 0.0
  %7159 = vmatpush2.msra.mxu0 %v6908
  %7160 = vmatprep.subr.mxu0 0.0
  %7161 = vmatpush2.msra.mxu0 %v6907
  %7162 = vmatprep.subr.mxu0 0.0
  %7163 = vmatpush2.msra.mxu0 %v6906
  %7164 = vmatprep.subr.mxu0 0.0
  %7165 = vmatpush2.msra.mxu0 %v6905
  %7166 = vmatprep.subr.mxu0 0.0
  %7167 = vmatpush2.msra.mxu0 %v6904
  %7168 = vmatprep.subr.mxu0 0.0
  %7169 = vmatpush2.msra.mxu0 %v6903
  %7170 = vmatprep.subr.mxu0 0.0
  %7171 = vmatpush2.msra.mxu0 %v6902
  %7172 = vmatprep.subr.mxu0 0.0
  %7173 = vmatpush2.msra.mxu0 %v6901
  %7174 = vmatprep.subr.mxu0 0.0
  %7175 = vmatpush2.msra.mxu0 %v6900
  %7176 = vmatprep.subr.mxu0 0.0
  %7177 = vmatpush2.msra.mxu0 %v6899
  %7178 = vmatprep.subr.mxu0 0.0
  %7179 = vmatpush2.msra.mxu0 %v6898
  %7180 = vmatprep.subr.mxu0 0.0
  %7181 = vmatpush2.msra.mxu0 %v6897
  %7182 = vmatprep.subr.mxu0 0.0
  %7183 = vmatpush2.msra.mxu0 %v6896
  %7184 = vmatprep.subr.mxu0 0.0
  %7185 = vmatpush2.msra.mxu0 %v6895
  %7186 = vmatprep.subr.mxu0 0.0
  %7187 = vmatpush2.msra.mxu0 %v6894
  %7188 = vmatprep.subr.mxu0 0.0
  %7189 = vmatpush2.msra.mxu0 %v6893
  %7190 = vmatprep.mubr.f32.mxu0 %v6780
  %7191 = vmatmul.mubr.f32.gmra.mxu0 %v6779
  %v7192 = vpop.f32.mrf.mxu0
  %v7193 = vadd.f32 %v7123, %v7192
  %v7194 = vpop.f32.mrf.mxu0
  %7195 = vdwg.mxu0
  %v7196 = vlaneseq
  %v7197 = vand.u32 %v7196, 127
  %vm7198 = vcmp.lt.s32.totalorder %v7197, 6
  %v7199 = vsel %vm7198, %v7193, -1e+30
  %v7200 = vsel %vm140, %v7199, -inf
  %7201 = vmax.xlane.f32.xlu0 %v7200
  %v7202 = vpop.xlane.xlu0 %7201
  %v7203 = vsub.f32 %v7193, %v7202
  %v7204 = vmul.f32 %v7203, 1.442695
  %v7205 = vpow.pop %v7204
  %v7206 = vsel %vm7198, %v7205, 0.0
  %v7207 = vsel %vm140, %v7206, 0.0
  %7208 = vadd.xlane.f32.xlu0 %v7207
  %v7209 = vpop.xlane.xlu0 %7208
  %v7210 = vrcp.pop %v7209
  %v7211 = vmul.f32 %v7206, %v7210
  %vm7212 = vcmp.eq.s32.totalorder %v7197, 6
  %v7213 = vsel %vm7212, %v7193, %v7211
  %7214 = vst [vmem:[%s11] sm:$0x3] %v7213
  // Predicated region
  $region46: #{actor_critic_forward.1} parent=0 // pred_check
    _
  $region47: #{actor_critic_forward.1} parent=0 // pred_check_branch
    %7216 = sbr.rel (0) target = $region49
  $region48: #{actor_critic_forward.1} parent=0 // pred_region
    _
  $region49: #{actor_critic_forward.1} parent=0 // pred_fallthru
    _
  // Predicated region
  $region50: #{actor_critic_forward.1} parent=0 // pred_check
    _
  $region51: #{actor_critic_forward.1} parent=0 // pred_check_branch
    %7218 = sbr.rel (0) target = $region53
  $region52: #{actor_critic_forward.1} parent=0 // pred_region
    _
  $region53: #{actor_critic_forward.1} parent=0 // pred_fallthru
    _

</llo_original>
